<compile_context>
chip_gen: v5e
topology: v5e:2x2
jax: 0.10.0
libtpu: 0.0.40
codegen_flags: <defaults>
</compile_context>

<pallas_src>
import jax
import jax.numpy as jnp
from jax.experimental import pallas as pl
from jax.experimental.pallas import tpu as pltpu


def _round_up(x, m):
    return -(-x // m) * m


def _vmem_cap_bytes():
    """Physical per-TensorCore VMEM (v5e/v6e: 128 MiB, v7x: 64 MiB)."""
    try:
        cap = int(pltpu.get_tpu_info().vmem_capacity_bytes)
        if cap > 0:
            return cap
    except Exception:
        pass
    return 64 << 20          # conservative (v7x-sized) fallback


# ----------------------------------------------------------------------------
# Pallas kernel: Y = act( BN_or_affine( A @ W ) )
#   Accumulates over the K grid axis into an f32 VMEM scratch; finalize on the
#   last K step applies (training-mode, biased-variance) BatchNorm or a plain
#   affine, then LeakyReLU, and stores in the output dtype (bf16 or f32).
#   A: (M, tk) bf16   W: (tk, tn) bf16   scale/shift: (1, tn) f32
# ----------------------------------------------------------------------------
def _make_fused_kernel(slope, bn_eps, inv_m):
    def kernel(a_ref, w_ref, s_ref, b_ref, o_ref, acc_ref):
        k = pl.program_id(1)

        @pl.when(k == 0)
        def _init():
            acc_ref[...] = jnp.zeros_like(acc_ref)

        acc_ref[...] += jnp.dot(a_ref[...], w_ref[...],
                                preferred_element_type=jnp.float32)

        @pl.when(k == pl.num_programs(1) - 1)
        def _finalize():
            acc = acc_ref[...]
            if bn_eps is not None:
                # PyTorch training-mode BatchNorm2d: batch stats over (N,H,W),
                # biased variance.  Stats are per output channel, so each
                # N tile is self-contained.  Two-pass variance (centered) to
                # avoid E[x^2]-E[x]^2 cancellation; acc is VMEM-resident so
                # the extra pass is on-chip only.
                mean = jnp.sum(acc, axis=0, keepdims=True) * inv_m
                centered = acc - mean
                var = jnp.sum(centered * centered, axis=0, keepdims=True) * inv_m
                y = centered * (s_ref[...] * jax.lax.rsqrt(var + bn_eps)) \
                    + b_ref[...]
            else:
                y = acc * s_ref[...] + b_ref[...]
            if slope != 1.0:
                y = jnp.where(y >= 0, y, slope * y)       # LeakyReLU
            o_ref[...] = y.astype(o_ref.dtype)

    return kernel


def _vmem_estimate(M, tk, tn, out_bytes):
    return (2 * M * tk * 2            # A tiles, double-buffered bf16
            + 2 * tk * tn * 2         # W tiles, double-buffered bf16
            + 2 * M * tn * out_bytes  # output tiles, double-buffered
            + M * tn * 4              # f32 accumulator scratch
            + 4 * tn * 4              # scale / shift tiles
            + (2 << 20))              # headroom


def _select_tiles(M, K, N, out_bytes, budget):
    """Pick (Kp, tk, tn).  Prefer large, exactly-dividing tiles (the kernel is
    weight-streaming bound at small M); only zero-pad K as a last resort."""
    tn_opts = [t for t in (512, 256, 128) if N % t == 0]
    if M <= 1024:
        tk_cands = (2048, 1536, 1280, 1024, 768, 512, 384, 256, 128)
    else:
        tk_cands = (512, 384, 256, 128)
    for tn in tn_opts:
        for tk in tk_cands:
            if K % tk:
                continue
            if _vmem_estimate(M, tk, tn, out_bytes) <= budget:
                return K, tk, tn
    # Fallback: zero-pad the contraction (numerically exact).
    # TODO(synk): add M tiling (two-pass BN stats accumulated in a (1, tn)
    # scratch) for very large M where the M-resident blocks alone exceed VMEM.
    tn = tn_opts[-1]
    for tk in (512, 256, 128):
        if _vmem_estimate(M, tk, tn, out_bytes) <= budget or tk == 128:
            return _round_up(K, tk), tk, tn


def fused_matmul_bn_act(a, w, scale, shift, *, slope, bn_eps, out_dtype):
    """act( BN_or_affine( A @ W ) ).

    a: (M, K) float; w: (K, N) bf16 (pre-padded so N % 128 == 0);
    scale/shift: (1, N) f32.  Returns (M, N) in out_dtype.
    """
    M, K = a.shape
    K2, N = w.shape
    assert K == K2 and N % 128 == 0, (a.shape, w.shape)
    assert w.dtype == jnp.bfloat16, w.dtype

    a = a.astype(jnp.bfloat16)            # no-op for bf16 inter-stage activations
    out_bytes = jnp.dtype(out_dtype).itemsize

    budget = _vmem_cap_bytes() - (8 << 20)
    Kp, tk, tn = _select_tiles(M, K, N, out_bytes, budget)
    if Kp != K:                           # rare fallback; exact
        a = jnp.pad(a, ((0, 0), (0, Kp - K)))
        w = jnp.pad(w, ((0, Kp - K), (0, 0)))

    grid = (N // tn, Kp // tk)            # N parallel (megacore), K inner
    kernel = _make_fused_kernel(slope, bn_eps, 1.0 / M)
    vmem_limit = int(min(max(_vmem_estimate(M, tk, tn, out_bytes) + (6 << 20),
                             32 << 20), budget))

    # TODO(synk): sweep pipeline_mode=pl.Buffered(3) on the W BlockSpec for
    # v5e (lowest HBM bandwidth; smooths DMA jitter at ~+1 W tile of VMEM).
    return pl.pallas_call(
        kernel,
        out_shape=jax.ShapeDtypeStruct((M, N), out_dtype),
        grid_spec=pltpu.PrefetchScalarGridSpec(
            num_scalar_prefetch=0,
            grid=grid,
            in_specs=[
                pl.BlockSpec((M, tk), lambda nj, k: (0, k)),
                pl.BlockSpec((tk, tn), lambda nj, k: (k, nj)),
                pl.BlockSpec((1, tn), lambda nj, k: (0, nj)),
                pl.BlockSpec((1, tn), lambda nj, k: (0, nj)),
            ],
            out_specs=pl.BlockSpec((M, tn), lambda nj, k: (0, nj)),
            scratch_shapes=[pltpu.VMEM((M, tn), jnp.float32)],
        ),
        compiler_params=pltpu.CompilerParams(
            dimension_semantics=("parallel", "arbitrary"),
            vmem_limit_bytes=vmem_limit),
    )(a, w, scale, shift)


# ----------------------------------------------------------------------------
# One-time parameter preparation (hoisted out of the per-forward trace):
# transpose to matmul layout, pad the output-channel axis to 128 lanes, cast
# weights to bf16, reshape BN params to (1, Np) f32.
# ----------------------------------------------------------------------------
def prepare_params(params):
    def cbl(p):
        w, gamma, beta = p["w"], p["gamma"], p["beta"]
        cout, cin = w.shape[0], w.shape[1]
        wm = jnp.transpose(w, (2, 3, 1, 0)).reshape(9 * cin, cout)  # (kh,kw,ci)->co
        n_pad = _round_up(cout, 128)
        if n_pad != cout:
            wm = jnp.pad(wm, ((0, 0), (0, n_pad - cout)))
            gamma = jnp.pad(gamma, (0, n_pad - cout), constant_values=1.0)
            beta = jnp.pad(beta, (0, n_pad - cout))
        return {"wm": wm.astype(jnp.bfloat16),
                "scale": gamma.reshape(1, n_pad).astype(jnp.float32),
                "shift": beta.reshape(1, n_pad).astype(jnp.float32)}

    pw, pb = params["pred_w"], params["pred_b"]
    cout, cin = pw.shape[0], pw.shape[1]
    wm = pw.reshape(cout, cin).T                                    # (C, Cout)
    n_pad = _round_up(cout, 128)                                    # 125 -> 128
    if n_pad != cout:
        wm = jnp.pad(wm, ((0, 0), (0, n_pad - cout)))
        pb = jnp.pad(pb, (0, n_pad - cout))
    return {
        "conv_layer": cbl(params["conv_layer"]),
        "conv_decrease_channel": cbl(params["conv_decrease_channel"]),
        "conv_mix": cbl(params["conv_mix"]),
        "pred": {"wm": wm.astype(jnp.bfloat16),
                 "scale": jnp.ones((1, n_pad), jnp.float32),
                 "shift": pb.reshape(1, n_pad).astype(jnp.float32)},
    }


# ----------------------------------------------------------------------------
# Glue (NHWC end-to-end): im2col, passthrough (nn.Unfold 2x2 stride 2)
# ----------------------------------------------------------------------------
def _im2col_3x3(x_nhwc):
    """3x3 / stride 1 / pad 1 patches; K ordering (kh, kw, c_in); bf16."""
    # TODO(synk): stream the 9 conv taps through the kernel's K grid axis via
    # shifted-window BlockSpecs on the padded NHWC input (and then fuse the two
    # back-to-back conv_layer applications) instead of materializing the
    # (M, 9C) tensor in HBM; kept XLA-side for lowering robustness.
    B, H, W, C = x_nhwc.shape
    xp = jnp.pad(x_nhwc.astype(jnp.bfloat16), ((0, 0), (1, 1), (1, 1), (0, 0)))
    cols = [xp[:, kh:kh + H, kw:kw + W, :]
            for kh in range(3) for kw in range(3)]
    return jnp.concatenate(cols, axis=-1).reshape(B * H * W, 9 * C)


def conv_bn_leakyrelu(x_nhwc, p, *, cout):
    """Conv2d(3x3, s=1, p=1, bias=False) + BatchNorm2d(train) + LeakyReLU(0.1).
    NHWC in / NHWC out (bf16)."""
    B, H, W, C = x_nhwc.shape
    a = _im2col_3x3(x_nhwc)                                   # (B*H*W, 9C) bf16
    y = fused_matmul_bn_act(a, p["wm"], p["scale"], p["shift"],
                            slope=0.1, bn_eps=1e-5, out_dtype=jnp.bfloat16)
    return y[:, :cout].reshape(B, H, W, cout)


def pred_conv1x1(x_nhwc, p, *, cout):
    """Conv2d(1024 -> 125, 1x1, bias=True), no activation.  NHWC in / out."""
    B, H, W, C = x_nhwc.shape
    a = x_nhwc.reshape(B * H * W, C)
    y = fused_matmul_bn_act(a, p["wm"], p["scale"], p["shift"],
                            slope=1.0, bn_eps=None, out_dtype=jnp.float32)
    return y[:, :cout].reshape(B, H, W, cout)


def passthrough(f_nhwc):
    """nn.Unfold([2,2], stride=2) + reshape(-1, C*4, h//2, w//2), in NHWC.
    Output channel ordering matches PyTorch: c_out = c_in*4 + kh*2 + kw."""
    B, h, w, C = f_nhwc.shape
    f = f_nhwc.reshape(B, h // 2, 2, w // 2, 2, C)
    f = jnp.transpose(f, (0, 1, 3, 5, 2, 4))      # b, i, j, c, kh, kw
    return f.reshape(B, h // 2, w // 2, C * 4)


# ----------------------------------------------------------------------------
# Detection.forward  (NCHW interface, NHWC internally)
# ----------------------------------------------------------------------------
def detection_forward(x_nchw, feature_nchw, prepared):
    # NCHW -> NHWC exactly once at entry.
    x = jnp.transpose(x_nchw, (0, 2, 3, 1))
    feature = jnp.transpose(feature_nchw, (0, 2, 3, 1))

    # x = self.conv_layer(x); x = self.conv_layer(x)   (same weights twice)
    x = conv_bn_leakyrelu(x, prepared["conv_layer"], cout=1024)
    x = conv_bn_leakyrelu(x, prepared["conv_layer"], cout=1024)
    # if is_conv: feature = self.conv_decrease_channel(feature)
    feature = conv_bn_leakyrelu(feature, prepared["conv_decrease_channel"],
                                cout=64)
    # passthrough (Unfold 2x2 / stride 2) + channel concat: 1024 + 64*4 = 1280
    feature = passthrough(feature)
    x = jnp.concatenate([x, feature], axis=-1)
    # Conv_BN_LeakyReLU(1280, 1024) is created inside forward in the PyTorch
    # module; deterministic stand-in parameters are used here.
    x = conv_bn_leakyrelu(x, prepared["conv_mix"], cout=1024)
    # pred: 1x1 conv 1024 -> 125 with bias, no activation.
    x = pred_conv1x1(x, prepared["pred"], cout=125)
    # NHWC -> NCHW exactly once at exit.
    return jnp.transpose(x, (0, 3, 1, 2))


# ----------------------------------------------------------------------------
# Deterministic parameter init (synthetic; mimics the module's shapes)
# ----------------------------------------------------------------------------
def _init_cbl(key, cin, cout):
    kw_, kg, kb = jax.random.split(key, 3)
    std = 1.0 / jnp.sqrt(9.0 * cin)
    return {
        "w": jax.random.normal(kw_, (cout, cin, 3, 3), jnp.float32) * std,
        "gamma": 1.0 + 0.1 * jax.random.normal(kg, (cout,), jnp.float32),
        "beta": 0.1 * jax.random.normal(kb, (cout,), jnp.float32),
    }


def init_params(key):
    k1, k2, k3, k4, k5 = jax.random.split(key, 5)
    return {
        "conv_layer": _init_cbl(k1, 1024, 1024),
        "conv_decrease_channel": _init_cbl(k2, 512, 64),
        "conv_mix": _init_cbl(k3, 1280, 1024),
        "pred_w": jax.random.normal(k4, (125, 1024, 1, 1), jnp.float32)
                  * (1.0 / jnp.sqrt(1024.0)),
        "pred_b": 0.1 * jax.random.normal(k5, (125,), jnp.float32),
    }


if __name__ == "__main__":
    key = jax.random.PRNGKey(0)
    kp, kx, kf = jax.random.split(key, 3)
    params = init_params(kp)
    prepared = prepare_params(params)      # one-time, outside the jitted forward

    # Small spatial dims; channel counts are fixed by the module definition.
    B, H, W = 2, 4, 4
    x = jax.random.normal(kx, (B, 1024, H, W), jnp.float32)               # NCHW
    feature = jax.random.normal(kf, (B, 512, 2 * H, 2 * W), jnp.float32)  # NCHW

    out = jax.jit(detection_forward)(x, feature, prepared)
    out = jax.block_until_ready(out)
    assert out.shape == (B, 125, H, W), out.shape
    assert jnp.all(jnp.isfinite(out))
    print("KERNEL_OK")
</pallas_src>

<mosaic_0001>
module attributes {stable_mosaic.version = 11 : i64} {
  func.func @kernel(%arg0: i32, %arg1: i32, %arg2: memref<32x1536xbf16, #tpu.memory_space<vmem>>, %arg3: memref<1536x512xbf16, #tpu.memory_space<vmem>>, %arg4: memref<1x512xf32, #tpu.memory_space<vmem>>, %arg5: memref<1x512xf32, #tpu.memory_space<vmem>>, %arg6: memref<32x512xbf16, #tpu.memory_space<vmem>>, %arg7: memref<32x512xf32, #tpu.memory_space<vmem>>) attributes {dimension_semantics = [#tpu.dimension_semantics<parallel>, #tpu.dimension_semantics<arbitrary>], iteration_bounds = array<i64: 2, 6>, scalar_prefetch = 0 : i64, scratch_operands = 1 : i64, tpu.core_type = #tpu.core_type<tc>, window_params = [{transform_indices = @transform_0, window_bounds = array<i64: 32, 1536>}, {transform_indices = @transform_1, window_bounds = array<i64: 1536, 512>}, {transform_indices = @transform_2, window_bounds = array<i64: 1, 512>}, {transform_indices = @transform_3, window_bounds = array<i64: 1, 512>}, {transform_indices = @transform_4, window_bounds = array<i64: 32, 512>}]} {
    %c0_i32 = arith.constant 0 : i32
    %0 = arith.cmpi eq, %arg1, %c0_i32 : i32
    %1 = arith.extui %0 : i1 to i32
    %c0_i32_0 = arith.constant 0 : i32
    %2 = arith.cmpi ne, %1, %c0_i32_0 : i32
    scf.if %2 {
      %cst_9 = arith.constant 0.000000e+00 : f32
      %12 = vector.broadcast %cst_9 : f32 to vector<32x512xf32>
      %c0_10 = arith.constant 0 : index
      %c0_11 = arith.constant 0 : index
      %13 = vector.load %arg7[%c0_10, %c0_11] : memref<32x512xf32, #tpu.memory_space<vmem>>, vector<32x512xf32>
      tpu.vector_store %arg7[%c0_10, %c0_11], %12 {strides = array<i32>} : memref<32x512xf32, #tpu.memory_space<vmem>>, vector<32x512xf32>,
    } else {
    }
    %c0 = arith.constant 0 : index
    %c0_1 = arith.constant 0 : index
    %3 = vector.load %arg7[%c0, %c0_1] : memref<32x512xf32, #tpu.memory_space<vmem>>, vector<32x512xf32>
    %c0_2 = arith.constant 0 : index
    %c0_3 = arith.constant 0 : index
    %4 = vector.load %arg2[%c0_2, %c0_3] : memref<32x1536xbf16, #tpu.memory_space<vmem>>, vector<32x1536xbf16>
    %c0_4 = arith.constant 0 : index
    %c0_5 = arith.constant 0 : index
    %5 = vector.load %arg3[%c0_4, %c0_5] : memref<1536x512xbf16, #tpu.memory_space<vmem>>, vector<1536x512xbf16>
    %cst = arith.constant dense<0.000000e+00> : vector<32x512xf32>
    %6 = tpu.matmul %4, %5, %cst {dimension_numbers = #tpu.dot_dimension_numbers<[1], [0], [0], [1], [0, 0, 1, 1], [], []>} : vector<32x1536xbf16>, vector<1536x512xbf16>, vector<32x512xf32> -> vector<32x512xf32>
    %7 = arith.addf %3, %6 : vector<32x512xf32>
    %c0_6 = arith.constant 0 : index
    %c0_7 = arith.constant 0 : index
    %8 = vector.load %arg7[%c0_6, %c0_7] : memref<32x512xf32, #tpu.memory_space<vmem>>, vector<32x512xf32>
    tpu.vector_store %arg7[%c0_6, %c0_7], %7 {strides = array<i32>} : memref<32x512xf32, #tpu.memory_space<vmem>>, vector<32x512xf32>,
    %c5_i32 = arith.constant 5 : i32
    %9 = arith.cmpi eq, %arg1, %c5_i32 : i32
    %10 = arith.extui %9 : i1 to i32
    %c0_i32_8 = arith.constant 0 : i32
    %11 = arith.cmpi ne, %10, %c0_i32_8 : i32
    scf.if %11 {
      %c0_9 = arith.constant 0 : index
      %c0_10 = arith.constant 0 : index
      %12 = vector.load %arg7[%c0_9, %c0_10] : memref<32x512xf32, #tpu.memory_space<vmem>>, vector<32x512xf32>
      %cst_11 = arith.constant dense<0.000000e+00> : vector<512xf32>
      %13 = vector.multi_reduction <add>, %12, %cst_11 [0] : vector<32x512xf32> to vector<512xf32>
      %14 = vector.shape_cast %13 : vector<512xf32> to vector<1x512xf32>
      %cst_12 = arith.constant 3.125000e-02 : f32
      %15 = vector.broadcast %cst_12 : f32 to vector<1x512xf32>
      %16 = arith.mulf %14, %15 : vector<1x512xf32>
      %17 = vector.broadcast %16 : vector<1x512xf32> to vector<32x512xf32>
      %18 = arith.subf %12, %17 : vector<32x512xf32>
      %19 = arith.mulf %18, %18 : vector<32x512xf32>
      %cst_13 = arith.constant dense<0.000000e+00> : vector<512xf32>
      %20 = vector.multi_reduction <add>, %19, %cst_13 [0] : vector<32x512xf32> to vector<512xf32>
      %21 = vector.shape_cast %20 : vector<512xf32> to vector<1x512xf32>
      %cst_14 = arith.constant 3.125000e-02 : f32
      %22 = vector.broadcast %cst_14 : f32 to vector<1x512xf32>
      %23 = arith.mulf %21, %22 : vector<1x512xf32>
      %c0_15 = arith.constant 0 : index
      %c0_16 = arith.constant 0 : index
      %24 = vector.load %arg4[%c0_15, %c0_16] : memref<1x512xf32, #tpu.memory_space<vmem>>, vector<1x512xf32>
      %cst_17 = arith.constant 9.99999974E-6 : f32
      %25 = vector.broadcast %cst_17 : f32 to vector<1x512xf32>
      %26 = arith.addf %23, %25 : vector<1x512xf32>
      %27 = math.rsqrt %26 : vector<1x512xf32>
      %28 = arith.mulf %24, %27 : vector<1x512xf32>
      %29 = vector.broadcast %28 : vector<1x512xf32> to vector<32x512xf32>
      %30 = arith.mulf %18, %29 : vector<32x512xf32>
      %c0_18 = arith.constant 0 : index
      %c0_19 = arith.constant 0 : index
      %31 = vector.load %arg5[%c0_18, %c0_19] : memref<1x512xf32, #tpu.memory_space<vmem>>, vector<1x512xf32>
      %32 = vector.broadcast %31 : vector<1x512xf32> to vector<32x512xf32>
      %33 = arith.addf %30, %32 : vector<32x512xf32>
      %cst_20 = arith.constant 0.000000e+00 : f32
      %34 = vector.broadcast %cst_20 : f32 to vector<32x512xf32>
      %35 = arith.cmpf oge, %33, %34 : vector<32x512xf32>
      %cst_21 = arith.constant 1.000000e-01 : f32
      %36 = vector.broadcast %cst_21 : f32 to vector<32x512xf32>
      %37 = arith.mulf %36, %33 : vector<32x512xf32>
      %38 = arith.select %35, %33, %37 : vector<32x512xi1>, vector<32x512xf32>
      %39 = arith.truncf %38 : vector<32x512xf32> to vector<32x512xbf16>
      %c0_22 = arith.constant 0 : index
      %c0_23 = arith.constant 0 : index
      %40 = vector.load %arg6[%c0_22, %c0_23] : memref<32x512xbf16, #tpu.memory_space<vmem>>, vector<32x512xbf16>
      tpu.vector_store %arg6[%c0_22, %c0_23], %39 {strides = array<i32>} : memref<32x512xbf16, #tpu.memory_space<vmem>>, vector<32x512xbf16>,
    } else {
    }
    return
  }
  func.func @transform_0(%arg0: i32, %arg1: i32) -> (i32, i32) {
    %c0_i32 = arith.constant 0 : i32
    %c0_i32_0 = arith.constant 0 : i32
    return %c0_i32, %arg1 : i32, i32
  }
  func.func @transform_1(%arg0: i32, %arg1: i32) -> (i32, i32) {
    %c0_i32 = arith.constant 0 : i32
    return %arg1, %arg0 : i32, i32
  }
  func.func @transform_2(%arg0: i32, %arg1: i32) -> (i32, i32) {
    %c0_i32 = arith.constant 0 : i32
    %c0_i32_0 = arith.constant 0 : i32
    return %c0_i32, %arg0 : i32, i32
  }
  func.func @transform_3(%arg0: i32, %arg1: i32) -> (i32, i32) {
    %c0_i32 = arith.constant 0 : i32
    %c0_i32_0 = arith.constant 0 : i32
    return %c0_i32, %arg0 : i32, i32
  }
  func.func @transform_4(%arg0: i32, %arg1: i32) -> (i32, i32) {
    %c0_i32 = arith.constant 0 : i32
    %c0_i32_0 = arith.constant 0 : i32
    return %c0_i32, %arg0 : i32, i32
  }
}

module attributes {stable_mosaic.version = 11 : i64} {
  func.func @kernel(%arg0: i32, %arg1: i32, %arg2: memref<128x1536xbf16, #tpu.memory_space<vmem>>, %arg3: memref<1536x128xbf16, #tpu.memory_space<vmem>>, %arg4: memref<1x128xf32, #tpu.memory_space<vmem>>, %arg5: memref<1x128xf32, #tpu.memory_space<vmem>>, %arg6: memref<128x128xbf16, #tpu.memory_space<vmem>>, %arg7: memref<128x128xf32, #tpu.memory_space<vmem>>) attributes {dimension_semantics = [#tpu.dimension_semantics<parallel>, #tpu.dimension_semantics<arbitrary>], iteration_bounds = array<i64: 1, 3>, scalar_prefetch = 0 : i64, scratch_operands = 1 : i64, tpu.core_type = #tpu.core_type<tc>, window_params = [{transform_indices = @transform_0, window_bounds = array<i64: 128, 1536>}, {transform_indices = @transform_1, window_bounds = array<i64: 1536, 128>}, {transform_indices = @transform_2, window_bounds = array<i64: 1, 128>}, {transform_indices = @transform_3, window_bounds = array<i64: 1, 128>}, {transform_indices = @transform_4, window_bounds = array<i64: 128, 128>}]} {
    %c0_i32 = arith.constant 0 : i32
    %0 = arith.cmpi eq, %arg1, %c0_i32 : i32
    %1 = arith.extui %0 : i1 to i32
    %c0_i32_0 = arith.constant 0 : i32
    %2 = arith.cmpi ne, %1, %c0_i32_0 : i32
    scf.if %2 {
      %cst_9 = arith.constant 0.000000e+00 : f32
      %12 = vector.broadcast %cst_9 : f32 to vector<128x128xf32>
      %c0_10 = arith.constant 0 : index
      %c0_11 = arith.constant 0 : index
      %13 = vector.load %arg7[%c0_10, %c0_11] : memref<128x128xf32, #tpu.memory_space<vmem>>, vector<128x128xf32>
      tpu.vector_store %arg7[%c0_10, %c0_11], %12 {strides = array<i32>} : memref<128x128xf32, #tpu.memory_space<vmem>>, vector<128x128xf32>,
    } else {
    }
    %c0 = arith.constant 0 : index
    %c0_1 = arith.constant 0 : index
    %3 = vector.load %arg7[%c0, %c0_1] : memref<128x128xf32, #tpu.memory_space<vmem>>, vector<128x128xf32>
    %c0_2 = arith.constant 0 : index
    %c0_3 = arith.constant 0 : index
    %4 = vector.load %arg2[%c0_2, %c0_3] : memref<128x1536xbf16, #tpu.memory_space<vmem>>, vector<128x1536xbf16>
    %c0_4 = arith.constant 0 : index
    %c0_5 = arith.constant 0 : index
    %5 = vector.load %arg3[%c0_4, %c0_5] : memref<1536x128xbf16, #tpu.memory_space<vmem>>, vector<1536x128xbf16>
    %cst = arith.constant dense<0.000000e+00> : vector<128x128xf32>
    %6 = tpu.matmul %4, %5, %cst {dimension_numbers = #tpu.dot_dimension_numbers<[1], [0], [0], [1], [0, 0, 1, 1], [], []>} : vector<128x1536xbf16>, vector<1536x128xbf16>, vector<128x128xf32> -> vector<128x128xf32>
    %7 = arith.addf %3, %6 : vector<128x128xf32>
    %c0_6 = arith.constant 0 : index
    %c0_7 = arith.constant 0 : index
    %8 = vector.load %arg7[%c0_6, %c0_7] : memref<128x128xf32, #tpu.memory_space<vmem>>, vector<128x128xf32>
    tpu.vector_store %arg7[%c0_6, %c0_7], %7 {strides = array<i32>} : memref<128x128xf32, #tpu.memory_space<vmem>>, vector<128x128xf32>,
    %c2_i32 = arith.constant 2 : i32
    %9 = arith.cmpi eq, %arg1, %c2_i32 : i32
    %10 = arith.extui %9 : i1 to i32
    %c0_i32_8 = arith.constant 0 : i32
    %11 = arith.cmpi ne, %10, %c0_i32_8 : i32
    scf.if %11 {
      %c0_9 = arith.constant 0 : index
      %c0_10 = arith.constant 0 : index
      %12 = vector.load %arg7[%c0_9, %c0_10] : memref<128x128xf32, #tpu.memory_space<vmem>>, vector<128x128xf32>
      %cst_11 = arith.constant dense<0.000000e+00> : vector<128xf32>
      %13 = vector.multi_reduction <add>, %12, %cst_11 [0] : vector<128x128xf32> to vector<128xf32>
      %14 = vector.shape_cast %13 : vector<128xf32> to vector<1x128xf32>
      %cst_12 = arith.constant 7.812500e-03 : f32
      %15 = vector.broadcast %cst_12 : f32 to vector<1x128xf32>
      %16 = arith.mulf %14, %15 : vector<1x128xf32>
      %17 = vector.broadcast %16 : vector<1x128xf32> to vector<128x128xf32>
      %18 = arith.subf %12, %17 : vector<128x128xf32>
      %19 = arith.mulf %18, %18 : vector<128x128xf32>
      %cst_13 = arith.constant dense<0.000000e+00> : vector<128xf32>
      %20 = vector.multi_reduction <add>, %19, %cst_13 [0] : vector<128x128xf32> to vector<128xf32>
      %21 = vector.shape_cast %20 : vector<128xf32> to vector<1x128xf32>
      %cst_14 = arith.constant 7.812500e-03 : f32
      %22 = vector.broadcast %cst_14 : f32 to vector<1x128xf32>
      %23 = arith.mulf %21, %22 : vector<1x128xf32>
      %c0_15 = arith.constant 0 : index
      %c0_16 = arith.constant 0 : index
      %24 = vector.load %arg4[%c0_15, %c0_16] : memref<1x128xf32, #tpu.memory_space<vmem>>, vector<1x128xf32>
      %cst_17 = arith.constant 9.99999974E-6 : f32
      %25 = vector.broadcast %cst_17 : f32 to vector<1x128xf32>
      %26 = arith.addf %23, %25 : vector<1x128xf32>
      %27 = math.rsqrt %26 : vector<1x128xf32>
      %28 = arith.mulf %24, %27 : vector<1x128xf32>
      %29 = vector.broadcast %28 : vector<1x128xf32> to vector<128x128xf32>
      %30 = arith.mulf %18, %29 : vector<128x128xf32>
      %c0_18 = arith.constant 0 : index
      %c0_19 = arith.constant 0 : index
      %31 = vector.load %arg5[%c0_18, %c0_19] : memref<1x128xf32, #tpu.memory_space<vmem>>, vector<1x128xf32>
      %32 = vector.broadcast %31 : vector<1x128xf32> to vector<128x128xf32>
      %33 = arith.addf %30, %32 : vector<128x128xf32>
      %cst_20 = arith.constant 0.000000e+00 : f32
      %34 = vector.broadcast %cst_20 : f32 to vector<128x128xf32>
      %35 = arith.cmpf oge, %33, %34 : vector<128x128xf32>
      %cst_21 = arith.constant 1.000000e-01 : f32
      %36 = vector.broadcast %cst_21 : f32 to vector<128x128xf32>
      %37 = arith.mulf %36, %33 : vector<128x128xf32>
      %38 = arith.select %35, %33, %37 : vector<128x128xi1>, vector<128x128xf32>
      %39 = arith.truncf %38 : vector<128x128xf32> to vector<128x128xbf16>
      %c0_22 = arith.constant 0 : index
      %c0_23 = arith.constant 0 : index
      %40 = vector.load %arg6[%c0_22, %c0_23] : memref<128x128xbf16, #tpu.memory_space<vmem>>, vector<128x128xbf16>
      tpu.vector_store %arg6[%c0_22, %c0_23], %39 {strides = array<i32>} : memref<128x128xbf16, #tpu.memory_space<vmem>>, vector<128x128xbf16>,
    } else {
    }
    return
  }
  func.func @transform_0(%arg0: i32, %arg1: i32) -> (i32, i32) {
    %c0_i32 = arith.constant 0 : i32
    %c0_i32_0 = arith.constant 0 : i32
    return %c0_i32, %arg1 : i32, i32
  }
  func.func @transform_1(%arg0: i32, %arg1: i32) -> (i32, i32) {
    %c0_i32 = arith.constant 0 : i32
    return %arg1, %arg0 : i32, i32
  }
  func.func @transform_2(%arg0: i32, %arg1: i32) -> (i32, i32) {
    %c0_i32 = arith.constant 0 : i32
    %c0_i32_0 = arith.constant 0 : i32
    return %c0_i32, %arg0 : i32, i32
  }
  func.func @transform_3(%arg0: i32, %arg1: i32) -> (i32, i32) {
    %c0_i32 = arith.constant 0 : i32
    %c0_i32_0 = arith.constant 0 : i32
    return %c0_i32, %arg0 : i32, i32
  }
  func.func @transform_4(%arg0: i32, %arg1: i32) -> (i32, i32) {
    %c0_i32 = arith.constant 0 : i32
    %c0_i32_0 = arith.constant 0 : i32
    return %c0_i32, %arg0 : i32, i32
  }
}

module attributes {stable_mosaic.version = 11 : i64} {
  func.func @kernel(%arg0: i32, %arg1: i32, %arg2: memref<32x1280xbf16, #tpu.memory_space<vmem>>, %arg3: memref<1280x512xbf16, #tpu.memory_space<vmem>>, %arg4: memref<1x512xf32, #tpu.memory_space<vmem>>, %arg5: memref<1x512xf32, #tpu.memory_space<vmem>>, %arg6: memref<32x512xbf16, #tpu.memory_space<vmem>>, %arg7: memref<32x512xf32, #tpu.memory_space<vmem>>) attributes {dimension_semantics = [#tpu.dimension_semantics<parallel>, #tpu.dimension_semantics<arbitrary>], iteration_bounds = array<i64: 2, 9>, scalar_prefetch = 0 : i64, scratch_operands = 1 : i64, tpu.core_type = #tpu.core_type<tc>, window_params = [{transform_indices = @transform_0, window_bounds = array<i64: 32, 1280>}, {transform_indices = @transform_1, window_bounds = array<i64: 1280, 512>}, {transform_indices = @transform_2, window_bounds = array<i64: 1, 512>}, {transform_indices = @transform_3, window_bounds = array<i64: 1, 512>}, {transform_indices = @transform_4, window_bounds = array<i64: 32, 512>}]} {
    %c0_i32 = arith.constant 0 : i32
    %0 = arith.cmpi eq, %arg1, %c0_i32 : i32
    %1 = arith.extui %0 : i1 to i32
    %c0_i32_0 = arith.constant 0 : i32
    %2 = arith.cmpi ne, %1, %c0_i32_0 : i32
    scf.if %2 {
      %cst_9 = arith.constant 0.000000e+00 : f32
      %12 = vector.broadcast %cst_9 : f32 to vector<32x512xf32>
      %c0_10 = arith.constant 0 : index
      %c0_11 = arith.constant 0 : index
      %13 = vector.load %arg7[%c0_10, %c0_11] : memref<32x512xf32, #tpu.memory_space<vmem>>, vector<32x512xf32>
      tpu.vector_store %arg7[%c0_10, %c0_11], %12 {strides = array<i32>} : memref<32x512xf32, #tpu.memory_space<vmem>>, vector<32x512xf32>,
    } else {
    }
    %c0 = arith.constant 0 : index
    %c0_1 = arith.constant 0 : index
    %3 = vector.load %arg7[%c0, %c0_1] : memref<32x512xf32, #tpu.memory_space<vmem>>, vector<32x512xf32>
    %c0_2 = arith.constant 0 : index
    %c0_3 = arith.constant 0 : index
    %4 = vector.load %arg2[%c0_2, %c0_3] : memref<32x1280xbf16, #tpu.memory_space<vmem>>, vector<32x1280xbf16>
    %c0_4 = arith.constant 0 : index
    %c0_5 = arith.constant 0 : index
    %5 = vector.load %arg3[%c0_4, %c0_5] : memref<1280x512xbf16, #tpu.memory_space<vmem>>, vector<1280x512xbf16>
    %cst = arith.constant dense<0.000000e+00> : vector<32x512xf32>
    %6 = tpu.matmul %4, %5, %cst {dimension_numbers = #tpu.dot_dimension_numbers<[1], [0], [0], [1], [0, 0, 1, 1], [], []>} : vector<32x1280xbf16>, vector<1280x512xbf16>, vector<32x512xf32> -> vector<32x512xf32>
    %7 = arith.addf %3, %6 : vector<32x512xf32>
    %c0_6 = arith.constant 0 : index
    %c0_7 = arith.constant 0 : index
    %8 = vector.load %arg7[%c0_6, %c0_7] : memref<32x512xf32, #tpu.memory_space<vmem>>, vector<32x512xf32>
    tpu.vector_store %arg7[%c0_6, %c0_7], %7 {strides = array<i32>} : memref<32x512xf32, #tpu.memory_space<vmem>>, vector<32x512xf32>,
    %c8_i32 = arith.constant 8 : i32
    %9 = arith.cmpi eq, %arg1, %c8_i32 : i32
    %10 = arith.extui %9 : i1 to i32
    %c0_i32_8 = arith.constant 0 : i32
    %11 = arith.cmpi ne, %10, %c0_i32_8 : i32
    scf.if %11 {
      %c0_9 = arith.constant 0 : index
      %c0_10 = arith.constant 0 : index
      %12 = vector.load %arg7[%c0_9, %c0_10] : memref<32x512xf32, #tpu.memory_space<vmem>>, vector<32x512xf32>
      %cst_11 = arith.constant dense<0.000000e+00> : vector<512xf32>
      %13 = vector.multi_reduction <add>, %12, %cst_11 [0] : vector<32x512xf32> to vector<512xf32>
      %14 = vector.shape_cast %13 : vector<512xf32> to vector<1x512xf32>
      %cst_12 = arith.constant 3.125000e-02 : f32
      %15 = vector.broadcast %cst_12 : f32 to vector<1x512xf32>
      %16 = arith.mulf %14, %15 : vector<1x512xf32>
      %17 = vector.broadcast %16 : vector<1x512xf32> to vector<32x512xf32>
      %18 = arith.subf %12, %17 : vector<32x512xf32>
      %19 = arith.mulf %18, %18 : vector<32x512xf32>
      %cst_13 = arith.constant dense<0.000000e+00> : vector<512xf32>
      %20 = vector.multi_reduction <add>, %19, %cst_13 [0] : vector<32x512xf32> to vector<512xf32>
      %21 = vector.shape_cast %20 : vector<512xf32> to vector<1x512xf32>
      %cst_14 = arith.constant 3.125000e-02 : f32
      %22 = vector.broadcast %cst_14 : f32 to vector<1x512xf32>
      %23 = arith.mulf %21, %22 : vector<1x512xf32>
      %c0_15 = arith.constant 0 : index
      %c0_16 = arith.constant 0 : index
      %24 = vector.load %arg4[%c0_15, %c0_16] : memref<1x512xf32, #tpu.memory_space<vmem>>, vector<1x512xf32>
      %cst_17 = arith.constant 9.99999974E-6 : f32
      %25 = vector.broadcast %cst_17 : f32 to vector<1x512xf32>
      %26 = arith.addf %23, %25 : vector<1x512xf32>
      %27 = math.rsqrt %26 : vector<1x512xf32>
      %28 = arith.mulf %24, %27 : vector<1x512xf32>
      %29 = vector.broadcast %28 : vector<1x512xf32> to vector<32x512xf32>
      %30 = arith.mulf %18, %29 : vector<32x512xf32>
      %c0_18 = arith.constant 0 : index
      %c0_19 = arith.constant 0 : index
      %31 = vector.load %arg5[%c0_18, %c0_19] : memref<1x512xf32, #tpu.memory_space<vmem>>, vector<1x512xf32>
      %32 = vector.broadcast %31 : vector<1x512xf32> to vector<32x512xf32>
      %33 = arith.addf %30, %32 : vector<32x512xf32>
      %cst_20 = arith.constant 0.000000e+00 : f32
      %34 = vector.broadcast %cst_20 : f32 to vector<32x512xf32>
      %35 = arith.cmpf oge, %33, %34 : vector<32x512xf32>
      %cst_21 = arith.constant 1.000000e-01 : f32
      %36 = vector.broadcast %cst_21 : f32 to vector<32x512xf32>
      %37 = arith.mulf %36, %33 : vector<32x512xf32>
      %38 = arith.select %35, %33, %37 : vector<32x512xi1>, vector<32x512xf32>
      %39 = arith.truncf %38 : vector<32x512xf32> to vector<32x512xbf16>
      %c0_22 = arith.constant 0 : index
      %c0_23 = arith.constant 0 : index
      %40 = vector.load %arg6[%c0_22, %c0_23] : memref<32x512xbf16, #tpu.memory_space<vmem>>, vector<32x512xbf16>
      tpu.vector_store %arg6[%c0_22, %c0_23], %39 {strides = array<i32>} : memref<32x512xbf16, #tpu.memory_space<vmem>>, vector<32x512xbf16>,
    } else {
    }
    return
  }
  func.func @transform_0(%arg0: i32, %arg1: i32) -> (i32, i32) {
    %c0_i32 = arith.constant 0 : i32
    %c0_i32_0 = arith.constant 0 : i32
    return %c0_i32, %arg1 : i32, i32
  }
  func.func @transform_1(%arg0: i32, %arg1: i32) -> (i32, i32) {
    %c0_i32 = arith.constant 0 : i32
    return %arg1, %arg0 : i32, i32
  }
  func.func @transform_2(%arg0: i32, %arg1: i32) -> (i32, i32) {
    %c0_i32 = arith.constant 0 : i32
    %c0_i32_0 = arith.constant 0 : i32
    return %c0_i32, %arg0 : i32, i32
  }
  func.func @transform_3(%arg0: i32, %arg1: i32) -> (i32, i32) {
    %c0_i32 = arith.constant 0 : i32
    %c0_i32_0 = arith.constant 0 : i32
    return %c0_i32, %arg0 : i32, i32
  }
  func.func @transform_4(%arg0: i32, %arg1: i32) -> (i32, i32) {
    %c0_i32 = arith.constant 0 : i32
    %c0_i32_0 = arith.constant 0 : i32
    return %c0_i32, %arg0 : i32, i32
  }
}

module attributes {stable_mosaic.version = 11 : i64} {
  func.func @kernel(%arg0: i32, %arg1: i32, %arg2: memref<32x1024xbf16, #tpu.memory_space<vmem>>, %arg3: memref<1024x128xbf16, #tpu.memory_space<vmem>>, %arg4: memref<1x128xf32, #tpu.memory_space<vmem>>, %arg5: memref<1x128xf32, #tpu.memory_space<vmem>>, %arg6: memref<32x128xf32, #tpu.memory_space<vmem>>, %arg7: memref<32x128xf32, #tpu.memory_space<vmem>>) attributes {dimension_semantics = [#tpu.dimension_semantics<parallel>, #tpu.dimension_semantics<arbitrary>], iteration_bounds = array<i64: 1, 1>, scalar_prefetch = 0 : i64, scratch_operands = 1 : i64, tpu.core_type = #tpu.core_type<tc>, window_params = [{transform_indices = @transform_0, window_bounds = array<i64: 32, 1024>}, {transform_indices = @transform_1, window_bounds = array<i64: 1024, 128>}, {transform_indices = @transform_2, window_bounds = array<i64: 1, 128>}, {transform_indices = @transform_3, window_bounds = array<i64: 1, 128>}, {transform_indices = @transform_4, window_bounds = array<i64: 32, 128>}]} {
    %c0_i32 = arith.constant 0 : i32
    %0 = arith.cmpi eq, %arg1, %c0_i32 : i32
    %1 = arith.extui %0 : i1 to i32
    %c0_i32_0 = arith.constant 0 : i32
    %2 = arith.cmpi ne, %1, %c0_i32_0 : i32
    scf.if %2 {
      %cst_10 = arith.constant 0.000000e+00 : f32
      %12 = vector.broadcast %cst_10 : f32 to vector<32x128xf32>
      %c0_11 = arith.constant 0 : index
      %c0_12 = arith.constant 0 : index
      %13 = vector.load %arg7[%c0_11, %c0_12] : memref<32x128xf32, #tpu.memory_space<vmem>>, vector<32x128xf32>
      tpu.vector_store %arg7[%c0_11, %c0_12], %12 {strides = array<i32>} : memref<32x128xf32, #tpu.memory_space<vmem>>, vector<32x128xf32>,
    } else {
    }
    %c0 = arith.constant 0 : index
    %c0_1 = arith.constant 0 : index
    %3 = vector.load %arg7[%c0, %c0_1] : memref<32x128xf32, #tpu.memory_space<vmem>>, vector<32x128xf32>
    %c0_2 = arith.constant 0 : index
    %c0_3 = arith.constant 0 : index
    %4 = vector.load %arg2[%c0_2, %c0_3] : memref<32x1024xbf16, #tpu.memory_space<vmem>>, vector<32x1024xbf16>
    %c0_4 = arith.constant 0 : index
    %c0_5 = arith.constant 0 : index
    %5 = vector.load %arg3[%c0_4, %c0_5] : memref<1024x128xbf16, #tpu.memory_space<vmem>>, vector<1024x128xbf16>
    %cst = arith.constant dense<0.000000e+00> : vector<32x128xf32>
    %6 = tpu.matmul %4, %5, %cst {dimension_numbers = #tpu.dot_dimension_numbers<[1], [0], [0], [1], [0, 0, 1, 1], [], []>} : vector<32x1024xbf16>, vector<1024x128xbf16>, vector<32x128xf32> -> vector<32x128xf32>
    %7 = arith.addf %3, %6 : vector<32x128xf32>
    %c0_6 = arith.constant 0 : index
    %c0_7 = arith.constant 0 : index
    %8 = vector.load %arg7[%c0_6, %c0_7] : memref<32x128xf32, #tpu.memory_space<vmem>>, vector<32x128xf32>
    tpu.vector_store %arg7[%c0_6, %c0_7], %7 {strides = array<i32>} : memref<32x128xf32, #tpu.memory_space<vmem>>, vector<32x128xf32>,
    %c0_i32_8 = arith.constant 0 : i32
    %9 = arith.cmpi eq, %arg1, %c0_i32_8 : i32
    %10 = arith.extui %9 : i1 to i32
    %c0_i32_9 = arith.constant 0 : i32
    %11 = arith.cmpi ne, %10, %c0_i32_9 : i32
    scf.if %11 {
      %c0_10 = arith.constant 0 : index
      %c0_11 = arith.constant 0 : index
      %12 = vector.load %arg7[%c0_10, %c0_11] : memref<32x128xf32, #tpu.memory_space<vmem>>, vector<32x128xf32>
      %c0_12 = arith.constant 0 : index
      %c0_13 = arith.constant 0 : index
      %13 = vector.load %arg4[%c0_12, %c0_13] : memref<1x128xf32, #tpu.memory_space<vmem>>, vector<1x128xf32>
      %14 = vector.broadcast %13 : vector<1x128xf32> to vector<32x128xf32>
      %15 = arith.mulf %12, %14 : vector<32x128xf32>
      %c0_14 = arith.constant 0 : index
      %c0_15 = arith.constant 0 : index
      %16 = vector.load %arg5[%c0_14, %c0_15] : memref<1x128xf32, #tpu.memory_space<vmem>>, vector<1x128xf32>
      %17 = vector.broadcast %16 : vector<1x128xf32> to vector<32x128xf32>
      %18 = arith.addf %15, %17 : vector<32x128xf32>
      %c0_16 = arith.constant 0 : index
      %c0_17 = arith.constant 0 : index
      %19 = vector.load %arg6[%c0_16, %c0_17] : memref<32x128xf32, #tpu.memory_space<vmem>>, vector<32x128xf32>
      tpu.vector_store %arg6[%c0_16, %c0_17], %18 {strides = array<i32>} : memref<32x128xf32, #tpu.memory_space<vmem>>, vector<32x128xf32>,
    } else {
    }
    return
  }
  func.func @transform_0(%arg0: i32, %arg1: i32) -> (i32, i32) {
    %c0_i32 = arith.constant 0 : i32
    %c0_i32_0 = arith.constant 0 : i32
    return %c0_i32, %arg1 : i32, i32
  }
  func.func @transform_1(%arg0: i32, %arg1: i32) -> (i32, i32) {
    %c0_i32 = arith.constant 0 : i32
    return %arg1, %arg0 : i32, i32
  }
  func.func @transform_2(%arg0: i32, %arg1: i32) -> (i32, i32) {
    %c0_i32 = arith.constant 0 : i32
    %c0_i32_0 = arith.constant 0 : i32
    return %c0_i32, %arg0 : i32, i32
  }
  func.func @transform_3(%arg0: i32, %arg1: i32) -> (i32, i32) {
    %c0_i32 = arith.constant 0 : i32
    %c0_i32_0 = arith.constant 0 : i32
    return %c0_i32, %arg0 : i32, i32
  }
  func.func @transform_4(%arg0: i32, %arg1: i32) -> (i32, i32) {
    %c0_i32 = arith.constant 0 : i32
    %c0_i32_0 = arith.constant 0 : i32
    return %c0_i32, %arg0 : i32, i32
  }
}

</mosaic_0001>

<llo_original>
// kernel: detection_forward.5
$region0: #{detection_forward.5}
  #allocation0 [shape = 'u32[]', space=smem, size = 0x4, offset = 0x4, fixed_abs, tag = 'smem constant byte address 0x4 - core index']
  #allocation1 [shape = 'u32[72,128]{1,0:T(1,128)}', space=vmem, size = 0x9000, scoped, tag = 'internal scratch']
  #allocation2 [shape = 'f32[32,512]{1,0:T(8,128)}', space=vmem, size = 0x10000, scoped, tag = 'scratch operand']
  %s0 = inlined_call_operand.vmem [shape: bf16[32,9216], index: 0, kind: input, shape index: {}]
  %s1 = inlined_call_operand.hbm [shape: bf16[9216,1024], index: 1, kind: input, shape index: {}]
  %s2 = inlined_call_operand.vmem [shape: f32[1,1024], index: 2, kind: input, shape index: {}]
  %s3 = inlined_call_operand.vmem [shape: f32[1,1024], index: 3, kind: input, shape index: {}]
  %s4 = inlined_call_operand.vmem [shape: bf16[32,1024], index: 4, kind: output, shape index: {}]
  %s5 = sld [smem:[#allocation0]]
  $region103: #{detection_forward.5} parent=0
    _
  %s7 = ssub.s32 1, %s5
  %s8 = scalar_select 0, %s7, %s5
  $region1: #{detection_forward.5} parent=0
    #allocation3 [shape = 'u8[196608]{0}', space=vmem, size = 0x30000, scoped, tag = 'input window, operand 0']
    #allocation4 [shape = 'u8[3145728]{0}', space=vmem, size = 0x300000, scoped, tag = 'input window, operand 1']
    #allocation5 [shape = 's32[2]{0}', space=sflag, size = 0x8, scoped, tag = 'scoped memory for detection_forward.5']
    #allocation6 [shape = 'u8[65536]{0}', space=vmem, size = 0x10000, scoped, tag = 'output window, operand 0']
    %9 = vsyncpa [#allocation5], 0
    %s10 = scalar_lea.sflag [#allocation5], 1
    %11 = vsyncpa %s10, 0
    loop: start=0, step=1, limit=14
    $region2: #{detection_forward.5} parent=1 // loop_pre_header
      _
    $region3: #{detection_forward.5} parent=1 // loop_header
      %s13 = sphi 0, %s17
      %p14 = scmp.ge.s32.totalorder %s13, 14
      %s20 = sphi 0, %s32
      %s21 = sphi 0, %s28
      %s22 = sphi 0, %s20
      %s23 = sphi 0, %s21
      %s24 = sphi 0, %s22
      %s25 = sphi 0, %s23
      %s35 = sphi 0, %s37
      %s38 = sphi 0, %s35
      %s39 = sphi 0, %s38
      %s55 = sphi 0, %s39
      %s63 = sphi 0, %s65
      %s66 = sphi 0, %s63
      %s67 = sphi 0, %s66
      %s83 = sphi 0, %s67
      %s89 = sphi 0, %s91
      %s92 = sphi 0, %s89
      %s93 = sphi 0, %s92
      %s109 = sphi 0, %s93
      %s115 = sphi 0, %s117
      %s118 = sphi 0, %s115
      %s119 = sphi 0, %s118
      %s135 = sphi 0, %s119
      %s141 = sphi 0, %s143
      %s144 = sphi 0, %s141
      %s145 = sphi 0, %s144
      %s161 = sphi 0, %s145
    $region4: #{detection_forward.5} parent=1 // loop_header_branch
      %16 = sbr.rel (%p14) target = $region8
    $region5: #{detection_forward.5} parent=1 // loop_body
      %s18 = ssub.s32 %s13, 1
      %s19 = ssub.s32 %s13, 2
      %s26 = sadd.s32 1, %s21
      %p27 = scmp.ge.s32.totalorder %s26, 6
      %s28 = scalar_select %p27, 0, %s26
      %s29 = sadd.s32 1, %s20
      %s30 = scalar_select %p27, %s29, %s20
      %p31 = scmp.ge.s32.totalorder %s30, 2
      %s32 = scalar_select %p31, 0, %s30
      %s33 = ssub.s32 %s21, %s28
      %p34 = scmp.eq.s32.totalorder %s33, 0
      %s36 = sadd.s32 %s35, 1
      %s37 = scalar_select %p34, %s35, %s36
      %p40 = pneg %p34
      %p41 = scmp.eq.s32.totalorder %s13, 11
      %p42 = por %p40, %p41
      %p43 = scmp.ne.s32.totalorder %s35, %s38
      %p44 = scmp.eq.s32.totalorder %s13, 0
      %p45 = por %p43, %p44
      %p46 = scmp.ne.s32.totalorder %s35, %s38
      %p47 = scmp.eq.s32.totalorder %s18, 11
      %p48 = por %p46, %p47
      %p49 = scmp.ne.s32.totalorder %s38, %s39
      %p50 = scmp.eq.s32.totalorder %s18, 0
      %p51 = por %p49, %p50
      %p52 = scmp.ne.s32.totalorder %s38, %s39
      %p53 = scmp.eq.s32.totalorder %s19, 11
      %p54 = por %p52, %p53
      %p56 = scmp.ne.s32.totalorder %s39, %s55
      %p57 = scmp.eq.s32.totalorder %s19, 0
      %p58 = por %p56, %p57
      %s59 = ssub.s32 %s21, %s28
      %s60 = ssub.s32 %s20, %s32
      %s61 = sor.u32 %s59, %s60
      %p62 = scmp.eq.s32.totalorder %s61, 0
      %s64 = sadd.s32 %s63, 1
      %s65 = scalar_select %p62, %s63, %s64
      %p68 = pneg %p62
      %p69 = scmp.eq.s32.totalorder %s13, 11
      %p70 = por %p68, %p69
      %p71 = scmp.ne.s32.totalorder %s63, %s66
      %p72 = scmp.eq.s32.totalorder %s13, 0
      %p73 = por %p71, %p72
      %p74 = scmp.ne.s32.totalorder %s63, %s66
      %p75 = scmp.eq.s32.totalorder %s18, 11
      %p76 = por %p74, %p75
      %p77 = scmp.ne.s32.totalorder %s66, %s67
      %p78 = scmp.eq.s32.totalorder %s18, 0
      %p79 = por %p77, %p78
      %p80 = scmp.ne.s32.totalorder %s66, %s67
      %p81 = scmp.eq.s32.totalorder %s19, 11
      %p82 = por %p80, %p81
      %p84 = scmp.ne.s32.totalorder %s67, %s83
      %p85 = scmp.eq.s32.totalorder %s19, 0
      %p86 = por %p84, %p85
      %s87 = ssub.s32 %s20, %s32
      %p88 = scmp.eq.s32.totalorder %s87, 0
      %s90 = sadd.s32 %s89, 1
      %s91 = scalar_select %p88, %s89, %s90
      %p94 = pneg %p88
      %p95 = scmp.eq.s32.totalorder %s13, 11
      %p96 = por %p94, %p95
      %p97 = scmp.ne.s32.totalorder %s89, %s92
      %p98 = scmp.eq.s32.totalorder %s13, 0
      %p99 = por %p97, %p98
      %p100 = scmp.ne.s32.totalorder %s89, %s92
      %p101 = scmp.eq.s32.totalorder %s18, 11
      %p102 = por %p100, %p101
      %p103 = scmp.ne.s32.totalorder %s92, %s93
      %p104 = scmp.eq.s32.totalorder %s18, 0
      %p105 = por %p103, %p104
      %p106 = scmp.ne.s32.totalorder %s92, %s93
      %p107 = scmp.eq.s32.totalorder %s19, 11
      %p108 = por %p106, %p107
      %p110 = scmp.ne.s32.totalorder %s93, %s109
      %p111 = scmp.eq.s32.totalorder %s19, 0
      %p112 = por %p110, %p111
      %s113 = ssub.s32 %s20, %s32
      %p114 = scmp.eq.s32.totalorder %s113, 0
      %s116 = sadd.s32 %s115, 1
      %s117 = scalar_select %p114, %s115, %s116
      %p120 = pneg %p114
      %p121 = scmp.eq.s32.totalorder %s13, 11
      %p122 = por %p120, %p121
      %p123 = scmp.ne.s32.totalorder %s115, %s118
      %p124 = scmp.eq.s32.totalorder %s13, 0
      %p125 = por %p123, %p124
      %p126 = scmp.ne.s32.totalorder %s115, %s118
      %p127 = scmp.eq.s32.totalorder %s18, 11
      %p128 = por %p126, %p127
      %p129 = scmp.ne.s32.totalorder %s118, %s119
      %p130 = scmp.eq.s32.totalorder %s18, 0
      %p131 = por %p129, %p130
      %p132 = scmp.ne.s32.totalorder %s118, %s119
      %p133 = scmp.eq.s32.totalorder %s19, 11
      %p134 = por %p132, %p133
      %p136 = scmp.ne.s32.totalorder %s119, %s135
      %p137 = scmp.eq.s32.totalorder %s19, 0
      %p138 = por %p136, %p137
      %s139 = ssub.s32 %s20, %s32
      %p140 = scmp.eq.s32.totalorder %s139, 0
      %s142 = sadd.s32 %s141, 1
      %s143 = scalar_select %p140, %s141, %s142
      %p146 = pneg %p140
      %p147 = scmp.eq.s32.totalorder %s13, 11
      %p148 = por %p146, %p147
      %p149 = scmp.ne.s32.totalorder %s141, %s144
      %p150 = scmp.eq.s32.totalorder %s13, 0
      %p151 = por %p149, %p150
      %p152 = scmp.ne.s32.totalorder %s141, %s144
      %p153 = scmp.eq.s32.totalorder %s18, 11
      %p154 = por %p152, %p153
      %p155 = scmp.ne.s32.totalorder %s144, %s145
      %p156 = scmp.eq.s32.totalorder %s18, 0
      %p157 = por %p155, %p156
      %p158 = scmp.ne.s32.totalorder %s144, %s145
      %p159 = scmp.eq.s32.totalorder %s19, 11
      %p160 = por %p158, %p159
      %p162 = scmp.ne.s32.totalorder %s145, %s161
      %p163 = scmp.eq.s32.totalorder %s19, 0
      %p164 = por %p162, %p163
      %p165 = scmp.le.s32.totalorder 1, %s13
      %p166 = scmp.lt.s32.totalorder %s13, 13
      %p167 = pnand %p165, %p166
      %p168 = pneg %p167
      // Predicated region
      $region9: #{detection_forward.5} parent=5 // pred_check
        _
      $region10: #{detection_forward.5} parent=5 // pred_check_branch
        %170 = sbr.rel (%p167) target = $region12
      $region11: #{detection_forward.5} parent=5 // pred_region
        %s171 = ssub.s32 %s13, 1
      $region12: #{detection_forward.5} parent=5 // pred_fallthru
        _
      %p172 = scmp.lt.s32.totalorder %s13, 12
      // Predicated region
      $region13: #{detection_forward.5} parent=5 // pred_check
        %p173 = pneg %p172
      $region14: #{detection_forward.5} parent=5 // pred_check_branch
        %175 = sbr.rel (%p173) target = $region16
      $region15: #{detection_forward.5} parent=5 // pred_region
        // Predicated region
        $region17: #{detection_forward.5} parent=15 // pred_check
          %p176 = pneg %p45
        $region18: #{detection_forward.5} parent=15 // pred_check_branch
          %178 = sbr.rel (%p176) target = $region20
        $region19: #{detection_forward.5} parent=15 // pred_region
          %s179 = sand.u32 %s35, 1
          %s180 = sand.u32 %s35, 1
          %s181 = smul.addr %s180, 192
          %s182 = scalar_lea.vmem [#allocation3], %s181
          %s183 = smul.u32 12, %s21
          %s184 = smul.addr %s183, 4
          %s185 = scalar_lea.vmem %s0, %s184
          // Predicated region
          $region21: #{detection_forward.5} parent=19 // pred_check
            _
          $region22: #{detection_forward.5} parent=19 // pred_check_branch
            %187 = sbr.rel (0) target = $region24
          $region23: #{detection_forward.5} parent=19 // pred_region
            // Predicated region
            $region25: #{detection_forward.5} parent=23 // pred_check
              _
            $region26: #{detection_forward.5} parent=23 // pred_check_branch
              %189 = sbr.rel (0) target = $region28
            $region27: #{detection_forward.5} parent=23 // pred_region
              loop: start=0, step=1, limit=1
              $region29: #{detection_forward.5} parent=27 // loop_pre_header
                _
              $region30: #{detection_forward.5} parent=27 // loop_header
                %s191 = sphi 0, %s195
                %p192 = scmp.ge.s32.totalorder %s191, 1
                %s196 = sphi %s185, %s185
                %s197 = sphi %s182, %s182
              $region31: #{detection_forward.5} parent=27 // loop_header_branch
                %194 = sbr.rel (%p192) target = $region35
              $region32: #{detection_forward.5} parent=27 // loop_body
                %v198 = vld [vmem:[%s196] sm:$0xff]
                %199 = vst [vmem:[%s197] sm:$0xff] %v198
                %v200 = vld [vmem:[%s196 + $0x8] sm:$0xff]
                %201 = vst [vmem:[%s197 + $0x8] sm:$0xff] %v200
                %v202 = vld [vmem:[%s196 + $0x10] sm:$0xff]
                %203 = vst [vmem:[%s197 + $0x10] sm:$0xff] %v202
                %v204 = vld [vmem:[%s196 + $0x18] sm:$0xff]
                %205 = vst [vmem:[%s197 + $0x18] sm:$0xff] %v204
                %v206 = vld [vmem:[%s196 + $0x20] sm:$0xff]
                %207 = vst [vmem:[%s197 + $0x20] sm:$0xff] %v206
                %v208 = vld [vmem:[%s196 + $0x28] sm:$0xff]
                %209 = vst [vmem:[%s197 + $0x28] sm:$0xff] %v208
                %v210 = vld [vmem:[%s196 + $0x120] sm:$0xff]
                %211 = vst [vmem:[%s197 + $0x30] sm:$0xff] %v210
                %v212 = vld [vmem:[%s196 + $0x128] sm:$0xff]
                %213 = vst [vmem:[%s197 + $0x38] sm:$0xff] %v212
                %v214 = vld [vmem:[%s196 + $0x130] sm:$0xff]
                %215 = vst [vmem:[%s197 + $0x40] sm:$0xff] %v214
                %v216 = vld [vmem:[%s196 + $0x138] sm:$0xff]
                %217 = vst [vmem:[%s197 + $0x48] sm:$0xff] %v216
                %v218 = vld [vmem:[%s196 + $0x140] sm:$0xff]
                %219 = vst [vmem:[%s197 + $0x50] sm:$0xff] %v218
                %v220 = vld [vmem:[%s196 + $0x148] sm:$0xff]
                %221 = vst [vmem:[%s197 + $0x58] sm:$0xff] %v220
                %v222 = vld [vmem:[%s196 + $0x240] sm:$0xff]
                %223 = vst [vmem:[%s197 + $0x60] sm:$0xff] %v222
                %v224 = vld [vmem:[%s196 + $0x248] sm:$0xff]
                %225 = vst [vmem:[%s197 + $0x68] sm:$0xff] %v224
                %v226 = vld [vmem:[%s196 + $0x250] sm:$0xff]
                %227 = vst [vmem:[%s197 + $0x70] sm:$0xff] %v226
                %v228 = vld [vmem:[%s196 + $0x258] sm:$0xff]
                %229 = vst [vmem:[%s197 + $0x78] sm:$0xff] %v228
                %v230 = vld [vmem:[%s196 + $0x260] sm:$0xff]
                %231 = vst [vmem:[%s197 + $0x80] sm:$0xff] %v230
                %v232 = vld [vmem:[%s196 + $0x268] sm:$0xff]
                %233 = vst [vmem:[%s197 + $0x88] sm:$0xff] %v232
                %v234 = vld [vmem:[%s196 + $0x360] sm:$0xff]
                %235 = vst [vmem:[%s197 + $0x90] sm:$0xff] %v234
                %v236 = vld [vmem:[%s196 + $0x368] sm:$0xff]
                %237 = vst [vmem:[%s197 + $0x98] sm:$0xff] %v236
                %v238 = vld [vmem:[%s196 + $0x370] sm:$0xff]
                %239 = vst [vmem:[%s197 + $0xa0] sm:$0xff] %v238
                %v240 = vld [vmem:[%s196 + $0x378] sm:$0xff]
                %241 = vst [vmem:[%s197 + $0xa8] sm:$0xff] %v240
                %v242 = vld [vmem:[%s196 + $0x380] sm:$0xff]
                %243 = vst [vmem:[%s197 + $0xb0] sm:$0xff] %v242
                %v244 = vld [vmem:[%s196 + $0x388] sm:$0xff]
                %245 = vst [vmem:[%s197 + $0xb8] sm:$0xff] %v244
              $region33: #{detection_forward.5} parent=27 // loop_footer
                %s195 = sadd.s32 1, %s191
              $region34: #{detection_forward.5} parent=27 // loop_footer_branch
                %190 = sbr.rel target = $region30
              $region35: #{detection_forward.5} parent=27 // loop_exit
                _
            $region28: #{detection_forward.5} parent=23 // pred_fallthru
              _
            // Predicated region
            $region36: #{detection_forward.5} parent=23 // pred_check
              _
            $region37: #{detection_forward.5} parent=23 // pred_check_branch
              %247 = sbr.rel target = $region39
            $region38: #{detection_forward.5} parent=23 // pred_region
              _
            $region39: #{detection_forward.5} parent=23 // pred_fallthru
              _
          $region24: #{detection_forward.5} parent=19 // pred_fallthru
            _
          %248 = vnop
        $region20: #{detection_forward.5} parent=15 // pred_fallthru
          _
        // Predicated region
        $region40: #{detection_forward.5} parent=15 // pred_check
          %p249 = pneg %p73
        $region41: #{detection_forward.5} parent=15 // pred_check_branch
          %251 = sbr.rel (%p249) target = $region43
        $region42: #{detection_forward.5} parent=15 // pred_region
          %s252 = sand.u32 %s63, 1
          %s253 = scalar_lea.sflag [#allocation5], %s252
          %s254 = sand.u32 %s63, 1
          %s255 = smul.addr %s254, 3072
          %s256 = scalar_lea.vmem [#allocation4], %s255
          %s257 = smul.u32 192, %s21
          %s258 = smul.u32 4, %s20
          %260 = vsyncadd %s253, 0
          %s261 = smul.addr %s257, 8
          %s262 = sadd.s32 %s258, %s261
          %s263 = smul.addr %s262, 4
          %s264 = scalar_lea.hbm %s1, %s263
          %s265 = sshll.u32 %s264, 4
          %s266 = int_to_ptr.hbm [resolvable:$true] %s265
          %s267 = sshll.u32 %s256, 4
          %s268 = int_to_ptr.vmem [resolvable:$true] %s267
          %273 = dma.hbm_to_vmem [thread:$0]  %s266, 49152, %s268, %s253, 512, 256, 16
        $region43: #{detection_forward.5} parent=15 // pred_fallthru
          _
        // Predicated region
        $region44: #{detection_forward.5} parent=15 // pred_check
          %p274 = pneg %p99
        $region45: #{detection_forward.5} parent=15 // pred_check_branch
          %276 = sbr.rel (%p274) target = $region47
        $region46: #{detection_forward.5} parent=15 // pred_region
          %s277 = smul.u32 4, %s20
          %p278 = scmp.lt.s32.totalorder %s277, 7
          %s279 = scalar_select %p278, %s277, 7
          %s280 = scalar_lea.vmem %s2, %s279
          %s281 = smul.u32 4, %s20
        $region47: #{detection_forward.5} parent=15 // pred_fallthru
          _
        // Predicated region
        $region48: #{detection_forward.5} parent=15 // pred_check
          %p282 = pneg %p125
        $region49: #{detection_forward.5} parent=15 // pred_check_branch
          %284 = sbr.rel (%p282) target = $region51
        $region50: #{detection_forward.5} parent=15 // pred_region
          %s285 = smul.u32 4, %s20
          %p286 = scmp.lt.s32.totalorder %s285, 7
          %s287 = scalar_select %p286, %s285, 7
          %s288 = scalar_lea.vmem %s3, %s287
          %s289 = smul.u32 4, %s20
        $region51: #{detection_forward.5} parent=15 // pred_fallthru
          _
      $region16: #{detection_forward.5} parent=5 // pred_fallthru
        _
      %p290 = scmp.le.s32.totalorder 1, %s13
      %p291 = scmp.lt.s32.totalorder %s13, 13
      %p292 = pnand %p290, %p291
      %p293 = pneg %p292
      // Predicated region
      $region52: #{detection_forward.5} parent=5 // pred_check
        _
      $region53: #{detection_forward.5} parent=5 // pred_check_branch
        %295 = sbr.rel (%p292) target = $region55
      $region54: #{detection_forward.5} parent=5 // pred_region
        %s296 = ssub.s32 %s13, 1
        %s297 = sand.u32 %s38, 1
        %s298 = sand.u32 %s38, 1
        %s299 = smul.addr %s298, 192
        %s300 = scalar_lea.vmem [#allocation3], %s299
        // Predicated region
        $region56: #{detection_forward.5} parent=54 // pred_check
          %p301 = pneg %p51
        $region57: #{detection_forward.5} parent=54 // pred_check_branch
          %303 = sbr.rel (%p301) target = $region59
        $region58: #{detection_forward.5} parent=54 // pred_region
          _
        $region59: #{detection_forward.5} parent=54 // pred_fallthru
          _
        %s304 = sand.u32 %s66, 1
        %s305 = scalar_lea.sflag [#allocation5], %s304
        %s306 = sand.u32 %s66, 1
        %s307 = smul.addr %s306, 3072
        %s308 = scalar_lea.vmem [#allocation4], %s307
        // Predicated region
        $region60: #{detection_forward.5} parent=54 // pred_check
          %p309 = pneg %p79
        $region61: #{detection_forward.5} parent=54 // pred_check_branch
          %311 = sbr.rel (%p309) target = $region63
        $region62: #{detection_forward.5} parent=54 // pred_region
          %313 = dma.done %s305, 49152
        $region63: #{detection_forward.5} parent=54 // pred_fallthru
          _
        %s314 = sand.u32 %s38, 1
        %s315 = sand.u32 %s38, 1
        %s316 = smul.addr %s315, 192
        %s317 = scalar_lea.vmem [#allocation3], %s316
        %p318 = pneg %p51
        %p319 = pneg %p48
        %s320 = sand.u32 %s66, 1
        %s321 = scalar_lea.sflag [#allocation5], %s320
        %s322 = sand.u32 %s66, 1
        %s323 = smul.addr %s322, 3072
        %s324 = scalar_lea.vmem [#allocation4], %s323
        %p325 = pneg %p79
        %p326 = pneg %p76
        %s327 = smul.u32 4, %s22
        %p328 = scmp.lt.s32.totalorder %s327, 7
        %s329 = scalar_select %p328, %s327, 7
        %s330 = scalar_lea.vmem %s2, %s329
        %p331 = pneg %p105
        %p332 = pneg %p102
        %s333 = smul.u32 4, %s22
        %p334 = scmp.lt.s32.totalorder %s333, 7
        %s335 = scalar_select %p334, %s333, 7
        %s336 = scalar_lea.vmem %s3, %s335
        %p337 = pneg %p131
        %p338 = pneg %p128
        %p339 = pneg %p157
        %p340 = pneg %p154
        %s341 = sand.u32 %s144, 1
        %s342 = sand.u32 %s144, 1
        %s343 = smul.addr %s342, 64
        %s344 = scalar_lea.vmem [#allocation6], %s343
        %s345 = smul.u32 12, %s23
        %s346 = smul.u32 192, %s23
        %s347 = smul.u32 4, %s22
        %s348 = smul.u32 4, %s22
        %p349 = scmp.lt.s32.totalorder %s348, 7
        %s350 = scalar_select %p349, %s348, 7
        %s351 = scalar_lea.vmem %s2, %s350
        %s352 = smul.u32 4, %s22
        %s353 = smul.u32 4, %s22
        %p354 = scmp.lt.s32.totalorder %s353, 7
        %s355 = scalar_select %p354, %s353, 7
        %s356 = scalar_lea.vmem %s3, %s355
        %s357 = smul.u32 4, %s22
        %s358 = smul.u32 4, %s22
        %p359 = scmp.eq.s32.totalorder %s23, 0
        // Predicated region
        $region64: #{detection_forward.5} parent=54 // pred_check
          %p360 = pneg %p359
        $region65: #{detection_forward.5} parent=54 // pred_check_branch
          %362 = sbr.rel (%p360) target = $region67
        $region66: #{detection_forward.5} parent=54 // pred_region
          %363 = vst [vmem:[#allocation2] sm:$0xff] 0.0
          %364 = vst [vmem:[#allocation2 + $0x8] sm:$0xff] 0.0
          %365 = vst [vmem:[#allocation2 + $0x10] sm:$0xff] 0.0
          %366 = vst [vmem:[#allocation2 + $0x18] sm:$0xff] 0.0
          %367 = vst [vmem:[#allocation2 + $0x20] sm:$0xff] 0.0
          %368 = vst [vmem:[#allocation2 + $0x28] sm:$0xff] 0.0
          %369 = vst [vmem:[#allocation2 + $0x30] sm:$0xff] 0.0
          %370 = vst [vmem:[#allocation2 + $0x38] sm:$0xff] 0.0
          %371 = vst [vmem:[#allocation2 + $0x40] sm:$0xff] 0.0
          %372 = vst [vmem:[#allocation2 + $0x48] sm:$0xff] 0.0
          %373 = vst [vmem:[#allocation2 + $0x50] sm:$0xff] 0.0
          %374 = vst [vmem:[#allocation2 + $0x58] sm:$0xff] 0.0
          %375 = vst [vmem:[#allocation2 + $0x60] sm:$0xff] 0.0
          %376 = vst [vmem:[#allocation2 + $0x68] sm:$0xff] 0.0
          %377 = vst [vmem:[#allocation2 + $0x70] sm:$0xff] 0.0
          %378 = vst [vmem:[#allocation2 + $0x78] sm:$0xff] 0.0
        $region67: #{detection_forward.5} parent=54 // pred_fallthru
          _
        %v379 = vld [vmem:[#allocation2] sm:$0xff]
        %v380 = vld [vmem:[#allocation2 + $0x8] sm:$0xff]
        %v381 = vld [vmem:[#allocation2 + $0x10] sm:$0xff]
        %v382 = vld [vmem:[#allocation2 + $0x18] sm:$0xff]
        %v383 = vld [vmem:[#allocation2 + $0x20] sm:$0xff]
        %v384 = vld [vmem:[#allocation2 + $0x28] sm:$0xff]
        %v385 = vld [vmem:[#allocation2 + $0x30] sm:$0xff]
        %v386 = vld [vmem:[#allocation2 + $0x38] sm:$0xff]
        %v387 = vld [vmem:[#allocation2 + $0x40] sm:$0xff]
        %v388 = vld [vmem:[#allocation2 + $0x48] sm:$0xff]
        %v389 = vld [vmem:[#allocation2 + $0x50] sm:$0xff]
        %v390 = vld [vmem:[#allocation2 + $0x58] sm:$0xff]
        %v391 = vld [vmem:[#allocation2 + $0x60] sm:$0xff]
        %v392 = vld [vmem:[#allocation2 + $0x68] sm:$0xff]
        %v393 = vld [vmem:[#allocation2 + $0x70] sm:$0xff]
        %v394 = vld [vmem:[#allocation2 + $0x78] sm:$0xff]
        %v395 = vld [vmem:[%s300] sm:$0xff]
        %v396 = vld [vmem:[%s300 + $0x8] sm:$0xff]
        %v397 = vld [vmem:[%s300 + $0x10] sm:$0xff]
        %v398 = vld [vmem:[%s300 + $0x18] sm:$0xff]
        %v399 = vld [vmem:[%s300 + $0x20] sm:$0xff]
        %v400 = vld [vmem:[%s300 + $0x28] sm:$0xff]
        %v401 = vld [vmem:[%s300 + $0x30] sm:$0xff]
        %v402 = vld [vmem:[%s300 + $0x38] sm:$0xff]
        %v403 = vld [vmem:[%s300 + $0x40] sm:$0xff]
        %v404 = vld [vmem:[%s300 + $0x48] sm:$0xff]
        %v405 = vld [vmem:[%s300 + $0x50] sm:$0xff]
        %v406 = vld [vmem:[%s300 + $0x58] sm:$0xff]
        %v407 = vld [vmem:[%s300 + $0x60] sm:$0xff]
        %v408 = vld [vmem:[%s300 + $0x68] sm:$0xff]
        %v409 = vld [vmem:[%s300 + $0x70] sm:$0xff]
        %v410 = vld [vmem:[%s300 + $0x78] sm:$0xff]
        %v411 = vld [vmem:[%s300 + $0x80] sm:$0xff]
        %v412 = vld [vmem:[%s300 + $0x88] sm:$0xff]
        %v413 = vld [vmem:[%s300 + $0x90] sm:$0xff]
        %v414 = vld [vmem:[%s300 + $0x98] sm:$0xff]
        %v415 = vld [vmem:[%s300 + $0xa0] sm:$0xff]
        %v416 = vld [vmem:[%s300 + $0xa8] sm:$0xff]
        %v417 = vld [vmem:[%s300 + $0xb0] sm:$0xff]
        %v418 = vld [vmem:[%s300 + $0xb8] sm:$0xff]
        %v419 = vld [vmem:[%s308] sm:$0xff]
        %v420 = vld [vmem:[%s308 + $0x8] sm:$0xff]
        %v421 = vld [vmem:[%s308 + $0x10] sm:$0xff]
        %v422 = vld [vmem:[%s308 + $0x18] sm:$0xff]
        %v423 = vld [vmem:[%s308 + $0x20] sm:$0xff]
        %v424 = vld [vmem:[%s308 + $0x28] sm:$0xff]
        %v425 = vld [vmem:[%s308 + $0x30] sm:$0xff]
        %v426 = vld [vmem:[%s308 + $0x38] sm:$0xff]
        %v427 = vld [vmem:[%s308 + $0x40] sm:$0xff]
        %v428 = vld [vmem:[%s308 + $0x48] sm:$0xff]
        %v429 = vld [vmem:[%s308 + $0x50] sm:$0xff]
        %v430 = vld [vmem:[%s308 + $0x58] sm:$0xff]
        %v431 = vld [vmem:[%s308 + $0x60] sm:$0xff]
        %v432 = vld [vmem:[%s308 + $0x68] sm:$0xff]
        %v433 = vld [vmem:[%s308 + $0x70] sm:$0xff]
        %v434 = vld [vmem:[%s308 + $0x78] sm:$0xff]
        %v435 = vld [vmem:[%s308 + $0x80] sm:$0xff]
        %v436 = vld [vmem:[%s308 + $0x88] sm:$0xff]
        %v437 = vld [vmem:[%s308 + $0x90] sm:$0xff]
        %v438 = vld [vmem:[%s308 + $0x98] sm:$0xff]
        %v439 = vld [vmem:[%s308 + $0xa0] sm:$0xff]
        %v440 = vld [vmem:[%s308 + $0xa8] sm:$0xff]
        %v441 = vld [vmem:[%s308 + $0xb0] sm:$0xff]
        %v442 = vld [vmem:[%s308 + $0xb8] sm:$0xff]
        %v443 = vld [vmem:[%s308 + $0xc0] sm:$0xff]
        %v444 = vld [vmem:[%s308 + $0xc8] sm:$0xff]
        %v445 = vld [vmem:[%s308 + $0xd0] sm:$0xff]
        %v446 = vld [vmem:[%s308 + $0xd8] sm:$0xff]
        %v447 = vld [vmem:[%s308 + $0xe0] sm:$0xff]
        %v448 = vld [vmem:[%s308 + $0xe8] sm:$0xff]
        %v449 = vld [vmem:[%s308 + $0xf0] sm:$0xff]
        %v450 = vld [vmem:[%s308 + $0xf8] sm:$0xff]
        %v451 = vld [vmem:[%s308 + $0x100] sm:$0xff]
        %v452 = vld [vmem:[%s308 + $0x108] sm:$0xff]
        %v453 = vld [vmem:[%s308 + $0x110] sm:$0xff]
        %v454 = vld [vmem:[%s308 + $0x118] sm:$0xff]
        %v455 = vld [vmem:[%s308 + $0x120] sm:$0xff]
        %v456 = vld [vmem:[%s308 + $0x128] sm:$0xff]
        %v457 = vld [vmem:[%s308 + $0x130] sm:$0xff]
        %v458 = vld [vmem:[%s308 + $0x138] sm:$0xff]
        %v459 = vld [vmem:[%s308 + $0x140] sm:$0xff]
        %v460 = vld [vmem:[%s308 + $0x148] sm:$0xff]
        %v461 = vld [vmem:[%s308 + $0x150] sm:$0xff]
        %v462 = vld [vmem:[%s308 + $0x158] sm:$0xff]
        %v463 = vld [vmem:[%s308 + $0x160] sm:$0xff]
        %v464 = vld [vmem:[%s308 + $0x168] sm:$0xff]
        %v465 = vld [vmem:[%s308 + $0x170] sm:$0xff]
        %v466 = vld [vmem:[%s308 + $0x178] sm:$0xff]
        %v467 = vld [vmem:[%s308 + $0x180] sm:$0xff]
        %v468 = vld [vmem:[%s308 + $0x188] sm:$0xff]
        %v469 = vld [vmem:[%s308 + $0x190] sm:$0xff]
        %v470 = vld [vmem:[%s308 + $0x198] sm:$0xff]
        %v471 = vld [vmem:[%s308 + $0x1a0] sm:$0xff]
        %v472 = vld [vmem:[%s308 + $0x1a8] sm:$0xff]
        %v473 = vld [vmem:[%s308 + $0x1b0] sm:$0xff]
        %v474 = vld [vmem:[%s308 + $0x1b8] sm:$0xff]
        %v475 = vld [vmem:[%s308 + $0x1c0] sm:$0xff]
        %v476 = vld [vmem:[%s308 + $0x1c8] sm:$0xff]
        %v477 = vld [vmem:[%s308 + $0x1d0] sm:$0xff]
        %v478 = vld [vmem:[%s308 + $0x1d8] sm:$0xff]
        %v479 = vld [vmem:[%s308 + $0x1e0] sm:$0xff]
        %v480 = vld [vmem:[%s308 + $0x1e8] sm:$0xff]
        %v481 = vld [vmem:[%s308 + $0x1f0] sm:$0xff]
        %v482 = vld [vmem:[%s308 + $0x1f8] sm:$0xff]
        %v483 = vld [vmem:[%s308 + $0x200] sm:$0xff]
        %v484 = vld [vmem:[%s308 + $0x208] sm:$0xff]
        %v485 = vld [vmem:[%s308 + $0x210] sm:$0xff]
        %v486 = vld [vmem:[%s308 + $0x218] sm:$0xff]
        %v487 = vld [vmem:[%s308 + $0x220] sm:$0xff]
        %v488 = vld [vmem:[%s308 + $0x228] sm:$0xff]
        %v489 = vld [vmem:[%s308 + $0x230] sm:$0xff]
        %v490 = vld [vmem:[%s308 + $0x238] sm:$0xff]
        %v491 = vld [vmem:[%s308 + $0x240] sm:$0xff]
        %v492 = vld [vmem:[%s308 + $0x248] sm:$0xff]
        %v493 = vld [vmem:[%s308 + $0x250] sm:$0xff]
        %v494 = vld [vmem:[%s308 + $0x258] sm:$0xff]
        %v495 = vld [vmem:[%s308 + $0x260] sm:$0xff]
        %v496 = vld [vmem:[%s308 + $0x268] sm:$0xff]
        %v497 = vld [vmem:[%s308 + $0x270] sm:$0xff]
        %v498 = vld [vmem:[%s308 + $0x278] sm:$0xff]
        %v499 = vld [vmem:[%s308 + $0x280] sm:$0xff]
        %v500 = vld [vmem:[%s308 + $0x288] sm:$0xff]
        %v501 = vld [vmem:[%s308 + $0x290] sm:$0xff]
        %v502 = vld [vmem:[%s308 + $0x298] sm:$0xff]
        %v503 = vld [vmem:[%s308 + $0x2a0] sm:$0xff]
        %v504 = vld [vmem:[%s308 + $0x2a8] sm:$0xff]
        %v505 = vld [vmem:[%s308 + $0x2b0] sm:$0xff]
        %v506 = vld [vmem:[%s308 + $0x2b8] sm:$0xff]
        %v507 = vld [vmem:[%s308 + $0x2c0] sm:$0xff]
        %v508 = vld [vmem:[%s308 + $0x2c8] sm:$0xff]
        %v509 = vld [vmem:[%s308 + $0x2d0] sm:$0xff]
        %v510 = vld [vmem:[%s308 + $0x2d8] sm:$0xff]
        %v511 = vld [vmem:[%s308 + $0x2e0] sm:$0xff]
        %v512 = vld [vmem:[%s308 + $0x2e8] sm:$0xff]
        %v513 = vld [vmem:[%s308 + $0x2f0] sm:$0xff]
        %v514 = vld [vmem:[%s308 + $0x2f8] sm:$0xff]
        %v515 = vld [vmem:[%s308 + $0x300] sm:$0xff]
        %v516 = vld [vmem:[%s308 + $0x308] sm:$0xff]
        %v517 = vld [vmem:[%s308 + $0x310] sm:$0xff]
        %v518 = vld [vmem:[%s308 + $0x318] sm:$0xff]
        %v519 = vld [vmem:[%s308 + $0x320] sm:$0xff]
        %v520 = vld [vmem:[%s308 + $0x328] sm:$0xff]
        %v521 = vld [vmem:[%s308 + $0x330] sm:$0xff]
        %v522 = vld [vmem:[%s308 + $0x338] sm:$0xff]
        %v523 = vld [vmem:[%s308 + $0x340] sm:$0xff]
        %v524 = vld [vmem:[%s308 + $0x348] sm:$0xff]
        %v525 = vld [vmem:[%s308 + $0x350] sm:$0xff]
        %v526 = vld [vmem:[%s308 + $0x358] sm:$0xff]
        %v527 = vld [vmem:[%s308 + $0x360] sm:$0xff]
        %v528 = vld [vmem:[%s308 + $0x368] sm:$0xff]
        %v529 = vld [vmem:[%s308 + $0x370] sm:$0xff]
        %v530 = vld [vmem:[%s308 + $0x378] sm:$0xff]
        %v531 = vld [vmem:[%s308 + $0x380] sm:$0xff]
        %v532 = vld [vmem:[%s308 + $0x388] sm:$0xff]
        %v533 = vld [vmem:[%s308 + $0x390] sm:$0xff]
        %v534 = vld [vmem:[%s308 + $0x398] sm:$0xff]
        %v535 = vld [vmem:[%s308 + $0x3a0] sm:$0xff]
        %v536 = vld [vmem:[%s308 + $0x3a8] sm:$0xff]
        %v537 = vld [vmem:[%s308 + $0x3b0] sm:$0xff]
        %v538 = vld [vmem:[%s308 + $0x3b8] sm:$0xff]
        %v539 = vld [vmem:[%s308 + $0x3c0] sm:$0xff]
        %v540 = vld [vmem:[%s308 + $0x3c8] sm:$0xff]
        %v541 = vld [vmem:[%s308 + $0x3d0] sm:$0xff]
        %v542 = vld [vmem:[%s308 + $0x3d8] sm:$0xff]
        %v543 = vld [vmem:[%s308 + $0x3e0] sm:$0xff]
        %v544 = vld [vmem:[%s308 + $0x3e8] sm:$0xff]
        %v545 = vld [vmem:[%s308 + $0x3f0] sm:$0xff]
        %v546 = vld [vmem:[%s308 + $0x3f8] sm:$0xff]
        %v547 = vld [vmem:[%s308 + $0x400] sm:$0xff]
        %v548 = vld [vmem:[%s308 + $0x408] sm:$0xff]
        %v549 = vld [vmem:[%s308 + $0x410] sm:$0xff]
        %v550 = vld [vmem:[%s308 + $0x418] sm:$0xff]
        %v551 = vld [vmem:[%s308 + $0x420] sm:$0xff]
        %v552 = vld [vmem:[%s308 + $0x428] sm:$0xff]
        %v553 = vld [vmem:[%s308 + $0x430] sm:$0xff]
        %v554 = vld [vmem:[%s308 + $0x438] sm:$0xff]
        %v555 = vld [vmem:[%s308 + $0x440] sm:$0xff]
        %v556 = vld [vmem:[%s308 + $0x448] sm:$0xff]
        %v557 = vld [vmem:[%s308 + $0x450] sm:$0xff]
        %v558 = vld [vmem:[%s308 + $0x458] sm:$0xff]
        %v559 = vld [vmem:[%s308 + $0x460] sm:$0xff]
        %v560 = vld [vmem:[%s308 + $0x468] sm:$0xff]
        %v561 = vld [vmem:[%s308 + $0x470] sm:$0xff]
        %v562 = vld [vmem:[%s308 + $0x478] sm:$0xff]
        %v563 = vld [vmem:[%s308 + $0x480] sm:$0xff]
        %v564 = vld [vmem:[%s308 + $0x488] sm:$0xff]
        %v565 = vld [vmem:[%s308 + $0x490] sm:$0xff]
        %v566 = vld [vmem:[%s308 + $0x498] sm:$0xff]
        %v567 = vld [vmem:[%s308 + $0x4a0] sm:$0xff]
        %v568 = vld [vmem:[%s308 + $0x4a8] sm:$0xff]
        %v569 = vld [vmem:[%s308 + $0x4b0] sm:$0xff]
        %v570 = vld [vmem:[%s308 + $0x4b8] sm:$0xff]
        %v571 = vld [vmem:[%s308 + $0x4c0] sm:$0xff]
        %v572 = vld [vmem:[%s308 + $0x4c8] sm:$0xff]
        %v573 = vld [vmem:[%s308 + $0x4d0] sm:$0xff]
        %v574 = vld [vmem:[%s308 + $0x4d8] sm:$0xff]
        %v575 = vld [vmem:[%s308 + $0x4e0] sm:$0xff]
        %v576 = vld [vmem:[%s308 + $0x4e8] sm:$0xff]
        %v577 = vld [vmem:[%s308 + $0x4f0] sm:$0xff]
        %v578 = vld [vmem:[%s308 + $0x4f8] sm:$0xff]
        %v579 = vld [vmem:[%s308 + $0x500] sm:$0xff]
        %v580 = vld [vmem:[%s308 + $0x508] sm:$0xff]
        %v581 = vld [vmem:[%s308 + $0x510] sm:$0xff]
        %v582 = vld [vmem:[%s308 + $0x518] sm:$0xff]
        %v583 = vld [vmem:[%s308 + $0x520] sm:$0xff]
        %v584 = vld [vmem:[%s308 + $0x528] sm:$0xff]
        %v585 = vld [vmem:[%s308 + $0x530] sm:$0xff]
        %v586 = vld [vmem:[%s308 + $0x538] sm:$0xff]
        %v587 = vld [vmem:[%s308 + $0x540] sm:$0xff]
        %v588 = vld [vmem:[%s308 + $0x548] sm:$0xff]
        %v589 = vld [vmem:[%s308 + $0x550] sm:$0xff]
        %v590 = vld [vmem:[%s308 + $0x558] sm:$0xff]
        %v591 = vld [vmem:[%s308 + $0x560] sm:$0xff]
        %v592 = vld [vmem:[%s308 + $0x568] sm:$0xff]
        %v593 = vld [vmem:[%s308 + $0x570] sm:$0xff]
        %v594 = vld [vmem:[%s308 + $0x578] sm:$0xff]
        %v595 = vld [vmem:[%s308 + $0x580] sm:$0xff]
        %v596 = vld [vmem:[%s308 + $0x588] sm:$0xff]
        %v597 = vld [vmem:[%s308 + $0x590] sm:$0xff]
        %v598 = vld [vmem:[%s308 + $0x598] sm:$0xff]
        %v599 = vld [vmem:[%s308 + $0x5a0] sm:$0xff]
        %v600 = vld [vmem:[%s308 + $0x5a8] sm:$0xff]
        %v601 = vld [vmem:[%s308 + $0x5b0] sm:$0xff]
        %v602 = vld [vmem:[%s308 + $0x5b8] sm:$0xff]
        %v603 = vld [vmem:[%s308 + $0x5c0] sm:$0xff]
        %v604 = vld [vmem:[%s308 + $0x5c8] sm:$0xff]
        %v605 = vld [vmem:[%s308 + $0x5d0] sm:$0xff]
        %v606 = vld [vmem:[%s308 + $0x5d8] sm:$0xff]
        %v607 = vld [vmem:[%s308 + $0x5e0] sm:$0xff]
        %v608 = vld [vmem:[%s308 + $0x5e8] sm:$0xff]
        %v609 = vld [vmem:[%s308 + $0x5f0] sm:$0xff]
        %v610 = vld [vmem:[%s308 + $0x5f8] sm:$0xff]
        %v611 = vld [vmem:[%s308 + $0x600] sm:$0xff]
        %v612 = vld [vmem:[%s308 + $0x608] sm:$0xff]
        %v613 = vld [vmem:[%s308 + $0x610] sm:$0xff]
        %v614 = vld [vmem:[%s308 + $0x618] sm:$0xff]
        %v615 = vld [vmem:[%s308 + $0x620] sm:$0xff]
        %v616 = vld [vmem:[%s308 + $0x628] sm:$0xff]
        %v617 = vld [vmem:[%s308 + $0x630] sm:$0xff]
        %v618 = vld [vmem:[%s308 + $0x638] sm:$0xff]
        %v619 = vld [vmem:[%s308 + $0x640] sm:$0xff]
        %v620 = vld [vmem:[%s308 + $0x648] sm:$0xff]
        %v621 = vld [vmem:[%s308 + $0x650] sm:$0xff]
        %v622 = vld [vmem:[%s308 + $0x658] sm:$0xff]
        %v623 = vld [vmem:[%s308 + $0x660] sm:$0xff]
        %v624 = vld [vmem:[%s308 + $0x668] sm:$0xff]
        %v625 = vld [vmem:[%s308 + $0x670] sm:$0xff]
        %v626 = vld [vmem:[%s308 + $0x678] sm:$0xff]
        %v627 = vld [vmem:[%s308 + $0x680] sm:$0xff]
        %v628 = vld [vmem:[%s308 + $0x688] sm:$0xff]
        %v629 = vld [vmem:[%s308 + $0x690] sm:$0xff]
        %v630 = vld [vmem:[%s308 + $0x698] sm:$0xff]
        %v631 = vld [vmem:[%s308 + $0x6a0] sm:$0xff]
        %v632 = vld [vmem:[%s308 + $0x6a8] sm:$0xff]
        %v633 = vld [vmem:[%s308 + $0x6b0] sm:$0xff]
        %v634 = vld [vmem:[%s308 + $0x6b8] sm:$0xff]
        %v635 = vld [vmem:[%s308 + $0x6c0] sm:$0xff]
        %v636 = vld [vmem:[%s308 + $0x6c8] sm:$0xff]
        %v637 = vld [vmem:[%s308 + $0x6d0] sm:$0xff]
        %v638 = vld [vmem:[%s308 + $0x6d8] sm:$0xff]
        %v639 = vld [vmem:[%s308 + $0x6e0] sm:$0xff]
        %v640 = vld [vmem:[%s308 + $0x6e8] sm:$0xff]
        %v641 = vld [vmem:[%s308 + $0x6f0] sm:$0xff]
        %v642 = vld [vmem:[%s308 + $0x6f8] sm:$0xff]
        %v643 = vld [vmem:[%s308 + $0x700] sm:$0xff]
        %v644 = vld [vmem:[%s308 + $0x708] sm:$0xff]
        %v645 = vld [vmem:[%s308 + $0x710] sm:$0xff]
        %v646 = vld [vmem:[%s308 + $0x718] sm:$0xff]
        %v647 = vld [vmem:[%s308 + $0x720] sm:$0xff]
        %v648 = vld [vmem:[%s308 + $0x728] sm:$0xff]
        %v649 = vld [vmem:[%s308 + $0x730] sm:$0xff]
        %v650 = vld [vmem:[%s308 + $0x738] sm:$0xff]
        %v651 = vld [vmem:[%s308 + $0x740] sm:$0xff]
        %v652 = vld [vmem:[%s308 + $0x748] sm:$0xff]
        %v653 = vld [vmem:[%s308 + $0x750] sm:$0xff]
        %v654 = vld [vmem:[%s308 + $0x758] sm:$0xff]
        %v655 = vld [vmem:[%s308 + $0x760] sm:$0xff]
        %v656 = vld [vmem:[%s308 + $0x768] sm:$0xff]
        %v657 = vld [vmem:[%s308 + $0x770] sm:$0xff]
        %v658 = vld [vmem:[%s308 + $0x778] sm:$0xff]
        %v659 = vld [vmem:[%s308 + $0x780] sm:$0xff]
        %v660 = vld [vmem:[%s308 + $0x788] sm:$0xff]
        %v661 = vld [vmem:[%s308 + $0x790] sm:$0xff]
        %v662 = vld [vmem:[%s308 + $0x798] sm:$0xff]
        %v663 = vld [vmem:[%s308 + $0x7a0] sm:$0xff]
        %v664 = vld [vmem:[%s308 + $0x7a8] sm:$0xff]
        %v665 = vld [vmem:[%s308 + $0x7b0] sm:$0xff]
        %v666 = vld [vmem:[%s308 + $0x7b8] sm:$0xff]
        %v667 = vld [vmem:[%s308 + $0x7c0] sm:$0xff]
        %v668 = vld [vmem:[%s308 + $0x7c8] sm:$0xff]
        %v669 = vld [vmem:[%s308 + $0x7d0] sm:$0xff]
        %v670 = vld [vmem:[%s308 + $0x7d8] sm:$0xff]
        %v671 = vld [vmem:[%s308 + $0x7e0] sm:$0xff]
        %v672 = vld [vmem:[%s308 + $0x7e8] sm:$0xff]
        %v673 = vld [vmem:[%s308 + $0x7f0] sm:$0xff]
        %v674 = vld [vmem:[%s308 + $0x7f8] sm:$0xff]
        %v675 = vld [vmem:[%s308 + $0x800] sm:$0xff]
        %v676 = vld [vmem:[%s308 + $0x808] sm:$0xff]
        %v677 = vld [vmem:[%s308 + $0x810] sm:$0xff]
        %v678 = vld [vmem:[%s308 + $0x818] sm:$0xff]
        %v679 = vld [vmem:[%s308 + $0x820] sm:$0xff]
        %v680 = vld [vmem:[%s308 + $0x828] sm:$0xff]
        %v681 = vld [vmem:[%s308 + $0x830] sm:$0xff]
        %v682 = vld [vmem:[%s308 + $0x838] sm:$0xff]
        %v683 = vld [vmem:[%s308 + $0x840] sm:$0xff]
        %v684 = vld [vmem:[%s308 + $0x848] sm:$0xff]
        %v685 = vld [vmem:[%s308 + $0x850] sm:$0xff]
        %v686 = vld [vmem:[%s308 + $0x858] sm:$0xff]
        %v687 = vld [vmem:[%s308 + $0x860] sm:$0xff]
        %v688 = vld [vmem:[%s308 + $0x868] sm:$0xff]
        %v689 = vld [vmem:[%s308 + $0x870] sm:$0xff]
        %v690 = vld [vmem:[%s308 + $0x878] sm:$0xff]
        %v691 = vld [vmem:[%s308 + $0x880] sm:$0xff]
        %v692 = vld [vmem:[%s308 + $0x888] sm:$0xff]
        %v693 = vld [vmem:[%s308 + $0x890] sm:$0xff]
        %v694 = vld [vmem:[%s308 + $0x898] sm:$0xff]
        %v695 = vld [vmem:[%s308 + $0x8a0] sm:$0xff]
        %v696 = vld [vmem:[%s308 + $0x8a8] sm:$0xff]
        %v697 = vld [vmem:[%s308 + $0x8b0] sm:$0xff]
        %v698 = vld [vmem:[%s308 + $0x8b8] sm:$0xff]
        %v699 = vld [vmem:[%s308 + $0x8c0] sm:$0xff]
        %v700 = vld [vmem:[%s308 + $0x8c8] sm:$0xff]
        %v701 = vld [vmem:[%s308 + $0x8d0] sm:$0xff]
        %v702 = vld [vmem:[%s308 + $0x8d8] sm:$0xff]
        %v703 = vld [vmem:[%s308 + $0x8e0] sm:$0xff]
        %v704 = vld [vmem:[%s308 + $0x8e8] sm:$0xff]
        %v705 = vld [vmem:[%s308 + $0x8f0] sm:$0xff]
        %v706 = vld [vmem:[%s308 + $0x8f8] sm:$0xff]
        %v707 = vld [vmem:[%s308 + $0x900] sm:$0xff]
        %v708 = vld [vmem:[%s308 + $0x908] sm:$0xff]
        %v709 = vld [vmem:[%s308 + $0x910] sm:$0xff]
        %v710 = vld [vmem:[%s308 + $0x918] sm:$0xff]
        %v711 = vld [vmem:[%s308 + $0x920] sm:$0xff]
        %v712 = vld [vmem:[%s308 + $0x928] sm:$0xff]
        %v713 = vld [vmem:[%s308 + $0x930] sm:$0xff]
        %v714 = vld [vmem:[%s308 + $0x938] sm:$0xff]
        %v715 = vld [vmem:[%s308 + $0x940] sm:$0xff]
        %v716 = vld [vmem:[%s308 + $0x948] sm:$0xff]
        %v717 = vld [vmem:[%s308 + $0x950] sm:$0xff]
        %v718 = vld [vmem:[%s308 + $0x958] sm:$0xff]
        %v719 = vld [vmem:[%s308 + $0x960] sm:$0xff]
        %v720 = vld [vmem:[%s308 + $0x968] sm:$0xff]
        %v721 = vld [vmem:[%s308 + $0x970] sm:$0xff]
        %v722 = vld [vmem:[%s308 + $0x978] sm:$0xff]
        %v723 = vld [vmem:[%s308 + $0x980] sm:$0xff]
        %v724 = vld [vmem:[%s308 + $0x988] sm:$0xff]
        %v725 = vld [vmem:[%s308 + $0x990] sm:$0xff]
        %v726 = vld [vmem:[%s308 + $0x998] sm:$0xff]
        %v727 = vld [vmem:[%s308 + $0x9a0] sm:$0xff]
        %v728 = vld [vmem:[%s308 + $0x9a8] sm:$0xff]
        %v729 = vld [vmem:[%s308 + $0x9b0] sm:$0xff]
        %v730 = vld [vmem:[%s308 + $0x9b8] sm:$0xff]
        %v731 = vld [vmem:[%s308 + $0x9c0] sm:$0xff]
        %v732 = vld [vmem:[%s308 + $0x9c8] sm:$0xff]
        %v733 = vld [vmem:[%s308 + $0x9d0] sm:$0xff]
        %v734 = vld [vmem:[%s308 + $0x9d8] sm:$0xff]
        %v735 = vld [vmem:[%s308 + $0x9e0] sm:$0xff]
        %v736 = vld [vmem:[%s308 + $0x9e8] sm:$0xff]
        %v737 = vld [vmem:[%s308 + $0x9f0] sm:$0xff]
        %v738 = vld [vmem:[%s308 + $0x9f8] sm:$0xff]
        %v739 = vld [vmem:[%s308 + $0xa00] sm:$0xff]
        %v740 = vld [vmem:[%s308 + $0xa08] sm:$0xff]
        %v741 = vld [vmem:[%s308 + $0xa10] sm:$0xff]
        %v742 = vld [vmem:[%s308 + $0xa18] sm:$0xff]
        %v743 = vld [vmem:[%s308 + $0xa20] sm:$0xff]
        %v744 = vld [vmem:[%s308 + $0xa28] sm:$0xff]
        %v745 = vld [vmem:[%s308 + $0xa30] sm:$0xff]
        %v746 = vld [vmem:[%s308 + $0xa38] sm:$0xff]
        %v747 = vld [vmem:[%s308 + $0xa40] sm:$0xff]
        %v748 = vld [vmem:[%s308 + $0xa48] sm:$0xff]
        %v749 = vld [vmem:[%s308 + $0xa50] sm:$0xff]
        %v750 = vld [vmem:[%s308 + $0xa58] sm:$0xff]
        %v751 = vld [vmem:[%s308 + $0xa60] sm:$0xff]
        %v752 = vld [vmem:[%s308 + $0xa68] sm:$0xff]
        %v753 = vld [vmem:[%s308 + $0xa70] sm:$0xff]
        %v754 = vld [vmem:[%s308 + $0xa78] sm:$0xff]
        %v755 = vld [vmem:[%s308 + $0xa80] sm:$0xff]
        %v756 = vld [vmem:[%s308 + $0xa88] sm:$0xff]
        %v757 = vld [vmem:[%s308 + $0xa90] sm:$0xff]
        %v758 = vld [vmem:[%s308 + $0xa98] sm:$0xff]
        %v759 = vld [vmem:[%s308 + $0xaa0] sm:$0xff]
        %v760 = vld [vmem:[%s308 + $0xaa8] sm:$0xff]
        %v761 = vld [vmem:[%s308 + $0xab0] sm:$0xff]
        %v762 = vld [vmem:[%s308 + $0xab8] sm:$0xff]
        %v763 = vld [vmem:[%s308 + $0xac0] sm:$0xff]
        %v764 = vld [vmem:[%s308 + $0xac8] sm:$0xff]
        %v765 = vld [vmem:[%s308 + $0xad0] sm:$0xff]
        %v766 = vld [vmem:[%s308 + $0xad8] sm:$0xff]
        %v767 = vld [vmem:[%s308 + $0xae0] sm:$0xff]
        %v768 = vld [vmem:[%s308 + $0xae8] sm:$0xff]
        %v769 = vld [vmem:[%s308 + $0xaf0] sm:$0xff]
        %v770 = vld [vmem:[%s308 + $0xaf8] sm:$0xff]
        %v771 = vld [vmem:[%s308 + $0xb00] sm:$0xff]
        %v772 = vld [vmem:[%s308 + $0xb08] sm:$0xff]
        %v773 = vld [vmem:[%s308 + $0xb10] sm:$0xff]
        %v774 = vld [vmem:[%s308 + $0xb18] sm:$0xff]
        %v775 = vld [vmem:[%s308 + $0xb20] sm:$0xff]
        %v776 = vld [vmem:[%s308 + $0xb28] sm:$0xff]
        %v777 = vld [vmem:[%s308 + $0xb30] sm:$0xff]
        %v778 = vld [vmem:[%s308 + $0xb38] sm:$0xff]
        %v779 = vld [vmem:[%s308 + $0xb40] sm:$0xff]
        %v780 = vld [vmem:[%s308 + $0xb48] sm:$0xff]
        %v781 = vld [vmem:[%s308 + $0xb50] sm:$0xff]
        %v782 = vld [vmem:[%s308 + $0xb58] sm:$0xff]
        %v783 = vld [vmem:[%s308 + $0xb60] sm:$0xff]
        %v784 = vld [vmem:[%s308 + $0xb68] sm:$0xff]
        %v785 = vld [vmem:[%s308 + $0xb70] sm:$0xff]
        %v786 = vld [vmem:[%s308 + $0xb78] sm:$0xff]
        %v787 = vld [vmem:[%s308 + $0xb80] sm:$0xff]
        %v788 = vld [vmem:[%s308 + $0xb88] sm:$0xff]
        %v789 = vld [vmem:[%s308 + $0xb90] sm:$0xff]
        %v790 = vld [vmem:[%s308 + $0xb98] sm:$0xff]
        %v791 = vld [vmem:[%s308 + $0xba0] sm:$0xff]
        %v792 = vld [vmem:[%s308 + $0xba8] sm:$0xff]
        %v793 = vld [vmem:[%s308 + $0xbb0] sm:$0xff]
        %v794 = vld [vmem:[%s308 + $0xbb8] sm:$0xff]
        %v795 = vld [vmem:[%s308 + $0xbc0] sm:$0xff]
        %v796 = vld [vmem:[%s308 + $0xbc8] sm:$0xff]
        %v797 = vld [vmem:[%s308 + $0xbd0] sm:$0xff]
        %v798 = vld [vmem:[%s308 + $0xbd8] sm:$0xff]
        %v799 = vld [vmem:[%s308 + $0xbe0] sm:$0xff]
        %v800 = vld [vmem:[%s308 + $0xbe8] sm:$0xff]
        %v801 = vld [vmem:[%s308 + $0xbf0] sm:$0xff]
        %v802 = vld [vmem:[%s308 + $0xbf8] sm:$0xff]
        %v827 = vunpack.c.l.b16 %v395
        %v828 = vunpack.c.h.b16 %v395
        %v829 = vunpack.c.l.b16 %v396
        %v830 = vunpack.c.h.b16 %v396
        %v831 = vunpack.c.l.b16 %v397
        %v832 = vunpack.c.h.b16 %v397
        %v833 = vunpack.c.l.b16 %v398
        %v834 = vunpack.c.h.b16 %v398
        %v835 = vunpack.c.l.b16 %v399
        %v836 = vunpack.c.h.b16 %v399
        %v837 = vunpack.c.l.b16 %v400
        %v838 = vunpack.c.h.b16 %v400
        %v839 = vunpack.c.l.b16 %v401
        %v840 = vunpack.c.h.b16 %v401
        %v841 = vunpack.c.l.b16 %v402
        %v842 = vunpack.c.h.b16 %v402
        %v843 = vunpack.c.l.b16 %v403
        %v844 = vunpack.c.h.b16 %v403
        %v845 = vunpack.c.l.b16 %v404
        %v846 = vunpack.c.h.b16 %v404
        %v847 = vunpack.c.l.b16 %v405
        %v848 = vunpack.c.h.b16 %v405
        %v849 = vunpack.c.l.b16 %v406
        %v850 = vunpack.c.h.b16 %v406
        %v851 = vunpack.c.l.b16 %v407
        %v852 = vunpack.c.h.b16 %v407
        %v853 = vunpack.c.l.b16 %v408
        %v854 = vunpack.c.h.b16 %v408
        %v855 = vunpack.c.l.b16 %v409
        %v856 = vunpack.c.h.b16 %v409
        %v857 = vunpack.c.l.b16 %v410
        %v858 = vunpack.c.h.b16 %v410
        %v859 = vunpack.c.l.b16 %v411
        %v860 = vunpack.c.h.b16 %v411
        %v861 = vunpack.c.l.b16 %v412
        %v862 = vunpack.c.h.b16 %v412
        %v863 = vunpack.c.l.b16 %v413
        %v864 = vunpack.c.h.b16 %v413
        %v865 = vunpack.c.l.b16 %v414
        %v866 = vunpack.c.h.b16 %v414
        %v867 = vunpack.c.l.b16 %v415
        %v868 = vunpack.c.h.b16 %v415
        %v869 = vunpack.c.l.b16 %v416
        %v870 = vunpack.c.h.b16 %v416
        %v871 = vunpack.c.l.b16 %v417
        %v872 = vunpack.c.h.b16 %v417
        %v873 = vunpack.c.l.b16 %v418
        %v874 = vunpack.c.h.b16 %v418
        %v875 = vpack.c.b16 %v839, %v827
        %v876 = vpack.c.b16 %v840, %v828
        %v877 = vpack.c.b16 %v841, %v829
        %v878 = vpack.c.b16 %v842, %v830
        %v879 = vpack.c.b16 %v843, %v831
        %v880 = vpack.c.b16 %v844, %v832
        %v881 = vpack.c.b16 %v845, %v833
        %v882 = vpack.c.b16 %v846, %v834
        %v883 = vpack.c.b16 %v847, %v835
        %v884 = vpack.c.b16 %v848, %v836
        %v885 = vpack.c.b16 %v849, %v837
        %v886 = vpack.c.b16 %v850, %v838
        %v887 = vpack.c.b16 %v863, %v851
        %v888 = vpack.c.b16 %v864, %v852
        %v889 = vpack.c.b16 %v865, %v853
        %v890 = vpack.c.b16 %v866, %v854
        %v891 = vpack.c.b16 %v867, %v855
        %v892 = vpack.c.b16 %v868, %v856
        %v893 = vpack.c.b16 %v869, %v857
        %v894 = vpack.c.b16 %v870, %v858
        %v895 = vpack.c.b16 %v871, %v859
        %v896 = vpack.c.b16 %v872, %v860
        %v897 = vpack.c.b16 %v873, %v861
        %v898 = vpack.c.b16 %v874, %v862
        %v1307 = vunpack.c.l.b16 %v419
        %v1308 = vunpack.c.h.b16 %v419
        %v1309 = vunpack.c.l.b16 %v420
        %v1310 = vunpack.c.h.b16 %v420
        %v1311 = vunpack.c.l.b16 %v421
        %v1312 = vunpack.c.h.b16 %v421
        %v1313 = vunpack.c.l.b16 %v422
        %v1314 = vunpack.c.h.b16 %v422
        %v1315 = vunpack.c.l.b16 %v423
        %v1316 = vunpack.c.h.b16 %v423
        %v1317 = vunpack.c.l.b16 %v424
        %v1318 = vunpack.c.h.b16 %v424
        %v1319 = vunpack.c.l.b16 %v425
        %v1320 = vunpack.c.h.b16 %v425
        %v1321 = vunpack.c.l.b16 %v426
        %v1322 = vunpack.c.h.b16 %v426
        %v1323 = vunpack.c.l.b16 %v427
        %v1324 = vunpack.c.h.b16 %v427
        %v1325 = vunpack.c.l.b16 %v428
        %v1326 = vunpack.c.h.b16 %v428
        %v1327 = vunpack.c.l.b16 %v429
        %v1328 = vunpack.c.h.b16 %v429
        %v1329 = vunpack.c.l.b16 %v430
        %v1330 = vunpack.c.h.b16 %v430
        %v1331 = vunpack.c.l.b16 %v431
        %v1332 = vunpack.c.h.b16 %v431
        %v1333 = vunpack.c.l.b16 %v432
        %v1334 = vunpack.c.h.b16 %v432
        %v1335 = vunpack.c.l.b16 %v433
        %v1336 = vunpack.c.h.b16 %v433
        %v1337 = vunpack.c.l.b16 %v434
        %v1338 = vunpack.c.h.b16 %v434
        %v1339 = vunpack.c.l.b16 %v435
        %v1340 = vunpack.c.h.b16 %v435
        %v1341 = vunpack.c.l.b16 %v436
        %v1342 = vunpack.c.h.b16 %v436
        %v1343 = vunpack.c.l.b16 %v437
        %v1344 = vunpack.c.h.b16 %v437
        %v1345 = vunpack.c.l.b16 %v438
        %v1346 = vunpack.c.h.b16 %v438
        %v1347 = vunpack.c.l.b16 %v439
        %v1348 = vunpack.c.h.b16 %v439
        %v1349 = vunpack.c.l.b16 %v440
        %v1350 = vunpack.c.h.b16 %v440
        %v1351 = vunpack.c.l.b16 %v441
        %v1352 = vunpack.c.h.b16 %v441
        %v1353 = vunpack.c.l.b16 %v442
        %v1354 = vunpack.c.h.b16 %v442
        %v1355 = vunpack.c.l.b16 %v443
        %v1356 = vunpack.c.h.b16 %v443
        %v1357 = vunpack.c.l.b16 %v444
        %v1358 = vunpack.c.h.b16 %v444
        %v1359 = vunpack.c.l.b16 %v445
        %v1360 = vunpack.c.h.b16 %v445
        %v1361 = vunpack.c.l.b16 %v446
        %v1362 = vunpack.c.h.b16 %v446
        %v1363 = vunpack.c.l.b16 %v447
        %v1364 = vunpack.c.h.b16 %v447
        %v1365 = vunpack.c.l.b16 %v448
        %v1366 = vunpack.c.h.b16 %v448
        %v1367 = vunpack.c.l.b16 %v449
        %v1368 = vunpack.c.h.b16 %v449
        %v1369 = vunpack.c.l.b16 %v450
        %v1370 = vunpack.c.h.b16 %v450
        %v1371 = vunpack.c.l.b16 %v451
        %v1372 = vunpack.c.h.b16 %v451
        %v1373 = vunpack.c.l.b16 %v452
        %v1374 = vunpack.c.h.b16 %v452
        %v1375 = vunpack.c.l.b16 %v453
        %v1376 = vunpack.c.h.b16 %v453
        %v1377 = vunpack.c.l.b16 %v454
        %v1378 = vunpack.c.h.b16 %v454
        %v1379 = vunpack.c.l.b16 %v455
        %v1380 = vunpack.c.h.b16 %v455
        %v1381 = vunpack.c.l.b16 %v456
        %v1382 = vunpack.c.h.b16 %v456
        %v1383 = vunpack.c.l.b16 %v457
        %v1384 = vunpack.c.h.b16 %v457
        %v1385 = vunpack.c.l.b16 %v458
        %v1386 = vunpack.c.h.b16 %v458
        %v1387 = vunpack.c.l.b16 %v459
        %v1388 = vunpack.c.h.b16 %v459
        %v1389 = vunpack.c.l.b16 %v460
        %v1390 = vunpack.c.h.b16 %v460
        %v1391 = vunpack.c.l.b16 %v461
        %v1392 = vunpack.c.h.b16 %v461
        %v1393 = vunpack.c.l.b16 %v462
        %v1394 = vunpack.c.h.b16 %v462
        %v1395 = vunpack.c.l.b16 %v463
        %v1396 = vunpack.c.h.b16 %v463
        %v1397 = vunpack.c.l.b16 %v464
        %v1398 = vunpack.c.h.b16 %v464
        %v1399 = vunpack.c.l.b16 %v465
        %v1400 = vunpack.c.h.b16 %v465
        %v1401 = vunpack.c.l.b16 %v466
        %v1402 = vunpack.c.h.b16 %v466
        %v1403 = vunpack.c.l.b16 %v467
        %v1404 = vunpack.c.h.b16 %v467
        %v1405 = vunpack.c.l.b16 %v468
        %v1406 = vunpack.c.h.b16 %v468
        %v1407 = vunpack.c.l.b16 %v469
        %v1408 = vunpack.c.h.b16 %v469
        %v1409 = vunpack.c.l.b16 %v470
        %v1410 = vunpack.c.h.b16 %v470
        %v1411 = vunpack.c.l.b16 %v471
        %v1412 = vunpack.c.h.b16 %v471
        %v1413 = vunpack.c.l.b16 %v472
        %v1414 = vunpack.c.h.b16 %v472
        %v1415 = vunpack.c.l.b16 %v473
        %v1416 = vunpack.c.h.b16 %v473
        %v1417 = vunpack.c.l.b16 %v474
        %v1418 = vunpack.c.h.b16 %v474
        %v1419 = vunpack.c.l.b16 %v475
        %v1420 = vunpack.c.h.b16 %v475
        %v1421 = vunpack.c.l.b16 %v476
        %v1422 = vunpack.c.h.b16 %v476
        %v1423 = vunpack.c.l.b16 %v477
        %v1424 = vunpack.c.h.b16 %v477
        %v1425 = vunpack.c.l.b16 %v478
        %v1426 = vunpack.c.h.b16 %v478
        %v1427 = vunpack.c.l.b16 %v479
        %v1428 = vunpack.c.h.b16 %v479
        %v1429 = vunpack.c.l.b16 %v480
        %v1430 = vunpack.c.h.b16 %v480
        %v1431 = vunpack.c.l.b16 %v481
        %v1432 = vunpack.c.h.b16 %v481
        %v1433 = vunpack.c.l.b16 %v482
        %v1434 = vunpack.c.h.b16 %v482
        %v1435 = vunpack.c.l.b16 %v483
        %v1436 = vunpack.c.h.b16 %v483
        %v1437 = vunpack.c.l.b16 %v484
        %v1438 = vunpack.c.h.b16 %v484
        %v1439 = vunpack.c.l.b16 %v485
        %v1440 = vunpack.c.h.b16 %v485
        %v1441 = vunpack.c.l.b16 %v486
        %v1442 = vunpack.c.h.b16 %v486
        %v1443 = vunpack.c.l.b16 %v487
        %v1444 = vunpack.c.h.b16 %v487
        %v1445 = vunpack.c.l.b16 %v488
        %v1446 = vunpack.c.h.b16 %v488
        %v1447 = vunpack.c.l.b16 %v489
        %v1448 = vunpack.c.h.b16 %v489
        %v1449 = vunpack.c.l.b16 %v490
        %v1450 = vunpack.c.h.b16 %v490
        %v1451 = vunpack.c.l.b16 %v491
        %v1452 = vunpack.c.h.b16 %v491
        %v1453 = vunpack.c.l.b16 %v492
        %v1454 = vunpack.c.h.b16 %v492
        %v1455 = vunpack.c.l.b16 %v493
        %v1456 = vunpack.c.h.b16 %v493
        %v1457 = vunpack.c.l.b16 %v494
        %v1458 = vunpack.c.h.b16 %v494
        %v1459 = vunpack.c.l.b16 %v495
        %v1460 = vunpack.c.h.b16 %v495
        %v1461 = vunpack.c.l.b16 %v496
        %v1462 = vunpack.c.h.b16 %v496
        %v1463 = vunpack.c.l.b16 %v497
        %v1464 = vunpack.c.h.b16 %v497
        %v1465 = vunpack.c.l.b16 %v498
        %v1466 = vunpack.c.h.b16 %v498
        %v1467 = vunpack.c.l.b16 %v499
        %v1468 = vunpack.c.h.b16 %v499
        %v1469 = vunpack.c.l.b16 %v500
        %v1470 = vunpack.c.h.b16 %v500
        %v1471 = vunpack.c.l.b16 %v501
        %v1472 = vunpack.c.h.b16 %v501
        %v1473 = vunpack.c.l.b16 %v502
        %v1474 = vunpack.c.h.b16 %v502
        %v1475 = vunpack.c.l.b16 %v503
        %v1476 = vunpack.c.h.b16 %v503
        %v1477 = vunpack.c.l.b16 %v504
        %v1478 = vunpack.c.h.b16 %v504
        %v1479 = vunpack.c.l.b16 %v505
        %v1480 = vunpack.c.h.b16 %v505
        %v1481 = vunpack.c.l.b16 %v506
        %v1482 = vunpack.c.h.b16 %v506
        %v1483 = vunpack.c.l.b16 %v507
        %v1484 = vunpack.c.h.b16 %v507
        %v1485 = vunpack.c.l.b16 %v508
        %v1486 = vunpack.c.h.b16 %v508
        %v1487 = vunpack.c.l.b16 %v509
        %v1488 = vunpack.c.h.b16 %v509
        %v1489 = vunpack.c.l.b16 %v510
        %v1490 = vunpack.c.h.b16 %v510
        %v1491 = vunpack.c.l.b16 %v511
        %v1492 = vunpack.c.h.b16 %v511
        %v1493 = vunpack.c.l.b16 %v512
        %v1494 = vunpack.c.h.b16 %v512
        %v1495 = vunpack.c.l.b16 %v513
        %v1496 = vunpack.c.h.b16 %v513
        %v1497 = vunpack.c.l.b16 %v514
        %v1498 = vunpack.c.h.b16 %v514
        %v1499 = vunpack.c.l.b16 %v515
        %v1500 = vunpack.c.h.b16 %v515
        %v1501 = vunpack.c.l.b16 %v516
        %v1502 = vunpack.c.h.b16 %v516
        %v1503 = vunpack.c.l.b16 %v517
        %v1504 = vunpack.c.h.b16 %v517
        %v1505 = vunpack.c.l.b16 %v518
        %v1506 = vunpack.c.h.b16 %v518
        %v1507 = vunpack.c.l.b16 %v519
        %v1508 = vunpack.c.h.b16 %v519
        %v1509 = vunpack.c.l.b16 %v520
        %v1510 = vunpack.c.h.b16 %v520
        %v1511 = vunpack.c.l.b16 %v521
        %v1512 = vunpack.c.h.b16 %v521
        %v1513 = vunpack.c.l.b16 %v522
        %v1514 = vunpack.c.h.b16 %v522
        %v1515 = vunpack.c.l.b16 %v523
        %v1516 = vunpack.c.h.b16 %v523
        %v1517 = vunpack.c.l.b16 %v524
        %v1518 = vunpack.c.h.b16 %v524
        %v1519 = vunpack.c.l.b16 %v525
        %v1520 = vunpack.c.h.b16 %v525
        %v1521 = vunpack.c.l.b16 %v526
        %v1522 = vunpack.c.h.b16 %v526
        %v1523 = vunpack.c.l.b16 %v527
        %v1524 = vunpack.c.h.b16 %v527
        %v1525 = vunpack.c.l.b16 %v528
        %v1526 = vunpack.c.h.b16 %v528
        %v1527 = vunpack.c.l.b16 %v529
        %v1528 = vunpack.c.h.b16 %v529
        %v1529 = vunpack.c.l.b16 %v530
        %v1530 = vunpack.c.h.b16 %v530
        %v1531 = vunpack.c.l.b16 %v531
        %v1532 = vunpack.c.h.b16 %v531
        %v1533 = vunpack.c.l.b16 %v532
        %v1534 = vunpack.c.h.b16 %v532
        %v1535 = vunpack.c.l.b16 %v533
        %v1536 = vunpack.c.h.b16 %v533
        %v1537 = vunpack.c.l.b16 %v534
        %v1538 = vunpack.c.h.b16 %v534
        %v1539 = vunpack.c.l.b16 %v535
        %v1540 = vunpack.c.h.b16 %v535
        %v1541 = vunpack.c.l.b16 %v536
        %v1542 = vunpack.c.h.b16 %v536
        %v1543 = vunpack.c.l.b16 %v537
        %v1544 = vunpack.c.h.b16 %v537
        %v1545 = vunpack.c.l.b16 %v538
        %v1546 = vunpack.c.h.b16 %v538
        %v1547 = vunpack.c.l.b16 %v539
        %v1548 = vunpack.c.h.b16 %v539
        %v1549 = vunpack.c.l.b16 %v540
        %v1550 = vunpack.c.h.b16 %v540
        %v1551 = vunpack.c.l.b16 %v541
        %v1552 = vunpack.c.h.b16 %v541
        %v1553 = vunpack.c.l.b16 %v542
        %v1554 = vunpack.c.h.b16 %v542
        %v1555 = vunpack.c.l.b16 %v543
        %v1556 = vunpack.c.h.b16 %v543
        %v1557 = vunpack.c.l.b16 %v544
        %v1558 = vunpack.c.h.b16 %v544
        %v1559 = vunpack.c.l.b16 %v545
        %v1560 = vunpack.c.h.b16 %v545
        %v1561 = vunpack.c.l.b16 %v546
        %v1562 = vunpack.c.h.b16 %v546
        %v1563 = vunpack.c.l.b16 %v547
        %v1564 = vunpack.c.h.b16 %v547
        %v1565 = vunpack.c.l.b16 %v548
        %v1566 = vunpack.c.h.b16 %v548
        %v1567 = vunpack.c.l.b16 %v549
        %v1568 = vunpack.c.h.b16 %v549
        %v1569 = vunpack.c.l.b16 %v550
        %v1570 = vunpack.c.h.b16 %v550
        %v1571 = vunpack.c.l.b16 %v551
        %v1572 = vunpack.c.h.b16 %v551
        %v1573 = vunpack.c.l.b16 %v552
        %v1574 = vunpack.c.h.b16 %v552
        %v1575 = vunpack.c.l.b16 %v553
        %v1576 = vunpack.c.h.b16 %v553
        %v1577 = vunpack.c.l.b16 %v554
        %v1578 = vunpack.c.h.b16 %v554
        %v1579 = vunpack.c.l.b16 %v555
        %v1580 = vunpack.c.h.b16 %v555
        %v1581 = vunpack.c.l.b16 %v556
        %v1582 = vunpack.c.h.b16 %v556
        %v1583 = vunpack.c.l.b16 %v557
        %v1584 = vunpack.c.h.b16 %v557
        %v1585 = vunpack.c.l.b16 %v558
        %v1586 = vunpack.c.h.b16 %v558
        %v1587 = vunpack.c.l.b16 %v559
        %v1588 = vunpack.c.h.b16 %v559
        %v1589 = vunpack.c.l.b16 %v560
        %v1590 = vunpack.c.h.b16 %v560
        %v1591 = vunpack.c.l.b16 %v561
        %v1592 = vunpack.c.h.b16 %v561
        %v1593 = vunpack.c.l.b16 %v562
        %v1594 = vunpack.c.h.b16 %v562
        %v1595 = vunpack.c.l.b16 %v563
        %v1596 = vunpack.c.h.b16 %v563
        %v1597 = vunpack.c.l.b16 %v564
        %v1598 = vunpack.c.h.b16 %v564
        %v1599 = vunpack.c.l.b16 %v565
        %v1600 = vunpack.c.h.b16 %v565
        %v1601 = vunpack.c.l.b16 %v566
        %v1602 = vunpack.c.h.b16 %v566
        %v1603 = vunpack.c.l.b16 %v567
        %v1604 = vunpack.c.h.b16 %v567
        %v1605 = vunpack.c.l.b16 %v568
        %v1606 = vunpack.c.h.b16 %v568
        %v1607 = vunpack.c.l.b16 %v569
        %v1608 = vunpack.c.h.b16 %v569
        %v1609 = vunpack.c.l.b16 %v570
        %v1610 = vunpack.c.h.b16 %v570
        %v1611 = vunpack.c.l.b16 %v571
        %v1612 = vunpack.c.h.b16 %v571
        %v1613 = vunpack.c.l.b16 %v572
        %v1614 = vunpack.c.h.b16 %v572
        %v1615 = vunpack.c.l.b16 %v573
        %v1616 = vunpack.c.h.b16 %v573
        %v1617 = vunpack.c.l.b16 %v574
        %v1618 = vunpack.c.h.b16 %v574
        %v1619 = vunpack.c.l.b16 %v575
        %v1620 = vunpack.c.h.b16 %v575
        %v1621 = vunpack.c.l.b16 %v576
        %v1622 = vunpack.c.h.b16 %v576
        %v1623 = vunpack.c.l.b16 %v577
        %v1624 = vunpack.c.h.b16 %v577
        %v1625 = vunpack.c.l.b16 %v578
        %v1626 = vunpack.c.h.b16 %v578
        %v1627 = vunpack.c.l.b16 %v579
        %v1628 = vunpack.c.h.b16 %v579
        %v1629 = vunpack.c.l.b16 %v580
        %v1630 = vunpack.c.h.b16 %v580
        %v1631 = vunpack.c.l.b16 %v581
        %v1632 = vunpack.c.h.b16 %v581
        %v1633 = vunpack.c.l.b16 %v582
        %v1634 = vunpack.c.h.b16 %v582
        %v1635 = vunpack.c.l.b16 %v583
        %v1636 = vunpack.c.h.b16 %v583
        %v1637 = vunpack.c.l.b16 %v584
        %v1638 = vunpack.c.h.b16 %v584
        %v1639 = vunpack.c.l.b16 %v585
        %v1640 = vunpack.c.h.b16 %v585
        %v1641 = vunpack.c.l.b16 %v586
        %v1642 = vunpack.c.h.b16 %v586
        %v1643 = vunpack.c.l.b16 %v587
        %v1644 = vunpack.c.h.b16 %v587
        %v1645 = vunpack.c.l.b16 %v588
        %v1646 = vunpack.c.h.b16 %v588
        %v1647 = vunpack.c.l.b16 %v589
        %v1648 = vunpack.c.h.b16 %v589
        %v1649 = vunpack.c.l.b16 %v590
        %v1650 = vunpack.c.h.b16 %v590
        %v1651 = vunpack.c.l.b16 %v591
        %v1652 = vunpack.c.h.b16 %v591
        %v1653 = vunpack.c.l.b16 %v592
        %v1654 = vunpack.c.h.b16 %v592
        %v1655 = vunpack.c.l.b16 %v593
        %v1656 = vunpack.c.h.b16 %v593
        %v1657 = vunpack.c.l.b16 %v594
        %v1658 = vunpack.c.h.b16 %v594
        %v1659 = vunpack.c.l.b16 %v595
        %v1660 = vunpack.c.h.b16 %v595
        %v1661 = vunpack.c.l.b16 %v596
        %v1662 = vunpack.c.h.b16 %v596
        %v1663 = vunpack.c.l.b16 %v597
        %v1664 = vunpack.c.h.b16 %v597
        %v1665 = vunpack.c.l.b16 %v598
        %v1666 = vunpack.c.h.b16 %v598
        %v1667 = vunpack.c.l.b16 %v599
        %v1668 = vunpack.c.h.b16 %v599
        %v1669 = vunpack.c.l.b16 %v600
        %v1670 = vunpack.c.h.b16 %v600
        %v1671 = vunpack.c.l.b16 %v601
        %v1672 = vunpack.c.h.b16 %v601
        %v1673 = vunpack.c.l.b16 %v602
        %v1674 = vunpack.c.h.b16 %v602
        %v1675 = vunpack.c.l.b16 %v603
        %v1676 = vunpack.c.h.b16 %v603
        %v1677 = vunpack.c.l.b16 %v604
        %v1678 = vunpack.c.h.b16 %v604
        %v1679 = vunpack.c.l.b16 %v605
        %v1680 = vunpack.c.h.b16 %v605
        %v1681 = vunpack.c.l.b16 %v606
        %v1682 = vunpack.c.h.b16 %v606
        %v1683 = vunpack.c.l.b16 %v607
        %v1684 = vunpack.c.h.b16 %v607
        %v1685 = vunpack.c.l.b16 %v608
        %v1686 = vunpack.c.h.b16 %v608
        %v1687 = vunpack.c.l.b16 %v609
        %v1688 = vunpack.c.h.b16 %v609
        %v1689 = vunpack.c.l.b16 %v610
        %v1690 = vunpack.c.h.b16 %v610
        %v1691 = vunpack.c.l.b16 %v611
        %v1692 = vunpack.c.h.b16 %v611
        %v1693 = vunpack.c.l.b16 %v612
        %v1694 = vunpack.c.h.b16 %v612
        %v1695 = vunpack.c.l.b16 %v613
        %v1696 = vunpack.c.h.b16 %v613
        %v1697 = vunpack.c.l.b16 %v614
        %v1698 = vunpack.c.h.b16 %v614
        %v1699 = vunpack.c.l.b16 %v615
        %v1700 = vunpack.c.h.b16 %v615
        %v1701 = vunpack.c.l.b16 %v616
        %v1702 = vunpack.c.h.b16 %v616
        %v1703 = vunpack.c.l.b16 %v617
        %v1704 = vunpack.c.h.b16 %v617
        %v1705 = vunpack.c.l.b16 %v618
        %v1706 = vunpack.c.h.b16 %v618
        %v1707 = vunpack.c.l.b16 %v619
        %v1708 = vunpack.c.h.b16 %v619
        %v1709 = vunpack.c.l.b16 %v620
        %v1710 = vunpack.c.h.b16 %v620
        %v1711 = vunpack.c.l.b16 %v621
        %v1712 = vunpack.c.h.b16 %v621
        %v1713 = vunpack.c.l.b16 %v622
        %v1714 = vunpack.c.h.b16 %v622
        %v1715 = vunpack.c.l.b16 %v623
        %v1716 = vunpack.c.h.b16 %v623
        %v1717 = vunpack.c.l.b16 %v624
        %v1718 = vunpack.c.h.b16 %v624
        %v1719 = vunpack.c.l.b16 %v625
        %v1720 = vunpack.c.h.b16 %v625
        %v1721 = vunpack.c.l.b16 %v626
        %v1722 = vunpack.c.h.b16 %v626
        %v1723 = vunpack.c.l.b16 %v627
        %v1724 = vunpack.c.h.b16 %v627
        %v1725 = vunpack.c.l.b16 %v628
        %v1726 = vunpack.c.h.b16 %v628
        %v1727 = vunpack.c.l.b16 %v629
        %v1728 = vunpack.c.h.b16 %v629
        %v1729 = vunpack.c.l.b16 %v630
        %v1730 = vunpack.c.h.b16 %v630
        %v1731 = vunpack.c.l.b16 %v631
        %v1732 = vunpack.c.h.b16 %v631
        %v1733 = vunpack.c.l.b16 %v632
        %v1734 = vunpack.c.h.b16 %v632
        %v1735 = vunpack.c.l.b16 %v633
        %v1736 = vunpack.c.h.b16 %v633
        %v1737 = vunpack.c.l.b16 %v634
        %v1738 = vunpack.c.h.b16 %v634
        %v1739 = vunpack.c.l.b16 %v635
        %v1740 = vunpack.c.h.b16 %v635
        %v1741 = vunpack.c.l.b16 %v636
        %v1742 = vunpack.c.h.b16 %v636
        %v1743 = vunpack.c.l.b16 %v637
        %v1744 = vunpack.c.h.b16 %v637
        %v1745 = vunpack.c.l.b16 %v638
        %v1746 = vunpack.c.h.b16 %v638
        %v1747 = vunpack.c.l.b16 %v639
        %v1748 = vunpack.c.h.b16 %v639
        %v1749 = vunpack.c.l.b16 %v640
        %v1750 = vunpack.c.h.b16 %v640
        %v1751 = vunpack.c.l.b16 %v641
        %v1752 = vunpack.c.h.b16 %v641
        %v1753 = vunpack.c.l.b16 %v642
        %v1754 = vunpack.c.h.b16 %v642
        %v1755 = vunpack.c.l.b16 %v643
        %v1756 = vunpack.c.h.b16 %v643
        %v1757 = vunpack.c.l.b16 %v644
        %v1758 = vunpack.c.h.b16 %v644
        %v1759 = vunpack.c.l.b16 %v645
        %v1760 = vunpack.c.h.b16 %v645
        %v1761 = vunpack.c.l.b16 %v646
        %v1762 = vunpack.c.h.b16 %v646
        %v1763 = vunpack.c.l.b16 %v647
        %v1764 = vunpack.c.h.b16 %v647
        %v1765 = vunpack.c.l.b16 %v648
        %v1766 = vunpack.c.h.b16 %v648
        %v1767 = vunpack.c.l.b16 %v649
        %v1768 = vunpack.c.h.b16 %v649
        %v1769 = vunpack.c.l.b16 %v650
        %v1770 = vunpack.c.h.b16 %v650
        %v1771 = vunpack.c.l.b16 %v651
        %v1772 = vunpack.c.h.b16 %v651
        %v1773 = vunpack.c.l.b16 %v652
        %v1774 = vunpack.c.h.b16 %v652
        %v1775 = vunpack.c.l.b16 %v653
        %v1776 = vunpack.c.h.b16 %v653
        %v1777 = vunpack.c.l.b16 %v654
        %v1778 = vunpack.c.h.b16 %v654
        %v1779 = vunpack.c.l.b16 %v655
        %v1780 = vunpack.c.h.b16 %v655
        %v1781 = vunpack.c.l.b16 %v656
        %v1782 = vunpack.c.h.b16 %v656
        %v1783 = vunpack.c.l.b16 %v657
        %v1784 = vunpack.c.h.b16 %v657
        %v1785 = vunpack.c.l.b16 %v658
        %v1786 = vunpack.c.h.b16 %v658
        %v1787 = vunpack.c.l.b16 %v659
        %v1788 = vunpack.c.h.b16 %v659
        %v1789 = vunpack.c.l.b16 %v660
        %v1790 = vunpack.c.h.b16 %v660
        %v1791 = vunpack.c.l.b16 %v661
        %v1792 = vunpack.c.h.b16 %v661
        %v1793 = vunpack.c.l.b16 %v662
        %v1794 = vunpack.c.h.b16 %v662
        %v1795 = vunpack.c.l.b16 %v663
        %v1796 = vunpack.c.h.b16 %v663
        %v1797 = vunpack.c.l.b16 %v664
        %v1798 = vunpack.c.h.b16 %v664
        %v1799 = vunpack.c.l.b16 %v665
        %v1800 = vunpack.c.h.b16 %v665
        %v1801 = vunpack.c.l.b16 %v666
        %v1802 = vunpack.c.h.b16 %v666
        %v1803 = vunpack.c.l.b16 %v667
        %v1804 = vunpack.c.h.b16 %v667
        %v1805 = vunpack.c.l.b16 %v668
        %v1806 = vunpack.c.h.b16 %v668
        %v1807 = vunpack.c.l.b16 %v669
        %v1808 = vunpack.c.h.b16 %v669
        %v1809 = vunpack.c.l.b16 %v670
        %v1810 = vunpack.c.h.b16 %v670
        %v1811 = vunpack.c.l.b16 %v671
        %v1812 = vunpack.c.h.b16 %v671
        %v1813 = vunpack.c.l.b16 %v672
        %v1814 = vunpack.c.h.b16 %v672
        %v1815 = vunpack.c.l.b16 %v673
        %v1816 = vunpack.c.h.b16 %v673
        %v1817 = vunpack.c.l.b16 %v674
        %v1818 = vunpack.c.h.b16 %v674
        %v1819 = vunpack.c.l.b16 %v675
        %v1820 = vunpack.c.h.b16 %v675
        %v1821 = vunpack.c.l.b16 %v676
        %v1822 = vunpack.c.h.b16 %v676
        %v1823 = vunpack.c.l.b16 %v677
        %v1824 = vunpack.c.h.b16 %v677
        %v1825 = vunpack.c.l.b16 %v678
        %v1826 = vunpack.c.h.b16 %v678
        %v1827 = vunpack.c.l.b16 %v679
        %v1828 = vunpack.c.h.b16 %v679
        %v1829 = vunpack.c.l.b16 %v680
        %v1830 = vunpack.c.h.b16 %v680
        %v1831 = vunpack.c.l.b16 %v681
        %v1832 = vunpack.c.h.b16 %v681
        %v1833 = vunpack.c.l.b16 %v682
        %v1834 = vunpack.c.h.b16 %v682
        %v1835 = vunpack.c.l.b16 %v683
        %v1836 = vunpack.c.h.b16 %v683
        %v1837 = vunpack.c.l.b16 %v684
        %v1838 = vunpack.c.h.b16 %v684
        %v1839 = vunpack.c.l.b16 %v685
        %v1840 = vunpack.c.h.b16 %v685
        %v1841 = vunpack.c.l.b16 %v686
        %v1842 = vunpack.c.h.b16 %v686
        %v1843 = vunpack.c.l.b16 %v687
        %v1844 = vunpack.c.h.b16 %v687
        %v1845 = vunpack.c.l.b16 %v688
        %v1846 = vunpack.c.h.b16 %v688
        %v1847 = vunpack.c.l.b16 %v689
        %v1848 = vunpack.c.h.b16 %v689
        %v1849 = vunpack.c.l.b16 %v690
        %v1850 = vunpack.c.h.b16 %v690
        %v1851 = vunpack.c.l.b16 %v691
        %v1852 = vunpack.c.h.b16 %v691
        %v1853 = vunpack.c.l.b16 %v692
        %v1854 = vunpack.c.h.b16 %v692
        %v1855 = vunpack.c.l.b16 %v693
        %v1856 = vunpack.c.h.b16 %v693
        %v1857 = vunpack.c.l.b16 %v694
        %v1858 = vunpack.c.h.b16 %v694
        %v1859 = vunpack.c.l.b16 %v695
        %v1860 = vunpack.c.h.b16 %v695
        %v1861 = vunpack.c.l.b16 %v696
        %v1862 = vunpack.c.h.b16 %v696
        %v1863 = vunpack.c.l.b16 %v697
        %v1864 = vunpack.c.h.b16 %v697
        %v1865 = vunpack.c.l.b16 %v698
        %v1866 = vunpack.c.h.b16 %v698
        %v1867 = vunpack.c.l.b16 %v699
        %v1868 = vunpack.c.h.b16 %v699
        %v1869 = vunpack.c.l.b16 %v700
        %v1870 = vunpack.c.h.b16 %v700
        %v1871 = vunpack.c.l.b16 %v701
        %v1872 = vunpack.c.h.b16 %v701
        %v1873 = vunpack.c.l.b16 %v702
        %v1874 = vunpack.c.h.b16 %v702
        %v1875 = vunpack.c.l.b16 %v703
        %v1876 = vunpack.c.h.b16 %v703
        %v1877 = vunpack.c.l.b16 %v704
        %v1878 = vunpack.c.h.b16 %v704
        %v1879 = vunpack.c.l.b16 %v705
        %v1880 = vunpack.c.h.b16 %v705
        %v1881 = vunpack.c.l.b16 %v706
        %v1882 = vunpack.c.h.b16 %v706
        %v1883 = vunpack.c.l.b16 %v707
        %v1884 = vunpack.c.h.b16 %v707
        %v1885 = vunpack.c.l.b16 %v708
        %v1886 = vunpack.c.h.b16 %v708
        %v1887 = vunpack.c.l.b16 %v709
        %v1888 = vunpack.c.h.b16 %v709
        %v1889 = vunpack.c.l.b16 %v710
        %v1890 = vunpack.c.h.b16 %v710
        %v1891 = vunpack.c.l.b16 %v711
        %v1892 = vunpack.c.h.b16 %v711
        %v1893 = vunpack.c.l.b16 %v712
        %v1894 = vunpack.c.h.b16 %v712
        %v1895 = vunpack.c.l.b16 %v713
        %v1896 = vunpack.c.h.b16 %v713
        %v1897 = vunpack.c.l.b16 %v714
        %v1898 = vunpack.c.h.b16 %v714
        %v1899 = vunpack.c.l.b16 %v715
        %v1900 = vunpack.c.h.b16 %v715
        %v1901 = vunpack.c.l.b16 %v716
        %v1902 = vunpack.c.h.b16 %v716
        %v1903 = vunpack.c.l.b16 %v717
        %v1904 = vunpack.c.h.b16 %v717
        %v1905 = vunpack.c.l.b16 %v718
        %v1906 = vunpack.c.h.b16 %v718
        %v1907 = vunpack.c.l.b16 %v719
        %v1908 = vunpack.c.h.b16 %v719
        %v1909 = vunpack.c.l.b16 %v720
        %v1910 = vunpack.c.h.b16 %v720
        %v1911 = vunpack.c.l.b16 %v721
        %v1912 = vunpack.c.h.b16 %v721
        %v1913 = vunpack.c.l.b16 %v722
        %v1914 = vunpack.c.h.b16 %v722
        %v1915 = vunpack.c.l.b16 %v723
        %v1916 = vunpack.c.h.b16 %v723
        %v1917 = vunpack.c.l.b16 %v724
        %v1918 = vunpack.c.h.b16 %v724
        %v1919 = vunpack.c.l.b16 %v725
        %v1920 = vunpack.c.h.b16 %v725
        %v1921 = vunpack.c.l.b16 %v726
        %v1922 = vunpack.c.h.b16 %v726
        %v1923 = vunpack.c.l.b16 %v727
        %v1924 = vunpack.c.h.b16 %v727
        %v1925 = vunpack.c.l.b16 %v728
        %v1926 = vunpack.c.h.b16 %v728
        %v1927 = vunpack.c.l.b16 %v729
        %v1928 = vunpack.c.h.b16 %v729
        %v1929 = vunpack.c.l.b16 %v730
        %v1930 = vunpack.c.h.b16 %v730
        %v1931 = vunpack.c.l.b16 %v731
        %v1932 = vunpack.c.h.b16 %v731
        %v1933 = vunpack.c.l.b16 %v732
        %v1934 = vunpack.c.h.b16 %v732
        %v1935 = vunpack.c.l.b16 %v733
        %v1936 = vunpack.c.h.b16 %v733
        %v1937 = vunpack.c.l.b16 %v734
        %v1938 = vunpack.c.h.b16 %v734
        %v1939 = vunpack.c.l.b16 %v735
        %v1940 = vunpack.c.h.b16 %v735
        %v1941 = vunpack.c.l.b16 %v736
        %v1942 = vunpack.c.h.b16 %v736
        %v1943 = vunpack.c.l.b16 %v737
        %v1944 = vunpack.c.h.b16 %v737
        %v1945 = vunpack.c.l.b16 %v738
        %v1946 = vunpack.c.h.b16 %v738
        %v1947 = vunpack.c.l.b16 %v739
        %v1948 = vunpack.c.h.b16 %v739
        %v1949 = vunpack.c.l.b16 %v740
        %v1950 = vunpack.c.h.b16 %v740
        %v1951 = vunpack.c.l.b16 %v741
        %v1952 = vunpack.c.h.b16 %v741
        %v1953 = vunpack.c.l.b16 %v742
        %v1954 = vunpack.c.h.b16 %v742
        %v1955 = vunpack.c.l.b16 %v743
        %v1956 = vunpack.c.h.b16 %v743
        %v1957 = vunpack.c.l.b16 %v744
        %v1958 = vunpack.c.h.b16 %v744
        %v1959 = vunpack.c.l.b16 %v745
        %v1960 = vunpack.c.h.b16 %v745
        %v1961 = vunpack.c.l.b16 %v746
        %v1962 = vunpack.c.h.b16 %v746
        %v1963 = vunpack.c.l.b16 %v747
        %v1964 = vunpack.c.h.b16 %v747
        %v1965 = vunpack.c.l.b16 %v748
        %v1966 = vunpack.c.h.b16 %v748
        %v1967 = vunpack.c.l.b16 %v749
        %v1968 = vunpack.c.h.b16 %v749
        %v1969 = vunpack.c.l.b16 %v750
        %v1970 = vunpack.c.h.b16 %v750
        %v1971 = vunpack.c.l.b16 %v751
        %v1972 = vunpack.c.h.b16 %v751
        %v1973 = vunpack.c.l.b16 %v752
        %v1974 = vunpack.c.h.b16 %v752
        %v1975 = vunpack.c.l.b16 %v753
        %v1976 = vunpack.c.h.b16 %v753
        %v1977 = vunpack.c.l.b16 %v754
        %v1978 = vunpack.c.h.b16 %v754
        %v1979 = vunpack.c.l.b16 %v755
        %v1980 = vunpack.c.h.b16 %v755
        %v1981 = vunpack.c.l.b16 %v756
        %v1982 = vunpack.c.h.b16 %v756
        %v1983 = vunpack.c.l.b16 %v757
        %v1984 = vunpack.c.h.b16 %v757
        %v1985 = vunpack.c.l.b16 %v758
        %v1986 = vunpack.c.h.b16 %v758
        %v1987 = vunpack.c.l.b16 %v759
        %v1988 = vunpack.c.h.b16 %v759
        %v1989 = vunpack.c.l.b16 %v760
        %v1990 = vunpack.c.h.b16 %v760
        %v1991 = vunpack.c.l.b16 %v761
        %v1992 = vunpack.c.h.b16 %v761
        %v1993 = vunpack.c.l.b16 %v762
        %v1994 = vunpack.c.h.b16 %v762
        %v1995 = vunpack.c.l.b16 %v763
        %v1996 = vunpack.c.h.b16 %v763
        %v1997 = vunpack.c.l.b16 %v764
        %v1998 = vunpack.c.h.b16 %v764
        %v1999 = vunpack.c.l.b16 %v765
        %v2000 = vunpack.c.h.b16 %v765
        %v2001 = vunpack.c.l.b16 %v766
        %v2002 = vunpack.c.h.b16 %v766
        %v2003 = vunpack.c.l.b16 %v767
        %v2004 = vunpack.c.h.b16 %v767
        %v2005 = vunpack.c.l.b16 %v768
        %v2006 = vunpack.c.h.b16 %v768
        %v2007 = vunpack.c.l.b16 %v769
        %v2008 = vunpack.c.h.b16 %v769
        %v2009 = vunpack.c.l.b16 %v770
        %v2010 = vunpack.c.h.b16 %v770
        %v2011 = vunpack.c.l.b16 %v771
        %v2012 = vunpack.c.h.b16 %v771
        %v2013 = vunpack.c.l.b16 %v772
        %v2014 = vunpack.c.h.b16 %v772
        %v2015 = vunpack.c.l.b16 %v773
        %v2016 = vunpack.c.h.b16 %v773
        %v2017 = vunpack.c.l.b16 %v774
        %v2018 = vunpack.c.h.b16 %v774
        %v2019 = vunpack.c.l.b16 %v775
        %v2020 = vunpack.c.h.b16 %v775
        %v2021 = vunpack.c.l.b16 %v776
        %v2022 = vunpack.c.h.b16 %v776
        %v2023 = vunpack.c.l.b16 %v777
        %v2024 = vunpack.c.h.b16 %v777
        %v2025 = vunpack.c.l.b16 %v778
        %v2026 = vunpack.c.h.b16 %v778
        %v2027 = vunpack.c.l.b16 %v779
        %v2028 = vunpack.c.h.b16 %v779
        %v2029 = vunpack.c.l.b16 %v780
        %v2030 = vunpack.c.h.b16 %v780
        %v2031 = vunpack.c.l.b16 %v781
        %v2032 = vunpack.c.h.b16 %v781
        %v2033 = vunpack.c.l.b16 %v782
        %v2034 = vunpack.c.h.b16 %v782
        %v2035 = vunpack.c.l.b16 %v783
        %v2036 = vunpack.c.h.b16 %v783
        %v2037 = vunpack.c.l.b16 %v784
        %v2038 = vunpack.c.h.b16 %v784
        %v2039 = vunpack.c.l.b16 %v785
        %v2040 = vunpack.c.h.b16 %v785
        %v2041 = vunpack.c.l.b16 %v786
        %v2042 = vunpack.c.h.b16 %v786
        %v2043 = vunpack.c.l.b16 %v787
        %v2044 = vunpack.c.h.b16 %v787
        %v2045 = vunpack.c.l.b16 %v788
        %v2046 = vunpack.c.h.b16 %v788
        %v2047 = vunpack.c.l.b16 %v789
        %v2048 = vunpack.c.h.b16 %v789
        %v2049 = vunpack.c.l.b16 %v790
        %v2050 = vunpack.c.h.b16 %v790
        %v2051 = vunpack.c.l.b16 %v791
        %v2052 = vunpack.c.h.b16 %v791
        %v2053 = vunpack.c.l.b16 %v792
        %v2054 = vunpack.c.h.b16 %v792
        %v2055 = vunpack.c.l.b16 %v793
        %v2056 = vunpack.c.h.b16 %v793
        %v2057 = vunpack.c.l.b16 %v794
        %v2058 = vunpack.c.h.b16 %v794
        %v2059 = vunpack.c.l.b16 %v795
        %v2060 = vunpack.c.h.b16 %v795
        %v2061 = vunpack.c.l.b16 %v796
        %v2062 = vunpack.c.h.b16 %v796
        %v2063 = vunpack.c.l.b16 %v797
        %v2064 = vunpack.c.h.b16 %v797
        %v2065 = vunpack.c.l.b16 %v798
        %v2066 = vunpack.c.h.b16 %v798
        %v2067 = vunpack.c.l.b16 %v799
        %v2068 = vunpack.c.h.b16 %v799
        %v2069 = vunpack.c.l.b16 %v800
        %v2070 = vunpack.c.h.b16 %v800
        %v2071 = vunpack.c.l.b16 %v801
        %v2072 = vunpack.c.h.b16 %v801
        %v2073 = vunpack.c.l.b16 %v802
        %v2074 = vunpack.c.h.b16 %v802
        %v2075 = vpack.c.b16 %v1311, %v1307
        %v2076 = vpack.c.b16 %v1312, %v1308
        %v2077 = vpack.c.b16 %v1313, %v1309
        %v2078 = vpack.c.b16 %v1314, %v1310
        %v2079 = vpack.c.b16 %v1319, %v1315
        %v2080 = vpack.c.b16 %v1320, %v1316
        %v2081 = vpack.c.b16 %v1321, %v1317
        %v2082 = vpack.c.b16 %v1322, %v1318
        %v2083 = vpack.c.b16 %v1327, %v1323
        %v2084 = vpack.c.b16 %v1328, %v1324
        %v2085 = vpack.c.b16 %v1329, %v1325
        %v2086 = vpack.c.b16 %v1330, %v1326
        %v2087 = vpack.c.b16 %v1335, %v1331
        %v2088 = vpack.c.b16 %v1336, %v1332
        %v2089 = vpack.c.b16 %v1337, %v1333
        %v2090 = vpack.c.b16 %v1338, %v1334
        %v2091 = vpack.c.b16 %v1343, %v1339
        %v2092 = vpack.c.b16 %v1344, %v1340
        %v2093 = vpack.c.b16 %v1345, %v1341
        %v2094 = vpack.c.b16 %v1346, %v1342
        %v2095 = vpack.c.b16 %v1351, %v1347
        %v2096 = vpack.c.b16 %v1352, %v1348
        %v2097 = vpack.c.b16 %v1353, %v1349
        %v2098 = vpack.c.b16 %v1354, %v1350
        %v2099 = vpack.c.b16 %v1359, %v1355
        %v2100 = vpack.c.b16 %v1360, %v1356
        %v2101 = vpack.c.b16 %v1361, %v1357
        %v2102 = vpack.c.b16 %v1362, %v1358
        %v2103 = vpack.c.b16 %v1367, %v1363
        %v2104 = vpack.c.b16 %v1368, %v1364
        %v2105 = vpack.c.b16 %v1369, %v1365
        %v2106 = vpack.c.b16 %v1370, %v1366
        %v2107 = vpack.c.b16 %v1375, %v1371
        %v2108 = vpack.c.b16 %v1376, %v1372
        %v2109 = vpack.c.b16 %v1377, %v1373
        %v2110 = vpack.c.b16 %v1378, %v1374
        %v2111 = vpack.c.b16 %v1383, %v1379
        %v2112 = vpack.c.b16 %v1384, %v1380
        %v2113 = vpack.c.b16 %v1385, %v1381
        %v2114 = vpack.c.b16 %v1386, %v1382
        %v2115 = vpack.c.b16 %v1391, %v1387
        %v2116 = vpack.c.b16 %v1392, %v1388
        %v2117 = vpack.c.b16 %v1393, %v1389
        %v2118 = vpack.c.b16 %v1394, %v1390
        %v2119 = vpack.c.b16 %v1399, %v1395
        %v2120 = vpack.c.b16 %v1400, %v1396
        %v2121 = vpack.c.b16 %v1401, %v1397
        %v2122 = vpack.c.b16 %v1402, %v1398
        %v2123 = vpack.c.b16 %v1407, %v1403
        %v2124 = vpack.c.b16 %v1408, %v1404
        %v2125 = vpack.c.b16 %v1409, %v1405
        %v2126 = vpack.c.b16 %v1410, %v1406
        %v2127 = vpack.c.b16 %v1415, %v1411
        %v2128 = vpack.c.b16 %v1416, %v1412
        %v2129 = vpack.c.b16 %v1417, %v1413
        %v2130 = vpack.c.b16 %v1418, %v1414
        %v2131 = vpack.c.b16 %v1423, %v1419
        %v2132 = vpack.c.b16 %v1424, %v1420
        %v2133 = vpack.c.b16 %v1425, %v1421
        %v2134 = vpack.c.b16 %v1426, %v1422
        %v2135 = vpack.c.b16 %v1431, %v1427
        %v2136 = vpack.c.b16 %v1432, %v1428
        %v2137 = vpack.c.b16 %v1433, %v1429
        %v2138 = vpack.c.b16 %v1434, %v1430
        %v2139 = vpack.c.b16 %v1439, %v1435
        %v2140 = vpack.c.b16 %v1440, %v1436
        %v2141 = vpack.c.b16 %v1441, %v1437
        %v2142 = vpack.c.b16 %v1442, %v1438
        %v2143 = vpack.c.b16 %v1447, %v1443
        %v2144 = vpack.c.b16 %v1448, %v1444
        %v2145 = vpack.c.b16 %v1449, %v1445
        %v2146 = vpack.c.b16 %v1450, %v1446
        %v2147 = vpack.c.b16 %v1455, %v1451
        %v2148 = vpack.c.b16 %v1456, %v1452
        %v2149 = vpack.c.b16 %v1457, %v1453
        %v2150 = vpack.c.b16 %v1458, %v1454
        %v2151 = vpack.c.b16 %v1463, %v1459
        %v2152 = vpack.c.b16 %v1464, %v1460
        %v2153 = vpack.c.b16 %v1465, %v1461
        %v2154 = vpack.c.b16 %v1466, %v1462
        %v2155 = vpack.c.b16 %v1471, %v1467
        %v2156 = vpack.c.b16 %v1472, %v1468
        %v2157 = vpack.c.b16 %v1473, %v1469
        %v2158 = vpack.c.b16 %v1474, %v1470
        %v2159 = vpack.c.b16 %v1479, %v1475
        %v2160 = vpack.c.b16 %v1480, %v1476
        %v2161 = vpack.c.b16 %v1481, %v1477
        %v2162 = vpack.c.b16 %v1482, %v1478
        %v2163 = vpack.c.b16 %v1487, %v1483
        %v2164 = vpack.c.b16 %v1488, %v1484
        %v2165 = vpack.c.b16 %v1489, %v1485
        %v2166 = vpack.c.b16 %v1490, %v1486
        %v2167 = vpack.c.b16 %v1495, %v1491
        %v2168 = vpack.c.b16 %v1496, %v1492
        %v2169 = vpack.c.b16 %v1497, %v1493
        %v2170 = vpack.c.b16 %v1498, %v1494
        %v2171 = vpack.c.b16 %v1503, %v1499
        %v2172 = vpack.c.b16 %v1504, %v1500
        %v2173 = vpack.c.b16 %v1505, %v1501
        %v2174 = vpack.c.b16 %v1506, %v1502
        %v2175 = vpack.c.b16 %v1511, %v1507
        %v2176 = vpack.c.b16 %v1512, %v1508
        %v2177 = vpack.c.b16 %v1513, %v1509
        %v2178 = vpack.c.b16 %v1514, %v1510
        %v2179 = vpack.c.b16 %v1519, %v1515
        %v2180 = vpack.c.b16 %v1520, %v1516
        %v2181 = vpack.c.b16 %v1521, %v1517
        %v2182 = vpack.c.b16 %v1522, %v1518
        %v2183 = vpack.c.b16 %v1527, %v1523
        %v2184 = vpack.c.b16 %v1528, %v1524
        %v2185 = vpack.c.b16 %v1529, %v1525
        %v2186 = vpack.c.b16 %v1530, %v1526
        %v2187 = vpack.c.b16 %v1535, %v1531
        %v2188 = vpack.c.b16 %v1536, %v1532
        %v2189 = vpack.c.b16 %v1537, %v1533
        %v2190 = vpack.c.b16 %v1538, %v1534
        %v2191 = vpack.c.b16 %v1543, %v1539
        %v2192 = vpack.c.b16 %v1544, %v1540
        %v2193 = vpack.c.b16 %v1545, %v1541
        %v2194 = vpack.c.b16 %v1546, %v1542
        %v2195 = vpack.c.b16 %v1551, %v1547
        %v2196 = vpack.c.b16 %v1552, %v1548
        %v2197 = vpack.c.b16 %v1553, %v1549
        %v2198 = vpack.c.b16 %v1554, %v1550
        %v2199 = vpack.c.b16 %v1559, %v1555
        %v2200 = vpack.c.b16 %v1560, %v1556
        %v2201 = vpack.c.b16 %v1561, %v1557
        %v2202 = vpack.c.b16 %v1562, %v1558
        %v2203 = vpack.c.b16 %v1567, %v1563
        %v2204 = vpack.c.b16 %v1568, %v1564
        %v2205 = vpack.c.b16 %v1569, %v1565
        %v2206 = vpack.c.b16 %v1570, %v1566
        %v2207 = vpack.c.b16 %v1575, %v1571
        %v2208 = vpack.c.b16 %v1576, %v1572
        %v2209 = vpack.c.b16 %v1577, %v1573
        %v2210 = vpack.c.b16 %v1578, %v1574
        %v2211 = vpack.c.b16 %v1583, %v1579
        %v2212 = vpack.c.b16 %v1584, %v1580
        %v2213 = vpack.c.b16 %v1585, %v1581
        %v2214 = vpack.c.b16 %v1586, %v1582
        %v2215 = vpack.c.b16 %v1591, %v1587
        %v2216 = vpack.c.b16 %v1592, %v1588
        %v2217 = vpack.c.b16 %v1593, %v1589
        %v2218 = vpack.c.b16 %v1594, %v1590
        %v2219 = vpack.c.b16 %v1599, %v1595
        %v2220 = vpack.c.b16 %v1600, %v1596
        %v2221 = vpack.c.b16 %v1601, %v1597
        %v2222 = vpack.c.b16 %v1602, %v1598
        %v2223 = vpack.c.b16 %v1607, %v1603
        %v2224 = vpack.c.b16 %v1608, %v1604
        %v2225 = vpack.c.b16 %v1609, %v1605
        %v2226 = vpack.c.b16 %v1610, %v1606
        %v2227 = vpack.c.b16 %v1615, %v1611
        %v2228 = vpack.c.b16 %v1616, %v1612
        %v2229 = vpack.c.b16 %v1617, %v1613
        %v2230 = vpack.c.b16 %v1618, %v1614
        %v2231 = vpack.c.b16 %v1623, %v1619
        %v2232 = vpack.c.b16 %v1624, %v1620
        %v2233 = vpack.c.b16 %v1625, %v1621
        %v2234 = vpack.c.b16 %v1626, %v1622
        %v2235 = vpack.c.b16 %v1631, %v1627
        %v2236 = vpack.c.b16 %v1632, %v1628
        %v2237 = vpack.c.b16 %v1633, %v1629
        %v2238 = vpack.c.b16 %v1634, %v1630
        %v2239 = vpack.c.b16 %v1639, %v1635
        %v2240 = vpack.c.b16 %v1640, %v1636
        %v2241 = vpack.c.b16 %v1641, %v1637
        %v2242 = vpack.c.b16 %v1642, %v1638
        %v2243 = vpack.c.b16 %v1647, %v1643
        %v2244 = vpack.c.b16 %v1648, %v1644
        %v2245 = vpack.c.b16 %v1649, %v1645
        %v2246 = vpack.c.b16 %v1650, %v1646
        %v2247 = vpack.c.b16 %v1655, %v1651
        %v2248 = vpack.c.b16 %v1656, %v1652
        %v2249 = vpack.c.b16 %v1657, %v1653
        %v2250 = vpack.c.b16 %v1658, %v1654
        %v2251 = vpack.c.b16 %v1663, %v1659
        %v2252 = vpack.c.b16 %v1664, %v1660
        %v2253 = vpack.c.b16 %v1665, %v1661
        %v2254 = vpack.c.b16 %v1666, %v1662
        %v2255 = vpack.c.b16 %v1671, %v1667
        %v2256 = vpack.c.b16 %v1672, %v1668
        %v2257 = vpack.c.b16 %v1673, %v1669
        %v2258 = vpack.c.b16 %v1674, %v1670
        %v2259 = vpack.c.b16 %v1679, %v1675
        %v2260 = vpack.c.b16 %v1680, %v1676
        %v2261 = vpack.c.b16 %v1681, %v1677
        %v2262 = vpack.c.b16 %v1682, %v1678
        %v2263 = vpack.c.b16 %v1687, %v1683
        %v2264 = vpack.c.b16 %v1688, %v1684
        %v2265 = vpack.c.b16 %v1689, %v1685
        %v2266 = vpack.c.b16 %v1690, %v1686
        %v2267 = vpack.c.b16 %v1695, %v1691
        %v2268 = vpack.c.b16 %v1696, %v1692
        %v2269 = vpack.c.b16 %v1697, %v1693
        %v2270 = vpack.c.b16 %v1698, %v1694
        %v2271 = vpack.c.b16 %v1703, %v1699
        %v2272 = vpack.c.b16 %v1704, %v1700
        %v2273 = vpack.c.b16 %v1705, %v1701
        %v2274 = vpack.c.b16 %v1706, %v1702
        %v2275 = vpack.c.b16 %v1711, %v1707
        %v2276 = vpack.c.b16 %v1712, %v1708
        %v2277 = vpack.c.b16 %v1713, %v1709
        %v2278 = vpack.c.b16 %v1714, %v1710
        %v2279 = vpack.c.b16 %v1719, %v1715
        %v2280 = vpack.c.b16 %v1720, %v1716
        %v2281 = vpack.c.b16 %v1721, %v1717
        %v2282 = vpack.c.b16 %v1722, %v1718
        %v2283 = vpack.c.b16 %v1727, %v1723
        %v2284 = vpack.c.b16 %v1728, %v1724
        %v2285 = vpack.c.b16 %v1729, %v1725
        %v2286 = vpack.c.b16 %v1730, %v1726
        %v2287 = vpack.c.b16 %v1735, %v1731
        %v2288 = vpack.c.b16 %v1736, %v1732
        %v2289 = vpack.c.b16 %v1737, %v1733
        %v2290 = vpack.c.b16 %v1738, %v1734
        %v2291 = vpack.c.b16 %v1743, %v1739
        %v2292 = vpack.c.b16 %v1744, %v1740
        %v2293 = vpack.c.b16 %v1745, %v1741
        %v2294 = vpack.c.b16 %v1746, %v1742
        %v2295 = vpack.c.b16 %v1751, %v1747
        %v2296 = vpack.c.b16 %v1752, %v1748
        %v2297 = vpack.c.b16 %v1753, %v1749
        %v2298 = vpack.c.b16 %v1754, %v1750
        %v2299 = vpack.c.b16 %v1759, %v1755
        %v2300 = vpack.c.b16 %v1760, %v1756
        %v2301 = vpack.c.b16 %v1761, %v1757
        %v2302 = vpack.c.b16 %v1762, %v1758
        %v2303 = vpack.c.b16 %v1767, %v1763
        %v2304 = vpack.c.b16 %v1768, %v1764
        %v2305 = vpack.c.b16 %v1769, %v1765
        %v2306 = vpack.c.b16 %v1770, %v1766
        %v2307 = vpack.c.b16 %v1775, %v1771
        %v2308 = vpack.c.b16 %v1776, %v1772
        %v2309 = vpack.c.b16 %v1777, %v1773
        %v2310 = vpack.c.b16 %v1778, %v1774
        %v2311 = vpack.c.b16 %v1783, %v1779
        %v2312 = vpack.c.b16 %v1784, %v1780
        %v2313 = vpack.c.b16 %v1785, %v1781
        %v2314 = vpack.c.b16 %v1786, %v1782
        %v2315 = vpack.c.b16 %v1791, %v1787
        %v2316 = vpack.c.b16 %v1792, %v1788
        %v2317 = vpack.c.b16 %v1793, %v1789
        %v2318 = vpack.c.b16 %v1794, %v1790
        %v2319 = vpack.c.b16 %v1799, %v1795
        %v2320 = vpack.c.b16 %v1800, %v1796
        %v2321 = vpack.c.b16 %v1801, %v1797
        %v2322 = vpack.c.b16 %v1802, %v1798
        %v2323 = vpack.c.b16 %v1807, %v1803
        %v2324 = vpack.c.b16 %v1808, %v1804
        %v2325 = vpack.c.b16 %v1809, %v1805
        %v2326 = vpack.c.b16 %v1810, %v1806
        %v2327 = vpack.c.b16 %v1815, %v1811
        %v2328 = vpack.c.b16 %v1816, %v1812
        %v2329 = vpack.c.b16 %v1817, %v1813
        %v2330 = vpack.c.b16 %v1818, %v1814
        %v2331 = vpack.c.b16 %v1823, %v1819
        %v2332 = vpack.c.b16 %v1824, %v1820
        %v2333 = vpack.c.b16 %v1825, %v1821
        %v2334 = vpack.c.b16 %v1826, %v1822
        %v2335 = vpack.c.b16 %v1831, %v1827
        %v2336 = vpack.c.b16 %v1832, %v1828
        %v2337 = vpack.c.b16 %v1833, %v1829
        %v2338 = vpack.c.b16 %v1834, %v1830
        %v2339 = vpack.c.b16 %v1839, %v1835
        %v2340 = vpack.c.b16 %v1840, %v1836
        %v2341 = vpack.c.b16 %v1841, %v1837
        %v2342 = vpack.c.b16 %v1842, %v1838
        %v2343 = vpack.c.b16 %v1847, %v1843
        %v2344 = vpack.c.b16 %v1848, %v1844
        %v2345 = vpack.c.b16 %v1849, %v1845
        %v2346 = vpack.c.b16 %v1850, %v1846
        %v2347 = vpack.c.b16 %v1855, %v1851
        %v2348 = vpack.c.b16 %v1856, %v1852
        %v2349 = vpack.c.b16 %v1857, %v1853
        %v2350 = vpack.c.b16 %v1858, %v1854
        %v2351 = vpack.c.b16 %v1863, %v1859
        %v2352 = vpack.c.b16 %v1864, %v1860
        %v2353 = vpack.c.b16 %v1865, %v1861
        %v2354 = vpack.c.b16 %v1866, %v1862
        %v2355 = vpack.c.b16 %v1871, %v1867
        %v2356 = vpack.c.b16 %v1872, %v1868
        %v2357 = vpack.c.b16 %v1873, %v1869
        %v2358 = vpack.c.b16 %v1874, %v1870
        %v2359 = vpack.c.b16 %v1879, %v1875
        %v2360 = vpack.c.b16 %v1880, %v1876
        %v2361 = vpack.c.b16 %v1881, %v1877
        %v2362 = vpack.c.b16 %v1882, %v1878
        %v2363 = vpack.c.b16 %v1887, %v1883
        %v2364 = vpack.c.b16 %v1888, %v1884
        %v2365 = vpack.c.b16 %v1889, %v1885
        %v2366 = vpack.c.b16 %v1890, %v1886
        %v2367 = vpack.c.b16 %v1895, %v1891
        %v2368 = vpack.c.b16 %v1896, %v1892
        %v2369 = vpack.c.b16 %v1897, %v1893
        %v2370 = vpack.c.b16 %v1898, %v1894
        %v2371 = vpack.c.b16 %v1903, %v1899
        %v2372 = vpack.c.b16 %v1904, %v1900
        %v2373 = vpack.c.b16 %v1905, %v1901
        %v2374 = vpack.c.b16 %v1906, %v1902
        %v2375 = vpack.c.b16 %v1911, %v1907
        %v2376 = vpack.c.b16 %v1912, %v1908
        %v2377 = vpack.c.b16 %v1913, %v1909
        %v2378 = vpack.c.b16 %v1914, %v1910
        %v2379 = vpack.c.b16 %v1919, %v1915
        %v2380 = vpack.c.b16 %v1920, %v1916
        %v2381 = vpack.c.b16 %v1921, %v1917
        %v2382 = vpack.c.b16 %v1922, %v1918
        %v2383 = vpack.c.b16 %v1927, %v1923
        %v2384 = vpack.c.b16 %v1928, %v1924
        %v2385 = vpack.c.b16 %v1929, %v1925
        %v2386 = vpack.c.b16 %v1930, %v1926
        %v2387 = vpack.c.b16 %v1935, %v1931
        %v2388 = vpack.c.b16 %v1936, %v1932
        %v2389 = vpack.c.b16 %v1937, %v1933
        %v2390 = vpack.c.b16 %v1938, %v1934
        %v2391 = vpack.c.b16 %v1943, %v1939
        %v2392 = vpack.c.b16 %v1944, %v1940
        %v2393 = vpack.c.b16 %v1945, %v1941
        %v2394 = vpack.c.b16 %v1946, %v1942
        %v2395 = vpack.c.b16 %v1951, %v1947
        %v2396 = vpack.c.b16 %v1952, %v1948
        %v2397 = vpack.c.b16 %v1953, %v1949
        %v2398 = vpack.c.b16 %v1954, %v1950
        %v2399 = vpack.c.b16 %v1959, %v1955
        %v2400 = vpack.c.b16 %v1960, %v1956
        %v2401 = vpack.c.b16 %v1961, %v1957
        %v2402 = vpack.c.b16 %v1962, %v1958
        %v2403 = vpack.c.b16 %v1967, %v1963
        %v2404 = vpack.c.b16 %v1968, %v1964
        %v2405 = vpack.c.b16 %v1969, %v1965
        %v2406 = vpack.c.b16 %v1970, %v1966
        %v2407 = vpack.c.b16 %v1975, %v1971
        %v2408 = vpack.c.b16 %v1976, %v1972
        %v2409 = vpack.c.b16 %v1977, %v1973
        %v2410 = vpack.c.b16 %v1978, %v1974
        %v2411 = vpack.c.b16 %v1983, %v1979
        %v2412 = vpack.c.b16 %v1984, %v1980
        %v2413 = vpack.c.b16 %v1985, %v1981
        %v2414 = vpack.c.b16 %v1986, %v1982
        %v2415 = vpack.c.b16 %v1991, %v1987
        %v2416 = vpack.c.b16 %v1992, %v1988
        %v2417 = vpack.c.b16 %v1993, %v1989
        %v2418 = vpack.c.b16 %v1994, %v1990
        %v2419 = vpack.c.b16 %v1999, %v1995
        %v2420 = vpack.c.b16 %v2000, %v1996
        %v2421 = vpack.c.b16 %v2001, %v1997
        %v2422 = vpack.c.b16 %v2002, %v1998
        %v2423 = vpack.c.b16 %v2007, %v2003
        %v2424 = vpack.c.b16 %v2008, %v2004
        %v2425 = vpack.c.b16 %v2009, %v2005
        %v2426 = vpack.c.b16 %v2010, %v2006
        %v2427 = vpack.c.b16 %v2015, %v2011
        %v2428 = vpack.c.b16 %v2016, %v2012
        %v2429 = vpack.c.b16 %v2017, %v2013
        %v2430 = vpack.c.b16 %v2018, %v2014
        %v2431 = vpack.c.b16 %v2023, %v2019
        %v2432 = vpack.c.b16 %v2024, %v2020
        %v2433 = vpack.c.b16 %v2025, %v2021
        %v2434 = vpack.c.b16 %v2026, %v2022
        %v2435 = vpack.c.b16 %v2031, %v2027
        %v2436 = vpack.c.b16 %v2032, %v2028
        %v2437 = vpack.c.b16 %v2033, %v2029
        %v2438 = vpack.c.b16 %v2034, %v2030
        %v2439 = vpack.c.b16 %v2039, %v2035
        %v2440 = vpack.c.b16 %v2040, %v2036
        %v2441 = vpack.c.b16 %v2041, %v2037
        %v2442 = vpack.c.b16 %v2042, %v2038
        %v2443 = vpack.c.b16 %v2047, %v2043
        %v2444 = vpack.c.b16 %v2048, %v2044
        %v2445 = vpack.c.b16 %v2049, %v2045
        %v2446 = vpack.c.b16 %v2050, %v2046
        %v2447 = vpack.c.b16 %v2055, %v2051
        %v2448 = vpack.c.b16 %v2056, %v2052
        %v2449 = vpack.c.b16 %v2057, %v2053
        %v2450 = vpack.c.b16 %v2058, %v2054
        %v2451 = vpack.c.b16 %v2063, %v2059
        %v2452 = vpack.c.b16 %v2064, %v2060
        %v2453 = vpack.c.b16 %v2065, %v2061
        %v2454 = vpack.c.b16 %v2066, %v2062
        %v2455 = vpack.c.b16 %v2071, %v2067
        %v2456 = vpack.c.b16 %v2072, %v2068
        %v2457 = vpack.c.b16 %v2073, %v2069
        %v2458 = vpack.c.b16 %v2074, %v2070
        %2843 = vmatpush.bf16.msra.mxu0 %v2103
        %2844 = vmatpush.bf16.msra.mxu0 %v2099
        %2845 = vmatpush.bf16.msra.mxu0 %v2095
        %2846 = vmatpush.bf16.msra.mxu0 %v2091
        %2847 = vmatpush.bf16.msra.mxu0 %v2087
        %2848 = vmatpush.bf16.msra.mxu0 %v2083
        %2849 = vmatpush.bf16.msra.mxu0 %v2079
        %2850 = vmatpush.bf16.msra.mxu0 %v2075
        %2851 = vmatmul.bf16.gmra.mxu0 %v875
        %v2852 = vpop.f32.mrf.mxu0
        %v2853 = vadd.f32 0.0, %v2852
        %v2854 = vpop.f32.mrf.mxu0
        %v2855 = vadd.f32 0.0, %v2854
        %2856 = vmatmul.bf16.gmra.mxu0 %v887
        %v2857 = vpop.f32.mrf.mxu0
        %v2858 = vadd.f32 0.0, %v2857
        %v2859 = vpop.f32.mrf.mxu0
        %v2860 = vadd.f32 0.0, %v2859
        %2861 = vdwg.mxu0
        %2862 = vmatpush.bf16.msra.mxu0 %v2135
        %2863 = vmatpush.bf16.msra.mxu0 %v2131
        %2864 = vmatpush.bf16.msra.mxu0 %v2127
        %2865 = vmatpush.bf16.msra.mxu0 %v2123
        %2866 = vmatpush.bf16.msra.mxu0 %v2119
        %2867 = vmatpush.bf16.msra.mxu0 %v2115
        %2868 = vmatpush.bf16.msra.mxu0 %v2111
        %2869 = vmatpush.bf16.msra.mxu0 %v2107
        %2870 = vmatmul.bf16.gmra.mxu0 %v876
        %v2871 = vpop.f32.mrf.mxu0
        %v2872 = vadd.f32 %v2853, %v2871
        %v2873 = vpop.f32.mrf.mxu0
        %v2874 = vadd.f32 %v2855, %v2873
        %2875 = vmatmul.bf16.gmra.mxu0 %v888
        %v2876 = vpop.f32.mrf.mxu0
        %v2877 = vadd.f32 %v2858, %v2876
        %v2878 = vpop.f32.mrf.mxu0
        %v2879 = vadd.f32 %v2860, %v2878
        %2880 = vdwg.mxu0
        %2881 = vmatpush.bf16.msra.mxu0 %v2167
        %2882 = vmatpush.bf16.msra.mxu0 %v2163
        %2883 = vmatpush.bf16.msra.mxu0 %v2159
        %2884 = vmatpush.bf16.msra.mxu0 %v2155
        %2885 = vmatpush.bf16.msra.mxu0 %v2151
        %2886 = vmatpush.bf16.msra.mxu0 %v2147
        %2887 = vmatpush.bf16.msra.mxu0 %v2143
        %2888 = vmatpush.bf16.msra.mxu0 %v2139
        %2889 = vmatmul.bf16.gmra.mxu0 %v877
        %v2890 = vpop.f32.mrf.mxu0
        %v2891 = vadd.f32 %v2872, %v2890
        %v2892 = vpop.f32.mrf.mxu0
        %v2893 = vadd.f32 %v2874, %v2892
        %2894 = vmatmul.bf16.gmra.mxu0 %v889
        %v2895 = vpop.f32.mrf.mxu0
        %v2896 = vadd.f32 %v2877, %v2895
        %v2897 = vpop.f32.mrf.mxu0
        %v2898 = vadd.f32 %v2879, %v2897
        %2899 = vdwg.mxu0
        %2900 = vmatpush.bf16.msra.mxu0 %v2199
        %2901 = vmatpush.bf16.msra.mxu0 %v2195
        %2902 = vmatpush.bf16.msra.mxu0 %v2191
        %2903 = vmatpush.bf16.msra.mxu0 %v2187
        %2904 = vmatpush.bf16.msra.mxu0 %v2183
        %2905 = vmatpush.bf16.msra.mxu0 %v2179
        %2906 = vmatpush.bf16.msra.mxu0 %v2175
        %2907 = vmatpush.bf16.msra.mxu0 %v2171
        %2908 = vmatmul.bf16.gmra.mxu0 %v878
        %v2909 = vpop.f32.mrf.mxu0
        %v2910 = vadd.f32 %v2891, %v2909
        %v2911 = vpop.f32.mrf.mxu0
        %v2912 = vadd.f32 %v2893, %v2911
        %2913 = vmatmul.bf16.gmra.mxu0 %v890
        %v2914 = vpop.f32.mrf.mxu0
        %v2915 = vadd.f32 %v2896, %v2914
        %v2916 = vpop.f32.mrf.mxu0
        %v2917 = vadd.f32 %v2898, %v2916
        %2918 = vdwg.mxu0
        %2919 = vmatpush.bf16.msra.mxu0 %v2231
        %2920 = vmatpush.bf16.msra.mxu0 %v2227
        %2921 = vmatpush.bf16.msra.mxu0 %v2223
        %2922 = vmatpush.bf16.msra.mxu0 %v2219
        %2923 = vmatpush.bf16.msra.mxu0 %v2215
        %2924 = vmatpush.bf16.msra.mxu0 %v2211
        %2925 = vmatpush.bf16.msra.mxu0 %v2207
        %2926 = vmatpush.bf16.msra.mxu0 %v2203
        %2927 = vmatmul.bf16.gmra.mxu0 %v879
        %v2928 = vpop.f32.mrf.mxu0
        %v2929 = vadd.f32 %v2910, %v2928
        %v2930 = vpop.f32.mrf.mxu0
        %v2931 = vadd.f32 %v2912, %v2930
        %2932 = vmatmul.bf16.gmra.mxu0 %v891
        %v2933 = vpop.f32.mrf.mxu0
        %v2934 = vadd.f32 %v2915, %v2933
        %v2935 = vpop.f32.mrf.mxu0
        %v2936 = vadd.f32 %v2917, %v2935
        %2937 = vdwg.mxu0
        %2938 = vmatpush.bf16.msra.mxu0 %v2263
        %2939 = vmatpush.bf16.msra.mxu0 %v2259
        %2940 = vmatpush.bf16.msra.mxu0 %v2255
        %2941 = vmatpush.bf16.msra.mxu0 %v2251
        %2942 = vmatpush.bf16.msra.mxu0 %v2247
        %2943 = vmatpush.bf16.msra.mxu0 %v2243
        %2944 = vmatpush.bf16.msra.mxu0 %v2239
        %2945 = vmatpush.bf16.msra.mxu0 %v2235
        %2946 = vmatmul.bf16.gmra.mxu0 %v880
        %v2947 = vpop.f32.mrf.mxu0
        %v2948 = vadd.f32 %v2929, %v2947
        %v2949 = vpop.f32.mrf.mxu0
        %v2950 = vadd.f32 %v2931, %v2949
        %2951 = vmatmul.bf16.gmra.mxu0 %v892
        %v2952 = vpop.f32.mrf.mxu0
        %v2953 = vadd.f32 %v2934, %v2952
        %v2954 = vpop.f32.mrf.mxu0
        %v2955 = vadd.f32 %v2936, %v2954
        %2956 = vdwg.mxu0
        %2957 = vmatpush.bf16.msra.mxu0 %v2295
        %2958 = vmatpush.bf16.msra.mxu0 %v2291
        %2959 = vmatpush.bf16.msra.mxu0 %v2287
        %2960 = vmatpush.bf16.msra.mxu0 %v2283
        %2961 = vmatpush.bf16.msra.mxu0 %v2279
        %2962 = vmatpush.bf16.msra.mxu0 %v2275
        %2963 = vmatpush.bf16.msra.mxu0 %v2271
        %2964 = vmatpush.bf16.msra.mxu0 %v2267
        %2965 = vmatmul.bf16.gmra.mxu0 %v881
        %v2966 = vpop.f32.mrf.mxu0
        %v2967 = vadd.f32 %v2948, %v2966
        %v2968 = vpop.f32.mrf.mxu0
        %v2969 = vadd.f32 %v2950, %v2968
        %2970 = vmatmul.bf16.gmra.mxu0 %v893
        %v2971 = vpop.f32.mrf.mxu0
        %v2972 = vadd.f32 %v2953, %v2971
        %v2973 = vpop.f32.mrf.mxu0
        %v2974 = vadd.f32 %v2955, %v2973
        %2975 = vdwg.mxu0
        %2976 = vmatpush.bf16.msra.mxu0 %v2327
        %2977 = vmatpush.bf16.msra.mxu0 %v2323
        %2978 = vmatpush.bf16.msra.mxu0 %v2319
        %2979 = vmatpush.bf16.msra.mxu0 %v2315
        %2980 = vmatpush.bf16.msra.mxu0 %v2311
        %2981 = vmatpush.bf16.msra.mxu0 %v2307
        %2982 = vmatpush.bf16.msra.mxu0 %v2303
        %2983 = vmatpush.bf16.msra.mxu0 %v2299
        %2984 = vmatmul.bf16.gmra.mxu0 %v882
        %v2985 = vpop.f32.mrf.mxu0
        %v2986 = vadd.f32 %v2967, %v2985
        %v2987 = vpop.f32.mrf.mxu0
        %v2988 = vadd.f32 %v2969, %v2987
        %2989 = vmatmul.bf16.gmra.mxu0 %v894
        %v2990 = vpop.f32.mrf.mxu0
        %v2991 = vadd.f32 %v2972, %v2990
        %v2992 = vpop.f32.mrf.mxu0
        %v2993 = vadd.f32 %v2974, %v2992
        %2994 = vdwg.mxu0
        %2995 = vmatpush.bf16.msra.mxu0 %v2359
        %2996 = vmatpush.bf16.msra.mxu0 %v2355
        %2997 = vmatpush.bf16.msra.mxu0 %v2351
        %2998 = vmatpush.bf16.msra.mxu0 %v2347
        %2999 = vmatpush.bf16.msra.mxu0 %v2343
        %3000 = vmatpush.bf16.msra.mxu0 %v2339
        %3001 = vmatpush.bf16.msra.mxu0 %v2335
        %3002 = vmatpush.bf16.msra.mxu0 %v2331
        %3003 = vmatmul.bf16.gmra.mxu0 %v883
        %v3004 = vpop.f32.mrf.mxu0
        %v3005 = vadd.f32 %v2986, %v3004
        %v3006 = vpop.f32.mrf.mxu0
        %v3007 = vadd.f32 %v2988, %v3006
        %3008 = vmatmul.bf16.gmra.mxu0 %v895
        %v3009 = vpop.f32.mrf.mxu0
        %v3010 = vadd.f32 %v2991, %v3009
        %v3011 = vpop.f32.mrf.mxu0
        %v3012 = vadd.f32 %v2993, %v3011
        %3013 = vdwg.mxu0
        %3014 = vmatpush.bf16.msra.mxu0 %v2391
        %3015 = vmatpush.bf16.msra.mxu0 %v2387
        %3016 = vmatpush.bf16.msra.mxu0 %v2383
        %3017 = vmatpush.bf16.msra.mxu0 %v2379
        %3018 = vmatpush.bf16.msra.mxu0 %v2375
        %3019 = vmatpush.bf16.msra.mxu0 %v2371
        %3020 = vmatpush.bf16.msra.mxu0 %v2367
        %3021 = vmatpush.bf16.msra.mxu0 %v2363
        %3022 = vmatmul.bf16.gmra.mxu0 %v884
        %v3023 = vpop.f32.mrf.mxu0
        %v3024 = vadd.f32 %v3005, %v3023
        %v3025 = vpop.f32.mrf.mxu0
        %v3026 = vadd.f32 %v3007, %v3025
        %3027 = vmatmul.bf16.gmra.mxu0 %v896
        %v3028 = vpop.f32.mrf.mxu0
        %v3029 = vadd.f32 %v3010, %v3028
        %v3030 = vpop.f32.mrf.mxu0
        %v3031 = vadd.f32 %v3012, %v3030
        %3032 = vdwg.mxu0
        %3033 = vmatpush.bf16.msra.mxu0 %v2423
        %3034 = vmatpush.bf16.msra.mxu0 %v2419
        %3035 = vmatpush.bf16.msra.mxu0 %v2415
        %3036 = vmatpush.bf16.msra.mxu0 %v2411
        %3037 = vmatpush.bf16.msra.mxu0 %v2407
        %3038 = vmatpush.bf16.msra.mxu0 %v2403
        %3039 = vmatpush.bf16.msra.mxu0 %v2399
        %3040 = vmatpush.bf16.msra.mxu0 %v2395
        %3041 = vmatmul.bf16.gmra.mxu0 %v885
        %v3042 = vpop.f32.mrf.mxu0
        %v3043 = vadd.f32 %v3024, %v3042
        %v3044 = vpop.f32.mrf.mxu0
        %v3045 = vadd.f32 %v3026, %v3044
        %3046 = vmatmul.bf16.gmra.mxu0 %v897
        %v3047 = vpop.f32.mrf.mxu0
        %v3048 = vadd.f32 %v3029, %v3047
        %v3049 = vpop.f32.mrf.mxu0
        %v3050 = vadd.f32 %v3031, %v3049
        %3051 = vdwg.mxu0
        %3052 = vmatpush.bf16.msra.mxu0 %v2455
        %3053 = vmatpush.bf16.msra.mxu0 %v2451
        %3054 = vmatpush.bf16.msra.mxu0 %v2447
        %3055 = vmatpush.bf16.msra.mxu0 %v2443
        %3056 = vmatpush.bf16.msra.mxu0 %v2439
        %3057 = vmatpush.bf16.msra.mxu0 %v2435
        %3058 = vmatpush.bf16.msra.mxu0 %v2431
        %3059 = vmatpush.bf16.msra.mxu0 %v2427
        %3060 = vmatmul.bf16.gmra.mxu0 %v886
        %v3061 = vpop.f32.mrf.mxu0
        %v3062 = vadd.f32 %v3043, %v3061
        %v3063 = vpop.f32.mrf.mxu0
        %v3064 = vadd.f32 %v3045, %v3063
        %3065 = vmatmul.bf16.gmra.mxu0 %v898
        %v3066 = vpop.f32.mrf.mxu0
        %v3067 = vadd.f32 %v3048, %v3066
        %v3068 = vpop.f32.mrf.mxu0
        %v3069 = vadd.f32 %v3050, %v3068
        %3070 = vdwg.mxu0
        %3071 = vmatpush.bf16.msra.mxu0 %v2104
        %3072 = vmatpush.bf16.msra.mxu0 %v2100
        %3073 = vmatpush.bf16.msra.mxu0 %v2096
        %3074 = vmatpush.bf16.msra.mxu0 %v2092
        %3075 = vmatpush.bf16.msra.mxu0 %v2088
        %3076 = vmatpush.bf16.msra.mxu0 %v2084
        %3077 = vmatpush.bf16.msra.mxu0 %v2080
        %3078 = vmatpush.bf16.msra.mxu0 %v2076
        %3079 = vmatmul.bf16.gmra.mxu0 %v875
        %v3080 = vpop.f32.mrf.mxu0
        %v3081 = vadd.f32 0.0, %v3080
        %v3082 = vpop.f32.mrf.mxu0
        %v3083 = vadd.f32 0.0, %v3082
        %3084 = vmatmul.bf16.gmra.mxu0 %v887
        %v3085 = vpop.f32.mrf.mxu0
        %v3086 = vadd.f32 0.0, %v3085
        %v3087 = vpop.f32.mrf.mxu0
        %v3088 = vadd.f32 0.0, %v3087
        %3089 = vdwg.mxu0
        %3090 = vmatpush.bf16.msra.mxu0 %v2136
        %3091 = vmatpush.bf16.msra.mxu0 %v2132
        %3092 = vmatpush.bf16.msra.mxu0 %v2128
        %3093 = vmatpush.bf16.msra.mxu0 %v2124
        %3094 = vmatpush.bf16.msra.mxu0 %v2120
        %3095 = vmatpush.bf16.msra.mxu0 %v2116
        %3096 = vmatpush.bf16.msra.mxu0 %v2112
        %3097 = vmatpush.bf16.msra.mxu0 %v2108
        %3098 = vmatmul.bf16.gmra.mxu0 %v876
        %v3099 = vpop.f32.mrf.mxu0
        %v3100 = vadd.f32 %v3081, %v3099
        %v3101 = vpop.f32.mrf.mxu0
        %v3102 = vadd.f32 %v3083, %v3101
        %3103 = vmatmul.bf16.gmra.mxu0 %v888
        %v3104 = vpop.f32.mrf.mxu0
        %v3105 = vadd.f32 %v3086, %v3104
        %v3106 = vpop.f32.mrf.mxu0
        %v3107 = vadd.f32 %v3088, %v3106
        %3108 = vdwg.mxu0
        %3109 = vmatpush.bf16.msra.mxu0 %v2168
        %3110 = vmatpush.bf16.msra.mxu0 %v2164
        %3111 = vmatpush.bf16.msra.mxu0 %v2160
        %3112 = vmatpush.bf16.msra.mxu0 %v2156
        %3113 = vmatpush.bf16.msra.mxu0 %v2152
        %3114 = vmatpush.bf16.msra.mxu0 %v2148
        %3115 = vmatpush.bf16.msra.mxu0 %v2144
        %3116 = vmatpush.bf16.msra.mxu0 %v2140
        %3117 = vmatmul.bf16.gmra.mxu0 %v877
        %v3118 = vpop.f32.mrf.mxu0
        %v3119 = vadd.f32 %v3100, %v3118
        %v3120 = vpop.f32.mrf.mxu0
        %v3121 = vadd.f32 %v3102, %v3120
        %3122 = vmatmul.bf16.gmra.mxu0 %v889
        %v3123 = vpop.f32.mrf.mxu0
        %v3124 = vadd.f32 %v3105, %v3123
        %v3125 = vpop.f32.mrf.mxu0
        %v3126 = vadd.f32 %v3107, %v3125
        %3127 = vdwg.mxu0
        %3128 = vmatpush.bf16.msra.mxu0 %v2200
        %3129 = vmatpush.bf16.msra.mxu0 %v2196
        %3130 = vmatpush.bf16.msra.mxu0 %v2192
        %3131 = vmatpush.bf16.msra.mxu0 %v2188
        %3132 = vmatpush.bf16.msra.mxu0 %v2184
        %3133 = vmatpush.bf16.msra.mxu0 %v2180
        %3134 = vmatpush.bf16.msra.mxu0 %v2176
        %3135 = vmatpush.bf16.msra.mxu0 %v2172
        %3136 = vmatmul.bf16.gmra.mxu0 %v878
        %v3137 = vpop.f32.mrf.mxu0
        %v3138 = vadd.f32 %v3119, %v3137
        %v3139 = vpop.f32.mrf.mxu0
        %v3140 = vadd.f32 %v3121, %v3139
        %3141 = vmatmul.bf16.gmra.mxu0 %v890
        %v3142 = vpop.f32.mrf.mxu0
        %v3143 = vadd.f32 %v3124, %v3142
        %v3144 = vpop.f32.mrf.mxu0
        %v3145 = vadd.f32 %v3126, %v3144
        %3146 = vdwg.mxu0
        %3147 = vmatpush.bf16.msra.mxu0 %v2232
        %3148 = vmatpush.bf16.msra.mxu0 %v2228
        %3149 = vmatpush.bf16.msra.mxu0 %v2224
        %3150 = vmatpush.bf16.msra.mxu0 %v2220
        %3151 = vmatpush.bf16.msra.mxu0 %v2216
        %3152 = vmatpush.bf16.msra.mxu0 %v2212
        %3153 = vmatpush.bf16.msra.mxu0 %v2208
        %3154 = vmatpush.bf16.msra.mxu0 %v2204
        %3155 = vmatmul.bf16.gmra.mxu0 %v879
        %v3156 = vpop.f32.mrf.mxu0
        %v3157 = vadd.f32 %v3138, %v3156
        %v3158 = vpop.f32.mrf.mxu0
        %v3159 = vadd.f32 %v3140, %v3158
        %3160 = vmatmul.bf16.gmra.mxu0 %v891
        %v3161 = vpop.f32.mrf.mxu0
        %v3162 = vadd.f32 %v3143, %v3161
        %v3163 = vpop.f32.mrf.mxu0
        %v3164 = vadd.f32 %v3145, %v3163
        %3165 = vdwg.mxu0
        %3166 = vmatpush.bf16.msra.mxu0 %v2264
        %3167 = vmatpush.bf16.msra.mxu0 %v2260
        %3168 = vmatpush.bf16.msra.mxu0 %v2256
        %3169 = vmatpush.bf16.msra.mxu0 %v2252
        %3170 = vmatpush.bf16.msra.mxu0 %v2248
        %3171 = vmatpush.bf16.msra.mxu0 %v2244
        %3172 = vmatpush.bf16.msra.mxu0 %v2240
        %3173 = vmatpush.bf16.msra.mxu0 %v2236
        %3174 = vmatmul.bf16.gmra.mxu0 %v880
        %v3175 = vpop.f32.mrf.mxu0
        %v3176 = vadd.f32 %v3157, %v3175
        %v3177 = vpop.f32.mrf.mxu0
        %v3178 = vadd.f32 %v3159, %v3177
        %3179 = vmatmul.bf16.gmra.mxu0 %v892
        %v3180 = vpop.f32.mrf.mxu0
        %v3181 = vadd.f32 %v3162, %v3180
        %v3182 = vpop.f32.mrf.mxu0
        %v3183 = vadd.f32 %v3164, %v3182
        %3184 = vdwg.mxu0
        %3185 = vmatpush.bf16.msra.mxu0 %v2296
        %3186 = vmatpush.bf16.msra.mxu0 %v2292
        %3187 = vmatpush.bf16.msra.mxu0 %v2288
        %3188 = vmatpush.bf16.msra.mxu0 %v2284
        %3189 = vmatpush.bf16.msra.mxu0 %v2280
        %3190 = vmatpush.bf16.msra.mxu0 %v2276
        %3191 = vmatpush.bf16.msra.mxu0 %v2272
        %3192 = vmatpush.bf16.msra.mxu0 %v2268
        %3193 = vmatmul.bf16.gmra.mxu0 %v881
        %v3194 = vpop.f32.mrf.mxu0
        %v3195 = vadd.f32 %v3176, %v3194
        %v3196 = vpop.f32.mrf.mxu0
        %v3197 = vadd.f32 %v3178, %v3196
        %3198 = vmatmul.bf16.gmra.mxu0 %v893
        %v3199 = vpop.f32.mrf.mxu0
        %v3200 = vadd.f32 %v3181, %v3199
        %v3201 = vpop.f32.mrf.mxu0
        %v3202 = vadd.f32 %v3183, %v3201
        %3203 = vdwg.mxu0
        %3204 = vmatpush.bf16.msra.mxu0 %v2328
        %3205 = vmatpush.bf16.msra.mxu0 %v2324
        %3206 = vmatpush.bf16.msra.mxu0 %v2320
        %3207 = vmatpush.bf16.msra.mxu0 %v2316
        %3208 = vmatpush.bf16.msra.mxu0 %v2312
        %3209 = vmatpush.bf16.msra.mxu0 %v2308
        %3210 = vmatpush.bf16.msra.mxu0 %v2304
        %3211 = vmatpush.bf16.msra.mxu0 %v2300
        %3212 = vmatmul.bf16.gmra.mxu0 %v882
        %v3213 = vpop.f32.mrf.mxu0
        %v3214 = vadd.f32 %v3195, %v3213
        %v3215 = vpop.f32.mrf.mxu0
        %v3216 = vadd.f32 %v3197, %v3215
        %3217 = vmatmul.bf16.gmra.mxu0 %v894
        %v3218 = vpop.f32.mrf.mxu0
        %v3219 = vadd.f32 %v3200, %v3218
        %v3220 = vpop.f32.mrf.mxu0
        %v3221 = vadd.f32 %v3202, %v3220
        %3222 = vdwg.mxu0
        %3223 = vmatpush.bf16.msra.mxu0 %v2360
        %3224 = vmatpush.bf16.msra.mxu0 %v2356
        %3225 = vmatpush.bf16.msra.mxu0 %v2352
        %3226 = vmatpush.bf16.msra.mxu0 %v2348
        %3227 = vmatpush.bf16.msra.mxu0 %v2344
        %3228 = vmatpush.bf16.msra.mxu0 %v2340
        %3229 = vmatpush.bf16.msra.mxu0 %v2336
        %3230 = vmatpush.bf16.msra.mxu0 %v2332
        %3231 = vmatmul.bf16.gmra.mxu0 %v883
        %v3232 = vpop.f32.mrf.mxu0
        %v3233 = vadd.f32 %v3214, %v3232
        %v3234 = vpop.f32.mrf.mxu0
        %v3235 = vadd.f32 %v3216, %v3234
        %3236 = vmatmul.bf16.gmra.mxu0 %v895
        %v3237 = vpop.f32.mrf.mxu0
        %v3238 = vadd.f32 %v3219, %v3237
        %v3239 = vpop.f32.mrf.mxu0
        %v3240 = vadd.f32 %v3221, %v3239
        %3241 = vdwg.mxu0
        %3242 = vmatpush.bf16.msra.mxu0 %v2392
        %3243 = vmatpush.bf16.msra.mxu0 %v2388
        %3244 = vmatpush.bf16.msra.mxu0 %v2384
        %3245 = vmatpush.bf16.msra.mxu0 %v2380
        %3246 = vmatpush.bf16.msra.mxu0 %v2376
        %3247 = vmatpush.bf16.msra.mxu0 %v2372
        %3248 = vmatpush.bf16.msra.mxu0 %v2368
        %3249 = vmatpush.bf16.msra.mxu0 %v2364
        %3250 = vmatmul.bf16.gmra.mxu0 %v884
        %v3251 = vpop.f32.mrf.mxu0
        %v3252 = vadd.f32 %v3233, %v3251
        %v3253 = vpop.f32.mrf.mxu0
        %v3254 = vadd.f32 %v3235, %v3253
        %3255 = vmatmul.bf16.gmra.mxu0 %v896
        %v3256 = vpop.f32.mrf.mxu0
        %v3257 = vadd.f32 %v3238, %v3256
        %v3258 = vpop.f32.mrf.mxu0
        %v3259 = vadd.f32 %v3240, %v3258
        %3260 = vdwg.mxu0
        %3261 = vmatpush.bf16.msra.mxu0 %v2424
        %3262 = vmatpush.bf16.msra.mxu0 %v2420
        %3263 = vmatpush.bf16.msra.mxu0 %v2416
        %3264 = vmatpush.bf16.msra.mxu0 %v2412
        %3265 = vmatpush.bf16.msra.mxu0 %v2408
        %3266 = vmatpush.bf16.msra.mxu0 %v2404
        %3267 = vmatpush.bf16.msra.mxu0 %v2400
        %3268 = vmatpush.bf16.msra.mxu0 %v2396
        %3269 = vmatmul.bf16.gmra.mxu0 %v885
        %v3270 = vpop.f32.mrf.mxu0
        %v3271 = vadd.f32 %v3252, %v3270
        %v3272 = vpop.f32.mrf.mxu0
        %v3273 = vadd.f32 %v3254, %v3272
        %3274 = vmatmul.bf16.gmra.mxu0 %v897
        %v3275 = vpop.f32.mrf.mxu0
        %v3276 = vadd.f32 %v3257, %v3275
        %v3277 = vpop.f32.mrf.mxu0
        %v3278 = vadd.f32 %v3259, %v3277
        %3279 = vdwg.mxu0
        %3280 = vmatpush.bf16.msra.mxu0 %v2456
        %3281 = vmatpush.bf16.msra.mxu0 %v2452
        %3282 = vmatpush.bf16.msra.mxu0 %v2448
        %3283 = vmatpush.bf16.msra.mxu0 %v2444
        %3284 = vmatpush.bf16.msra.mxu0 %v2440
        %3285 = vmatpush.bf16.msra.mxu0 %v2436
        %3286 = vmatpush.bf16.msra.mxu0 %v2432
        %3287 = vmatpush.bf16.msra.mxu0 %v2428
        %3288 = vmatmul.bf16.gmra.mxu0 %v886
        %v3289 = vpop.f32.mrf.mxu0
        %v3290 = vadd.f32 %v3271, %v3289
        %v3291 = vpop.f32.mrf.mxu0
        %v3292 = vadd.f32 %v3273, %v3291
        %3293 = vmatmul.bf16.gmra.mxu0 %v898
        %v3294 = vpop.f32.mrf.mxu0
        %v3295 = vadd.f32 %v3276, %v3294
        %v3296 = vpop.f32.mrf.mxu0
        %v3297 = vadd.f32 %v3278, %v3296
        %3298 = vdwg.mxu0
        %3299 = vmatpush.bf16.msra.mxu0 %v2105
        %3300 = vmatpush.bf16.msra.mxu0 %v2101
        %3301 = vmatpush.bf16.msra.mxu0 %v2097
        %3302 = vmatpush.bf16.msra.mxu0 %v2093
        %3303 = vmatpush.bf16.msra.mxu0 %v2089
        %3304 = vmatpush.bf16.msra.mxu0 %v2085
        %3305 = vmatpush.bf16.msra.mxu0 %v2081
        %3306 = vmatpush.bf16.msra.mxu0 %v2077
        %3307 = vmatmul.bf16.gmra.mxu0 %v875
        %v3308 = vpop.f32.mrf.mxu0
        %v3309 = vadd.f32 0.0, %v3308
        %v3310 = vpop.f32.mrf.mxu0
        %v3311 = vadd.f32 0.0, %v3310
        %3312 = vmatmul.bf16.gmra.mxu0 %v887
        %v3313 = vpop.f32.mrf.mxu0
        %v3314 = vadd.f32 0.0, %v3313
        %v3315 = vpop.f32.mrf.mxu0
        %v3316 = vadd.f32 0.0, %v3315
        %3317 = vdwg.mxu0
        %3318 = vmatpush.bf16.msra.mxu0 %v2137
        %3319 = vmatpush.bf16.msra.mxu0 %v2133
        %3320 = vmatpush.bf16.msra.mxu0 %v2129
        %3321 = vmatpush.bf16.msra.mxu0 %v2125
        %3322 = vmatpush.bf16.msra.mxu0 %v2121
        %3323 = vmatpush.bf16.msra.mxu0 %v2117
        %3324 = vmatpush.bf16.msra.mxu0 %v2113
        %3325 = vmatpush.bf16.msra.mxu0 %v2109
        %3326 = vmatmul.bf16.gmra.mxu0 %v876
        %v3327 = vpop.f32.mrf.mxu0
        %v3328 = vadd.f32 %v3309, %v3327
        %v3329 = vpop.f32.mrf.mxu0
        %v3330 = vadd.f32 %v3311, %v3329
        %3331 = vmatmul.bf16.gmra.mxu0 %v888
        %v3332 = vpop.f32.mrf.mxu0
        %v3333 = vadd.f32 %v3314, %v3332
        %v3334 = vpop.f32.mrf.mxu0
        %v3335 = vadd.f32 %v3316, %v3334
        %3336 = vdwg.mxu0
        %3337 = vmatpush.bf16.msra.mxu0 %v2169
        %3338 = vmatpush.bf16.msra.mxu0 %v2165
        %3339 = vmatpush.bf16.msra.mxu0 %v2161
        %3340 = vmatpush.bf16.msra.mxu0 %v2157
        %3341 = vmatpush.bf16.msra.mxu0 %v2153
        %3342 = vmatpush.bf16.msra.mxu0 %v2149
        %3343 = vmatpush.bf16.msra.mxu0 %v2145
        %3344 = vmatpush.bf16.msra.mxu0 %v2141
        %3345 = vmatmul.bf16.gmra.mxu0 %v877
        %v3346 = vpop.f32.mrf.mxu0
        %v3347 = vadd.f32 %v3328, %v3346
        %v3348 = vpop.f32.mrf.mxu0
        %v3349 = vadd.f32 %v3330, %v3348
        %3350 = vmatmul.bf16.gmra.mxu0 %v889
        %v3351 = vpop.f32.mrf.mxu0
        %v3352 = vadd.f32 %v3333, %v3351
        %v3353 = vpop.f32.mrf.mxu0
        %v3354 = vadd.f32 %v3335, %v3353
        %3355 = vdwg.mxu0
        %3356 = vmatpush.bf16.msra.mxu0 %v2201
        %3357 = vmatpush.bf16.msra.mxu0 %v2197
        %3358 = vmatpush.bf16.msra.mxu0 %v2193
        %3359 = vmatpush.bf16.msra.mxu0 %v2189
        %3360 = vmatpush.bf16.msra.mxu0 %v2185
        %3361 = vmatpush.bf16.msra.mxu0 %v2181
        %3362 = vmatpush.bf16.msra.mxu0 %v2177
        %3363 = vmatpush.bf16.msra.mxu0 %v2173
        %3364 = vmatmul.bf16.gmra.mxu0 %v878
        %v3365 = vpop.f32.mrf.mxu0
        %v3366 = vadd.f32 %v3347, %v3365
        %v3367 = vpop.f32.mrf.mxu0
        %v3368 = vadd.f32 %v3349, %v3367
        %3369 = vmatmul.bf16.gmra.mxu0 %v890
        %v3370 = vpop.f32.mrf.mxu0
        %v3371 = vadd.f32 %v3352, %v3370
        %v3372 = vpop.f32.mrf.mxu0
        %v3373 = vadd.f32 %v3354, %v3372
        %3374 = vdwg.mxu0
        %3375 = vmatpush.bf16.msra.mxu0 %v2233
        %3376 = vmatpush.bf16.msra.mxu0 %v2229
        %3377 = vmatpush.bf16.msra.mxu0 %v2225
        %3378 = vmatpush.bf16.msra.mxu0 %v2221
        %3379 = vmatpush.bf16.msra.mxu0 %v2217
        %3380 = vmatpush.bf16.msra.mxu0 %v2213
        %3381 = vmatpush.bf16.msra.mxu0 %v2209
        %3382 = vmatpush.bf16.msra.mxu0 %v2205
        %3383 = vmatmul.bf16.gmra.mxu0 %v879
        %v3384 = vpop.f32.mrf.mxu0
        %v3385 = vadd.f32 %v3366, %v3384
        %v3386 = vpop.f32.mrf.mxu0
        %v3387 = vadd.f32 %v3368, %v3386
        %3388 = vmatmul.bf16.gmra.mxu0 %v891
        %v3389 = vpop.f32.mrf.mxu0
        %v3390 = vadd.f32 %v3371, %v3389
        %v3391 = vpop.f32.mrf.mxu0
        %v3392 = vadd.f32 %v3373, %v3391
        %3393 = vdwg.mxu0
        %3394 = vmatpush.bf16.msra.mxu0 %v2265
        %3395 = vmatpush.bf16.msra.mxu0 %v2261
        %3396 = vmatpush.bf16.msra.mxu0 %v2257
        %3397 = vmatpush.bf16.msra.mxu0 %v2253
        %3398 = vmatpush.bf16.msra.mxu0 %v2249
        %3399 = vmatpush.bf16.msra.mxu0 %v2245
        %3400 = vmatpush.bf16.msra.mxu0 %v2241
        %3401 = vmatpush.bf16.msra.mxu0 %v2237
        %3402 = vmatmul.bf16.gmra.mxu0 %v880
        %v3403 = vpop.f32.mrf.mxu0
        %v3404 = vadd.f32 %v3385, %v3403
        %v3405 = vpop.f32.mrf.mxu0
        %v3406 = vadd.f32 %v3387, %v3405
        %3407 = vmatmul.bf16.gmra.mxu0 %v892
        %v3408 = vpop.f32.mrf.mxu0
        %v3409 = vadd.f32 %v3390, %v3408
        %v3410 = vpop.f32.mrf.mxu0
        %v3411 = vadd.f32 %v3392, %v3410
        %3412 = vdwg.mxu0
        %3413 = vmatpush.bf16.msra.mxu0 %v2297
        %3414 = vmatpush.bf16.msra.mxu0 %v2293
        %3415 = vmatpush.bf16.msra.mxu0 %v2289
        %3416 = vmatpush.bf16.msra.mxu0 %v2285
        %3417 = vmatpush.bf16.msra.mxu0 %v2281
        %3418 = vmatpush.bf16.msra.mxu0 %v2277
        %3419 = vmatpush.bf16.msra.mxu0 %v2273
        %3420 = vmatpush.bf16.msra.mxu0 %v2269
        %3421 = vmatmul.bf16.gmra.mxu0 %v881
        %v3422 = vpop.f32.mrf.mxu0
        %v3423 = vadd.f32 %v3404, %v3422
        %v3424 = vpop.f32.mrf.mxu0
        %v3425 = vadd.f32 %v3406, %v3424
        %3426 = vmatmul.bf16.gmra.mxu0 %v893
        %v3427 = vpop.f32.mrf.mxu0
        %v3428 = vadd.f32 %v3409, %v3427
        %v3429 = vpop.f32.mrf.mxu0
        %v3430 = vadd.f32 %v3411, %v3429
        %3431 = vdwg.mxu0
        %3432 = vmatpush.bf16.msra.mxu0 %v2329
        %3433 = vmatpush.bf16.msra.mxu0 %v2325
        %3434 = vmatpush.bf16.msra.mxu0 %v2321
        %3435 = vmatpush.bf16.msra.mxu0 %v2317
        %3436 = vmatpush.bf16.msra.mxu0 %v2313
        %3437 = vmatpush.bf16.msra.mxu0 %v2309
        %3438 = vmatpush.bf16.msra.mxu0 %v2305
        %3439 = vmatpush.bf16.msra.mxu0 %v2301
        %3440 = vmatmul.bf16.gmra.mxu0 %v882
        %v3441 = vpop.f32.mrf.mxu0
        %v3442 = vadd.f32 %v3423, %v3441
        %v3443 = vpop.f32.mrf.mxu0
        %v3444 = vadd.f32 %v3425, %v3443
        %3445 = vmatmul.bf16.gmra.mxu0 %v894
        %v3446 = vpop.f32.mrf.mxu0
        %v3447 = vadd.f32 %v3428, %v3446
        %v3448 = vpop.f32.mrf.mxu0
        %v3449 = vadd.f32 %v3430, %v3448
        %3450 = vdwg.mxu0
        %3451 = vmatpush.bf16.msra.mxu0 %v2361
        %3452 = vmatpush.bf16.msra.mxu0 %v2357
        %3453 = vmatpush.bf16.msra.mxu0 %v2353
        %3454 = vmatpush.bf16.msra.mxu0 %v2349
        %3455 = vmatpush.bf16.msra.mxu0 %v2345
        %3456 = vmatpush.bf16.msra.mxu0 %v2341
        %3457 = vmatpush.bf16.msra.mxu0 %v2337
        %3458 = vmatpush.bf16.msra.mxu0 %v2333
        %3459 = vmatmul.bf16.gmra.mxu0 %v883
        %v3460 = vpop.f32.mrf.mxu0
        %v3461 = vadd.f32 %v3442, %v3460
        %v3462 = vpop.f32.mrf.mxu0
        %v3463 = vadd.f32 %v3444, %v3462
        %3464 = vmatmul.bf16.gmra.mxu0 %v895
        %v3465 = vpop.f32.mrf.mxu0
        %v3466 = vadd.f32 %v3447, %v3465
        %v3467 = vpop.f32.mrf.mxu0
        %v3468 = vadd.f32 %v3449, %v3467
        %3469 = vdwg.mxu0
        %3470 = vmatpush.bf16.msra.mxu0 %v2393
        %3471 = vmatpush.bf16.msra.mxu0 %v2389
        %3472 = vmatpush.bf16.msra.mxu0 %v2385
        %3473 = vmatpush.bf16.msra.mxu0 %v2381
        %3474 = vmatpush.bf16.msra.mxu0 %v2377
        %3475 = vmatpush.bf16.msra.mxu0 %v2373
        %3476 = vmatpush.bf16.msra.mxu0 %v2369
        %3477 = vmatpush.bf16.msra.mxu0 %v2365
        %3478 = vmatmul.bf16.gmra.mxu0 %v884
        %v3479 = vpop.f32.mrf.mxu0
        %v3480 = vadd.f32 %v3461, %v3479
        %v3481 = vpop.f32.mrf.mxu0
        %v3482 = vadd.f32 %v3463, %v3481
        %3483 = vmatmul.bf16.gmra.mxu0 %v896
        %v3484 = vpop.f32.mrf.mxu0
        %v3485 = vadd.f32 %v3466, %v3484
        %v3486 = vpop.f32.mrf.mxu0
        %v3487 = vadd.f32 %v3468, %v3486
        %3488 = vdwg.mxu0
        %3489 = vmatpush.bf16.msra.mxu0 %v2425
        %3490 = vmatpush.bf16.msra.mxu0 %v2421
        %3491 = vmatpush.bf16.msra.mxu0 %v2417
        %3492 = vmatpush.bf16.msra.mxu0 %v2413
        %3493 = vmatpush.bf16.msra.mxu0 %v2409
        %3494 = vmatpush.bf16.msra.mxu0 %v2405
        %3495 = vmatpush.bf16.msra.mxu0 %v2401
        %3496 = vmatpush.bf16.msra.mxu0 %v2397
        %3497 = vmatmul.bf16.gmra.mxu0 %v885
        %v3498 = vpop.f32.mrf.mxu0
        %v3499 = vadd.f32 %v3480, %v3498
        %v3500 = vpop.f32.mrf.mxu0
        %v3501 = vadd.f32 %v3482, %v3500
        %3502 = vmatmul.bf16.gmra.mxu0 %v897
        %v3503 = vpop.f32.mrf.mxu0
        %v3504 = vadd.f32 %v3485, %v3503
        %v3505 = vpop.f32.mrf.mxu0
        %v3506 = vadd.f32 %v3487, %v3505
        %3507 = vdwg.mxu0
        %3508 = vmatpush.bf16.msra.mxu0 %v2457
        %3509 = vmatpush.bf16.msra.mxu0 %v2453
        %3510 = vmatpush.bf16.msra.mxu0 %v2449
        %3511 = vmatpush.bf16.msra.mxu0 %v2445
        %3512 = vmatpush.bf16.msra.mxu0 %v2441
        %3513 = vmatpush.bf16.msra.mxu0 %v2437
        %3514 = vmatpush.bf16.msra.mxu0 %v2433
        %3515 = vmatpush.bf16.msra.mxu0 %v2429
        %3516 = vmatmul.bf16.gmra.mxu0 %v886
        %v3517 = vpop.f32.mrf.mxu0
        %v3518 = vadd.f32 %v3499, %v3517
        %v3519 = vpop.f32.mrf.mxu0
        %v3520 = vadd.f32 %v3501, %v3519
        %3521 = vmatmul.bf16.gmra.mxu0 %v898
        %v3522 = vpop.f32.mrf.mxu0
        %v3523 = vadd.f32 %v3504, %v3522
        %v3524 = vpop.f32.mrf.mxu0
        %v3525 = vadd.f32 %v3506, %v3524
        %3526 = vdwg.mxu0
        %3527 = vmatpush.bf16.msra.mxu0 %v2106
        %3528 = vmatpush.bf16.msra.mxu0 %v2102
        %3529 = vmatpush.bf16.msra.mxu0 %v2098
        %3530 = vmatpush.bf16.msra.mxu0 %v2094
        %3531 = vmatpush.bf16.msra.mxu0 %v2090
        %3532 = vmatpush.bf16.msra.mxu0 %v2086
        %3533 = vmatpush.bf16.msra.mxu0 %v2082
        %3534 = vmatpush.bf16.msra.mxu0 %v2078
        %3535 = vmatmul.bf16.gmra.mxu0 %v875
        %v3536 = vpop.f32.mrf.mxu0
        %v3537 = vadd.f32 0.0, %v3536
        %v3538 = vpop.f32.mrf.mxu0
        %v3539 = vadd.f32 0.0, %v3538
        %3540 = vmatmul.bf16.gmra.mxu0 %v887
        %v3541 = vpop.f32.mrf.mxu0
        %v3542 = vadd.f32 0.0, %v3541
        %v3543 = vpop.f32.mrf.mxu0
        %v3544 = vadd.f32 0.0, %v3543
        %3545 = vdwg.mxu0
        %3546 = vmatpush.bf16.msra.mxu0 %v2138
        %3547 = vmatpush.bf16.msra.mxu0 %v2134
        %3548 = vmatpush.bf16.msra.mxu0 %v2130
        %3549 = vmatpush.bf16.msra.mxu0 %v2126
        %3550 = vmatpush.bf16.msra.mxu0 %v2122
        %3551 = vmatpush.bf16.msra.mxu0 %v2118
        %3552 = vmatpush.bf16.msra.mxu0 %v2114
        %3553 = vmatpush.bf16.msra.mxu0 %v2110
        %3554 = vmatmul.bf16.gmra.mxu0 %v876
        %v3555 = vpop.f32.mrf.mxu0
        %v3556 = vadd.f32 %v3537, %v3555
        %v3557 = vpop.f32.mrf.mxu0
        %v3558 = vadd.f32 %v3539, %v3557
        %3559 = vmatmul.bf16.gmra.mxu0 %v888
        %v3560 = vpop.f32.mrf.mxu0
        %v3561 = vadd.f32 %v3542, %v3560
        %v3562 = vpop.f32.mrf.mxu0
        %v3563 = vadd.f32 %v3544, %v3562
        %3564 = vdwg.mxu0
        %3565 = vmatpush.bf16.msra.mxu0 %v2170
        %3566 = vmatpush.bf16.msra.mxu0 %v2166
        %3567 = vmatpush.bf16.msra.mxu0 %v2162
        %3568 = vmatpush.bf16.msra.mxu0 %v2158
        %3569 = vmatpush.bf16.msra.mxu0 %v2154
        %3570 = vmatpush.bf16.msra.mxu0 %v2150
        %3571 = vmatpush.bf16.msra.mxu0 %v2146
        %3572 = vmatpush.bf16.msra.mxu0 %v2142
        %3573 = vmatmul.bf16.gmra.mxu0 %v877
        %v3574 = vpop.f32.mrf.mxu0
        %v3575 = vadd.f32 %v3556, %v3574
        %v3576 = vpop.f32.mrf.mxu0
        %v3577 = vadd.f32 %v3558, %v3576
        %3578 = vmatmul.bf16.gmra.mxu0 %v889
        %v3579 = vpop.f32.mrf.mxu0
        %v3580 = vadd.f32 %v3561, %v3579
        %v3581 = vpop.f32.mrf.mxu0
        %v3582 = vadd.f32 %v3563, %v3581
        %3583 = vdwg.mxu0
        %3584 = vmatpush.bf16.msra.mxu0 %v2202
        %3585 = vmatpush.bf16.msra.mxu0 %v2198
        %3586 = vmatpush.bf16.msra.mxu0 %v2194
        %3587 = vmatpush.bf16.msra.mxu0 %v2190
        %3588 = vmatpush.bf16.msra.mxu0 %v2186
        %3589 = vmatpush.bf16.msra.mxu0 %v2182
        %3590 = vmatpush.bf16.msra.mxu0 %v2178
        %3591 = vmatpush.bf16.msra.mxu0 %v2174
        %3592 = vmatmul.bf16.gmra.mxu0 %v878
        %v3593 = vpop.f32.mrf.mxu0
        %v3594 = vadd.f32 %v3575, %v3593
        %v3595 = vpop.f32.mrf.mxu0
        %v3596 = vadd.f32 %v3577, %v3595
        %3597 = vmatmul.bf16.gmra.mxu0 %v890
        %v3598 = vpop.f32.mrf.mxu0
        %v3599 = vadd.f32 %v3580, %v3598
        %v3600 = vpop.f32.mrf.mxu0
        %v3601 = vadd.f32 %v3582, %v3600
        %3602 = vdwg.mxu0
        %3603 = vmatpush.bf16.msra.mxu0 %v2234
        %3604 = vmatpush.bf16.msra.mxu0 %v2230
        %3605 = vmatpush.bf16.msra.mxu0 %v2226
        %3606 = vmatpush.bf16.msra.mxu0 %v2222
        %3607 = vmatpush.bf16.msra.mxu0 %v2218
        %3608 = vmatpush.bf16.msra.mxu0 %v2214
        %3609 = vmatpush.bf16.msra.mxu0 %v2210
        %3610 = vmatpush.bf16.msra.mxu0 %v2206
        %3611 = vmatmul.bf16.gmra.mxu0 %v879
        %v3612 = vpop.f32.mrf.mxu0
        %v3613 = vadd.f32 %v3594, %v3612
        %v3614 = vpop.f32.mrf.mxu0
        %v3615 = vadd.f32 %v3596, %v3614
        %3616 = vmatmul.bf16.gmra.mxu0 %v891
        %v3617 = vpop.f32.mrf.mxu0
        %v3618 = vadd.f32 %v3599, %v3617
        %v3619 = vpop.f32.mrf.mxu0
        %v3620 = vadd.f32 %v3601, %v3619
        %3621 = vdwg.mxu0
        %3622 = vmatpush.bf16.msra.mxu0 %v2266
        %3623 = vmatpush.bf16.msra.mxu0 %v2262
        %3624 = vmatpush.bf16.msra.mxu0 %v2258
        %3625 = vmatpush.bf16.msra.mxu0 %v2254
        %3626 = vmatpush.bf16.msra.mxu0 %v2250
        %3627 = vmatpush.bf16.msra.mxu0 %v2246
        %3628 = vmatpush.bf16.msra.mxu0 %v2242
        %3629 = vmatpush.bf16.msra.mxu0 %v2238
        %3630 = vmatmul.bf16.gmra.mxu0 %v880
        %v3631 = vpop.f32.mrf.mxu0
        %v3632 = vadd.f32 %v3613, %v3631
        %v3633 = vpop.f32.mrf.mxu0
        %v3634 = vadd.f32 %v3615, %v3633
        %3635 = vmatmul.bf16.gmra.mxu0 %v892
        %v3636 = vpop.f32.mrf.mxu0
        %v3637 = vadd.f32 %v3618, %v3636
        %v3638 = vpop.f32.mrf.mxu0
        %v3639 = vadd.f32 %v3620, %v3638
        %3640 = vdwg.mxu0
        %3641 = vmatpush.bf16.msra.mxu0 %v2298
        %3642 = vmatpush.bf16.msra.mxu0 %v2294
        %3643 = vmatpush.bf16.msra.mxu0 %v2290
        %3644 = vmatpush.bf16.msra.mxu0 %v2286
        %3645 = vmatpush.bf16.msra.mxu0 %v2282
        %3646 = vmatpush.bf16.msra.mxu0 %v2278
        %3647 = vmatpush.bf16.msra.mxu0 %v2274
        %3648 = vmatpush.bf16.msra.mxu0 %v2270
        %3649 = vmatmul.bf16.gmra.mxu0 %v881
        %v3650 = vpop.f32.mrf.mxu0
        %v3651 = vadd.f32 %v3632, %v3650
        %v3652 = vpop.f32.mrf.mxu0
        %v3653 = vadd.f32 %v3634, %v3652
        %3654 = vmatmul.bf16.gmra.mxu0 %v893
        %v3655 = vpop.f32.mrf.mxu0
        %v3656 = vadd.f32 %v3637, %v3655
        %v3657 = vpop.f32.mrf.mxu0
        %v3658 = vadd.f32 %v3639, %v3657
        %3659 = vdwg.mxu0
        %3660 = vmatpush.bf16.msra.mxu0 %v2330
        %3661 = vmatpush.bf16.msra.mxu0 %v2326
        %3662 = vmatpush.bf16.msra.mxu0 %v2322
        %3663 = vmatpush.bf16.msra.mxu0 %v2318
        %3664 = vmatpush.bf16.msra.mxu0 %v2314
        %3665 = vmatpush.bf16.msra.mxu0 %v2310
        %3666 = vmatpush.bf16.msra.mxu0 %v2306
        %3667 = vmatpush.bf16.msra.mxu0 %v2302
        %3668 = vmatmul.bf16.gmra.mxu0 %v882
        %v3669 = vpop.f32.mrf.mxu0
        %v3670 = vadd.f32 %v3651, %v3669
        %v3671 = vpop.f32.mrf.mxu0
        %v3672 = vadd.f32 %v3653, %v3671
        %3673 = vmatmul.bf16.gmra.mxu0 %v894
        %v3674 = vpop.f32.mrf.mxu0
        %v3675 = vadd.f32 %v3656, %v3674
        %v3676 = vpop.f32.mrf.mxu0
        %v3677 = vadd.f32 %v3658, %v3676
        %3678 = vdwg.mxu0
        %3679 = vmatpush.bf16.msra.mxu0 %v2362
        %3680 = vmatpush.bf16.msra.mxu0 %v2358
        %3681 = vmatpush.bf16.msra.mxu0 %v2354
        %3682 = vmatpush.bf16.msra.mxu0 %v2350
        %3683 = vmatpush.bf16.msra.mxu0 %v2346
        %3684 = vmatpush.bf16.msra.mxu0 %v2342
        %3685 = vmatpush.bf16.msra.mxu0 %v2338
        %3686 = vmatpush.bf16.msra.mxu0 %v2334
        %3687 = vmatmul.bf16.gmra.mxu0 %v883
        %v3688 = vpop.f32.mrf.mxu0
        %v3689 = vadd.f32 %v3670, %v3688
        %v3690 = vpop.f32.mrf.mxu0
        %v3691 = vadd.f32 %v3672, %v3690
        %3692 = vmatmul.bf16.gmra.mxu0 %v895
        %v3693 = vpop.f32.mrf.mxu0
        %v3694 = vadd.f32 %v3675, %v3693
        %v3695 = vpop.f32.mrf.mxu0
        %v3696 = vadd.f32 %v3677, %v3695
        %3697 = vdwg.mxu0
        %3698 = vmatpush.bf16.msra.mxu0 %v2394
        %3699 = vmatpush.bf16.msra.mxu0 %v2390
        %3700 = vmatpush.bf16.msra.mxu0 %v2386
        %3701 = vmatpush.bf16.msra.mxu0 %v2382
        %3702 = vmatpush.bf16.msra.mxu0 %v2378
        %3703 = vmatpush.bf16.msra.mxu0 %v2374
        %3704 = vmatpush.bf16.msra.mxu0 %v2370
        %3705 = vmatpush.bf16.msra.mxu0 %v2366
        %3706 = vmatmul.bf16.gmra.mxu0 %v884
        %v3707 = vpop.f32.mrf.mxu0
        %v3708 = vadd.f32 %v3689, %v3707
        %v3709 = vpop.f32.mrf.mxu0
        %v3710 = vadd.f32 %v3691, %v3709
        %3711 = vmatmul.bf16.gmra.mxu0 %v896
        %v3712 = vpop.f32.mrf.mxu0
        %v3713 = vadd.f32 %v3694, %v3712
        %v3714 = vpop.f32.mrf.mxu0
        %v3715 = vadd.f32 %v3696, %v3714
        %3716 = vdwg.mxu0
        %3717 = vmatpush.bf16.msra.mxu0 %v2426
        %3718 = vmatpush.bf16.msra.mxu0 %v2422
        %3719 = vmatpush.bf16.msra.mxu0 %v2418
        %3720 = vmatpush.bf16.msra.mxu0 %v2414
        %3721 = vmatpush.bf16.msra.mxu0 %v2410
        %3722 = vmatpush.bf16.msra.mxu0 %v2406
        %3723 = vmatpush.bf16.msra.mxu0 %v2402
        %3724 = vmatpush.bf16.msra.mxu0 %v2398
        %3725 = vmatmul.bf16.gmra.mxu0 %v885
        %v3726 = vpop.f32.mrf.mxu0
        %v3727 = vadd.f32 %v3708, %v3726
        %v3728 = vpop.f32.mrf.mxu0
        %v3729 = vadd.f32 %v3710, %v3728
        %3730 = vmatmul.bf16.gmra.mxu0 %v897
        %v3731 = vpop.f32.mrf.mxu0
        %v3732 = vadd.f32 %v3713, %v3731
        %v3733 = vpop.f32.mrf.mxu0
        %v3734 = vadd.f32 %v3715, %v3733
        %3735 = vdwg.mxu0
        %3736 = vmatpush.bf16.msra.mxu0 %v2458
        %3737 = vmatpush.bf16.msra.mxu0 %v2454
        %3738 = vmatpush.bf16.msra.mxu0 %v2450
        %3739 = vmatpush.bf16.msra.mxu0 %v2446
        %3740 = vmatpush.bf16.msra.mxu0 %v2442
        %3741 = vmatpush.bf16.msra.mxu0 %v2438
        %3742 = vmatpush.bf16.msra.mxu0 %v2434
        %3743 = vmatpush.bf16.msra.mxu0 %v2430
        %3744 = vmatmul.bf16.gmra.mxu0 %v886
        %v3745 = vpop.f32.mrf.mxu0
        %v3746 = vadd.f32 %v3727, %v3745
        %v3747 = vpop.f32.mrf.mxu0
        %v3748 = vadd.f32 %v3729, %v3747
        %3749 = vmatmul.bf16.gmra.mxu0 %v898
        %v3750 = vpop.f32.mrf.mxu0
        %v3751 = vadd.f32 %v3732, %v3750
        %v3752 = vpop.f32.mrf.mxu0
        %v3753 = vadd.f32 %v3734, %v3752
        %3754 = vdwg.mxu0
        %v3755 = vadd.f32 %v379, %v3062
        %v3756 = vadd.f32 %v380, %v3290
        %v3757 = vadd.f32 %v381, %v3518
        %v3758 = vadd.f32 %v382, %v3746
        %v3759 = vadd.f32 %v383, %v3064
        %v3760 = vadd.f32 %v384, %v3292
        %v3761 = vadd.f32 %v385, %v3520
        %v3762 = vadd.f32 %v386, %v3748
        %v3763 = vadd.f32 %v387, %v3067
        %v3764 = vadd.f32 %v388, %v3295
        %v3765 = vadd.f32 %v389, %v3523
        %v3766 = vadd.f32 %v390, %v3751
        %v3767 = vadd.f32 %v391, %v3069
        %v3768 = vadd.f32 %v392, %v3297
        %v3769 = vadd.f32 %v393, %v3525
        %v3770 = vadd.f32 %v394, %v3753
        %3771 = vst [vmem:[#allocation2] sm:$0xff] %v3755
        %3772 = vst [vmem:[#allocation2 + $0x8] sm:$0xff] %v3756
        %3773 = vst [vmem:[#allocation2 + $0x10] sm:$0xff] %v3757
        %3774 = vst [vmem:[#allocation2 + $0x18] sm:$0xff] %v3758
        %3775 = vst [vmem:[#allocation2 + $0x20] sm:$0xff] %v3759
        %3776 = vst [vmem:[#allocation2 + $0x28] sm:$0xff] %v3760
        %3777 = vst [vmem:[#allocation2 + $0x30] sm:$0xff] %v3761
        %3778 = vst [vmem:[#allocation2 + $0x38] sm:$0xff] %v3762
        %3779 = vst [vmem:[#allocation2 + $0x40] sm:$0xff] %v3763
        %3780 = vst [vmem:[#allocation2 + $0x48] sm:$0xff] %v3764
        %3781 = vst [vmem:[#allocation2 + $0x50] sm:$0xff] %v3765
        %3782 = vst [vmem:[#allocation2 + $0x58] sm:$0xff] %v3766
        %3783 = vst [vmem:[#allocation2 + $0x60] sm:$0xff] %v3767
        %3784 = vst [vmem:[#allocation2 + $0x68] sm:$0xff] %v3768
        %3785 = vst [vmem:[#allocation2 + $0x70] sm:$0xff] %v3769
        %3786 = vst [vmem:[#allocation2 + $0x78] sm:$0xff] %v3770
        %p3787 = scmp.eq.s32.totalorder %s23, 5
        // Predicated region
        $region68: #{detection_forward.5} parent=54 // pred_check
          %p3788 = pneg %p3787
        $region69: #{detection_forward.5} parent=54 // pred_check_branch
          %3790 = sbr.rel (%p3788) target = $region71
        $region70: #{detection_forward.5} parent=54 // pred_region
          %v3791 = vld [vmem:[#allocation2] sm:$0xff]
          %v3792 = vld [vmem:[#allocation2 + $0x8] sm:$0xff]
          %v3793 = vld [vmem:[#allocation2 + $0x10] sm:$0xff]
          %v3794 = vld [vmem:[#allocation2 + $0x18] sm:$0xff]
          %v3795 = vld [vmem:[#allocation2 + $0x20] sm:$0xff]
          %v3796 = vld [vmem:[#allocation2 + $0x28] sm:$0xff]
          %v3797 = vld [vmem:[#allocation2 + $0x30] sm:$0xff]
          %v3798 = vld [vmem:[#allocation2 + $0x38] sm:$0xff]
          %v3799 = vld [vmem:[#allocation2 + $0x40] sm:$0xff]
          %v3800 = vld [vmem:[#allocation2 + $0x48] sm:$0xff]
          %v3801 = vld [vmem:[#allocation2 + $0x50] sm:$0xff]
          %v3802 = vld [vmem:[#allocation2 + $0x58] sm:$0xff]
          %v3803 = vld [vmem:[#allocation2 + $0x60] sm:$0xff]
          %v3804 = vld [vmem:[#allocation2 + $0x68] sm:$0xff]
          %v3805 = vld [vmem:[#allocation2 + $0x70] sm:$0xff]
          %v3806 = vld [vmem:[#allocation2 + $0x78] sm:$0xff]
          %v3807 = vadd.f32 %v3791, %v3795
          %v3808 = vadd.f32 %v3807, %v3799
          %v3809 = vadd.f32 %v3808, %v3803
          %v3810 = vrot.slane %v3809, 4
          %v3811 = vadd.f32 %v3809, %v3810
          %v3812 = vrot.slane %v3811, 2
          %v3813 = vadd.f32 %v3811, %v3812
          %v3814 = vrot.slane %v3813, 1
          %v3815 = vadd.f32 %v3813, %v3814
          %v3816 = vadd.f32 %v3792, %v3796
          %v3817 = vadd.f32 %v3816, %v3800
          %v3818 = vadd.f32 %v3817, %v3804
          %v3819 = vrot.slane %v3818, 4
          %v3820 = vadd.f32 %v3818, %v3819
          %v3821 = vrot.slane %v3820, 2
          %v3822 = vadd.f32 %v3820, %v3821
          %v3823 = vrot.slane %v3822, 1
          %v3824 = vadd.f32 %v3822, %v3823
          %v3825 = vadd.f32 %v3793, %v3797
          %v3826 = vadd.f32 %v3825, %v3801
          %v3827 = vadd.f32 %v3826, %v3805
          %v3828 = vrot.slane %v3827, 4
          %v3829 = vadd.f32 %v3827, %v3828
          %v3830 = vrot.slane %v3829, 2
          %v3831 = vadd.f32 %v3829, %v3830
          %v3832 = vrot.slane %v3831, 1
          %v3833 = vadd.f32 %v3831, %v3832
          %v3834 = vadd.f32 %v3794, %v3798
          %v3835 = vadd.f32 %v3834, %v3802
          %v3836 = vadd.f32 %v3835, %v3806
          %v3837 = vrot.slane %v3836, 4
          %v3838 = vadd.f32 %v3836, %v3837
          %v3839 = vrot.slane %v3838, 2
          %v3840 = vadd.f32 %v3838, %v3839
          %v3841 = vrot.slane %v3840, 1
          %v3842 = vadd.f32 %v3840, %v3841
          %v3843 = vmul.f32 %v3815, 0.03125
          %v3844 = vmul.f32 %v3824, 0.03125
          %v3845 = vmul.f32 %v3833, 0.03125
          %v3846 = vmul.f32 %v3842, 0.03125
          %v3847 = vsub.f32 %v3791, %v3843
          %v3848 = vsub.f32 %v3792, %v3844
          %v3849 = vsub.f32 %v3793, %v3845
          %v3850 = vsub.f32 %v3794, %v3846
          %v3851 = vsub.f32 %v3795, %v3843
          %v3852 = vsub.f32 %v3796, %v3844
          %v3853 = vsub.f32 %v3797, %v3845
          %v3854 = vsub.f32 %v3798, %v3846
          %v3855 = vsub.f32 %v3799, %v3843
          %v3856 = vsub.f32 %v3800, %v3844
          %v3857 = vsub.f32 %v3801, %v3845
          %v3858 = vsub.f32 %v3802, %v3846
          %v3859 = vsub.f32 %v3803, %v3843
          %v3860 = vsub.f32 %v3804, %v3844
          %v3861 = vsub.f32 %v3805, %v3845
          %v3862 = vsub.f32 %v3806, %v3846
          %v3863 = vmul.f32 %v3847, %v3847
          %v3864 = vmul.f32 %v3848, %v3848
          %v3865 = vmul.f32 %v3849, %v3849
          %v3866 = vmul.f32 %v3850, %v3850
          %v3867 = vmul.f32 %v3851, %v3851
          %v3868 = vmul.f32 %v3852, %v3852
          %v3869 = vmul.f32 %v3853, %v3853
          %v3870 = vmul.f32 %v3854, %v3854
          %v3871 = vmul.f32 %v3855, %v3855
          %v3872 = vmul.f32 %v3856, %v3856
          %v3873 = vmul.f32 %v3857, %v3857
          %v3874 = vmul.f32 %v3858, %v3858
          %v3875 = vmul.f32 %v3859, %v3859
          %v3876 = vmul.f32 %v3860, %v3860
          %v3877 = vmul.f32 %v3861, %v3861
          %v3878 = vmul.f32 %v3862, %v3862
          %v3879 = vadd.f32 %v3863, %v3867
          %v3880 = vadd.f32 %v3879, %v3871
          %v3881 = vadd.f32 %v3880, %v3875
          %v3882 = vrot.slane %v3881, 4
          %v3883 = vadd.f32 %v3881, %v3882
          %v3884 = vrot.slane %v3883, 2
          %v3885 = vadd.f32 %v3883, %v3884
          %v3886 = vrot.slane %v3885, 1
          %v3887 = vadd.f32 %v3885, %v3886
          %v3888 = vadd.f32 %v3864, %v3868
          %v3889 = vadd.f32 %v3888, %v3872
          %v3890 = vadd.f32 %v3889, %v3876
          %v3891 = vrot.slane %v3890, 4
          %v3892 = vadd.f32 %v3890, %v3891
          %v3893 = vrot.slane %v3892, 2
          %v3894 = vadd.f32 %v3892, %v3893
          %v3895 = vrot.slane %v3894, 1
          %v3896 = vadd.f32 %v3894, %v3895
          %v3897 = vadd.f32 %v3865, %v3869
          %v3898 = vadd.f32 %v3897, %v3873
          %v3899 = vadd.f32 %v3898, %v3877
          %v3900 = vrot.slane %v3899, 4
          %v3901 = vadd.f32 %v3899, %v3900
          %v3902 = vrot.slane %v3901, 2
          %v3903 = vadd.f32 %v3901, %v3902
          %v3904 = vrot.slane %v3903, 1
          %v3905 = vadd.f32 %v3903, %v3904
          %v3906 = vadd.f32 %v3866, %v3870
          %v3907 = vadd.f32 %v3906, %v3874
          %v3908 = vadd.f32 %v3907, %v3878
          %v3909 = vrot.slane %v3908, 4
          %v3910 = vadd.f32 %v3908, %v3909
          %v3911 = vrot.slane %v3910, 2
          %v3912 = vadd.f32 %v3910, %v3911
          %v3913 = vrot.slane %v3912, 1
          %v3914 = vadd.f32 %v3912, %v3913
          %v3915 = vmul.f32 %v3887, 0.03125
          %v3916 = vmul.f32 %v3896, 0.03125
          %v3917 = vmul.f32 %v3905, 0.03125
          %v3918 = vmul.f32 %v3914, 0.03125
          %v3919 = vld [vmem:[%s351] sm:$0xf]
          %v3920 = vadd.f32 %v3915, 1e-05
          %v3921 = vadd.f32 %v3916, 1e-05
          %v3922 = vadd.f32 %v3917, 1e-05
          %v3923 = vadd.f32 %v3918, 1e-05
          %v3924 = vrsqrt.pop %v3920
          %v3925 = vmul.f32 %v3924, %v3920
          %v3926 = vmul.f32 %v3925, %v3924
          %v3927 = vmul.f32 0.5, %v3926
          %v3928 = vsub.f32 1.5, %v3927
          %v3929 = vmul.f32 %v3924, %v3928
          %vm3930 = vweird.f32 %v3920
          %vm3931 = vweird.f32 %v3924
          %vm3932 = vmor %vm3930, %vm3931
          %v3933 = vsel %vm3932, %v3924, %v3929
          %v3934 = vrsqrt.pop %v3921
          %v3935 = vmul.f32 %v3934, %v3921
          %v3936 = vmul.f32 %v3935, %v3934
          %v3937 = vmul.f32 0.5, %v3936
          %v3938 = vsub.f32 1.5, %v3937
          %v3939 = vmul.f32 %v3934, %v3938
          %vm3940 = vweird.f32 %v3921
          %vm3941 = vweird.f32 %v3934
          %vm3942 = vmor %vm3940, %vm3941
          %v3943 = vsel %vm3942, %v3934, %v3939
          %v3944 = vrsqrt.pop %v3922
          %v3945 = vmul.f32 %v3944, %v3922
          %v3946 = vmul.f32 %v3945, %v3944
          %v3947 = vmul.f32 0.5, %v3946
          %v3948 = vsub.f32 1.5, %v3947
          %v3949 = vmul.f32 %v3944, %v3948
          %vm3950 = vweird.f32 %v3922
          %vm3951 = vweird.f32 %v3944
          %vm3952 = vmor %vm3950, %vm3951
          %v3953 = vsel %vm3952, %v3944, %v3949
          %v3954 = vrsqrt.pop %v3923
          %v3955 = vmul.f32 %v3954, %v3923
          %v3956 = vmul.f32 %v3955, %v3954
          %v3957 = vmul.f32 0.5, %v3956
          %v3958 = vsub.f32 1.5, %v3957
          %v3959 = vmul.f32 %v3954, %v3958
          %vm3960 = vweird.f32 %v3923
          %vm3961 = vweird.f32 %v3954
          %vm3962 = vmor %vm3960, %vm3961
          %v3963 = vsel %vm3962, %v3954, %v3959
          %v3968 = vrot.slane %v3943, 7
          %v3969 = vrot.slane %v3953, 6
          %v3970 = vrot.slane %v3963, 5
          %vm3971 = vcmask 1040384
          %v3972 = vsel %vm3971, %v3933, %v3968
          %vm3973 = vcmask 1042434
          %v3974 = vsel %vm3973, %v3969, %v3970
          %vm3975 = vcmask 1041408
          %v3976 = vsel %vm3975, %v3972, %v3974
          %v3978 = vmul.f32 %v3919, %v3976
          %v3980 = vperm.slane %v3978, 0
          %v3981 = vperm.slane %v3978, 1
          %v3982 = vperm.slane %v3978, 2
          %v3983 = vperm.slane %v3978, 3
          %v3988 = vmul.f32 %v3847, %v3980
          %v3989 = vmul.f32 %v3848, %v3981
          %v3990 = vmul.f32 %v3849, %v3982
          %v3991 = vmul.f32 %v3850, %v3983
          %v3992 = vmul.f32 %v3851, %v3980
          %v3993 = vmul.f32 %v3852, %v3981
          %v3994 = vmul.f32 %v3853, %v3982
          %v3995 = vmul.f32 %v3854, %v3983
          %v3996 = vmul.f32 %v3855, %v3980
          %v3997 = vmul.f32 %v3856, %v3981
          %v3998 = vmul.f32 %v3857, %v3982
          %v3999 = vmul.f32 %v3858, %v3983
          %v4000 = vmul.f32 %v3859, %v3980
          %v4001 = vmul.f32 %v3860, %v3981
          %v4002 = vmul.f32 %v3861, %v3982
          %v4003 = vmul.f32 %v3862, %v3983
          %v4004 = vld [vmem:[%s356] sm:$0xf]
          %v4006 = vperm.slane %v4004, 0
          %v4007 = vperm.slane %v4004, 1
          %v4008 = vperm.slane %v4004, 2
          %v4009 = vperm.slane %v4004, 3
          %v4014 = vadd.f32 %v3988, %v4006
          %v4015 = vadd.f32 %v3989, %v4007
          %v4016 = vadd.f32 %v3990, %v4008
          %v4017 = vadd.f32 %v3991, %v4009
          %v4018 = vadd.f32 %v3992, %v4006
          %v4019 = vadd.f32 %v3993, %v4007
          %v4020 = vadd.f32 %v3994, %v4008
          %v4021 = vadd.f32 %v3995, %v4009
          %v4022 = vadd.f32 %v3996, %v4006
          %v4023 = vadd.f32 %v3997, %v4007
          %v4024 = vadd.f32 %v3998, %v4008
          %v4025 = vadd.f32 %v3999, %v4009
          %v4026 = vadd.f32 %v4000, %v4006
          %v4027 = vadd.f32 %v4001, %v4007
          %v4028 = vadd.f32 %v4002, %v4008
          %v4029 = vadd.f32 %v4003, %v4009
          %vm4030 = vcmp.ge.f32.partialorder %v4014, 0.0
          %vm4031 = vcmp.ge.f32.partialorder %v4015, 0.0
          %vm4032 = vcmp.ge.f32.partialorder %v4016, 0.0
          %vm4033 = vcmp.ge.f32.partialorder %v4017, 0.0
          %vm4034 = vcmp.ge.f32.partialorder %v4018, 0.0
          %vm4035 = vcmp.ge.f32.partialorder %v4019, 0.0
          %vm4036 = vcmp.ge.f32.partialorder %v4020, 0.0
          %vm4037 = vcmp.ge.f32.partialorder %v4021, 0.0
          %vm4038 = vcmp.ge.f32.partialorder %v4022, 0.0
          %vm4039 = vcmp.ge.f32.partialorder %v4023, 0.0
          %vm4040 = vcmp.ge.f32.partialorder %v4024, 0.0
          %vm4041 = vcmp.ge.f32.partialorder %v4025, 0.0
          %vm4042 = vcmp.ge.f32.partialorder %v4026, 0.0
          %vm4043 = vcmp.ge.f32.partialorder %v4027, 0.0
          %vm4044 = vcmp.ge.f32.partialorder %v4028, 0.0
          %vm4045 = vcmp.ge.f32.partialorder %v4029, 0.0
          %v4046 = vmul.f32 %v4014, 0.1
          %v4047 = vmul.f32 %v4015, 0.1
          %v4048 = vmul.f32 %v4016, 0.1
          %v4049 = vmul.f32 %v4017, 0.1
          %v4050 = vmul.f32 %v4018, 0.1
          %v4051 = vmul.f32 %v4019, 0.1
          %v4052 = vmul.f32 %v4020, 0.1
          %v4053 = vmul.f32 %v4021, 0.1
          %v4054 = vmul.f32 %v4022, 0.1
          %v4055 = vmul.f32 %v4023, 0.1
          %v4056 = vmul.f32 %v4024, 0.1
          %v4057 = vmul.f32 %v4025, 0.1
          %v4058 = vmul.f32 %v4026, 0.1
          %v4059 = vmul.f32 %v4027, 0.1
          %v4060 = vmul.f32 %v4028, 0.1
          %v4061 = vmul.f32 %v4029, 0.1
          %v4062 = vsel %vm4030, %v4014, %v4046
          %v4063 = vsel %vm4031, %v4015, %v4047
          %v4064 = vsel %vm4032, %v4016, %v4048
          %v4065 = vsel %vm4033, %v4017, %v4049
          %v4066 = vsel %vm4034, %v4018, %v4050
          %v4067 = vsel %vm4035, %v4019, %v4051
          %v4068 = vsel %vm4036, %v4020, %v4052
          %v4069 = vsel %vm4037, %v4021, %v4053
          %v4070 = vsel %vm4038, %v4022, %v4054
          %v4071 = vsel %vm4039, %v4023, %v4055
          %v4072 = vsel %vm4040, %v4024, %v4056
          %v4073 = vsel %vm4041, %v4025, %v4057
          %v4074 = vsel %vm4042, %v4026, %v4058
          %v4075 = vsel %vm4043, %v4027, %v4059
          %v4076 = vsel %vm4044, %v4028, %v4060
          %v4077 = vsel %vm4045, %v4029, %v4061
          %v4078 = vpack.c.bf16 %v4063, %v4062
          %v4079 = vpack.c.bf16 %v4065, %v4064
          %v4080 = vpack.c.bf16 %v4067, %v4066
          %v4081 = vpack.c.bf16 %v4069, %v4068
          %v4082 = vpack.c.bf16 %v4071, %v4070
          %v4083 = vpack.c.bf16 %v4073, %v4072
          %v4084 = vpack.c.bf16 %v4075, %v4074
          %v4085 = vpack.c.bf16 %v4077, %v4076
          %4086 = vst [vmem:[%s344] sm:$0xff] %v4078
          %4087 = vst [vmem:[%s344 + $0x8] sm:$0xff] %v4079
          %4088 = vst [vmem:[%s344 + $0x10] sm:$0xff] %v4080
          %4089 = vst [vmem:[%s344 + $0x18] sm:$0xff] %v4081
          %4090 = vst [vmem:[%s344 + $0x20] sm:$0xff] %v4082
          %4091 = vst [vmem:[%s344 + $0x28] sm:$0xff] %v4083
          %4092 = vst [vmem:[%s344 + $0x30] sm:$0xff] %v4084
          %4093 = vst [vmem:[%s344 + $0x38] sm:$0xff] %v4085
        $region71: #{detection_forward.5} parent=54 // pred_fallthru
          _
        %s4094 = sand.u32 %s144, 1
        %s4095 = sand.u32 %s144, 1
        %s4096 = smul.addr %s4095, 64
        %s4097 = scalar_lea.vmem [#allocation6], %s4096
        // Predicated region
        $region72: #{detection_forward.5} parent=54 // pred_check
          %p4098 = pneg %p154
        $region73: #{detection_forward.5} parent=54 // pred_check_branch
          %4100 = sbr.rel (%p4098) target = $region75
        $region74: #{detection_forward.5} parent=54 // pred_region
          %s4101 = smul.u32 4, %s22
          %s4102 = smul.addr %s4101, 4
          %s4103 = scalar_lea.vmem %s4, %s4102
          // Predicated region
          $region76: #{detection_forward.5} parent=74 // pred_check
            _
          $region77: #{detection_forward.5} parent=74 // pred_check_branch
            %4105 = sbr.rel (0) target = $region79
          $region78: #{detection_forward.5} parent=74 // pred_region
            // Predicated region
            $region80: #{detection_forward.5} parent=78 // pred_check
              _
            $region81: #{detection_forward.5} parent=78 // pred_check_branch
              %4107 = sbr.rel (0) target = $region83
            $region82: #{detection_forward.5} parent=78 // pred_region
              loop: start=0, step=1, limit=1
              $region84: #{detection_forward.5} parent=82 // loop_pre_header
                _
              $region85: #{detection_forward.5} parent=82 // loop_header
                %s4109 = sphi 0, %s4113
                %p4110 = scmp.ge.s32.totalorder %s4109, 1
                %s4114 = sphi %s4097, %s4097
                %s4115 = sphi %s4103, %s4103
              $region86: #{detection_forward.5} parent=82 // loop_header_branch
                %4112 = sbr.rel (%p4110) target = $region90
              $region87: #{detection_forward.5} parent=82 // loop_body
                %v4116 = vld [vmem:[%s4114] sm:$0xff]
                %4117 = vst [vmem:[%s4115] sm:$0xff] %v4116
                %v4118 = vld [vmem:[%s4114 + $0x8] sm:$0xff]
                %4119 = vst [vmem:[%s4115 + $0x8] sm:$0xff] %v4118
                %v4120 = vld [vmem:[%s4114 + $0x10] sm:$0xff]
                %4121 = vst [vmem:[%s4115 + $0x20] sm:$0xff] %v4120
                %v4122 = vld [vmem:[%s4114 + $0x18] sm:$0xff]
                %4123 = vst [vmem:[%s4115 + $0x28] sm:$0xff] %v4122
                %v4124 = vld [vmem:[%s4114 + $0x20] sm:$0xff]
                %4125 = vst [vmem:[%s4115 + $0x40] sm:$0xff] %v4124
                %v4126 = vld [vmem:[%s4114 + $0x28] sm:$0xff]
                %4127 = vst [vmem:[%s4115 + $0x48] sm:$0xff] %v4126
                %v4128 = vld [vmem:[%s4114 + $0x30] sm:$0xff]
                %4129 = vst [vmem:[%s4115 + $0x60] sm:$0xff] %v4128
                %v4130 = vld [vmem:[%s4114 + $0x38] sm:$0xff]
                %4131 = vst [vmem:[%s4115 + $0x68] sm:$0xff] %v4130
              $region88: #{detection_forward.5} parent=82 // loop_footer
                %s4113 = sadd.s32 1, %s4109
              $region89: #{detection_forward.5} parent=82 // loop_footer_branch
                %4108 = sbr.rel target = $region85
              $region90: #{detection_forward.5} parent=82 // loop_exit
                _
            $region83: #{detection_forward.5} parent=78 // pred_fallthru
              _
            // Predicated region
            $region91: #{detection_forward.5} parent=78 // pred_check
              _
            $region92: #{detection_forward.5} parent=78 // pred_check_branch
              %4133 = sbr.rel target = $region94
            $region93: #{detection_forward.5} parent=78 // pred_region
              _
            $region94: #{detection_forward.5} parent=78 // pred_fallthru
              _
          $region79: #{detection_forward.5} parent=74 // pred_fallthru
            _
          %4134 = vnop
        $region75: #{detection_forward.5} parent=54 // pred_fallthru
          _
      $region55: #{detection_forward.5} parent=5 // pred_fallthru
        _
      %p4135 = scmp.le.s32.totalorder 2, %s13
      // Predicated region
      $region95: #{detection_forward.5} parent=5 // pred_check
        %p4136 = pneg %p4135
      $region96: #{detection_forward.5} parent=5 // pred_check_branch
        %4138 = sbr.rel (%p4136) target = $region98
      $region97: #{detection_forward.5} parent=5 // pred_region
        %s4139 = ssub.s32 %s13, 2
        // Predicated region
        $region99: #{detection_forward.5} parent=97 // pred_check
          %p4140 = pneg %p160
        $region100: #{detection_forward.5} parent=97 // pred_check_branch
          %4142 = sbr.rel (%p4140) target = $region102
        $region101: #{detection_forward.5} parent=97 // pred_region
          %s4143 = sand.u32 %s145, 1
          %s4144 = sand.u32 %s145, 1
          %s4145 = smul.addr %s4144, 64
          %s4146 = scalar_lea.vmem [#allocation6], %s4145
        $region102: #{detection_forward.5} parent=97 // pred_fallthru
          _
      $region98: #{detection_forward.5} parent=5 // pred_fallthru
        _
    $region6: #{detection_forward.5} parent=1 // loop_footer
      %s17 = sadd.s32 1, %s13
    $region7: #{detection_forward.5} parent=1 // loop_footer_branch
      %12 = sbr.rel target = $region3
    $region8: #{detection_forward.5} parent=1 // loop_exit
      _
    %4147 = vsyncpa [#allocation5], 1
    %s4148 = scalar_lea.sflag [#allocation5], 1
    %4149 = vsyncpa %s4148, 1

// kernel: detection_forward.7
$region0: #{detection_forward.7}
  #allocation0 [shape = 'u32[]', space=smem, size = 0x4, offset = 0x4, fixed_abs, tag = 'smem constant byte address 0x4 - core index']
  #allocation1 [shape = 'u32[72,128]{1,0:T(1,128)}', space=vmem, size = 0x9000, scoped, tag = 'internal scratch']
  #allocation2 [shape = 'f32[128,128]{1,0:T(8,128)}', space=vmem, size = 0x10000, scoped, tag = 'scratch operand']
  %s0 = inlined_call_operand.vmem [shape: bf16[128,4608], index: 0, kind: input, shape index: {}]
  %s1 = inlined_call_operand.vmem [shape: bf16[4608,128], index: 1, kind: input, shape index: {}]
  %s2 = inlined_call_operand.vmem [shape: f32[1,128], index: 2, kind: input, shape index: {}]
  %s3 = inlined_call_operand.vmem [shape: f32[1,128], index: 3, kind: input, shape index: {}]
  %s4 = inlined_call_operand.vmem [shape: bf16[128,128], index: 4, kind: output, shape index: {}]
  %s5 = sld [smem:[#allocation0]]
  $region80: #{detection_forward.7} parent=0
    _
  %s7 = ssub.s32 1, %s5
  %s8 = scalar_select 0, %s7, %s5
  $region1: #{detection_forward.7} parent=0
    #allocation3 [shape = 'u8[786432]{0}', space=vmem, size = 0xc0000, scoped, tag = 'input window, operand 0']
    loop: start=0, step=1, limit=5
    $region2: #{detection_forward.7} parent=1 // loop_pre_header
      _
    $region3: #{detection_forward.7} parent=1 // loop_header
      %s10 = sphi 0, %s14
      %p11 = scmp.ge.s32.totalorder %s10, 5
      %s17 = sphi 0, %s29
      %s18 = sphi 0, %s25
      %s19 = sphi 0, %s17
      %s20 = sphi 0, %s18
      %s21 = sphi 0, %s19
      %s22 = sphi 0, %s20
      %s32 = sphi 0, %s34
      %s35 = sphi 0, %s32
      %s36 = sphi 0, %s35
      %s52 = sphi 0, %s36
      %s60 = sphi 0, %s62
      %s63 = sphi 0, %s60
      %s64 = sphi 0, %s63
      %s80 = sphi 0, %s64
      %s86 = sphi 0, %s88
      %s89 = sphi 0, %s86
      %s90 = sphi 0, %s89
      %s106 = sphi 0, %s90
      %s112 = sphi 0, %s114
      %s115 = sphi 0, %s112
      %s116 = sphi 0, %s115
      %s132 = sphi 0, %s116
      %s138 = sphi 0, %s140
      %s141 = sphi 0, %s138
      %s142 = sphi 0, %s141
      %s158 = sphi 0, %s142
    $region4: #{detection_forward.7} parent=1 // loop_header_branch
      %13 = sbr.rel (%p11) target = $region8
    $region5: #{detection_forward.7} parent=1 // loop_body
      %s15 = ssub.s32 %s10, 1
      %s16 = ssub.s32 %s10, 2
      %s23 = sadd.s32 1, %s18
      %p24 = scmp.ge.s32.totalorder %s23, 3
      %s25 = scalar_select %p24, 0, %s23
      %s26 = sadd.s32 1, %s17
      %s27 = scalar_select %p24, %s26, %s17
      %p28 = scmp.ge.s32.totalorder %s27, 1
      %s29 = scalar_select %p28, 0, %s27
      %s30 = ssub.s32 %s18, %s25
      %p31 = scmp.eq.s32.totalorder %s30, 0
      %s33 = sadd.s32 %s32, 1
      %s34 = scalar_select %p31, %s32, %s33
      %p37 = pneg %p31
      %p38 = scmp.eq.s32.totalorder %s10, 2
      %p39 = por %p37, %p38
      %p40 = scmp.ne.s32.totalorder %s32, %s35
      %p41 = scmp.eq.s32.totalorder %s10, 0
      %p42 = por %p40, %p41
      %p43 = scmp.ne.s32.totalorder %s32, %s35
      %p44 = scmp.eq.s32.totalorder %s15, 2
      %p45 = por %p43, %p44
      %p46 = scmp.ne.s32.totalorder %s35, %s36
      %p47 = scmp.eq.s32.totalorder %s15, 0
      %p48 = por %p46, %p47
      %p49 = scmp.ne.s32.totalorder %s35, %s36
      %p50 = scmp.eq.s32.totalorder %s16, 2
      %p51 = por %p49, %p50
      %p53 = scmp.ne.s32.totalorder %s36, %s52
      %p54 = scmp.eq.s32.totalorder %s16, 0
      %p55 = por %p53, %p54
      %s56 = ssub.s32 %s18, %s25
      %s57 = ssub.s32 %s17, %s29
      %s58 = sor.u32 %s56, %s57
      %p59 = scmp.eq.s32.totalorder %s58, 0
      %s61 = sadd.s32 %s60, 1
      %s62 = scalar_select %p59, %s60, %s61
      %p65 = pneg %p59
      %p66 = scmp.eq.s32.totalorder %s10, 2
      %p67 = por %p65, %p66
      %p68 = scmp.ne.s32.totalorder %s60, %s63
      %p69 = scmp.eq.s32.totalorder %s10, 0
      %p70 = por %p68, %p69
      %p71 = scmp.ne.s32.totalorder %s60, %s63
      %p72 = scmp.eq.s32.totalorder %s15, 2
      %p73 = por %p71, %p72
      %p74 = scmp.ne.s32.totalorder %s63, %s64
      %p75 = scmp.eq.s32.totalorder %s15, 0
      %p76 = por %p74, %p75
      %p77 = scmp.ne.s32.totalorder %s63, %s64
      %p78 = scmp.eq.s32.totalorder %s16, 2
      %p79 = por %p77, %p78
      %p81 = scmp.ne.s32.totalorder %s64, %s80
      %p82 = scmp.eq.s32.totalorder %s16, 0
      %p83 = por %p81, %p82
      %s84 = ssub.s32 %s17, %s29
      %p85 = scmp.eq.s32.totalorder %s84, 0
      %s87 = sadd.s32 %s86, 1
      %s88 = scalar_select %p85, %s86, %s87
      %p91 = pneg %p85
      %p92 = scmp.eq.s32.totalorder %s10, 2
      %p93 = por %p91, %p92
      %p94 = scmp.ne.s32.totalorder %s86, %s89
      %p95 = scmp.eq.s32.totalorder %s10, 0
      %p96 = por %p94, %p95
      %p97 = scmp.ne.s32.totalorder %s86, %s89
      %p98 = scmp.eq.s32.totalorder %s15, 2
      %p99 = por %p97, %p98
      %p100 = scmp.ne.s32.totalorder %s89, %s90
      %p101 = scmp.eq.s32.totalorder %s15, 0
      %p102 = por %p100, %p101
      %p103 = scmp.ne.s32.totalorder %s89, %s90
      %p104 = scmp.eq.s32.totalorder %s16, 2
      %p105 = por %p103, %p104
      %p107 = scmp.ne.s32.totalorder %s90, %s106
      %p108 = scmp.eq.s32.totalorder %s16, 0
      %p109 = por %p107, %p108
      %s110 = ssub.s32 %s17, %s29
      %p111 = scmp.eq.s32.totalorder %s110, 0
      %s113 = sadd.s32 %s112, 1
      %s114 = scalar_select %p111, %s112, %s113
      %p117 = pneg %p111
      %p118 = scmp.eq.s32.totalorder %s10, 2
      %p119 = por %p117, %p118
      %p120 = scmp.ne.s32.totalorder %s112, %s115
      %p121 = scmp.eq.s32.totalorder %s10, 0
      %p122 = por %p120, %p121
      %p123 = scmp.ne.s32.totalorder %s112, %s115
      %p124 = scmp.eq.s32.totalorder %s15, 2
      %p125 = por %p123, %p124
      %p126 = scmp.ne.s32.totalorder %s115, %s116
      %p127 = scmp.eq.s32.totalorder %s15, 0
      %p128 = por %p126, %p127
      %p129 = scmp.ne.s32.totalorder %s115, %s116
      %p130 = scmp.eq.s32.totalorder %s16, 2
      %p131 = por %p129, %p130
      %p133 = scmp.ne.s32.totalorder %s116, %s132
      %p134 = scmp.eq.s32.totalorder %s16, 0
      %p135 = por %p133, %p134
      %s136 = ssub.s32 %s17, %s29
      %p137 = scmp.eq.s32.totalorder %s136, 0
      %s139 = sadd.s32 %s138, 1
      %s140 = scalar_select %p137, %s138, %s139
      %p143 = pneg %p137
      %p144 = scmp.eq.s32.totalorder %s10, 2
      %p145 = por %p143, %p144
      %p146 = scmp.ne.s32.totalorder %s138, %s141
      %p147 = scmp.eq.s32.totalorder %s10, 0
      %p148 = por %p146, %p147
      %p149 = scmp.ne.s32.totalorder %s138, %s141
      %p150 = scmp.eq.s32.totalorder %s15, 2
      %p151 = por %p149, %p150
      %p152 = scmp.ne.s32.totalorder %s141, %s142
      %p153 = scmp.eq.s32.totalorder %s15, 0
      %p154 = por %p152, %p153
      %p155 = scmp.ne.s32.totalorder %s141, %s142
      %p156 = scmp.eq.s32.totalorder %s16, 2
      %p157 = por %p155, %p156
      %p159 = scmp.ne.s32.totalorder %s142, %s158
      %p160 = scmp.eq.s32.totalorder %s16, 0
      %p161 = por %p159, %p160
      %p162 = scmp.le.s32.totalorder 1, %s10
      %p163 = scmp.lt.s32.totalorder %s10, 4
      %p164 = pnand %p162, %p163
      %p165 = pneg %p164
      // Predicated region
      $region9: #{detection_forward.7} parent=5 // pred_check
        _
      $region10: #{detection_forward.7} parent=5 // pred_check_branch
        %167 = sbr.rel (%p164) target = $region12
      $region11: #{detection_forward.7} parent=5 // pred_region
        %s168 = ssub.s32 %s10, 1
        // Predicated region
        $region13: #{detection_forward.7} parent=11 // pred_check
          %p169 = pneg %p102
        $region14: #{detection_forward.7} parent=11 // pred_check_branch
          %171 = sbr.rel (%p169) target = $region16
        $region15: #{detection_forward.7} parent=11 // pred_region
          %p172 = scmp.lt.s32.totalorder %s19, 0
          %s173 = scalar_select %p172, %s19, 0
          %s174 = scalar_lea.vmem %s2, %s173
        $region16: #{detection_forward.7} parent=11 // pred_fallthru
          _
        // Predicated region
        $region17: #{detection_forward.7} parent=11 // pred_check
          %p175 = pneg %p128
        $region18: #{detection_forward.7} parent=11 // pred_check_branch
          %177 = sbr.rel (%p175) target = $region20
        $region19: #{detection_forward.7} parent=11 // pred_region
          %p178 = scmp.lt.s32.totalorder %s19, 0
          %s179 = scalar_select %p178, %s19, 0
          %s180 = scalar_lea.vmem %s3, %s179
        $region20: #{detection_forward.7} parent=11 // pred_fallthru
          _
      $region12: #{detection_forward.7} parent=5 // pred_fallthru
        _
      %p181 = scmp.lt.s32.totalorder %s10, 3
      // Predicated region
      $region21: #{detection_forward.7} parent=5 // pred_check
        %p182 = pneg %p181
      $region22: #{detection_forward.7} parent=5 // pred_check_branch
        %184 = sbr.rel (%p182) target = $region24
      $region23: #{detection_forward.7} parent=5 // pred_region
        // Predicated region
        $region25: #{detection_forward.7} parent=23 // pred_check
          %p185 = pneg %p42
        $region26: #{detection_forward.7} parent=23 // pred_check_branch
          %187 = sbr.rel (%p185) target = $region28
        $region27: #{detection_forward.7} parent=23 // pred_region
          %s188 = sand.u32 %s32, 1
          %s189 = sand.u32 %s32, 1
          %s190 = smul.addr %s189, 768
          %s191 = scalar_lea.vmem [#allocation3], %s190
          %s192 = smul.u32 12, %s18
          %s193 = smul.addr %s192, 4
          %s194 = scalar_lea.vmem %s0, %s193
          // Predicated region
          $region29: #{detection_forward.7} parent=27 // pred_check
            _
          $region30: #{detection_forward.7} parent=27 // pred_check_branch
            %196 = sbr.rel (0) target = $region32
          $region31: #{detection_forward.7} parent=27 // pred_region
            // Predicated region
            $region33: #{detection_forward.7} parent=31 // pred_check
              _
            $region34: #{detection_forward.7} parent=31 // pred_check_branch
              %198 = sbr.rel (0) target = $region36
            $region35: #{detection_forward.7} parent=31 // pred_region
              loop: start=0, step=1, limit=1
              $region37: #{detection_forward.7} parent=35 // loop_pre_header
                _
              $region38: #{detection_forward.7} parent=35 // loop_header
                %s200 = sphi 0, %s204
                %p201 = scmp.ge.s32.totalorder %s200, 1
                %s205 = sphi %s194, %s194
                %s206 = sphi %s191, %s191
              $region39: #{detection_forward.7} parent=35 // loop_header_branch
                %203 = sbr.rel (%p201) target = $region43
              $region40: #{detection_forward.7} parent=35 // loop_body
                %v207 = vld [vmem:[%s205] sm:$0xff]
                %208 = vst [vmem:[%s206] sm:$0xff] %v207
                %v209 = vld [vmem:[%s205 + $0x8] sm:$0xff]
                %210 = vst [vmem:[%s206 + $0x8] sm:$0xff] %v209
                %v211 = vld [vmem:[%s205 + $0x10] sm:$0xff]
                %212 = vst [vmem:[%s206 + $0x10] sm:$0xff] %v211
                %v213 = vld [vmem:[%s205 + $0x18] sm:$0xff]
                %214 = vst [vmem:[%s206 + $0x18] sm:$0xff] %v213
                %v215 = vld [vmem:[%s205 + $0x20] sm:$0xff]
                %216 = vst [vmem:[%s206 + $0x20] sm:$0xff] %v215
                %v217 = vld [vmem:[%s205 + $0x28] sm:$0xff]
                %218 = vst [vmem:[%s206 + $0x28] sm:$0xff] %v217
                %v219 = vld [vmem:[%s205 + $0x90] sm:$0xff]
                %220 = vst [vmem:[%s206 + $0x30] sm:$0xff] %v219
                %v221 = vld [vmem:[%s205 + $0x98] sm:$0xff]
                %222 = vst [vmem:[%s206 + $0x38] sm:$0xff] %v221
                %v223 = vld [vmem:[%s205 + $0xa0] sm:$0xff]
                %224 = vst [vmem:[%s206 + $0x40] sm:$0xff] %v223
                %v225 = vld [vmem:[%s205 + $0xa8] sm:$0xff]
                %226 = vst [vmem:[%s206 + $0x48] sm:$0xff] %v225
                %v227 = vld [vmem:[%s205 + $0xb0] sm:$0xff]
                %228 = vst [vmem:[%s206 + $0x50] sm:$0xff] %v227
                %v229 = vld [vmem:[%s205 + $0xb8] sm:$0xff]
                %230 = vst [vmem:[%s206 + $0x58] sm:$0xff] %v229
                %v231 = vld [vmem:[%s205 + $0x120] sm:$0xff]
                %232 = vst [vmem:[%s206 + $0x60] sm:$0xff] %v231
                %v233 = vld [vmem:[%s205 + $0x128] sm:$0xff]
                %234 = vst [vmem:[%s206 + $0x68] sm:$0xff] %v233
                %v235 = vld [vmem:[%s205 + $0x130] sm:$0xff]
                %236 = vst [vmem:[%s206 + $0x70] sm:$0xff] %v235
                %v237 = vld [vmem:[%s205 + $0x138] sm:$0xff]
                %238 = vst [vmem:[%s206 + $0x78] sm:$0xff] %v237
                %v239 = vld [vmem:[%s205 + $0x140] sm:$0xff]
                %240 = vst [vmem:[%s206 + $0x80] sm:$0xff] %v239
                %v241 = vld [vmem:[%s205 + $0x148] sm:$0xff]
                %242 = vst [vmem:[%s206 + $0x88] sm:$0xff] %v241
                %v243 = vld [vmem:[%s205 + $0x1b0] sm:$0xff]
                %244 = vst [vmem:[%s206 + $0x90] sm:$0xff] %v243
                %v245 = vld [vmem:[%s205 + $0x1b8] sm:$0xff]
                %246 = vst [vmem:[%s206 + $0x98] sm:$0xff] %v245
                %v247 = vld [vmem:[%s205 + $0x1c0] sm:$0xff]
                %248 = vst [vmem:[%s206 + $0xa0] sm:$0xff] %v247
                %v249 = vld [vmem:[%s205 + $0x1c8] sm:$0xff]
                %250 = vst [vmem:[%s206 + $0xa8] sm:$0xff] %v249
                %v251 = vld [vmem:[%s205 + $0x1d0] sm:$0xff]
                %252 = vst [vmem:[%s206 + $0xb0] sm:$0xff] %v251
                %v253 = vld [vmem:[%s205 + $0x1d8] sm:$0xff]
                %254 = vst [vmem:[%s206 + $0xb8] sm:$0xff] %v253
                %v255 = vld [vmem:[%s205 + $0x240] sm:$0xff]
                %256 = vst [vmem:[%s206 + $0xc0] sm:$0xff] %v255
                %v257 = vld [vmem:[%s205 + $0x248] sm:$0xff]
                %258 = vst [vmem:[%s206 + $0xc8] sm:$0xff] %v257
                %v259 = vld [vmem:[%s205 + $0x250] sm:$0xff]
                %260 = vst [vmem:[%s206 + $0xd0] sm:$0xff] %v259
                %v261 = vld [vmem:[%s205 + $0x258] sm:$0xff]
                %262 = vst [vmem:[%s206 + $0xd8] sm:$0xff] %v261
                %v263 = vld [vmem:[%s205 + $0x260] sm:$0xff]
                %264 = vst [vmem:[%s206 + $0xe0] sm:$0xff] %v263
                %v265 = vld [vmem:[%s205 + $0x268] sm:$0xff]
                %266 = vst [vmem:[%s206 + $0xe8] sm:$0xff] %v265
                %v267 = vld [vmem:[%s205 + $0x2d0] sm:$0xff]
                %268 = vst [vmem:[%s206 + $0xf0] sm:$0xff] %v267
                %v269 = vld [vmem:[%s205 + $0x2d8] sm:$0xff]
                %270 = vst [vmem:[%s206 + $0xf8] sm:$0xff] %v269
                %v271 = vld [vmem:[%s205 + $0x2e0] sm:$0xff]
                %272 = vst [vmem:[%s206 + $0x100] sm:$0xff] %v271
                %v273 = vld [vmem:[%s205 + $0x2e8] sm:$0xff]
                %274 = vst [vmem:[%s206 + $0x108] sm:$0xff] %v273
                %v275 = vld [vmem:[%s205 + $0x2f0] sm:$0xff]
                %276 = vst [vmem:[%s206 + $0x110] sm:$0xff] %v275
                %v277 = vld [vmem:[%s205 + $0x2f8] sm:$0xff]
                %278 = vst [vmem:[%s206 + $0x118] sm:$0xff] %v277
                %v279 = vld [vmem:[%s205 + $0x360] sm:$0xff]
                %280 = vst [vmem:[%s206 + $0x120] sm:$0xff] %v279
                %v281 = vld [vmem:[%s205 + $0x368] sm:$0xff]
                %282 = vst [vmem:[%s206 + $0x128] sm:$0xff] %v281
                %v283 = vld [vmem:[%s205 + $0x370] sm:$0xff]
                %284 = vst [vmem:[%s206 + $0x130] sm:$0xff] %v283
                %v285 = vld [vmem:[%s205 + $0x378] sm:$0xff]
                %286 = vst [vmem:[%s206 + $0x138] sm:$0xff] %v285
                %v287 = vld [vmem:[%s205 + $0x380] sm:$0xff]
                %288 = vst [vmem:[%s206 + $0x140] sm:$0xff] %v287
                %v289 = vld [vmem:[%s205 + $0x388] sm:$0xff]
                %290 = vst [vmem:[%s206 + $0x148] sm:$0xff] %v289
                %v291 = vld [vmem:[%s205 + $0x3f0] sm:$0xff]
                %292 = vst [vmem:[%s206 + $0x150] sm:$0xff] %v291
                %v293 = vld [vmem:[%s205 + $0x3f8] sm:$0xff]
                %294 = vst [vmem:[%s206 + $0x158] sm:$0xff] %v293
                %v295 = vld [vmem:[%s205 + $0x400] sm:$0xff]
                %296 = vst [vmem:[%s206 + $0x160] sm:$0xff] %v295
                %v297 = vld [vmem:[%s205 + $0x408] sm:$0xff]
                %298 = vst [vmem:[%s206 + $0x168] sm:$0xff] %v297
                %v299 = vld [vmem:[%s205 + $0x410] sm:$0xff]
                %300 = vst [vmem:[%s206 + $0x170] sm:$0xff] %v299
                %v301 = vld [vmem:[%s205 + $0x418] sm:$0xff]
                %302 = vst [vmem:[%s206 + $0x178] sm:$0xff] %v301
                %v303 = vld [vmem:[%s205 + $0x480] sm:$0xff]
                %304 = vst [vmem:[%s206 + $0x180] sm:$0xff] %v303
                %v305 = vld [vmem:[%s205 + $0x488] sm:$0xff]
                %306 = vst [vmem:[%s206 + $0x188] sm:$0xff] %v305
                %v307 = vld [vmem:[%s205 + $0x490] sm:$0xff]
                %308 = vst [vmem:[%s206 + $0x190] sm:$0xff] %v307
                %v309 = vld [vmem:[%s205 + $0x498] sm:$0xff]
                %310 = vst [vmem:[%s206 + $0x198] sm:$0xff] %v309
                %v311 = vld [vmem:[%s205 + $0x4a0] sm:$0xff]
                %312 = vst [vmem:[%s206 + $0x1a0] sm:$0xff] %v311
                %v313 = vld [vmem:[%s205 + $0x4a8] sm:$0xff]
                %314 = vst [vmem:[%s206 + $0x1a8] sm:$0xff] %v313
                %v315 = vld [vmem:[%s205 + $0x510] sm:$0xff]
                %316 = vst [vmem:[%s206 + $0x1b0] sm:$0xff] %v315
                %v317 = vld [vmem:[%s205 + $0x518] sm:$0xff]
                %318 = vst [vmem:[%s206 + $0x1b8] sm:$0xff] %v317
                %v319 = vld [vmem:[%s205 + $0x520] sm:$0xff]
                %320 = vst [vmem:[%s206 + $0x1c0] sm:$0xff] %v319
                %v321 = vld [vmem:[%s205 + $0x528] sm:$0xff]
                %322 = vst [vmem:[%s206 + $0x1c8] sm:$0xff] %v321
                %v323 = vld [vmem:[%s205 + $0x530] sm:$0xff]
                %324 = vst [vmem:[%s206 + $0x1d0] sm:$0xff] %v323
                %v325 = vld [vmem:[%s205 + $0x538] sm:$0xff]
                %326 = vst [vmem:[%s206 + $0x1d8] sm:$0xff] %v325
                %v327 = vld [vmem:[%s205 + $0x5a0] sm:$0xff]
                %328 = vst [vmem:[%s206 + $0x1e0] sm:$0xff] %v327
                %v329 = vld [vmem:[%s205 + $0x5a8] sm:$0xff]
                %330 = vst [vmem:[%s206 + $0x1e8] sm:$0xff] %v329
                %v331 = vld [vmem:[%s205 + $0x5b0] sm:$0xff]
                %332 = vst [vmem:[%s206 + $0x1f0] sm:$0xff] %v331
                %v333 = vld [vmem:[%s205 + $0x5b8] sm:$0xff]
                %334 = vst [vmem:[%s206 + $0x1f8] sm:$0xff] %v333
                %v335 = vld [vmem:[%s205 + $0x5c0] sm:$0xff]
                %336 = vst [vmem:[%s206 + $0x200] sm:$0xff] %v335
                %v337 = vld [vmem:[%s205 + $0x5c8] sm:$0xff]
                %338 = vst [vmem:[%s206 + $0x208] sm:$0xff] %v337
                %v339 = vld [vmem:[%s205 + $0x630] sm:$0xff]
                %340 = vst [vmem:[%s206 + $0x210] sm:$0xff] %v339
                %v341 = vld [vmem:[%s205 + $0x638] sm:$0xff]
                %342 = vst [vmem:[%s206 + $0x218] sm:$0xff] %v341
                %v343 = vld [vmem:[%s205 + $0x640] sm:$0xff]
                %344 = vst [vmem:[%s206 + $0x220] sm:$0xff] %v343
                %v345 = vld [vmem:[%s205 + $0x648] sm:$0xff]
                %346 = vst [vmem:[%s206 + $0x228] sm:$0xff] %v345
                %v347 = vld [vmem:[%s205 + $0x650] sm:$0xff]
                %348 = vst [vmem:[%s206 + $0x230] sm:$0xff] %v347
                %v349 = vld [vmem:[%s205 + $0x658] sm:$0xff]
                %350 = vst [vmem:[%s206 + $0x238] sm:$0xff] %v349
                %v351 = vld [vmem:[%s205 + $0x6c0] sm:$0xff]
                %352 = vst [vmem:[%s206 + $0x240] sm:$0xff] %v351
                %v353 = vld [vmem:[%s205 + $0x6c8] sm:$0xff]
                %354 = vst [vmem:[%s206 + $0x248] sm:$0xff] %v353
                %v355 = vld [vmem:[%s205 + $0x6d0] sm:$0xff]
                %356 = vst [vmem:[%s206 + $0x250] sm:$0xff] %v355
                %v357 = vld [vmem:[%s205 + $0x6d8] sm:$0xff]
                %358 = vst [vmem:[%s206 + $0x258] sm:$0xff] %v357
                %v359 = vld [vmem:[%s205 + $0x6e0] sm:$0xff]
                %360 = vst [vmem:[%s206 + $0x260] sm:$0xff] %v359
                %v361 = vld [vmem:[%s205 + $0x6e8] sm:$0xff]
                %362 = vst [vmem:[%s206 + $0x268] sm:$0xff] %v361
                %v363 = vld [vmem:[%s205 + $0x750] sm:$0xff]
                %364 = vst [vmem:[%s206 + $0x270] sm:$0xff] %v363
                %v365 = vld [vmem:[%s205 + $0x758] sm:$0xff]
                %366 = vst [vmem:[%s206 + $0x278] sm:$0xff] %v365
                %v367 = vld [vmem:[%s205 + $0x760] sm:$0xff]
                %368 = vst [vmem:[%s206 + $0x280] sm:$0xff] %v367
                %v369 = vld [vmem:[%s205 + $0x768] sm:$0xff]
                %370 = vst [vmem:[%s206 + $0x288] sm:$0xff] %v369
                %v371 = vld [vmem:[%s205 + $0x770] sm:$0xff]
                %372 = vst [vmem:[%s206 + $0x290] sm:$0xff] %v371
                %v373 = vld [vmem:[%s205 + $0x778] sm:$0xff]
                %374 = vst [vmem:[%s206 + $0x298] sm:$0xff] %v373
                %v375 = vld [vmem:[%s205 + $0x7e0] sm:$0xff]
                %376 = vst [vmem:[%s206 + $0x2a0] sm:$0xff] %v375
                %v377 = vld [vmem:[%s205 + $0x7e8] sm:$0xff]
                %378 = vst [vmem:[%s206 + $0x2a8] sm:$0xff] %v377
                %v379 = vld [vmem:[%s205 + $0x7f0] sm:$0xff]
                %380 = vst [vmem:[%s206 + $0x2b0] sm:$0xff] %v379
                %v381 = vld [vmem:[%s205 + $0x7f8] sm:$0xff]
                %382 = vst [vmem:[%s206 + $0x2b8] sm:$0xff] %v381
                %v383 = vld [vmem:[%s205 + $0x800] sm:$0xff]
                %384 = vst [vmem:[%s206 + $0x2c0] sm:$0xff] %v383
                %v385 = vld [vmem:[%s205 + $0x808] sm:$0xff]
                %386 = vst [vmem:[%s206 + $0x2c8] sm:$0xff] %v385
                %v387 = vld [vmem:[%s205 + $0x870] sm:$0xff]
                %388 = vst [vmem:[%s206 + $0x2d0] sm:$0xff] %v387
                %v389 = vld [vmem:[%s205 + $0x878] sm:$0xff]
                %390 = vst [vmem:[%s206 + $0x2d8] sm:$0xff] %v389
                %v391 = vld [vmem:[%s205 + $0x880] sm:$0xff]
                %392 = vst [vmem:[%s206 + $0x2e0] sm:$0xff] %v391
                %v393 = vld [vmem:[%s205 + $0x888] sm:$0xff]
                %394 = vst [vmem:[%s206 + $0x2e8] sm:$0xff] %v393
                %v395 = vld [vmem:[%s205 + $0x890] sm:$0xff]
                %396 = vst [vmem:[%s206 + $0x2f0] sm:$0xff] %v395
                %v397 = vld [vmem:[%s205 + $0x898] sm:$0xff]
                %398 = vst [vmem:[%s206 + $0x2f8] sm:$0xff] %v397
              $region41: #{detection_forward.7} parent=35 // loop_footer
                %s204 = sadd.s32 1, %s200
              $region42: #{detection_forward.7} parent=35 // loop_footer_branch
                %199 = sbr.rel target = $region38
              $region43: #{detection_forward.7} parent=35 // loop_exit
                _
            $region36: #{detection_forward.7} parent=31 // pred_fallthru
              _
            // Predicated region
            $region44: #{detection_forward.7} parent=31 // pred_check
              _
            $region45: #{detection_forward.7} parent=31 // pred_check_branch
              %400 = sbr.rel target = $region47
            $region46: #{detection_forward.7} parent=31 // pred_region
              _
            $region47: #{detection_forward.7} parent=31 // pred_fallthru
              _
          $region32: #{detection_forward.7} parent=27 // pred_fallthru
            _
          %401 = vnop
        $region28: #{detection_forward.7} parent=23 // pred_fallthru
          _
        // Predicated region
        $region48: #{detection_forward.7} parent=23 // pred_check
          %p402 = pneg %p70
        $region49: #{detection_forward.7} parent=23 // pred_check_branch
          %404 = sbr.rel (%p402) target = $region51
        $region50: #{detection_forward.7} parent=23 // pred_region
          %s405 = smul.u32 192, %s18
          %p406 = scmp.lt.s32.totalorder %s405, 575
          %s407 = scalar_select %p406, %s405, 575
          %p408 = scmp.lt.s32.totalorder %s17, 0
          %s409 = scalar_select %p408, %s17, 0
          %s410 = sadd.s32 %s409, %s407
          %s411 = smul.addr %s410, 4
          %s412 = scalar_lea.vmem %s1, %s411
          %s413 = smul.u32 192, %s18
        $region51: #{detection_forward.7} parent=23 // pred_fallthru
          _
      $region24: #{detection_forward.7} parent=5 // pred_fallthru
        _
      %p414 = scmp.le.s32.totalorder 1, %s10
      %p415 = scmp.lt.s32.totalorder %s10, 4
      %p416 = pnand %p414, %p415
      %p417 = pneg %p416
      // Predicated region
      $region52: #{detection_forward.7} parent=5 // pred_check
        _
      $region53: #{detection_forward.7} parent=5 // pred_check_branch
        %419 = sbr.rel (%p416) target = $region55
      $region54: #{detection_forward.7} parent=5 // pred_region
        %s420 = ssub.s32 %s10, 1
        %s421 = sand.u32 %s35, 1
        %s422 = sand.u32 %s35, 1
        %s423 = smul.addr %s422, 768
        %s424 = scalar_lea.vmem [#allocation3], %s423
        // Predicated region
        $region56: #{detection_forward.7} parent=54 // pred_check
          %p425 = pneg %p48
        $region57: #{detection_forward.7} parent=54 // pred_check_branch
          %427 = sbr.rel (%p425) target = $region59
        $region58: #{detection_forward.7} parent=54 // pred_region
          _
        $region59: #{detection_forward.7} parent=54 // pred_fallthru
          _
        %s428 = sand.u32 %s35, 1
        %s429 = sand.u32 %s35, 1
        %s430 = smul.addr %s429, 768
        %s431 = scalar_lea.vmem [#allocation3], %s430
        %p432 = pneg %p48
        %p433 = pneg %p45
        %s434 = smul.u32 192, %s20
        %p435 = scmp.lt.s32.totalorder %s434, 575
        %s436 = scalar_select %p435, %s434, 575
        %p437 = scmp.lt.s32.totalorder %s19, 0
        %s438 = scalar_select %p437, %s19, 0
        %s439 = sadd.s32 %s438, %s436
        %s440 = smul.addr %s439, 4
        %s441 = scalar_lea.vmem %s1, %s440
        %p442 = pneg %p76
        %p443 = pneg %p73
        %p444 = scmp.lt.s32.totalorder %s19, 0
        %s445 = scalar_select %p444, %s19, 0
        %s446 = scalar_lea.vmem %s2, %s445
        %p447 = pneg %p102
        %p448 = pneg %p99
        %p449 = scmp.lt.s32.totalorder %s19, 0
        %s450 = scalar_select %p449, %s19, 0
        %s451 = scalar_lea.vmem %s3, %s450
        %p452 = pneg %p128
        %p453 = pneg %p125
        %p454 = pneg %p154
        %p455 = pneg %p151
        %p456 = scmp.lt.s32.totalorder %s19, 0
        %s457 = scalar_select %p456, %s19, 0
        %s458 = smul.addr %s457, 4
        %s459 = scalar_lea.vmem %s4, %s458
        %s460 = smul.u32 12, %s20
        %s461 = smul.u32 192, %s20
        %p462 = scmp.lt.s32.totalorder %s461, 575
        %s463 = scalar_select %p462, %s461, 575
        %p464 = scmp.lt.s32.totalorder %s19, 0
        %s465 = scalar_select %p464, %s19, 0
        %s466 = sadd.s32 %s465, %s463
        %s467 = smul.addr %s466, 4
        %s468 = scalar_lea.vmem %s1, %s467
        %s469 = smul.u32 192, %s20
        %p470 = scmp.lt.s32.totalorder %s19, 0
        %s471 = scalar_select %p470, %s19, 0
        %s472 = scalar_lea.vmem %s2, %s471
        %p473 = scmp.lt.s32.totalorder %s19, 0
        %s474 = scalar_select %p473, %s19, 0
        %s475 = scalar_lea.vmem %s3, %s474
        %p476 = scmp.lt.s32.totalorder %s19, 0
        %s477 = scalar_select %p476, %s19, 0
        %s478 = smul.addr %s477, 4
        %s479 = scalar_lea.vmem %s4, %s478
        %p480 = scmp.eq.s32.totalorder %s20, 0
        // Predicated region
        $region60: #{detection_forward.7} parent=54 // pred_check
          %p481 = pneg %p480
        $region61: #{detection_forward.7} parent=54 // pred_check_branch
          %483 = sbr.rel (%p481) target = $region63
        $region62: #{detection_forward.7} parent=54 // pred_region
          %484 = vst [vmem:[#allocation2] sm:$0xff] 0.0
          %485 = vst [vmem:[#allocation2 + $0x8] sm:$0xff] 0.0
          %486 = vst [vmem:[#allocation2 + $0x10] sm:$0xff] 0.0
          %487 = vst [vmem:[#allocation2 + $0x18] sm:$0xff] 0.0
          %488 = vst [vmem:[#allocation2 + $0x20] sm:$0xff] 0.0
          %489 = vst [vmem:[#allocation2 + $0x28] sm:$0xff] 0.0
          %490 = vst [vmem:[#allocation2 + $0x30] sm:$0xff] 0.0
          %491 = vst [vmem:[#allocation2 + $0x38] sm:$0xff] 0.0
          %492 = vst [vmem:[#allocation2 + $0x40] sm:$0xff] 0.0
          %493 = vst [vmem:[#allocation2 + $0x48] sm:$0xff] 0.0
          %494 = vst [vmem:[#allocation2 + $0x50] sm:$0xff] 0.0
          %495 = vst [vmem:[#allocation2 + $0x58] sm:$0xff] 0.0
          %496 = vst [vmem:[#allocation2 + $0x60] sm:$0xff] 0.0
          %497 = vst [vmem:[#allocation2 + $0x68] sm:$0xff] 0.0
          %498 = vst [vmem:[#allocation2 + $0x70] sm:$0xff] 0.0
          %499 = vst [vmem:[#allocation2 + $0x78] sm:$0xff] 0.0
        $region63: #{detection_forward.7} parent=54 // pred_fallthru
          _
        %v500 = vld [vmem:[#allocation2] sm:$0xff]
        %v501 = vld [vmem:[#allocation2 + $0x8] sm:$0xff]
        %v502 = vld [vmem:[#allocation2 + $0x10] sm:$0xff]
        %v503 = vld [vmem:[#allocation2 + $0x18] sm:$0xff]
        %v504 = vld [vmem:[#allocation2 + $0x20] sm:$0xff]
        %v505 = vld [vmem:[#allocation2 + $0x28] sm:$0xff]
        %v506 = vld [vmem:[#allocation2 + $0x30] sm:$0xff]
        %v507 = vld [vmem:[#allocation2 + $0x38] sm:$0xff]
        %v508 = vld [vmem:[#allocation2 + $0x40] sm:$0xff]
        %v509 = vld [vmem:[#allocation2 + $0x48] sm:$0xff]
        %v510 = vld [vmem:[#allocation2 + $0x50] sm:$0xff]
        %v511 = vld [vmem:[#allocation2 + $0x58] sm:$0xff]
        %v512 = vld [vmem:[#allocation2 + $0x60] sm:$0xff]
        %v513 = vld [vmem:[#allocation2 + $0x68] sm:$0xff]
        %v514 = vld [vmem:[#allocation2 + $0x70] sm:$0xff]
        %v515 = vld [vmem:[#allocation2 + $0x78] sm:$0xff]
        %v516 = vld [vmem:[%s424] sm:$0xff]
        %v517 = vld [vmem:[%s424 + $0x8] sm:$0xff]
        %v518 = vld [vmem:[%s424 + $0x10] sm:$0xff]
        %v519 = vld [vmem:[%s424 + $0x18] sm:$0xff]
        %v520 = vld [vmem:[%s424 + $0x20] sm:$0xff]
        %v521 = vld [vmem:[%s424 + $0x28] sm:$0xff]
        %v522 = vld [vmem:[%s424 + $0x30] sm:$0xff]
        %v523 = vld [vmem:[%s424 + $0x38] sm:$0xff]
        %v524 = vld [vmem:[%s424 + $0x40] sm:$0xff]
        %v525 = vld [vmem:[%s424 + $0x48] sm:$0xff]
        %v526 = vld [vmem:[%s424 + $0x50] sm:$0xff]
        %v527 = vld [vmem:[%s424 + $0x58] sm:$0xff]
        %v528 = vld [vmem:[%s424 + $0x60] sm:$0xff]
        %v529 = vld [vmem:[%s424 + $0x68] sm:$0xff]
        %v530 = vld [vmem:[%s424 + $0x70] sm:$0xff]
        %v531 = vld [vmem:[%s424 + $0x78] sm:$0xff]
        %v532 = vld [vmem:[%s424 + $0x80] sm:$0xff]
        %v533 = vld [vmem:[%s424 + $0x88] sm:$0xff]
        %v534 = vld [vmem:[%s424 + $0x90] sm:$0xff]
        %v535 = vld [vmem:[%s424 + $0x98] sm:$0xff]
        %v536 = vld [vmem:[%s424 + $0xa0] sm:$0xff]
        %v537 = vld [vmem:[%s424 + $0xa8] sm:$0xff]
        %v538 = vld [vmem:[%s424 + $0xb0] sm:$0xff]
        %v539 = vld [vmem:[%s424 + $0xb8] sm:$0xff]
        %v540 = vld [vmem:[%s424 + $0xc0] sm:$0xff]
        %v541 = vld [vmem:[%s424 + $0xc8] sm:$0xff]
        %v542 = vld [vmem:[%s424 + $0xd0] sm:$0xff]
        %v543 = vld [vmem:[%s424 + $0xd8] sm:$0xff]
        %v544 = vld [vmem:[%s424 + $0xe0] sm:$0xff]
        %v545 = vld [vmem:[%s424 + $0xe8] sm:$0xff]
        %v546 = vld [vmem:[%s424 + $0xf0] sm:$0xff]
        %v547 = vld [vmem:[%s424 + $0xf8] sm:$0xff]
        %v548 = vld [vmem:[%s424 + $0x100] sm:$0xff]
        %v549 = vld [vmem:[%s424 + $0x108] sm:$0xff]
        %v550 = vld [vmem:[%s424 + $0x110] sm:$0xff]
        %v551 = vld [vmem:[%s424 + $0x118] sm:$0xff]
        %v552 = vld [vmem:[%s424 + $0x120] sm:$0xff]
        %v553 = vld [vmem:[%s424 + $0x128] sm:$0xff]
        %v554 = vld [vmem:[%s424 + $0x130] sm:$0xff]
        %v555 = vld [vmem:[%s424 + $0x138] sm:$0xff]
        %v556 = vld [vmem:[%s424 + $0x140] sm:$0xff]
        %v557 = vld [vmem:[%s424 + $0x148] sm:$0xff]
        %v558 = vld [vmem:[%s424 + $0x150] sm:$0xff]
        %v559 = vld [vmem:[%s424 + $0x158] sm:$0xff]
        %v560 = vld [vmem:[%s424 + $0x160] sm:$0xff]
        %v561 = vld [vmem:[%s424 + $0x168] sm:$0xff]
        %v562 = vld [vmem:[%s424 + $0x170] sm:$0xff]
        %v563 = vld [vmem:[%s424 + $0x178] sm:$0xff]
        %v564 = vld [vmem:[%s424 + $0x180] sm:$0xff]
        %v565 = vld [vmem:[%s424 + $0x188] sm:$0xff]
        %v566 = vld [vmem:[%s424 + $0x190] sm:$0xff]
        %v567 = vld [vmem:[%s424 + $0x198] sm:$0xff]
        %v568 = vld [vmem:[%s424 + $0x1a0] sm:$0xff]
        %v569 = vld [vmem:[%s424 + $0x1a8] sm:$0xff]
        %v570 = vld [vmem:[%s424 + $0x1b0] sm:$0xff]
        %v571 = vld [vmem:[%s424 + $0x1b8] sm:$0xff]
        %v572 = vld [vmem:[%s424 + $0x1c0] sm:$0xff]
        %v573 = vld [vmem:[%s424 + $0x1c8] sm:$0xff]
        %v574 = vld [vmem:[%s424 + $0x1d0] sm:$0xff]
        %v575 = vld [vmem:[%s424 + $0x1d8] sm:$0xff]
        %v576 = vld [vmem:[%s424 + $0x1e0] sm:$0xff]
        %v577 = vld [vmem:[%s424 + $0x1e8] sm:$0xff]
        %v578 = vld [vmem:[%s424 + $0x1f0] sm:$0xff]
        %v579 = vld [vmem:[%s424 + $0x1f8] sm:$0xff]
        %v580 = vld [vmem:[%s424 + $0x200] sm:$0xff]
        %v581 = vld [vmem:[%s424 + $0x208] sm:$0xff]
        %v582 = vld [vmem:[%s424 + $0x210] sm:$0xff]
        %v583 = vld [vmem:[%s424 + $0x218] sm:$0xff]
        %v584 = vld [vmem:[%s424 + $0x220] sm:$0xff]
        %v585 = vld [vmem:[%s424 + $0x228] sm:$0xff]
        %v586 = vld [vmem:[%s424 + $0x230] sm:$0xff]
        %v587 = vld [vmem:[%s424 + $0x238] sm:$0xff]
        %v588 = vld [vmem:[%s424 + $0x240] sm:$0xff]
        %v589 = vld [vmem:[%s424 + $0x248] sm:$0xff]
        %v590 = vld [vmem:[%s424 + $0x250] sm:$0xff]
        %v591 = vld [vmem:[%s424 + $0x258] sm:$0xff]
        %v592 = vld [vmem:[%s424 + $0x260] sm:$0xff]
        %v593 = vld [vmem:[%s424 + $0x268] sm:$0xff]
        %v594 = vld [vmem:[%s424 + $0x270] sm:$0xff]
        %v595 = vld [vmem:[%s424 + $0x278] sm:$0xff]
        %v596 = vld [vmem:[%s424 + $0x280] sm:$0xff]
        %v597 = vld [vmem:[%s424 + $0x288] sm:$0xff]
        %v598 = vld [vmem:[%s424 + $0x290] sm:$0xff]
        %v599 = vld [vmem:[%s424 + $0x298] sm:$0xff]
        %v600 = vld [vmem:[%s424 + $0x2a0] sm:$0xff]
        %v601 = vld [vmem:[%s424 + $0x2a8] sm:$0xff]
        %v602 = vld [vmem:[%s424 + $0x2b0] sm:$0xff]
        %v603 = vld [vmem:[%s424 + $0x2b8] sm:$0xff]
        %v604 = vld [vmem:[%s424 + $0x2c0] sm:$0xff]
        %v605 = vld [vmem:[%s424 + $0x2c8] sm:$0xff]
        %v606 = vld [vmem:[%s424 + $0x2d0] sm:$0xff]
        %v607 = vld [vmem:[%s424 + $0x2d8] sm:$0xff]
        %v608 = vld [vmem:[%s424 + $0x2e0] sm:$0xff]
        %v609 = vld [vmem:[%s424 + $0x2e8] sm:$0xff]
        %v610 = vld [vmem:[%s424 + $0x2f0] sm:$0xff]
        %v611 = vld [vmem:[%s424 + $0x2f8] sm:$0xff]
        %v612 = vld [vmem:[%s468] sm:$0xf]
        %v613 = vld [vmem:[%s468 + $0x4] sm:$0xf]
        %v614 = vld [vmem:[%s468 + $0x8] sm:$0xf]
        %v615 = vld [vmem:[%s468 + $0xc] sm:$0xf]
        %v616 = vld [vmem:[%s468 + $0x10] sm:$0xf]
        %v617 = vld [vmem:[%s468 + $0x14] sm:$0xf]
        %v618 = vld [vmem:[%s468 + $0x18] sm:$0xf]
        %v619 = vld [vmem:[%s468 + $0x1c] sm:$0xf]
        %v620 = vld [vmem:[%s468 + $0x20] sm:$0xf]
        %v621 = vld [vmem:[%s468 + $0x24] sm:$0xf]
        %v622 = vld [vmem:[%s468 + $0x28] sm:$0xf]
        %v623 = vld [vmem:[%s468 + $0x2c] sm:$0xf]
        %v624 = vld [vmem:[%s468 + $0x30] sm:$0xf]
        %v625 = vld [vmem:[%s468 + $0x34] sm:$0xf]
        %v626 = vld [vmem:[%s468 + $0x38] sm:$0xf]
        %v627 = vld [vmem:[%s468 + $0x3c] sm:$0xf]
        %v628 = vld [vmem:[%s468 + $0x40] sm:$0xf]
        %v629 = vld [vmem:[%s468 + $0x44] sm:$0xf]
        %v630 = vld [vmem:[%s468 + $0x48] sm:$0xf]
        %v631 = vld [vmem:[%s468 + $0x4c] sm:$0xf]
        %v632 = vld [vmem:[%s468 + $0x50] sm:$0xf]
        %v633 = vld [vmem:[%s468 + $0x54] sm:$0xf]
        %v634 = vld [vmem:[%s468 + $0x58] sm:$0xf]
        %v635 = vld [vmem:[%s468 + $0x5c] sm:$0xf]
        %v636 = vld [vmem:[%s468 + $0x60] sm:$0xf]
        %v637 = vld [vmem:[%s468 + $0x64] sm:$0xf]
        %v638 = vld [vmem:[%s468 + $0x68] sm:$0xf]
        %v639 = vld [vmem:[%s468 + $0x6c] sm:$0xf]
        %v640 = vld [vmem:[%s468 + $0x70] sm:$0xf]
        %v641 = vld [vmem:[%s468 + $0x74] sm:$0xf]
        %v642 = vld [vmem:[%s468 + $0x78] sm:$0xf]
        %v643 = vld [vmem:[%s468 + $0x7c] sm:$0xf]
        %v644 = vld [vmem:[%s468 + $0x80] sm:$0xf]
        %v645 = vld [vmem:[%s468 + $0x84] sm:$0xf]
        %v646 = vld [vmem:[%s468 + $0x88] sm:$0xf]
        %v647 = vld [vmem:[%s468 + $0x8c] sm:$0xf]
        %v648 = vld [vmem:[%s468 + $0x90] sm:$0xf]
        %v649 = vld [vmem:[%s468 + $0x94] sm:$0xf]
        %v650 = vld [vmem:[%s468 + $0x98] sm:$0xf]
        %v651 = vld [vmem:[%s468 + $0x9c] sm:$0xf]
        %v652 = vld [vmem:[%s468 + $0xa0] sm:$0xf]
        %v653 = vld [vmem:[%s468 + $0xa4] sm:$0xf]
        %v654 = vld [vmem:[%s468 + $0xa8] sm:$0xf]
        %v655 = vld [vmem:[%s468 + $0xac] sm:$0xf]
        %v656 = vld [vmem:[%s468 + $0xb0] sm:$0xf]
        %v657 = vld [vmem:[%s468 + $0xb4] sm:$0xf]
        %v658 = vld [vmem:[%s468 + $0xb8] sm:$0xf]
        %v659 = vld [vmem:[%s468 + $0xbc] sm:$0xf]
        %v660 = vld [vmem:[%s468 + $0xc0] sm:$0xf]
        %v661 = vld [vmem:[%s468 + $0xc4] sm:$0xf]
        %v662 = vld [vmem:[%s468 + $0xc8] sm:$0xf]
        %v663 = vld [vmem:[%s468 + $0xcc] sm:$0xf]
        %v664 = vld [vmem:[%s468 + $0xd0] sm:$0xf]
        %v665 = vld [vmem:[%s468 + $0xd4] sm:$0xf]
        %v666 = vld [vmem:[%s468 + $0xd8] sm:$0xf]
        %v667 = vld [vmem:[%s468 + $0xdc] sm:$0xf]
        %v668 = vld [vmem:[%s468 + $0xe0] sm:$0xf]
        %v669 = vld [vmem:[%s468 + $0xe4] sm:$0xf]
        %v670 = vld [vmem:[%s468 + $0xe8] sm:$0xf]
        %v671 = vld [vmem:[%s468 + $0xec] sm:$0xf]
        %v672 = vld [vmem:[%s468 + $0xf0] sm:$0xf]
        %v673 = vld [vmem:[%s468 + $0xf4] sm:$0xf]
        %v674 = vld [vmem:[%s468 + $0xf8] sm:$0xf]
        %v675 = vld [vmem:[%s468 + $0xfc] sm:$0xf]
        %v676 = vld [vmem:[%s468 + $0x100] sm:$0xf]
        %v677 = vld [vmem:[%s468 + $0x104] sm:$0xf]
        %v678 = vld [vmem:[%s468 + $0x108] sm:$0xf]
        %v679 = vld [vmem:[%s468 + $0x10c] sm:$0xf]
        %v680 = vld [vmem:[%s468 + $0x110] sm:$0xf]
        %v681 = vld [vmem:[%s468 + $0x114] sm:$0xf]
        %v682 = vld [vmem:[%s468 + $0x118] sm:$0xf]
        %v683 = vld [vmem:[%s468 + $0x11c] sm:$0xf]
        %v684 = vld [vmem:[%s468 + $0x120] sm:$0xf]
        %v685 = vld [vmem:[%s468 + $0x124] sm:$0xf]
        %v686 = vld [vmem:[%s468 + $0x128] sm:$0xf]
        %v687 = vld [vmem:[%s468 + $0x12c] sm:$0xf]
        %v688 = vld [vmem:[%s468 + $0x130] sm:$0xf]
        %v689 = vld [vmem:[%s468 + $0x134] sm:$0xf]
        %v690 = vld [vmem:[%s468 + $0x138] sm:$0xf]
        %v691 = vld [vmem:[%s468 + $0x13c] sm:$0xf]
        %v692 = vld [vmem:[%s468 + $0x140] sm:$0xf]
        %v693 = vld [vmem:[%s468 + $0x144] sm:$0xf]
        %v694 = vld [vmem:[%s468 + $0x148] sm:$0xf]
        %v695 = vld [vmem:[%s468 + $0x14c] sm:$0xf]
        %v696 = vld [vmem:[%s468 + $0x150] sm:$0xf]
        %v697 = vld [vmem:[%s468 + $0x154] sm:$0xf]
        %v698 = vld [vmem:[%s468 + $0x158] sm:$0xf]
        %v699 = vld [vmem:[%s468 + $0x15c] sm:$0xf]
        %v700 = vld [vmem:[%s468 + $0x160] sm:$0xf]
        %v701 = vld [vmem:[%s468 + $0x164] sm:$0xf]
        %v702 = vld [vmem:[%s468 + $0x168] sm:$0xf]
        %v703 = vld [vmem:[%s468 + $0x16c] sm:$0xf]
        %v704 = vld [vmem:[%s468 + $0x170] sm:$0xf]
        %v705 = vld [vmem:[%s468 + $0x174] sm:$0xf]
        %v706 = vld [vmem:[%s468 + $0x178] sm:$0xf]
        %v707 = vld [vmem:[%s468 + $0x17c] sm:$0xf]
        %v708 = vld [vmem:[%s468 + $0x180] sm:$0xf]
        %v709 = vld [vmem:[%s468 + $0x184] sm:$0xf]
        %v710 = vld [vmem:[%s468 + $0x188] sm:$0xf]
        %v711 = vld [vmem:[%s468 + $0x18c] sm:$0xf]
        %v712 = vld [vmem:[%s468 + $0x190] sm:$0xf]
        %v713 = vld [vmem:[%s468 + $0x194] sm:$0xf]
        %v714 = vld [vmem:[%s468 + $0x198] sm:$0xf]
        %v715 = vld [vmem:[%s468 + $0x19c] sm:$0xf]
        %v716 = vld [vmem:[%s468 + $0x1a0] sm:$0xf]
        %v717 = vld [vmem:[%s468 + $0x1a4] sm:$0xf]
        %v718 = vld [vmem:[%s468 + $0x1a8] sm:$0xf]
        %v719 = vld [vmem:[%s468 + $0x1ac] sm:$0xf]
        %v720 = vld [vmem:[%s468 + $0x1b0] sm:$0xf]
        %v721 = vld [vmem:[%s468 + $0x1b4] sm:$0xf]
        %v722 = vld [vmem:[%s468 + $0x1b8] sm:$0xf]
        %v723 = vld [vmem:[%s468 + $0x1bc] sm:$0xf]
        %v724 = vld [vmem:[%s468 + $0x1c0] sm:$0xf]
        %v725 = vld [vmem:[%s468 + $0x1c4] sm:$0xf]
        %v726 = vld [vmem:[%s468 + $0x1c8] sm:$0xf]
        %v727 = vld [vmem:[%s468 + $0x1cc] sm:$0xf]
        %v728 = vld [vmem:[%s468 + $0x1d0] sm:$0xf]
        %v729 = vld [vmem:[%s468 + $0x1d4] sm:$0xf]
        %v730 = vld [vmem:[%s468 + $0x1d8] sm:$0xf]
        %v731 = vld [vmem:[%s468 + $0x1dc] sm:$0xf]
        %v732 = vld [vmem:[%s468 + $0x1e0] sm:$0xf]
        %v733 = vld [vmem:[%s468 + $0x1e4] sm:$0xf]
        %v734 = vld [vmem:[%s468 + $0x1e8] sm:$0xf]
        %v735 = vld [vmem:[%s468 + $0x1ec] sm:$0xf]
        %v736 = vld [vmem:[%s468 + $0x1f0] sm:$0xf]
        %v737 = vld [vmem:[%s468 + $0x1f4] sm:$0xf]
        %v738 = vld [vmem:[%s468 + $0x1f8] sm:$0xf]
        %v739 = vld [vmem:[%s468 + $0x1fc] sm:$0xf]
        %v740 = vld [vmem:[%s468 + $0x200] sm:$0xf]
        %v741 = vld [vmem:[%s468 + $0x204] sm:$0xf]
        %v742 = vld [vmem:[%s468 + $0x208] sm:$0xf]
        %v743 = vld [vmem:[%s468 + $0x20c] sm:$0xf]
        %v744 = vld [vmem:[%s468 + $0x210] sm:$0xf]
        %v745 = vld [vmem:[%s468 + $0x214] sm:$0xf]
        %v746 = vld [vmem:[%s468 + $0x218] sm:$0xf]
        %v747 = vld [vmem:[%s468 + $0x21c] sm:$0xf]
        %v748 = vld [vmem:[%s468 + $0x220] sm:$0xf]
        %v749 = vld [vmem:[%s468 + $0x224] sm:$0xf]
        %v750 = vld [vmem:[%s468 + $0x228] sm:$0xf]
        %v751 = vld [vmem:[%s468 + $0x22c] sm:$0xf]
        %v752 = vld [vmem:[%s468 + $0x230] sm:$0xf]
        %v753 = vld [vmem:[%s468 + $0x234] sm:$0xf]
        %v754 = vld [vmem:[%s468 + $0x238] sm:$0xf]
        %v755 = vld [vmem:[%s468 + $0x23c] sm:$0xf]
        %v756 = vld [vmem:[%s468 + $0x240] sm:$0xf]
        %v757 = vld [vmem:[%s468 + $0x244] sm:$0xf]
        %v758 = vld [vmem:[%s468 + $0x248] sm:$0xf]
        %v759 = vld [vmem:[%s468 + $0x24c] sm:$0xf]
        %v760 = vld [vmem:[%s468 + $0x250] sm:$0xf]
        %v761 = vld [vmem:[%s468 + $0x254] sm:$0xf]
        %v762 = vld [vmem:[%s468 + $0x258] sm:$0xf]
        %v763 = vld [vmem:[%s468 + $0x25c] sm:$0xf]
        %v764 = vld [vmem:[%s468 + $0x260] sm:$0xf]
        %v765 = vld [vmem:[%s468 + $0x264] sm:$0xf]
        %v766 = vld [vmem:[%s468 + $0x268] sm:$0xf]
        %v767 = vld [vmem:[%s468 + $0x26c] sm:$0xf]
        %v768 = vld [vmem:[%s468 + $0x270] sm:$0xf]
        %v769 = vld [vmem:[%s468 + $0x274] sm:$0xf]
        %v770 = vld [vmem:[%s468 + $0x278] sm:$0xf]
        %v771 = vld [vmem:[%s468 + $0x27c] sm:$0xf]
        %v772 = vld [vmem:[%s468 + $0x280] sm:$0xf]
        %v773 = vld [vmem:[%s468 + $0x284] sm:$0xf]
        %v774 = vld [vmem:[%s468 + $0x288] sm:$0xf]
        %v775 = vld [vmem:[%s468 + $0x28c] sm:$0xf]
        %v776 = vld [vmem:[%s468 + $0x290] sm:$0xf]
        %v777 = vld [vmem:[%s468 + $0x294] sm:$0xf]
        %v778 = vld [vmem:[%s468 + $0x298] sm:$0xf]
        %v779 = vld [vmem:[%s468 + $0x29c] sm:$0xf]
        %v780 = vld [vmem:[%s468 + $0x2a0] sm:$0xf]
        %v781 = vld [vmem:[%s468 + $0x2a4] sm:$0xf]
        %v782 = vld [vmem:[%s468 + $0x2a8] sm:$0xf]
        %v783 = vld [vmem:[%s468 + $0x2ac] sm:$0xf]
        %v784 = vld [vmem:[%s468 + $0x2b0] sm:$0xf]
        %v785 = vld [vmem:[%s468 + $0x2b4] sm:$0xf]
        %v786 = vld [vmem:[%s468 + $0x2b8] sm:$0xf]
        %v787 = vld [vmem:[%s468 + $0x2bc] sm:$0xf]
        %v788 = vld [vmem:[%s468 + $0x2c0] sm:$0xf]
        %v789 = vld [vmem:[%s468 + $0x2c4] sm:$0xf]
        %v790 = vld [vmem:[%s468 + $0x2c8] sm:$0xf]
        %v791 = vld [vmem:[%s468 + $0x2cc] sm:$0xf]
        %v792 = vld [vmem:[%s468 + $0x2d0] sm:$0xf]
        %v793 = vld [vmem:[%s468 + $0x2d4] sm:$0xf]
        %v794 = vld [vmem:[%s468 + $0x2d8] sm:$0xf]
        %v795 = vld [vmem:[%s468 + $0x2dc] sm:$0xf]
        %v796 = vld [vmem:[%s468 + $0x2e0] sm:$0xf]
        %v797 = vld [vmem:[%s468 + $0x2e4] sm:$0xf]
        %v798 = vld [vmem:[%s468 + $0x2e8] sm:$0xf]
        %v799 = vld [vmem:[%s468 + $0x2ec] sm:$0xf]
        %v800 = vld [vmem:[%s468 + $0x2f0] sm:$0xf]
        %v801 = vld [vmem:[%s468 + $0x2f4] sm:$0xf]
        %v802 = vld [vmem:[%s468 + $0x2f8] sm:$0xf]
        %v803 = vld [vmem:[%s468 + $0x2fc] sm:$0xf]
        %v900 = vunpack.c.l.b16 %v516
        %v901 = vunpack.c.h.b16 %v516
        %v902 = vunpack.c.l.b16 %v517
        %v903 = vunpack.c.h.b16 %v517
        %v904 = vunpack.c.l.b16 %v518
        %v905 = vunpack.c.h.b16 %v518
        %v906 = vunpack.c.l.b16 %v519
        %v907 = vunpack.c.h.b16 %v519
        %v908 = vunpack.c.l.b16 %v520
        %v909 = vunpack.c.h.b16 %v520
        %v910 = vunpack.c.l.b16 %v521
        %v911 = vunpack.c.h.b16 %v521
        %v912 = vunpack.c.l.b16 %v522
        %v913 = vunpack.c.h.b16 %v522
        %v914 = vunpack.c.l.b16 %v523
        %v915 = vunpack.c.h.b16 %v523
        %v916 = vunpack.c.l.b16 %v524
        %v917 = vunpack.c.h.b16 %v524
        %v918 = vunpack.c.l.b16 %v525
        %v919 = vunpack.c.h.b16 %v525
        %v920 = vunpack.c.l.b16 %v526
        %v921 = vunpack.c.h.b16 %v526
        %v922 = vunpack.c.l.b16 %v527
        %v923 = vunpack.c.h.b16 %v527
        %v924 = vunpack.c.l.b16 %v528
        %v925 = vunpack.c.h.b16 %v528
        %v926 = vunpack.c.l.b16 %v529
        %v927 = vunpack.c.h.b16 %v529
        %v928 = vunpack.c.l.b16 %v530
        %v929 = vunpack.c.h.b16 %v530
        %v930 = vunpack.c.l.b16 %v531
        %v931 = vunpack.c.h.b16 %v531
        %v932 = vunpack.c.l.b16 %v532
        %v933 = vunpack.c.h.b16 %v532
        %v934 = vunpack.c.l.b16 %v533
        %v935 = vunpack.c.h.b16 %v533
        %v936 = vunpack.c.l.b16 %v534
        %v937 = vunpack.c.h.b16 %v534
        %v938 = vunpack.c.l.b16 %v535
        %v939 = vunpack.c.h.b16 %v535
        %v940 = vunpack.c.l.b16 %v536
        %v941 = vunpack.c.h.b16 %v536
        %v942 = vunpack.c.l.b16 %v537
        %v943 = vunpack.c.h.b16 %v537
        %v944 = vunpack.c.l.b16 %v538
        %v945 = vunpack.c.h.b16 %v538
        %v946 = vunpack.c.l.b16 %v539
        %v947 = vunpack.c.h.b16 %v539
        %v948 = vunpack.c.l.b16 %v540
        %v949 = vunpack.c.h.b16 %v540
        %v950 = vunpack.c.l.b16 %v541
        %v951 = vunpack.c.h.b16 %v541
        %v952 = vunpack.c.l.b16 %v542
        %v953 = vunpack.c.h.b16 %v542
        %v954 = vunpack.c.l.b16 %v543
        %v955 = vunpack.c.h.b16 %v543
        %v956 = vunpack.c.l.b16 %v544
        %v957 = vunpack.c.h.b16 %v544
        %v958 = vunpack.c.l.b16 %v545
        %v959 = vunpack.c.h.b16 %v545
        %v960 = vunpack.c.l.b16 %v546
        %v961 = vunpack.c.h.b16 %v546
        %v962 = vunpack.c.l.b16 %v547
        %v963 = vunpack.c.h.b16 %v547
        %v964 = vunpack.c.l.b16 %v548
        %v965 = vunpack.c.h.b16 %v548
        %v966 = vunpack.c.l.b16 %v549
        %v967 = vunpack.c.h.b16 %v549
        %v968 = vunpack.c.l.b16 %v550
        %v969 = vunpack.c.h.b16 %v550
        %v970 = vunpack.c.l.b16 %v551
        %v971 = vunpack.c.h.b16 %v551
        %v972 = vunpack.c.l.b16 %v552
        %v973 = vunpack.c.h.b16 %v552
        %v974 = vunpack.c.l.b16 %v553
        %v975 = vunpack.c.h.b16 %v553
        %v976 = vunpack.c.l.b16 %v554
        %v977 = vunpack.c.h.b16 %v554
        %v978 = vunpack.c.l.b16 %v555
        %v979 = vunpack.c.h.b16 %v555
        %v980 = vunpack.c.l.b16 %v556
        %v981 = vunpack.c.h.b16 %v556
        %v982 = vunpack.c.l.b16 %v557
        %v983 = vunpack.c.h.b16 %v557
        %v984 = vunpack.c.l.b16 %v558
        %v985 = vunpack.c.h.b16 %v558
        %v986 = vunpack.c.l.b16 %v559
        %v987 = vunpack.c.h.b16 %v559
        %v988 = vunpack.c.l.b16 %v560
        %v989 = vunpack.c.h.b16 %v560
        %v990 = vunpack.c.l.b16 %v561
        %v991 = vunpack.c.h.b16 %v561
        %v992 = vunpack.c.l.b16 %v562
        %v993 = vunpack.c.h.b16 %v562
        %v994 = vunpack.c.l.b16 %v563
        %v995 = vunpack.c.h.b16 %v563
        %v996 = vunpack.c.l.b16 %v564
        %v997 = vunpack.c.h.b16 %v564
        %v998 = vunpack.c.l.b16 %v565
        %v999 = vunpack.c.h.b16 %v565
        %v1000 = vunpack.c.l.b16 %v566
        %v1001 = vunpack.c.h.b16 %v566
        %v1002 = vunpack.c.l.b16 %v567
        %v1003 = vunpack.c.h.b16 %v567
        %v1004 = vunpack.c.l.b16 %v568
        %v1005 = vunpack.c.h.b16 %v568
        %v1006 = vunpack.c.l.b16 %v569
        %v1007 = vunpack.c.h.b16 %v569
        %v1008 = vunpack.c.l.b16 %v570
        %v1009 = vunpack.c.h.b16 %v570
        %v1010 = vunpack.c.l.b16 %v571
        %v1011 = vunpack.c.h.b16 %v571
        %v1012 = vunpack.c.l.b16 %v572
        %v1013 = vunpack.c.h.b16 %v572
        %v1014 = vunpack.c.l.b16 %v573
        %v1015 = vunpack.c.h.b16 %v573
        %v1016 = vunpack.c.l.b16 %v574
        %v1017 = vunpack.c.h.b16 %v574
        %v1018 = vunpack.c.l.b16 %v575
        %v1019 = vunpack.c.h.b16 %v575
        %v1020 = vunpack.c.l.b16 %v576
        %v1021 = vunpack.c.h.b16 %v576
        %v1022 = vunpack.c.l.b16 %v577
        %v1023 = vunpack.c.h.b16 %v577
        %v1024 = vunpack.c.l.b16 %v578
        %v1025 = vunpack.c.h.b16 %v578
        %v1026 = vunpack.c.l.b16 %v579
        %v1027 = vunpack.c.h.b16 %v579
        %v1028 = vunpack.c.l.b16 %v580
        %v1029 = vunpack.c.h.b16 %v580
        %v1030 = vunpack.c.l.b16 %v581
        %v1031 = vunpack.c.h.b16 %v581
        %v1032 = vunpack.c.l.b16 %v582
        %v1033 = vunpack.c.h.b16 %v582
        %v1034 = vunpack.c.l.b16 %v583
        %v1035 = vunpack.c.h.b16 %v583
        %v1036 = vunpack.c.l.b16 %v584
        %v1037 = vunpack.c.h.b16 %v584
        %v1038 = vunpack.c.l.b16 %v585
        %v1039 = vunpack.c.h.b16 %v585
        %v1040 = vunpack.c.l.b16 %v586
        %v1041 = vunpack.c.h.b16 %v586
        %v1042 = vunpack.c.l.b16 %v587
        %v1043 = vunpack.c.h.b16 %v587
        %v1044 = vunpack.c.l.b16 %v588
        %v1045 = vunpack.c.h.b16 %v588
        %v1046 = vunpack.c.l.b16 %v589
        %v1047 = vunpack.c.h.b16 %v589
        %v1048 = vunpack.c.l.b16 %v590
        %v1049 = vunpack.c.h.b16 %v590
        %v1050 = vunpack.c.l.b16 %v591
        %v1051 = vunpack.c.h.b16 %v591
        %v1052 = vunpack.c.l.b16 %v592
        %v1053 = vunpack.c.h.b16 %v592
        %v1054 = vunpack.c.l.b16 %v593
        %v1055 = vunpack.c.h.b16 %v593
        %v1056 = vunpack.c.l.b16 %v594
        %v1057 = vunpack.c.h.b16 %v594
        %v1058 = vunpack.c.l.b16 %v595
        %v1059 = vunpack.c.h.b16 %v595
        %v1060 = vunpack.c.l.b16 %v596
        %v1061 = vunpack.c.h.b16 %v596
        %v1062 = vunpack.c.l.b16 %v597
        %v1063 = vunpack.c.h.b16 %v597
        %v1064 = vunpack.c.l.b16 %v598
        %v1065 = vunpack.c.h.b16 %v598
        %v1066 = vunpack.c.l.b16 %v599
        %v1067 = vunpack.c.h.b16 %v599
        %v1068 = vunpack.c.l.b16 %v600
        %v1069 = vunpack.c.h.b16 %v600
        %v1070 = vunpack.c.l.b16 %v601
        %v1071 = vunpack.c.h.b16 %v601
        %v1072 = vunpack.c.l.b16 %v602
        %v1073 = vunpack.c.h.b16 %v602
        %v1074 = vunpack.c.l.b16 %v603
        %v1075 = vunpack.c.h.b16 %v603
        %v1076 = vunpack.c.l.b16 %v604
        %v1077 = vunpack.c.h.b16 %v604
        %v1078 = vunpack.c.l.b16 %v605
        %v1079 = vunpack.c.h.b16 %v605
        %v1080 = vunpack.c.l.b16 %v606
        %v1081 = vunpack.c.h.b16 %v606
        %v1082 = vunpack.c.l.b16 %v607
        %v1083 = vunpack.c.h.b16 %v607
        %v1084 = vunpack.c.l.b16 %v608
        %v1085 = vunpack.c.h.b16 %v608
        %v1086 = vunpack.c.l.b16 %v609
        %v1087 = vunpack.c.h.b16 %v609
        %v1088 = vunpack.c.l.b16 %v610
        %v1089 = vunpack.c.h.b16 %v610
        %v1090 = vunpack.c.l.b16 %v611
        %v1091 = vunpack.c.h.b16 %v611
        %v1092 = vpack.c.b16 %v912, %v900
        %v1093 = vpack.c.b16 %v913, %v901
        %v1094 = vpack.c.b16 %v914, %v902
        %v1095 = vpack.c.b16 %v915, %v903
        %v1096 = vpack.c.b16 %v916, %v904
        %v1097 = vpack.c.b16 %v917, %v905
        %v1098 = vpack.c.b16 %v918, %v906
        %v1099 = vpack.c.b16 %v919, %v907
        %v1100 = vpack.c.b16 %v920, %v908
        %v1101 = vpack.c.b16 %v921, %v909
        %v1102 = vpack.c.b16 %v922, %v910
        %v1103 = vpack.c.b16 %v923, %v911
        %v1104 = vpack.c.b16 %v936, %v924
        %v1105 = vpack.c.b16 %v937, %v925
        %v1106 = vpack.c.b16 %v938, %v926
        %v1107 = vpack.c.b16 %v939, %v927
        %v1108 = vpack.c.b16 %v940, %v928
        %v1109 = vpack.c.b16 %v941, %v929
        %v1110 = vpack.c.b16 %v942, %v930
        %v1111 = vpack.c.b16 %v943, %v931
        %v1112 = vpack.c.b16 %v944, %v932
        %v1113 = vpack.c.b16 %v945, %v933
        %v1114 = vpack.c.b16 %v946, %v934
        %v1115 = vpack.c.b16 %v947, %v935
        %v1116 = vpack.c.b16 %v960, %v948
        %v1117 = vpack.c.b16 %v961, %v949
        %v1118 = vpack.c.b16 %v962, %v950
        %v1119 = vpack.c.b16 %v963, %v951
        %v1120 = vpack.c.b16 %v964, %v952
        %v1121 = vpack.c.b16 %v965, %v953
        %v1122 = vpack.c.b16 %v966, %v954
        %v1123 = vpack.c.b16 %v967, %v955
        %v1124 = vpack.c.b16 %v968, %v956
        %v1125 = vpack.c.b16 %v969, %v957
        %v1126 = vpack.c.b16 %v970, %v958
        %v1127 = vpack.c.b16 %v971, %v959
        %v1128 = vpack.c.b16 %v984, %v972
        %v1129 = vpack.c.b16 %v985, %v973
        %v1130 = vpack.c.b16 %v986, %v974
        %v1131 = vpack.c.b16 %v987, %v975
        %v1132 = vpack.c.b16 %v988, %v976
        %v1133 = vpack.c.b16 %v989, %v977
        %v1134 = vpack.c.b16 %v990, %v978
        %v1135 = vpack.c.b16 %v991, %v979
        %v1136 = vpack.c.b16 %v992, %v980
        %v1137 = vpack.c.b16 %v993, %v981
        %v1138 = vpack.c.b16 %v994, %v982
        %v1139 = vpack.c.b16 %v995, %v983
        %v1140 = vpack.c.b16 %v1008, %v996
        %v1141 = vpack.c.b16 %v1009, %v997
        %v1142 = vpack.c.b16 %v1010, %v998
        %v1143 = vpack.c.b16 %v1011, %v999
        %v1144 = vpack.c.b16 %v1012, %v1000
        %v1145 = vpack.c.b16 %v1013, %v1001
        %v1146 = vpack.c.b16 %v1014, %v1002
        %v1147 = vpack.c.b16 %v1015, %v1003
        %v1148 = vpack.c.b16 %v1016, %v1004
        %v1149 = vpack.c.b16 %v1017, %v1005
        %v1150 = vpack.c.b16 %v1018, %v1006
        %v1151 = vpack.c.b16 %v1019, %v1007
        %v1152 = vpack.c.b16 %v1032, %v1020
        %v1153 = vpack.c.b16 %v1033, %v1021
        %v1154 = vpack.c.b16 %v1034, %v1022
        %v1155 = vpack.c.b16 %v1035, %v1023
        %v1156 = vpack.c.b16 %v1036, %v1024
        %v1157 = vpack.c.b16 %v1037, %v1025
        %v1158 = vpack.c.b16 %v1038, %v1026
        %v1159 = vpack.c.b16 %v1039, %v1027
        %v1160 = vpack.c.b16 %v1040, %v1028
        %v1161 = vpack.c.b16 %v1041, %v1029
        %v1162 = vpack.c.b16 %v1042, %v1030
        %v1163 = vpack.c.b16 %v1043, %v1031
        %v1164 = vpack.c.b16 %v1056, %v1044
        %v1165 = vpack.c.b16 %v1057, %v1045
        %v1166 = vpack.c.b16 %v1058, %v1046
        %v1167 = vpack.c.b16 %v1059, %v1047
        %v1168 = vpack.c.b16 %v1060, %v1048
        %v1169 = vpack.c.b16 %v1061, %v1049
        %v1170 = vpack.c.b16 %v1062, %v1050
        %v1171 = vpack.c.b16 %v1063, %v1051
        %v1172 = vpack.c.b16 %v1064, %v1052
        %v1173 = vpack.c.b16 %v1065, %v1053
        %v1174 = vpack.c.b16 %v1066, %v1054
        %v1175 = vpack.c.b16 %v1067, %v1055
        %v1176 = vpack.c.b16 %v1080, %v1068
        %v1177 = vpack.c.b16 %v1081, %v1069
        %v1178 = vpack.c.b16 %v1082, %v1070
        %v1179 = vpack.c.b16 %v1083, %v1071
        %v1180 = vpack.c.b16 %v1084, %v1072
        %v1181 = vpack.c.b16 %v1085, %v1073
        %v1182 = vpack.c.b16 %v1086, %v1074
        %v1183 = vpack.c.b16 %v1087, %v1075
        %v1184 = vpack.c.b16 %v1088, %v1076
        %v1185 = vpack.c.b16 %v1089, %v1077
        %v1186 = vpack.c.b16 %v1090, %v1078
        %v1187 = vpack.c.b16 %v1091, %v1079
        %v1476 = vunpack.c.l.b16 %v612
        %v1477 = vunpack.c.l.b16 %v613
        %v1478 = vunpack.c.l.b16 %v614
        %v1479 = vunpack.c.l.b16 %v615
        %v1480 = vunpack.c.l.b16 %v616
        %v1481 = vunpack.c.l.b16 %v617
        %v1482 = vunpack.c.l.b16 %v618
        %v1483 = vunpack.c.l.b16 %v619
        %v1484 = vunpack.c.l.b16 %v620
        %v1485 = vunpack.c.l.b16 %v621
        %v1486 = vunpack.c.l.b16 %v622
        %v1487 = vunpack.c.l.b16 %v623
        %v1488 = vunpack.c.l.b16 %v624
        %v1489 = vunpack.c.l.b16 %v625
        %v1490 = vunpack.c.l.b16 %v626
        %v1491 = vunpack.c.l.b16 %v627
        %v1492 = vunpack.c.l.b16 %v628
        %v1493 = vunpack.c.l.b16 %v629
        %v1494 = vunpack.c.l.b16 %v630
        %v1495 = vunpack.c.l.b16 %v631
        %v1496 = vunpack.c.l.b16 %v632
        %v1497 = vunpack.c.l.b16 %v633
        %v1498 = vunpack.c.l.b16 %v634
        %v1499 = vunpack.c.l.b16 %v635
        %v1500 = vunpack.c.l.b16 %v636
        %v1501 = vunpack.c.l.b16 %v637
        %v1502 = vunpack.c.l.b16 %v638
        %v1503 = vunpack.c.l.b16 %v639
        %v1504 = vunpack.c.l.b16 %v640
        %v1505 = vunpack.c.l.b16 %v641
        %v1506 = vunpack.c.l.b16 %v642
        %v1507 = vunpack.c.l.b16 %v643
        %v1508 = vunpack.c.l.b16 %v644
        %v1509 = vunpack.c.l.b16 %v645
        %v1510 = vunpack.c.l.b16 %v646
        %v1511 = vunpack.c.l.b16 %v647
        %v1512 = vunpack.c.l.b16 %v648
        %v1513 = vunpack.c.l.b16 %v649
        %v1514 = vunpack.c.l.b16 %v650
        %v1515 = vunpack.c.l.b16 %v651
        %v1516 = vunpack.c.l.b16 %v652
        %v1517 = vunpack.c.l.b16 %v653
        %v1518 = vunpack.c.l.b16 %v654
        %v1519 = vunpack.c.l.b16 %v655
        %v1520 = vunpack.c.l.b16 %v656
        %v1521 = vunpack.c.l.b16 %v657
        %v1522 = vunpack.c.l.b16 %v658
        %v1523 = vunpack.c.l.b16 %v659
        %v1524 = vunpack.c.l.b16 %v660
        %v1525 = vunpack.c.l.b16 %v661
        %v1526 = vunpack.c.l.b16 %v662
        %v1527 = vunpack.c.l.b16 %v663
        %v1528 = vunpack.c.l.b16 %v664
        %v1529 = vunpack.c.l.b16 %v665
        %v1530 = vunpack.c.l.b16 %v666
        %v1531 = vunpack.c.l.b16 %v667
        %v1532 = vunpack.c.l.b16 %v668
        %v1533 = vunpack.c.l.b16 %v669
        %v1534 = vunpack.c.l.b16 %v670
        %v1535 = vunpack.c.l.b16 %v671
        %v1536 = vunpack.c.l.b16 %v672
        %v1537 = vunpack.c.l.b16 %v673
        %v1538 = vunpack.c.l.b16 %v674
        %v1539 = vunpack.c.l.b16 %v675
        %v1540 = vunpack.c.l.b16 %v676
        %v1541 = vunpack.c.l.b16 %v677
        %v1542 = vunpack.c.l.b16 %v678
        %v1543 = vunpack.c.l.b16 %v679
        %v1544 = vunpack.c.l.b16 %v680
        %v1545 = vunpack.c.l.b16 %v681
        %v1546 = vunpack.c.l.b16 %v682
        %v1547 = vunpack.c.l.b16 %v683
        %v1548 = vunpack.c.l.b16 %v684
        %v1549 = vunpack.c.l.b16 %v685
        %v1550 = vunpack.c.l.b16 %v686
        %v1551 = vunpack.c.l.b16 %v687
        %v1552 = vunpack.c.l.b16 %v688
        %v1553 = vunpack.c.l.b16 %v689
        %v1554 = vunpack.c.l.b16 %v690
        %v1555 = vunpack.c.l.b16 %v691
        %v1556 = vunpack.c.l.b16 %v692
        %v1557 = vunpack.c.l.b16 %v693
        %v1558 = vunpack.c.l.b16 %v694
        %v1559 = vunpack.c.l.b16 %v695
        %v1560 = vunpack.c.l.b16 %v696
        %v1561 = vunpack.c.l.b16 %v697
        %v1562 = vunpack.c.l.b16 %v698
        %v1563 = vunpack.c.l.b16 %v699
        %v1564 = vunpack.c.l.b16 %v700
        %v1565 = vunpack.c.l.b16 %v701
        %v1566 = vunpack.c.l.b16 %v702
        %v1567 = vunpack.c.l.b16 %v703
        %v1568 = vunpack.c.l.b16 %v704
        %v1569 = vunpack.c.l.b16 %v705
        %v1570 = vunpack.c.l.b16 %v706
        %v1571 = vunpack.c.l.b16 %v707
        %v1572 = vunpack.c.l.b16 %v708
        %v1573 = vunpack.c.l.b16 %v709
        %v1574 = vunpack.c.l.b16 %v710
        %v1575 = vunpack.c.l.b16 %v711
        %v1576 = vunpack.c.l.b16 %v712
        %v1577 = vunpack.c.l.b16 %v713
        %v1578 = vunpack.c.l.b16 %v714
        %v1579 = vunpack.c.l.b16 %v715
        %v1580 = vunpack.c.l.b16 %v716
        %v1581 = vunpack.c.l.b16 %v717
        %v1582 = vunpack.c.l.b16 %v718
        %v1583 = vunpack.c.l.b16 %v719
        %v1584 = vunpack.c.l.b16 %v720
        %v1585 = vunpack.c.l.b16 %v721
        %v1586 = vunpack.c.l.b16 %v722
        %v1587 = vunpack.c.l.b16 %v723
        %v1588 = vunpack.c.l.b16 %v724
        %v1589 = vunpack.c.l.b16 %v725
        %v1590 = vunpack.c.l.b16 %v726
        %v1591 = vunpack.c.l.b16 %v727
        %v1592 = vunpack.c.l.b16 %v728
        %v1593 = vunpack.c.l.b16 %v729
        %v1594 = vunpack.c.l.b16 %v730
        %v1595 = vunpack.c.l.b16 %v731
        %v1596 = vunpack.c.l.b16 %v732
        %v1597 = vunpack.c.l.b16 %v733
        %v1598 = vunpack.c.l.b16 %v734
        %v1599 = vunpack.c.l.b16 %v735
        %v1600 = vunpack.c.l.b16 %v736
        %v1601 = vunpack.c.l.b16 %v737
        %v1602 = vunpack.c.l.b16 %v738
        %v1603 = vunpack.c.l.b16 %v739
        %v1604 = vunpack.c.l.b16 %v740
        %v1605 = vunpack.c.l.b16 %v741
        %v1606 = vunpack.c.l.b16 %v742
        %v1607 = vunpack.c.l.b16 %v743
        %v1608 = vunpack.c.l.b16 %v744
        %v1609 = vunpack.c.l.b16 %v745
        %v1610 = vunpack.c.l.b16 %v746
        %v1611 = vunpack.c.l.b16 %v747
        %v1612 = vunpack.c.l.b16 %v748
        %v1613 = vunpack.c.l.b16 %v749
        %v1614 = vunpack.c.l.b16 %v750
        %v1615 = vunpack.c.l.b16 %v751
        %v1616 = vunpack.c.l.b16 %v752
        %v1617 = vunpack.c.l.b16 %v753
        %v1618 = vunpack.c.l.b16 %v754
        %v1619 = vunpack.c.l.b16 %v755
        %v1620 = vunpack.c.l.b16 %v756
        %v1621 = vunpack.c.l.b16 %v757
        %v1622 = vunpack.c.l.b16 %v758
        %v1623 = vunpack.c.l.b16 %v759
        %v1624 = vunpack.c.l.b16 %v760
        %v1625 = vunpack.c.l.b16 %v761
        %v1626 = vunpack.c.l.b16 %v762
        %v1627 = vunpack.c.l.b16 %v763
        %v1628 = vunpack.c.l.b16 %v764
        %v1629 = vunpack.c.l.b16 %v765
        %v1630 = vunpack.c.l.b16 %v766
        %v1631 = vunpack.c.l.b16 %v767
        %v1632 = vunpack.c.l.b16 %v768
        %v1633 = vunpack.c.l.b16 %v769
        %v1634 = vunpack.c.l.b16 %v770
        %v1635 = vunpack.c.l.b16 %v771
        %v1636 = vunpack.c.l.b16 %v772
        %v1637 = vunpack.c.l.b16 %v773
        %v1638 = vunpack.c.l.b16 %v774
        %v1639 = vunpack.c.l.b16 %v775
        %v1640 = vunpack.c.l.b16 %v776
        %v1641 = vunpack.c.l.b16 %v777
        %v1642 = vunpack.c.l.b16 %v778
        %v1643 = vunpack.c.l.b16 %v779
        %v1644 = vunpack.c.l.b16 %v780
        %v1645 = vunpack.c.l.b16 %v781
        %v1646 = vunpack.c.l.b16 %v782
        %v1647 = vunpack.c.l.b16 %v783
        %v1648 = vunpack.c.l.b16 %v784
        %v1649 = vunpack.c.l.b16 %v785
        %v1650 = vunpack.c.l.b16 %v786
        %v1651 = vunpack.c.l.b16 %v787
        %v1652 = vunpack.c.l.b16 %v788
        %v1653 = vunpack.c.l.b16 %v789
        %v1654 = vunpack.c.l.b16 %v790
        %v1655 = vunpack.c.l.b16 %v791
        %v1656 = vunpack.c.l.b16 %v792
        %v1657 = vunpack.c.l.b16 %v793
        %v1658 = vunpack.c.l.b16 %v794
        %v1659 = vunpack.c.l.b16 %v795
        %v1660 = vunpack.c.l.b16 %v796
        %v1661 = vunpack.c.l.b16 %v797
        %v1662 = vunpack.c.l.b16 %v798
        %v1663 = vunpack.c.l.b16 %v799
        %v1664 = vunpack.c.l.b16 %v800
        %v1665 = vunpack.c.l.b16 %v801
        %v1666 = vunpack.c.l.b16 %v802
        %v1667 = vunpack.c.l.b16 %v803
        %v1668 = vpack.c.b16 %v1477, %v1476
        %v1669 = vpack.c.b16 %v1479, %v1478
        %v1670 = vpack.c.b16 %v1481, %v1480
        %v1671 = vpack.c.b16 %v1483, %v1482
        %v1672 = vpack.c.b16 %v1485, %v1484
        %v1673 = vpack.c.b16 %v1487, %v1486
        %v1674 = vpack.c.b16 %v1489, %v1488
        %v1675 = vpack.c.b16 %v1491, %v1490
        %v1676 = vpack.c.b16 %v1493, %v1492
        %v1677 = vpack.c.b16 %v1495, %v1494
        %v1678 = vpack.c.b16 %v1497, %v1496
        %v1679 = vpack.c.b16 %v1499, %v1498
        %v1680 = vpack.c.b16 %v1501, %v1500
        %v1681 = vpack.c.b16 %v1503, %v1502
        %v1682 = vpack.c.b16 %v1505, %v1504
        %v1683 = vpack.c.b16 %v1507, %v1506
        %v1684 = vpack.c.b16 %v1509, %v1508
        %v1685 = vpack.c.b16 %v1511, %v1510
        %v1686 = vpack.c.b16 %v1513, %v1512
        %v1687 = vpack.c.b16 %v1515, %v1514
        %v1688 = vpack.c.b16 %v1517, %v1516
        %v1689 = vpack.c.b16 %v1519, %v1518
        %v1690 = vpack.c.b16 %v1521, %v1520
        %v1691 = vpack.c.b16 %v1523, %v1522
        %v1692 = vpack.c.b16 %v1525, %v1524
        %v1693 = vpack.c.b16 %v1527, %v1526
        %v1694 = vpack.c.b16 %v1529, %v1528
        %v1695 = vpack.c.b16 %v1531, %v1530
        %v1696 = vpack.c.b16 %v1533, %v1532
        %v1697 = vpack.c.b16 %v1535, %v1534
        %v1698 = vpack.c.b16 %v1537, %v1536
        %v1699 = vpack.c.b16 %v1539, %v1538
        %v1700 = vpack.c.b16 %v1541, %v1540
        %v1701 = vpack.c.b16 %v1543, %v1542
        %v1702 = vpack.c.b16 %v1545, %v1544
        %v1703 = vpack.c.b16 %v1547, %v1546
        %v1704 = vpack.c.b16 %v1549, %v1548
        %v1705 = vpack.c.b16 %v1551, %v1550
        %v1706 = vpack.c.b16 %v1553, %v1552
        %v1707 = vpack.c.b16 %v1555, %v1554
        %v1708 = vpack.c.b16 %v1557, %v1556
        %v1709 = vpack.c.b16 %v1559, %v1558
        %v1710 = vpack.c.b16 %v1561, %v1560
        %v1711 = vpack.c.b16 %v1563, %v1562
        %v1712 = vpack.c.b16 %v1565, %v1564
        %v1713 = vpack.c.b16 %v1567, %v1566
        %v1714 = vpack.c.b16 %v1569, %v1568
        %v1715 = vpack.c.b16 %v1571, %v1570
        %v1716 = vpack.c.b16 %v1573, %v1572
        %v1717 = vpack.c.b16 %v1575, %v1574
        %v1718 = vpack.c.b16 %v1577, %v1576
        %v1719 = vpack.c.b16 %v1579, %v1578
        %v1720 = vpack.c.b16 %v1581, %v1580
        %v1721 = vpack.c.b16 %v1583, %v1582
        %v1722 = vpack.c.b16 %v1585, %v1584
        %v1723 = vpack.c.b16 %v1587, %v1586
        %v1724 = vpack.c.b16 %v1589, %v1588
        %v1725 = vpack.c.b16 %v1591, %v1590
        %v1726 = vpack.c.b16 %v1593, %v1592
        %v1727 = vpack.c.b16 %v1595, %v1594
        %v1728 = vpack.c.b16 %v1597, %v1596
        %v1729 = vpack.c.b16 %v1599, %v1598
        %v1730 = vpack.c.b16 %v1601, %v1600
        %v1731 = vpack.c.b16 %v1603, %v1602
        %v1732 = vpack.c.b16 %v1605, %v1604
        %v1733 = vpack.c.b16 %v1607, %v1606
        %v1734 = vpack.c.b16 %v1609, %v1608
        %v1735 = vpack.c.b16 %v1611, %v1610
        %v1736 = vpack.c.b16 %v1613, %v1612
        %v1737 = vpack.c.b16 %v1615, %v1614
        %v1738 = vpack.c.b16 %v1617, %v1616
        %v1739 = vpack.c.b16 %v1619, %v1618
        %v1740 = vpack.c.b16 %v1621, %v1620
        %v1741 = vpack.c.b16 %v1623, %v1622
        %v1742 = vpack.c.b16 %v1625, %v1624
        %v1743 = vpack.c.b16 %v1627, %v1626
        %v1744 = vpack.c.b16 %v1629, %v1628
        %v1745 = vpack.c.b16 %v1631, %v1630
        %v1746 = vpack.c.b16 %v1633, %v1632
        %v1747 = vpack.c.b16 %v1635, %v1634
        %v1748 = vpack.c.b16 %v1637, %v1636
        %v1749 = vpack.c.b16 %v1639, %v1638
        %v1750 = vpack.c.b16 %v1641, %v1640
        %v1751 = vpack.c.b16 %v1643, %v1642
        %v1752 = vpack.c.b16 %v1645, %v1644
        %v1753 = vpack.c.b16 %v1647, %v1646
        %v1754 = vpack.c.b16 %v1649, %v1648
        %v1755 = vpack.c.b16 %v1651, %v1650
        %v1756 = vpack.c.b16 %v1653, %v1652
        %v1757 = vpack.c.b16 %v1655, %v1654
        %v1758 = vpack.c.b16 %v1657, %v1656
        %v1759 = vpack.c.b16 %v1659, %v1658
        %v1760 = vpack.c.b16 %v1661, %v1660
        %v1761 = vpack.c.b16 %v1663, %v1662
        %v1762 = vpack.c.b16 %v1665, %v1664
        %v1763 = vpack.c.b16 %v1667, %v1666
        %1860 = vmatpush.bf16.msra.mxu0 %v1675
        %1861 = vmatpush.bf16.msra.mxu0 %v1674
        %1862 = vmatpush.bf16.msra.mxu0 %v1673
        %1863 = vmatpush.bf16.msra.mxu0 %v1672
        %1864 = vmatpush.bf16.msra.mxu0 %v1671
        %1865 = vmatpush.bf16.msra.mxu0 %v1670
        %1866 = vmatpush.bf16.msra.mxu0 %v1669
        %1867 = vmatpush.bf16.msra.mxu0 %v1668
        %1868 = vmatmul.bf16.gmra.mxu0 %v1092
        %v1869 = vpop.f32.mrf.mxu0
        %v1870 = vadd.f32 0.0, %v1869
        %v1871 = vpop.f32.mrf.mxu0
        %v1872 = vadd.f32 0.0, %v1871
        %1873 = vmatmul.bf16.gmra.mxu0 %v1104
        %v1874 = vpop.f32.mrf.mxu0
        %v1875 = vadd.f32 0.0, %v1874
        %v1876 = vpop.f32.mrf.mxu0
        %v1877 = vadd.f32 0.0, %v1876
        %1878 = vmatmul.bf16.gmra.mxu0 %v1116
        %v1879 = vpop.f32.mrf.mxu0
        %v1880 = vadd.f32 0.0, %v1879
        %v1881 = vpop.f32.mrf.mxu0
        %v1882 = vadd.f32 0.0, %v1881
        %1883 = vmatmul.bf16.gmra.mxu0 %v1128
        %v1884 = vpop.f32.mrf.mxu0
        %v1885 = vadd.f32 0.0, %v1884
        %v1886 = vpop.f32.mrf.mxu0
        %v1887 = vadd.f32 0.0, %v1886
        %1888 = vmatmul.bf16.gmra.mxu0 %v1140
        %v1889 = vpop.f32.mrf.mxu0
        %v1890 = vadd.f32 0.0, %v1889
        %v1891 = vpop.f32.mrf.mxu0
        %v1892 = vadd.f32 0.0, %v1891
        %1893 = vmatmul.bf16.gmra.mxu0 %v1152
        %v1894 = vpop.f32.mrf.mxu0
        %v1895 = vadd.f32 0.0, %v1894
        %v1896 = vpop.f32.mrf.mxu0
        %v1897 = vadd.f32 0.0, %v1896
        %1898 = vmatmul.bf16.gmra.mxu0 %v1164
        %v1899 = vpop.f32.mrf.mxu0
        %v1900 = vadd.f32 0.0, %v1899
        %v1901 = vpop.f32.mrf.mxu0
        %v1902 = vadd.f32 0.0, %v1901
        %1903 = vmatmul.bf16.gmra.mxu0 %v1176
        %v1904 = vpop.f32.mrf.mxu0
        %v1905 = vadd.f32 0.0, %v1904
        %v1906 = vpop.f32.mrf.mxu0
        %v1907 = vadd.f32 0.0, %v1906
        %1908 = vdwg.mxu0
        %1909 = vmatpush.bf16.msra.mxu0 %v1683
        %1910 = vmatpush.bf16.msra.mxu0 %v1682
        %1911 = vmatpush.bf16.msra.mxu0 %v1681
        %1912 = vmatpush.bf16.msra.mxu0 %v1680
        %1913 = vmatpush.bf16.msra.mxu0 %v1679
        %1914 = vmatpush.bf16.msra.mxu0 %v1678
        %1915 = vmatpush.bf16.msra.mxu0 %v1677
        %1916 = vmatpush.bf16.msra.mxu0 %v1676
        %1917 = vmatmul.bf16.gmra.mxu0 %v1093
        %v1918 = vpop.f32.mrf.mxu0
        %v1919 = vadd.f32 %v1870, %v1918
        %v1920 = vpop.f32.mrf.mxu0
        %v1921 = vadd.f32 %v1872, %v1920
        %1922 = vmatmul.bf16.gmra.mxu0 %v1105
        %v1923 = vpop.f32.mrf.mxu0
        %v1924 = vadd.f32 %v1875, %v1923
        %v1925 = vpop.f32.mrf.mxu0
        %v1926 = vadd.f32 %v1877, %v1925
        %1927 = vmatmul.bf16.gmra.mxu0 %v1117
        %v1928 = vpop.f32.mrf.mxu0
        %v1929 = vadd.f32 %v1880, %v1928
        %v1930 = vpop.f32.mrf.mxu0
        %v1931 = vadd.f32 %v1882, %v1930
        %1932 = vmatmul.bf16.gmra.mxu0 %v1129
        %v1933 = vpop.f32.mrf.mxu0
        %v1934 = vadd.f32 %v1885, %v1933
        %v1935 = vpop.f32.mrf.mxu0
        %v1936 = vadd.f32 %v1887, %v1935
        %1937 = vmatmul.bf16.gmra.mxu0 %v1141
        %v1938 = vpop.f32.mrf.mxu0
        %v1939 = vadd.f32 %v1890, %v1938
        %v1940 = vpop.f32.mrf.mxu0
        %v1941 = vadd.f32 %v1892, %v1940
        %1942 = vmatmul.bf16.gmra.mxu0 %v1153
        %v1943 = vpop.f32.mrf.mxu0
        %v1944 = vadd.f32 %v1895, %v1943
        %v1945 = vpop.f32.mrf.mxu0
        %v1946 = vadd.f32 %v1897, %v1945
        %1947 = vmatmul.bf16.gmra.mxu0 %v1165
        %v1948 = vpop.f32.mrf.mxu0
        %v1949 = vadd.f32 %v1900, %v1948
        %v1950 = vpop.f32.mrf.mxu0
        %v1951 = vadd.f32 %v1902, %v1950
        %1952 = vmatmul.bf16.gmra.mxu0 %v1177
        %v1953 = vpop.f32.mrf.mxu0
        %v1954 = vadd.f32 %v1905, %v1953
        %v1955 = vpop.f32.mrf.mxu0
        %v1956 = vadd.f32 %v1907, %v1955
        %1957 = vdwg.mxu0
        %1958 = vmatpush.bf16.msra.mxu0 %v1691
        %1959 = vmatpush.bf16.msra.mxu0 %v1690
        %1960 = vmatpush.bf16.msra.mxu0 %v1689
        %1961 = vmatpush.bf16.msra.mxu0 %v1688
        %1962 = vmatpush.bf16.msra.mxu0 %v1687
        %1963 = vmatpush.bf16.msra.mxu0 %v1686
        %1964 = vmatpush.bf16.msra.mxu0 %v1685
        %1965 = vmatpush.bf16.msra.mxu0 %v1684
        %1966 = vmatmul.bf16.gmra.mxu0 %v1094
        %v1967 = vpop.f32.mrf.mxu0
        %v1968 = vadd.f32 %v1919, %v1967
        %v1969 = vpop.f32.mrf.mxu0
        %v1970 = vadd.f32 %v1921, %v1969
        %1971 = vmatmul.bf16.gmra.mxu0 %v1106
        %v1972 = vpop.f32.mrf.mxu0
        %v1973 = vadd.f32 %v1924, %v1972
        %v1974 = vpop.f32.mrf.mxu0
        %v1975 = vadd.f32 %v1926, %v1974
        %1976 = vmatmul.bf16.gmra.mxu0 %v1118
        %v1977 = vpop.f32.mrf.mxu0
        %v1978 = vadd.f32 %v1929, %v1977
        %v1979 = vpop.f32.mrf.mxu0
        %v1980 = vadd.f32 %v1931, %v1979
        %1981 = vmatmul.bf16.gmra.mxu0 %v1130
        %v1982 = vpop.f32.mrf.mxu0
        %v1983 = vadd.f32 %v1934, %v1982
        %v1984 = vpop.f32.mrf.mxu0
        %v1985 = vadd.f32 %v1936, %v1984
        %1986 = vmatmul.bf16.gmra.mxu0 %v1142
        %v1987 = vpop.f32.mrf.mxu0
        %v1988 = vadd.f32 %v1939, %v1987
        %v1989 = vpop.f32.mrf.mxu0
        %v1990 = vadd.f32 %v1941, %v1989
        %1991 = vmatmul.bf16.gmra.mxu0 %v1154
        %v1992 = vpop.f32.mrf.mxu0
        %v1993 = vadd.f32 %v1944, %v1992
        %v1994 = vpop.f32.mrf.mxu0
        %v1995 = vadd.f32 %v1946, %v1994
        %1996 = vmatmul.bf16.gmra.mxu0 %v1166
        %v1997 = vpop.f32.mrf.mxu0
        %v1998 = vadd.f32 %v1949, %v1997
        %v1999 = vpop.f32.mrf.mxu0
        %v2000 = vadd.f32 %v1951, %v1999
        %2001 = vmatmul.bf16.gmra.mxu0 %v1178
        %v2002 = vpop.f32.mrf.mxu0
        %v2003 = vadd.f32 %v1954, %v2002
        %v2004 = vpop.f32.mrf.mxu0
        %v2005 = vadd.f32 %v1956, %v2004
        %2006 = vdwg.mxu0
        %2007 = vmatpush.bf16.msra.mxu0 %v1699
        %2008 = vmatpush.bf16.msra.mxu0 %v1698
        %2009 = vmatpush.bf16.msra.mxu0 %v1697
        %2010 = vmatpush.bf16.msra.mxu0 %v1696
        %2011 = vmatpush.bf16.msra.mxu0 %v1695
        %2012 = vmatpush.bf16.msra.mxu0 %v1694
        %2013 = vmatpush.bf16.msra.mxu0 %v1693
        %2014 = vmatpush.bf16.msra.mxu0 %v1692
        %2015 = vmatmul.bf16.gmra.mxu0 %v1095
        %v2016 = vpop.f32.mrf.mxu0
        %v2017 = vadd.f32 %v1968, %v2016
        %v2018 = vpop.f32.mrf.mxu0
        %v2019 = vadd.f32 %v1970, %v2018
        %2020 = vmatmul.bf16.gmra.mxu0 %v1107
        %v2021 = vpop.f32.mrf.mxu0
        %v2022 = vadd.f32 %v1973, %v2021
        %v2023 = vpop.f32.mrf.mxu0
        %v2024 = vadd.f32 %v1975, %v2023
        %2025 = vmatmul.bf16.gmra.mxu0 %v1119
        %v2026 = vpop.f32.mrf.mxu0
        %v2027 = vadd.f32 %v1978, %v2026
        %v2028 = vpop.f32.mrf.mxu0
        %v2029 = vadd.f32 %v1980, %v2028
        %2030 = vmatmul.bf16.gmra.mxu0 %v1131
        %v2031 = vpop.f32.mrf.mxu0
        %v2032 = vadd.f32 %v1983, %v2031
        %v2033 = vpop.f32.mrf.mxu0
        %v2034 = vadd.f32 %v1985, %v2033
        %2035 = vmatmul.bf16.gmra.mxu0 %v1143
        %v2036 = vpop.f32.mrf.mxu0
        %v2037 = vadd.f32 %v1988, %v2036
        %v2038 = vpop.f32.mrf.mxu0
        %v2039 = vadd.f32 %v1990, %v2038
        %2040 = vmatmul.bf16.gmra.mxu0 %v1155
        %v2041 = vpop.f32.mrf.mxu0
        %v2042 = vadd.f32 %v1993, %v2041
        %v2043 = vpop.f32.mrf.mxu0
        %v2044 = vadd.f32 %v1995, %v2043
        %2045 = vmatmul.bf16.gmra.mxu0 %v1167
        %v2046 = vpop.f32.mrf.mxu0
        %v2047 = vadd.f32 %v1998, %v2046
        %v2048 = vpop.f32.mrf.mxu0
        %v2049 = vadd.f32 %v2000, %v2048
        %2050 = vmatmul.bf16.gmra.mxu0 %v1179
        %v2051 = vpop.f32.mrf.mxu0
        %v2052 = vadd.f32 %v2003, %v2051
        %v2053 = vpop.f32.mrf.mxu0
        %v2054 = vadd.f32 %v2005, %v2053
        %2055 = vdwg.mxu0
        %2056 = vmatpush.bf16.msra.mxu0 %v1707
        %2057 = vmatpush.bf16.msra.mxu0 %v1706
        %2058 = vmatpush.bf16.msra.mxu0 %v1705
        %2059 = vmatpush.bf16.msra.mxu0 %v1704
        %2060 = vmatpush.bf16.msra.mxu0 %v1703
        %2061 = vmatpush.bf16.msra.mxu0 %v1702
        %2062 = vmatpush.bf16.msra.mxu0 %v1701
        %2063 = vmatpush.bf16.msra.mxu0 %v1700
        %2064 = vmatmul.bf16.gmra.mxu0 %v1096
        %v2065 = vpop.f32.mrf.mxu0
        %v2066 = vadd.f32 %v2017, %v2065
        %v2067 = vpop.f32.mrf.mxu0
        %v2068 = vadd.f32 %v2019, %v2067
        %2069 = vmatmul.bf16.gmra.mxu0 %v1108
        %v2070 = vpop.f32.mrf.mxu0
        %v2071 = vadd.f32 %v2022, %v2070
        %v2072 = vpop.f32.mrf.mxu0
        %v2073 = vadd.f32 %v2024, %v2072
        %2074 = vmatmul.bf16.gmra.mxu0 %v1120
        %v2075 = vpop.f32.mrf.mxu0
        %v2076 = vadd.f32 %v2027, %v2075
        %v2077 = vpop.f32.mrf.mxu0
        %v2078 = vadd.f32 %v2029, %v2077
        %2079 = vmatmul.bf16.gmra.mxu0 %v1132
        %v2080 = vpop.f32.mrf.mxu0
        %v2081 = vadd.f32 %v2032, %v2080
        %v2082 = vpop.f32.mrf.mxu0
        %v2083 = vadd.f32 %v2034, %v2082
        %2084 = vmatmul.bf16.gmra.mxu0 %v1144
        %v2085 = vpop.f32.mrf.mxu0
        %v2086 = vadd.f32 %v2037, %v2085
        %v2087 = vpop.f32.mrf.mxu0
        %v2088 = vadd.f32 %v2039, %v2087
        %2089 = vmatmul.bf16.gmra.mxu0 %v1156
        %v2090 = vpop.f32.mrf.mxu0
        %v2091 = vadd.f32 %v2042, %v2090
        %v2092 = vpop.f32.mrf.mxu0
        %v2093 = vadd.f32 %v2044, %v2092
        %2094 = vmatmul.bf16.gmra.mxu0 %v1168
        %v2095 = vpop.f32.mrf.mxu0
        %v2096 = vadd.f32 %v2047, %v2095
        %v2097 = vpop.f32.mrf.mxu0
        %v2098 = vadd.f32 %v2049, %v2097
        %2099 = vmatmul.bf16.gmra.mxu0 %v1180
        %v2100 = vpop.f32.mrf.mxu0
        %v2101 = vadd.f32 %v2052, %v2100
        %v2102 = vpop.f32.mrf.mxu0
        %v2103 = vadd.f32 %v2054, %v2102
        %2104 = vdwg.mxu0
        %2105 = vmatpush.bf16.msra.mxu0 %v1715
        %2106 = vmatpush.bf16.msra.mxu0 %v1714
        %2107 = vmatpush.bf16.msra.mxu0 %v1713
        %2108 = vmatpush.bf16.msra.mxu0 %v1712
        %2109 = vmatpush.bf16.msra.mxu0 %v1711
        %2110 = vmatpush.bf16.msra.mxu0 %v1710
        %2111 = vmatpush.bf16.msra.mxu0 %v1709
        %2112 = vmatpush.bf16.msra.mxu0 %v1708
        %2113 = vmatmul.bf16.gmra.mxu0 %v1097
        %v2114 = vpop.f32.mrf.mxu0
        %v2115 = vadd.f32 %v2066, %v2114
        %v2116 = vpop.f32.mrf.mxu0
        %v2117 = vadd.f32 %v2068, %v2116
        %2118 = vmatmul.bf16.gmra.mxu0 %v1109
        %v2119 = vpop.f32.mrf.mxu0
        %v2120 = vadd.f32 %v2071, %v2119
        %v2121 = vpop.f32.mrf.mxu0
        %v2122 = vadd.f32 %v2073, %v2121
        %2123 = vmatmul.bf16.gmra.mxu0 %v1121
        %v2124 = vpop.f32.mrf.mxu0
        %v2125 = vadd.f32 %v2076, %v2124
        %v2126 = vpop.f32.mrf.mxu0
        %v2127 = vadd.f32 %v2078, %v2126
        %2128 = vmatmul.bf16.gmra.mxu0 %v1133
        %v2129 = vpop.f32.mrf.mxu0
        %v2130 = vadd.f32 %v2081, %v2129
        %v2131 = vpop.f32.mrf.mxu0
        %v2132 = vadd.f32 %v2083, %v2131
        %2133 = vmatmul.bf16.gmra.mxu0 %v1145
        %v2134 = vpop.f32.mrf.mxu0
        %v2135 = vadd.f32 %v2086, %v2134
        %v2136 = vpop.f32.mrf.mxu0
        %v2137 = vadd.f32 %v2088, %v2136
        %2138 = vmatmul.bf16.gmra.mxu0 %v1157
        %v2139 = vpop.f32.mrf.mxu0
        %v2140 = vadd.f32 %v2091, %v2139
        %v2141 = vpop.f32.mrf.mxu0
        %v2142 = vadd.f32 %v2093, %v2141
        %2143 = vmatmul.bf16.gmra.mxu0 %v1169
        %v2144 = vpop.f32.mrf.mxu0
        %v2145 = vadd.f32 %v2096, %v2144
        %v2146 = vpop.f32.mrf.mxu0
        %v2147 = vadd.f32 %v2098, %v2146
        %2148 = vmatmul.bf16.gmra.mxu0 %v1181
        %v2149 = vpop.f32.mrf.mxu0
        %v2150 = vadd.f32 %v2101, %v2149
        %v2151 = vpop.f32.mrf.mxu0
        %v2152 = vadd.f32 %v2103, %v2151
        %2153 = vdwg.mxu0
        %2154 = vmatpush.bf16.msra.mxu0 %v1723
        %2155 = vmatpush.bf16.msra.mxu0 %v1722
        %2156 = vmatpush.bf16.msra.mxu0 %v1721
        %2157 = vmatpush.bf16.msra.mxu0 %v1720
        %2158 = vmatpush.bf16.msra.mxu0 %v1719
        %2159 = vmatpush.bf16.msra.mxu0 %v1718
        %2160 = vmatpush.bf16.msra.mxu0 %v1717
        %2161 = vmatpush.bf16.msra.mxu0 %v1716
        %2162 = vmatmul.bf16.gmra.mxu0 %v1098
        %v2163 = vpop.f32.mrf.mxu0
        %v2164 = vadd.f32 %v2115, %v2163
        %v2165 = vpop.f32.mrf.mxu0
        %v2166 = vadd.f32 %v2117, %v2165
        %2167 = vmatmul.bf16.gmra.mxu0 %v1110
        %v2168 = vpop.f32.mrf.mxu0
        %v2169 = vadd.f32 %v2120, %v2168
        %v2170 = vpop.f32.mrf.mxu0
        %v2171 = vadd.f32 %v2122, %v2170
        %2172 = vmatmul.bf16.gmra.mxu0 %v1122
        %v2173 = vpop.f32.mrf.mxu0
        %v2174 = vadd.f32 %v2125, %v2173
        %v2175 = vpop.f32.mrf.mxu0
        %v2176 = vadd.f32 %v2127, %v2175
        %2177 = vmatmul.bf16.gmra.mxu0 %v1134
        %v2178 = vpop.f32.mrf.mxu0
        %v2179 = vadd.f32 %v2130, %v2178
        %v2180 = vpop.f32.mrf.mxu0
        %v2181 = vadd.f32 %v2132, %v2180
        %2182 = vmatmul.bf16.gmra.mxu0 %v1146
        %v2183 = vpop.f32.mrf.mxu0
        %v2184 = vadd.f32 %v2135, %v2183
        %v2185 = vpop.f32.mrf.mxu0
        %v2186 = vadd.f32 %v2137, %v2185
        %2187 = vmatmul.bf16.gmra.mxu0 %v1158
        %v2188 = vpop.f32.mrf.mxu0
        %v2189 = vadd.f32 %v2140, %v2188
        %v2190 = vpop.f32.mrf.mxu0
        %v2191 = vadd.f32 %v2142, %v2190
        %2192 = vmatmul.bf16.gmra.mxu0 %v1170
        %v2193 = vpop.f32.mrf.mxu0
        %v2194 = vadd.f32 %v2145, %v2193
        %v2195 = vpop.f32.mrf.mxu0
        %v2196 = vadd.f32 %v2147, %v2195
        %2197 = vmatmul.bf16.gmra.mxu0 %v1182
        %v2198 = vpop.f32.mrf.mxu0
        %v2199 = vadd.f32 %v2150, %v2198
        %v2200 = vpop.f32.mrf.mxu0
        %v2201 = vadd.f32 %v2152, %v2200
        %2202 = vdwg.mxu0
        %2203 = vmatpush.bf16.msra.mxu0 %v1731
        %2204 = vmatpush.bf16.msra.mxu0 %v1730
        %2205 = vmatpush.bf16.msra.mxu0 %v1729
        %2206 = vmatpush.bf16.msra.mxu0 %v1728
        %2207 = vmatpush.bf16.msra.mxu0 %v1727
        %2208 = vmatpush.bf16.msra.mxu0 %v1726
        %2209 = vmatpush.bf16.msra.mxu0 %v1725
        %2210 = vmatpush.bf16.msra.mxu0 %v1724
        %2211 = vmatmul.bf16.gmra.mxu0 %v1099
        %v2212 = vpop.f32.mrf.mxu0
        %v2213 = vadd.f32 %v2164, %v2212
        %v2214 = vpop.f32.mrf.mxu0
        %v2215 = vadd.f32 %v2166, %v2214
        %2216 = vmatmul.bf16.gmra.mxu0 %v1111
        %v2217 = vpop.f32.mrf.mxu0
        %v2218 = vadd.f32 %v2169, %v2217
        %v2219 = vpop.f32.mrf.mxu0
        %v2220 = vadd.f32 %v2171, %v2219
        %2221 = vmatmul.bf16.gmra.mxu0 %v1123
        %v2222 = vpop.f32.mrf.mxu0
        %v2223 = vadd.f32 %v2174, %v2222
        %v2224 = vpop.f32.mrf.mxu0
        %v2225 = vadd.f32 %v2176, %v2224
        %2226 = vmatmul.bf16.gmra.mxu0 %v1135
        %v2227 = vpop.f32.mrf.mxu0
        %v2228 = vadd.f32 %v2179, %v2227
        %v2229 = vpop.f32.mrf.mxu0
        %v2230 = vadd.f32 %v2181, %v2229
        %2231 = vmatmul.bf16.gmra.mxu0 %v1147
        %v2232 = vpop.f32.mrf.mxu0
        %v2233 = vadd.f32 %v2184, %v2232
        %v2234 = vpop.f32.mrf.mxu0
        %v2235 = vadd.f32 %v2186, %v2234
        %2236 = vmatmul.bf16.gmra.mxu0 %v1159
        %v2237 = vpop.f32.mrf.mxu0
        %v2238 = vadd.f32 %v2189, %v2237
        %v2239 = vpop.f32.mrf.mxu0
        %v2240 = vadd.f32 %v2191, %v2239
        %2241 = vmatmul.bf16.gmra.mxu0 %v1171
        %v2242 = vpop.f32.mrf.mxu0
        %v2243 = vadd.f32 %v2194, %v2242
        %v2244 = vpop.f32.mrf.mxu0
        %v2245 = vadd.f32 %v2196, %v2244
        %2246 = vmatmul.bf16.gmra.mxu0 %v1183
        %v2247 = vpop.f32.mrf.mxu0
        %v2248 = vadd.f32 %v2199, %v2247
        %v2249 = vpop.f32.mrf.mxu0
        %v2250 = vadd.f32 %v2201, %v2249
        %2251 = vdwg.mxu0
        %2252 = vmatpush.bf16.msra.mxu0 %v1739
        %2253 = vmatpush.bf16.msra.mxu0 %v1738
        %2254 = vmatpush.bf16.msra.mxu0 %v1737
        %2255 = vmatpush.bf16.msra.mxu0 %v1736
        %2256 = vmatpush.bf16.msra.mxu0 %v1735
        %2257 = vmatpush.bf16.msra.mxu0 %v1734
        %2258 = vmatpush.bf16.msra.mxu0 %v1733
        %2259 = vmatpush.bf16.msra.mxu0 %v1732
        %2260 = vmatmul.bf16.gmra.mxu0 %v1100
        %v2261 = vpop.f32.mrf.mxu0
        %v2262 = vadd.f32 %v2213, %v2261
        %v2263 = vpop.f32.mrf.mxu0
        %v2264 = vadd.f32 %v2215, %v2263
        %2265 = vmatmul.bf16.gmra.mxu0 %v1112
        %v2266 = vpop.f32.mrf.mxu0
        %v2267 = vadd.f32 %v2218, %v2266
        %v2268 = vpop.f32.mrf.mxu0
        %v2269 = vadd.f32 %v2220, %v2268
        %2270 = vmatmul.bf16.gmra.mxu0 %v1124
        %v2271 = vpop.f32.mrf.mxu0
        %v2272 = vadd.f32 %v2223, %v2271
        %v2273 = vpop.f32.mrf.mxu0
        %v2274 = vadd.f32 %v2225, %v2273
        %2275 = vmatmul.bf16.gmra.mxu0 %v1136
        %v2276 = vpop.f32.mrf.mxu0
        %v2277 = vadd.f32 %v2228, %v2276
        %v2278 = vpop.f32.mrf.mxu0
        %v2279 = vadd.f32 %v2230, %v2278
        %2280 = vmatmul.bf16.gmra.mxu0 %v1148
        %v2281 = vpop.f32.mrf.mxu0
        %v2282 = vadd.f32 %v2233, %v2281
        %v2283 = vpop.f32.mrf.mxu0
        %v2284 = vadd.f32 %v2235, %v2283
        %2285 = vmatmul.bf16.gmra.mxu0 %v1160
        %v2286 = vpop.f32.mrf.mxu0
        %v2287 = vadd.f32 %v2238, %v2286
        %v2288 = vpop.f32.mrf.mxu0
        %v2289 = vadd.f32 %v2240, %v2288
        %2290 = vmatmul.bf16.gmra.mxu0 %v1172
        %v2291 = vpop.f32.mrf.mxu0
        %v2292 = vadd.f32 %v2243, %v2291
        %v2293 = vpop.f32.mrf.mxu0
        %v2294 = vadd.f32 %v2245, %v2293
        %2295 = vmatmul.bf16.gmra.mxu0 %v1184
        %v2296 = vpop.f32.mrf.mxu0
        %v2297 = vadd.f32 %v2248, %v2296
        %v2298 = vpop.f32.mrf.mxu0
        %v2299 = vadd.f32 %v2250, %v2298
        %2300 = vdwg.mxu0
        %2301 = vmatpush.bf16.msra.mxu0 %v1747
        %2302 = vmatpush.bf16.msra.mxu0 %v1746
        %2303 = vmatpush.bf16.msra.mxu0 %v1745
        %2304 = vmatpush.bf16.msra.mxu0 %v1744
        %2305 = vmatpush.bf16.msra.mxu0 %v1743
        %2306 = vmatpush.bf16.msra.mxu0 %v1742
        %2307 = vmatpush.bf16.msra.mxu0 %v1741
        %2308 = vmatpush.bf16.msra.mxu0 %v1740
        %2309 = vmatmul.bf16.gmra.mxu0 %v1101
        %v2310 = vpop.f32.mrf.mxu0
        %v2311 = vadd.f32 %v2262, %v2310
        %v2312 = vpop.f32.mrf.mxu0
        %v2313 = vadd.f32 %v2264, %v2312
        %2314 = vmatmul.bf16.gmra.mxu0 %v1113
        %v2315 = vpop.f32.mrf.mxu0
        %v2316 = vadd.f32 %v2267, %v2315
        %v2317 = vpop.f32.mrf.mxu0
        %v2318 = vadd.f32 %v2269, %v2317
        %2319 = vmatmul.bf16.gmra.mxu0 %v1125
        %v2320 = vpop.f32.mrf.mxu0
        %v2321 = vadd.f32 %v2272, %v2320
        %v2322 = vpop.f32.mrf.mxu0
        %v2323 = vadd.f32 %v2274, %v2322
        %2324 = vmatmul.bf16.gmra.mxu0 %v1137
        %v2325 = vpop.f32.mrf.mxu0
        %v2326 = vadd.f32 %v2277, %v2325
        %v2327 = vpop.f32.mrf.mxu0
        %v2328 = vadd.f32 %v2279, %v2327
        %2329 = vmatmul.bf16.gmra.mxu0 %v1149
        %v2330 = vpop.f32.mrf.mxu0
        %v2331 = vadd.f32 %v2282, %v2330
        %v2332 = vpop.f32.mrf.mxu0
        %v2333 = vadd.f32 %v2284, %v2332
        %2334 = vmatmul.bf16.gmra.mxu0 %v1161
        %v2335 = vpop.f32.mrf.mxu0
        %v2336 = vadd.f32 %v2287, %v2335
        %v2337 = vpop.f32.mrf.mxu0
        %v2338 = vadd.f32 %v2289, %v2337
        %2339 = vmatmul.bf16.gmra.mxu0 %v1173
        %v2340 = vpop.f32.mrf.mxu0
        %v2341 = vadd.f32 %v2292, %v2340
        %v2342 = vpop.f32.mrf.mxu0
        %v2343 = vadd.f32 %v2294, %v2342
        %2344 = vmatmul.bf16.gmra.mxu0 %v1185
        %v2345 = vpop.f32.mrf.mxu0
        %v2346 = vadd.f32 %v2297, %v2345
        %v2347 = vpop.f32.mrf.mxu0
        %v2348 = vadd.f32 %v2299, %v2347
        %2349 = vdwg.mxu0
        %2350 = vmatpush.bf16.msra.mxu0 %v1755
        %2351 = vmatpush.bf16.msra.mxu0 %v1754
        %2352 = vmatpush.bf16.msra.mxu0 %v1753
        %2353 = vmatpush.bf16.msra.mxu0 %v1752
        %2354 = vmatpush.bf16.msra.mxu0 %v1751
        %2355 = vmatpush.bf16.msra.mxu0 %v1750
        %2356 = vmatpush.bf16.msra.mxu0 %v1749
        %2357 = vmatpush.bf16.msra.mxu0 %v1748
        %2358 = vmatmul.bf16.gmra.mxu0 %v1102
        %v2359 = vpop.f32.mrf.mxu0
        %v2360 = vadd.f32 %v2311, %v2359
        %v2361 = vpop.f32.mrf.mxu0
        %v2362 = vadd.f32 %v2313, %v2361
        %2363 = vmatmul.bf16.gmra.mxu0 %v1114
        %v2364 = vpop.f32.mrf.mxu0
        %v2365 = vadd.f32 %v2316, %v2364
        %v2366 = vpop.f32.mrf.mxu0
        %v2367 = vadd.f32 %v2318, %v2366
        %2368 = vmatmul.bf16.gmra.mxu0 %v1126
        %v2369 = vpop.f32.mrf.mxu0
        %v2370 = vadd.f32 %v2321, %v2369
        %v2371 = vpop.f32.mrf.mxu0
        %v2372 = vadd.f32 %v2323, %v2371
        %2373 = vmatmul.bf16.gmra.mxu0 %v1138
        %v2374 = vpop.f32.mrf.mxu0
        %v2375 = vadd.f32 %v2326, %v2374
        %v2376 = vpop.f32.mrf.mxu0
        %v2377 = vadd.f32 %v2328, %v2376
        %2378 = vmatmul.bf16.gmra.mxu0 %v1150
        %v2379 = vpop.f32.mrf.mxu0
        %v2380 = vadd.f32 %v2331, %v2379
        %v2381 = vpop.f32.mrf.mxu0
        %v2382 = vadd.f32 %v2333, %v2381
        %2383 = vmatmul.bf16.gmra.mxu0 %v1162
        %v2384 = vpop.f32.mrf.mxu0
        %v2385 = vadd.f32 %v2336, %v2384
        %v2386 = vpop.f32.mrf.mxu0
        %v2387 = vadd.f32 %v2338, %v2386
        %2388 = vmatmul.bf16.gmra.mxu0 %v1174
        %v2389 = vpop.f32.mrf.mxu0
        %v2390 = vadd.f32 %v2341, %v2389
        %v2391 = vpop.f32.mrf.mxu0
        %v2392 = vadd.f32 %v2343, %v2391
        %2393 = vmatmul.bf16.gmra.mxu0 %v1186
        %v2394 = vpop.f32.mrf.mxu0
        %v2395 = vadd.f32 %v2346, %v2394
        %v2396 = vpop.f32.mrf.mxu0
        %v2397 = vadd.f32 %v2348, %v2396
        %2398 = vdwg.mxu0
        %2399 = vmatpush.bf16.msra.mxu0 %v1763
        %2400 = vmatpush.bf16.msra.mxu0 %v1762
        %2401 = vmatpush.bf16.msra.mxu0 %v1761
        %2402 = vmatpush.bf16.msra.mxu0 %v1760
        %2403 = vmatpush.bf16.msra.mxu0 %v1759
        %2404 = vmatpush.bf16.msra.mxu0 %v1758
        %2405 = vmatpush.bf16.msra.mxu0 %v1757
        %2406 = vmatpush.bf16.msra.mxu0 %v1756
        %2407 = vmatmul.bf16.gmra.mxu0 %v1103
        %v2408 = vpop.f32.mrf.mxu0
        %v2409 = vadd.f32 %v2360, %v2408
        %v2410 = vpop.f32.mrf.mxu0
        %v2411 = vadd.f32 %v2362, %v2410
        %2412 = vmatmul.bf16.gmra.mxu0 %v1115
        %v2413 = vpop.f32.mrf.mxu0
        %v2414 = vadd.f32 %v2365, %v2413
        %v2415 = vpop.f32.mrf.mxu0
        %v2416 = vadd.f32 %v2367, %v2415
        %2417 = vmatmul.bf16.gmra.mxu0 %v1127
        %v2418 = vpop.f32.mrf.mxu0
        %v2419 = vadd.f32 %v2370, %v2418
        %v2420 = vpop.f32.mrf.mxu0
        %v2421 = vadd.f32 %v2372, %v2420
        %2422 = vmatmul.bf16.gmra.mxu0 %v1139
        %v2423 = vpop.f32.mrf.mxu0
        %v2424 = vadd.f32 %v2375, %v2423
        %v2425 = vpop.f32.mrf.mxu0
        %v2426 = vadd.f32 %v2377, %v2425
        %2427 = vmatmul.bf16.gmra.mxu0 %v1151
        %v2428 = vpop.f32.mrf.mxu0
        %v2429 = vadd.f32 %v2380, %v2428
        %v2430 = vpop.f32.mrf.mxu0
        %v2431 = vadd.f32 %v2382, %v2430
        %2432 = vmatmul.bf16.gmra.mxu0 %v1163
        %v2433 = vpop.f32.mrf.mxu0
        %v2434 = vadd.f32 %v2385, %v2433
        %v2435 = vpop.f32.mrf.mxu0
        %v2436 = vadd.f32 %v2387, %v2435
        %2437 = vmatmul.bf16.gmra.mxu0 %v1175
        %v2438 = vpop.f32.mrf.mxu0
        %v2439 = vadd.f32 %v2390, %v2438
        %v2440 = vpop.f32.mrf.mxu0
        %v2441 = vadd.f32 %v2392, %v2440
        %2442 = vmatmul.bf16.gmra.mxu0 %v1187
        %v2443 = vpop.f32.mrf.mxu0
        %v2444 = vadd.f32 %v2395, %v2443
        %v2445 = vpop.f32.mrf.mxu0
        %v2446 = vadd.f32 %v2397, %v2445
        %2447 = vdwg.mxu0
        %v2448 = vadd.f32 %v500, %v2409
        %v2449 = vadd.f32 %v501, %v2411
        %v2450 = vadd.f32 %v502, %v2414
        %v2451 = vadd.f32 %v503, %v2416
        %v2452 = vadd.f32 %v504, %v2419
        %v2453 = vadd.f32 %v505, %v2421
        %v2454 = vadd.f32 %v506, %v2424
        %v2455 = vadd.f32 %v507, %v2426
        %v2456 = vadd.f32 %v508, %v2429
        %v2457 = vadd.f32 %v509, %v2431
        %v2458 = vadd.f32 %v510, %v2434
        %v2459 = vadd.f32 %v511, %v2436
        %v2460 = vadd.f32 %v512, %v2439
        %v2461 = vadd.f32 %v513, %v2441
        %v2462 = vadd.f32 %v514, %v2444
        %v2463 = vadd.f32 %v515, %v2446
        %2464 = vst [vmem:[#allocation2] sm:$0xff] %v2448
        %2465 = vst [vmem:[#allocation2 + $0x8] sm:$0xff] %v2449
        %2466 = vst [vmem:[#allocation2 + $0x10] sm:$0xff] %v2450
        %2467 = vst [vmem:[#allocation2 + $0x18] sm:$0xff] %v2451
        %2468 = vst [vmem:[#allocation2 + $0x20] sm:$0xff] %v2452
        %2469 = vst [vmem:[#allocation2 + $0x28] sm:$0xff] %v2453
        %2470 = vst [vmem:[#allocation2 + $0x30] sm:$0xff] %v2454
        %2471 = vst [vmem:[#allocation2 + $0x38] sm:$0xff] %v2455
        %2472 = vst [vmem:[#allocation2 + $0x40] sm:$0xff] %v2456
        %2473 = vst [vmem:[#allocation2 + $0x48] sm:$0xff] %v2457
        %2474 = vst [vmem:[#allocation2 + $0x50] sm:$0xff] %v2458
        %2475 = vst [vmem:[#allocation2 + $0x58] sm:$0xff] %v2459
        %2476 = vst [vmem:[#allocation2 + $0x60] sm:$0xff] %v2460
        %2477 = vst [vmem:[#allocation2 + $0x68] sm:$0xff] %v2461
        %2478 = vst [vmem:[#allocation2 + $0x70] sm:$0xff] %v2462
        %2479 = vst [vmem:[#allocation2 + $0x78] sm:$0xff] %v2463
        %p2480 = scmp.eq.s32.totalorder %s20, 2
        // Predicated region
        $region64: #{detection_forward.7} parent=54 // pred_check
          %p2481 = pneg %p2480
        $region65: #{detection_forward.7} parent=54 // pred_check_branch
          %2483 = sbr.rel (%p2481) target = $region67
        $region66: #{detection_forward.7} parent=54 // pred_region
          %v2484 = vld [vmem:[#allocation2] sm:$0xff]
          %v2485 = vld [vmem:[#allocation2 + $0x8] sm:$0xff]
          %v2486 = vld [vmem:[#allocation2 + $0x10] sm:$0xff]
          %v2487 = vld [vmem:[#allocation2 + $0x18] sm:$0xff]
          %v2488 = vld [vmem:[#allocation2 + $0x20] sm:$0xff]
          %v2489 = vld [vmem:[#allocation2 + $0x28] sm:$0xff]
          %v2490 = vld [vmem:[#allocation2 + $0x30] sm:$0xff]
          %v2491 = vld [vmem:[#allocation2 + $0x38] sm:$0xff]
          %v2492 = vld [vmem:[#allocation2 + $0x40] sm:$0xff]
          %v2493 = vld [vmem:[#allocation2 + $0x48] sm:$0xff]
          %v2494 = vld [vmem:[#allocation2 + $0x50] sm:$0xff]
          %v2495 = vld [vmem:[#allocation2 + $0x58] sm:$0xff]
          %v2496 = vld [vmem:[#allocation2 + $0x60] sm:$0xff]
          %v2497 = vld [vmem:[#allocation2 + $0x68] sm:$0xff]
          %v2498 = vld [vmem:[#allocation2 + $0x70] sm:$0xff]
          %v2499 = vld [vmem:[#allocation2 + $0x78] sm:$0xff]
          %v2500 = vadd.f32 %v2484, %v2485
          %v2501 = vadd.f32 %v2500, %v2486
          %v2502 = vadd.f32 %v2501, %v2487
          %v2503 = vadd.f32 %v2502, %v2488
          %v2504 = vadd.f32 %v2503, %v2489
          %v2505 = vadd.f32 %v2504, %v2490
          %v2506 = vadd.f32 %v2505, %v2491
          %v2507 = vadd.f32 %v2506, %v2492
          %v2508 = vadd.f32 %v2507, %v2493
          %v2509 = vadd.f32 %v2508, %v2494
          %v2510 = vadd.f32 %v2509, %v2495
          %v2511 = vadd.f32 %v2510, %v2496
          %v2512 = vadd.f32 %v2511, %v2497
          %v2513 = vadd.f32 %v2512, %v2498
          %v2514 = vadd.f32 %v2513, %v2499
          %v2515 = vrot.slane %v2514, 4
          %v2516 = vadd.f32 %v2514, %v2515
          %v2517 = vrot.slane %v2516, 2
          %v2518 = vadd.f32 %v2516, %v2517
          %v2519 = vrot.slane %v2518, 1
          %v2520 = vadd.f32 %v2518, %v2519
          %v2521 = vmul.f32 %v2520, 0.0078125
          %v2522 = vsub.f32 %v2484, %v2521
          %v2523 = vsub.f32 %v2485, %v2521
          %v2524 = vsub.f32 %v2486, %v2521
          %v2525 = vsub.f32 %v2487, %v2521
          %v2526 = vsub.f32 %v2488, %v2521
          %v2527 = vsub.f32 %v2489, %v2521
          %v2528 = vsub.f32 %v2490, %v2521
          %v2529 = vsub.f32 %v2491, %v2521
          %v2530 = vsub.f32 %v2492, %v2521
          %v2531 = vsub.f32 %v2493, %v2521
          %v2532 = vsub.f32 %v2494, %v2521
          %v2533 = vsub.f32 %v2495, %v2521
          %v2534 = vsub.f32 %v2496, %v2521
          %v2535 = vsub.f32 %v2497, %v2521
          %v2536 = vsub.f32 %v2498, %v2521
          %v2537 = vsub.f32 %v2499, %v2521
          %v2538 = vmul.f32 %v2522, %v2522
          %v2539 = vmul.f32 %v2523, %v2523
          %v2540 = vmul.f32 %v2524, %v2524
          %v2541 = vmul.f32 %v2525, %v2525
          %v2542 = vmul.f32 %v2526, %v2526
          %v2543 = vmul.f32 %v2527, %v2527
          %v2544 = vmul.f32 %v2528, %v2528
          %v2545 = vmul.f32 %v2529, %v2529
          %v2546 = vmul.f32 %v2530, %v2530
          %v2547 = vmul.f32 %v2531, %v2531
          %v2548 = vmul.f32 %v2532, %v2532
          %v2549 = vmul.f32 %v2533, %v2533
          %v2550 = vmul.f32 %v2534, %v2534
          %v2551 = vmul.f32 %v2535, %v2535
          %v2552 = vmul.f32 %v2536, %v2536
          %v2553 = vmul.f32 %v2537, %v2537
          %v2554 = vadd.f32 %v2538, %v2539
          %v2555 = vadd.f32 %v2554, %v2540
          %v2556 = vadd.f32 %v2555, %v2541
          %v2557 = vadd.f32 %v2556, %v2542
          %v2558 = vadd.f32 %v2557, %v2543
          %v2559 = vadd.f32 %v2558, %v2544
          %v2560 = vadd.f32 %v2559, %v2545
          %v2561 = vadd.f32 %v2560, %v2546
          %v2562 = vadd.f32 %v2561, %v2547
          %v2563 = vadd.f32 %v2562, %v2548
          %v2564 = vadd.f32 %v2563, %v2549
          %v2565 = vadd.f32 %v2564, %v2550
          %v2566 = vadd.f32 %v2565, %v2551
          %v2567 = vadd.f32 %v2566, %v2552
          %v2568 = vadd.f32 %v2567, %v2553
          %v2569 = vrot.slane %v2568, 4
          %v2570 = vadd.f32 %v2568, %v2569
          %v2571 = vrot.slane %v2570, 2
          %v2572 = vadd.f32 %v2570, %v2571
          %v2573 = vrot.slane %v2572, 1
          %v2574 = vadd.f32 %v2572, %v2573
          %v2575 = vmul.f32 %v2574, 0.0078125
          %v2576 = vld [vmem:[%s472] sm:$0x1]
          %v2577 = vadd.f32 %v2575, 1e-05
          %v2578 = vrsqrt.pop %v2577
          %v2579 = vmul.f32 %v2578, %v2577
          %v2580 = vmul.f32 %v2579, %v2578
          %v2581 = vmul.f32 0.5, %v2580
          %v2582 = vsub.f32 1.5, %v2581
          %v2583 = vmul.f32 %v2578, %v2582
          %vm2584 = vweird.f32 %v2577
          %vm2585 = vweird.f32 %v2578
          %vm2586 = vmor %vm2584, %vm2585
          %v2587 = vsel %vm2586, %v2578, %v2583
          %v2588 = vmul.f32 %v2576, %v2587
          %v2590 = vperm.slane %v2588, 0
          %v2592 = vmul.f32 %v2522, %v2590
          %v2593 = vmul.f32 %v2523, %v2590
          %v2594 = vmul.f32 %v2524, %v2590
          %v2595 = vmul.f32 %v2525, %v2590
          %v2596 = vmul.f32 %v2526, %v2590
          %v2597 = vmul.f32 %v2527, %v2590
          %v2598 = vmul.f32 %v2528, %v2590
          %v2599 = vmul.f32 %v2529, %v2590
          %v2600 = vmul.f32 %v2530, %v2590
          %v2601 = vmul.f32 %v2531, %v2590
          %v2602 = vmul.f32 %v2532, %v2590
          %v2603 = vmul.f32 %v2533, %v2590
          %v2604 = vmul.f32 %v2534, %v2590
          %v2605 = vmul.f32 %v2535, %v2590
          %v2606 = vmul.f32 %v2536, %v2590
          %v2607 = vmul.f32 %v2537, %v2590
          %v2608 = vld [vmem:[%s475] sm:$0x1]
          %v2610 = vperm.slane %v2608, 0
          %v2612 = vadd.f32 %v2592, %v2610
          %v2613 = vadd.f32 %v2593, %v2610
          %v2614 = vadd.f32 %v2594, %v2610
          %v2615 = vadd.f32 %v2595, %v2610
          %v2616 = vadd.f32 %v2596, %v2610
          %v2617 = vadd.f32 %v2597, %v2610
          %v2618 = vadd.f32 %v2598, %v2610
          %v2619 = vadd.f32 %v2599, %v2610
          %v2620 = vadd.f32 %v2600, %v2610
          %v2621 = vadd.f32 %v2601, %v2610
          %v2622 = vadd.f32 %v2602, %v2610
          %v2623 = vadd.f32 %v2603, %v2610
          %v2624 = vadd.f32 %v2604, %v2610
          %v2625 = vadd.f32 %v2605, %v2610
          %v2626 = vadd.f32 %v2606, %v2610
          %v2627 = vadd.f32 %v2607, %v2610
          %vm2628 = vcmp.ge.f32.partialorder %v2612, 0.0
          %vm2629 = vcmp.ge.f32.partialorder %v2613, 0.0
          %vm2630 = vcmp.ge.f32.partialorder %v2614, 0.0
          %vm2631 = vcmp.ge.f32.partialorder %v2615, 0.0
          %vm2632 = vcmp.ge.f32.partialorder %v2616, 0.0
          %vm2633 = vcmp.ge.f32.partialorder %v2617, 0.0
          %vm2634 = vcmp.ge.f32.partialorder %v2618, 0.0
          %vm2635 = vcmp.ge.f32.partialorder %v2619, 0.0
          %vm2636 = vcmp.ge.f32.partialorder %v2620, 0.0
          %vm2637 = vcmp.ge.f32.partialorder %v2621, 0.0
          %vm2638 = vcmp.ge.f32.partialorder %v2622, 0.0
          %vm2639 = vcmp.ge.f32.partialorder %v2623, 0.0
          %vm2640 = vcmp.ge.f32.partialorder %v2624, 0.0
          %vm2641 = vcmp.ge.f32.partialorder %v2625, 0.0
          %vm2642 = vcmp.ge.f32.partialorder %v2626, 0.0
          %vm2643 = vcmp.ge.f32.partialorder %v2627, 0.0
          %v2644 = vmul.f32 %v2612, 0.1
          %v2645 = vmul.f32 %v2613, 0.1
          %v2646 = vmul.f32 %v2614, 0.1
          %v2647 = vmul.f32 %v2615, 0.1
          %v2648 = vmul.f32 %v2616, 0.1
          %v2649 = vmul.f32 %v2617, 0.1
          %v2650 = vmul.f32 %v2618, 0.1
          %v2651 = vmul.f32 %v2619, 0.1
          %v2652 = vmul.f32 %v2620, 0.1
          %v2653 = vmul.f32 %v2621, 0.1
          %v2654 = vmul.f32 %v2622, 0.1
          %v2655 = vmul.f32 %v2623, 0.1
          %v2656 = vmul.f32 %v2624, 0.1
          %v2657 = vmul.f32 %v2625, 0.1
          %v2658 = vmul.f32 %v2626, 0.1
          %v2659 = vmul.f32 %v2627, 0.1
          %v2660 = vsel %vm2628, %v2612, %v2644
          %v2661 = vsel %vm2629, %v2613, %v2645
          %v2662 = vsel %vm2630, %v2614, %v2646
          %v2663 = vsel %vm2631, %v2615, %v2647
          %v2664 = vsel %vm2632, %v2616, %v2648
          %v2665 = vsel %vm2633, %v2617, %v2649
          %v2666 = vsel %vm2634, %v2618, %v2650
          %v2667 = vsel %vm2635, %v2619, %v2651
          %v2668 = vsel %vm2636, %v2620, %v2652
          %v2669 = vsel %vm2637, %v2621, %v2653
          %v2670 = vsel %vm2638, %v2622, %v2654
          %v2671 = vsel %vm2639, %v2623, %v2655
          %v2672 = vsel %vm2640, %v2624, %v2656
          %v2673 = vsel %vm2641, %v2625, %v2657
          %v2674 = vsel %vm2642, %v2626, %v2658
          %v2675 = vsel %vm2643, %v2627, %v2659
          %v2676 = vpack.c.bf16 %v2660, %v2660
          %v2677 = vpack.c.bf16 %v2661, %v2661
          %v2678 = vpack.c.bf16 %v2662, %v2662
          %v2679 = vpack.c.bf16 %v2663, %v2663
          %v2680 = vpack.c.bf16 %v2664, %v2664
          %v2681 = vpack.c.bf16 %v2665, %v2665
          %v2682 = vpack.c.bf16 %v2666, %v2666
          %v2683 = vpack.c.bf16 %v2667, %v2667
          %v2684 = vpack.c.bf16 %v2668, %v2668
          %v2685 = vpack.c.bf16 %v2669, %v2669
          %v2686 = vpack.c.bf16 %v2670, %v2670
          %v2687 = vpack.c.bf16 %v2671, %v2671
          %v2688 = vpack.c.bf16 %v2672, %v2672
          %v2689 = vpack.c.bf16 %v2673, %v2673
          %v2690 = vpack.c.bf16 %v2674, %v2674
          %v2691 = vpack.c.bf16 %v2675, %v2675
          %2692 = vst [vmem:[%s479] sm:$0xf] %v2676
          %2693 = vst [vmem:[%s479 + $0x4] sm:$0xf] %v2677
          %2694 = vst [vmem:[%s479 + $0x8] sm:$0xf] %v2678
          %2695 = vst [vmem:[%s479 + $0xc] sm:$0xf] %v2679
          %2696 = vst [vmem:[%s479 + $0x10] sm:$0xf] %v2680
          %2697 = vst [vmem:[%s479 + $0x14] sm:$0xf] %v2681
          %2698 = vst [vmem:[%s479 + $0x18] sm:$0xf] %v2682
          %2699 = vst [vmem:[%s479 + $0x1c] sm:$0xf] %v2683
          %2700 = vst [vmem:[%s479 + $0x20] sm:$0xf] %v2684
          %2701 = vst [vmem:[%s479 + $0x24] sm:$0xf] %v2685
          %2702 = vst [vmem:[%s479 + $0x28] sm:$0xf] %v2686
          %2703 = vst [vmem:[%s479 + $0x2c] sm:$0xf] %v2687
          %2704 = vst [vmem:[%s479 + $0x30] sm:$0xf] %v2688
          %2705 = vst [vmem:[%s479 + $0x34] sm:$0xf] %v2689
          %2706 = vst [vmem:[%s479 + $0x38] sm:$0xf] %v2690
          %2707 = vst [vmem:[%s479 + $0x3c] sm:$0xf] %v2691
        $region67: #{detection_forward.7} parent=54 // pred_fallthru
          _
        %p2708 = scmp.lt.s32.totalorder %s19, 0
        %s2709 = scalar_select %p2708, %s19, 0
        %s2710 = smul.addr %s2709, 4
        %s2711 = scalar_lea.vmem %s4, %s2710
        // Predicated region
        $region68: #{detection_forward.7} parent=54 // pred_check
          %p2712 = pneg %p151
        $region69: #{detection_forward.7} parent=54 // pred_check_branch
          %2714 = sbr.rel (%p2712) target = $region71
        $region70: #{detection_forward.7} parent=54 // pred_region
          _
        $region71: #{detection_forward.7} parent=54 // pred_fallthru
          _
        // Predicated region
        $region72: #{detection_forward.7} parent=54 // pred_check
          %p2715 = pneg %p151
        $region73: #{detection_forward.7} parent=54 // pred_check_branch
          %2717 = sbr.rel (%p2715) target = $region75
        $region74: #{detection_forward.7} parent=54 // pred_region
          %p2718 = scmp.lt.s32.totalorder %s19, 0
          %s2719 = scalar_select %p2718, %s19, 0
          %s2720 = smul.addr %s2719, 4
          %s2721 = scalar_lea.vmem %s4, %s2720
        $region75: #{detection_forward.7} parent=54 // pred_fallthru
          _
      $region55: #{detection_forward.7} parent=5 // pred_fallthru
        _
      %p2722 = scmp.le.s32.totalorder 2, %s10
      // Predicated region
      $region76: #{detection_forward.7} parent=5 // pred_check
        %p2723 = pneg %p2722
      $region77: #{detection_forward.7} parent=5 // pred_check_branch
        %2725 = sbr.rel (%p2723) target = $region79
      $region78: #{detection_forward.7} parent=5 // pred_region
        %s2726 = ssub.s32 %s10, 2
      $region79: #{detection_forward.7} parent=5 // pred_fallthru
        _
    $region6: #{detection_forward.7} parent=1 // loop_footer
      %s14 = sadd.s32 1, %s10
    $region7: #{detection_forward.7} parent=1 // loop_footer_branch
      %9 = sbr.rel target = $region3
    $region8: #{detection_forward.7} parent=1 // loop_exit
      _

// kernel: detection_forward.9
$region0: #{detection_forward.9}
  #allocation0 [shape = 'u32[]', space=smem, size = 0x4, offset = 0x4, fixed_abs, tag = 'smem constant byte address 0x4 - core index']
  #allocation1 [shape = 'u32[72,128]{1,0:T(1,128)}', space=vmem, size = 0x9000, scoped, tag = 'internal scratch']
  #allocation2 [shape = 'f32[32,128]{1,0:T(8,128)}', space=vmem, size = 0x4000, scoped, tag = 'scratch operand']
  %s0 = inlined_call_operand.vmem [shape: bf16[32,1024], index: 0, kind: input, shape index: {}]
  %s1 = inlined_call_operand.vmem [shape: bf16[1024,128], index: 1, kind: input, shape index: {}]
  %s2 = inlined_call_operand.vmem [shape: f32[1,128], index: 2, kind: input, shape index: {}]
  %s3 = inlined_call_operand.vmem [shape: f32[1,128], index: 3, kind: input, shape index: {}]
  %s4 = inlined_call_operand.hbm [shape: f32[32,128], index: 4, kind: output, shape index: {}]
  %s5 = sld [smem:[#allocation0]]
  $region34: #{detection_forward.9} parent=0
    _
  %s7 = ssub.s32 1, %s5
  %s8 = scalar_select 0, %s7, %s5
  $region1: #{detection_forward.9} parent=0
    #allocation3 [shape = 'u8[16384]{0}', space=vmem, size = 0x4000, scoped, tag = 'output window, operand 0, single buffered']
    #allocation4 [shape = 's32[1]{0}', space=sflag, size = 0x4, scoped, tag = 'scoped memory for detection_forward.9']
    %9 = vsyncpa [#allocation4], 0
    // Predicated region
    $region2: #{detection_forward.9} parent=1 // pred_check
      _
    $region3: #{detection_forward.9} parent=1 // pred_check_branch
      %11 = sbr.rel (0) target = $region5
    $region4: #{detection_forward.9} parent=1 // pred_region
      _
    $region5: #{detection_forward.9} parent=1 // pred_fallthru
      _
    // Predicated region
    $region6: #{detection_forward.9} parent=1 // pred_check
      _
    $region7: #{detection_forward.9} parent=1 // pred_check_branch
      %13 = sbr.rel (0) target = $region9
    $region8: #{detection_forward.9} parent=1 // pred_region
      _
    $region9: #{detection_forward.9} parent=1 // pred_fallthru
      _
    // Predicated region
    $region10: #{detection_forward.9} parent=1 // pred_check
      _
    $region11: #{detection_forward.9} parent=1 // pred_check_branch
      %15 = sbr.rel (0) target = $region13
    $region12: #{detection_forward.9} parent=1 // pred_region
      _
    $region13: #{detection_forward.9} parent=1 // pred_fallthru
      _
    // Predicated region
    $region14: #{detection_forward.9} parent=1 // pred_check
      _
    $region15: #{detection_forward.9} parent=1 // pred_check_branch
      %17 = sbr.rel (0) target = $region17
    $region16: #{detection_forward.9} parent=1 // pred_region
      _
    $region17: #{detection_forward.9} parent=1 // pred_fallthru
      _
    %p18 = scmp.eq.s32.totalorder 0, 0
    // Predicated region
    $region18: #{detection_forward.9} parent=1 // pred_check
      %p19 = pneg %p18
    $region19: #{detection_forward.9} parent=1 // pred_check_branch
      %21 = sbr.rel (%p19) target = $region21
    $region20: #{detection_forward.9} parent=1 // pred_region
      %22 = vst [vmem:[#allocation2] sm:$0xff] 0.0
      %23 = vst [vmem:[#allocation2 + $0x8] sm:$0xff] 0.0
      %24 = vst [vmem:[#allocation2 + $0x10] sm:$0xff] 0.0
      %25 = vst [vmem:[#allocation2 + $0x18] sm:$0xff] 0.0
    $region21: #{detection_forward.9} parent=1 // pred_fallthru
      _
    %v26 = vld [vmem:[#allocation2] sm:$0xff]
    %v27 = vld [vmem:[#allocation2 + $0x8] sm:$0xff]
    %v28 = vld [vmem:[#allocation2 + $0x10] sm:$0xff]
    %v29 = vld [vmem:[#allocation2 + $0x18] sm:$0xff]
    %v30 = vld [vmem:[%s0] sm:$0xff]
    %v31 = vld [vmem:[%s0 + $0x8] sm:$0xff]
    %v32 = vld [vmem:[%s0 + $0x10] sm:$0xff]
    %v33 = vld [vmem:[%s0 + $0x18] sm:$0xff]
    %v34 = vld [vmem:[%s0 + $0x20] sm:$0xff]
    %v35 = vld [vmem:[%s0 + $0x28] sm:$0xff]
    %v36 = vld [vmem:[%s0 + $0x30] sm:$0xff]
    %v37 = vld [vmem:[%s0 + $0x38] sm:$0xff]
    %v38 = vld [vmem:[%s0 + $0x40] sm:$0xff]
    %v39 = vld [vmem:[%s0 + $0x48] sm:$0xff]
    %v40 = vld [vmem:[%s0 + $0x50] sm:$0xff]
    %v41 = vld [vmem:[%s0 + $0x58] sm:$0xff]
    %v42 = vld [vmem:[%s0 + $0x60] sm:$0xff]
    %v43 = vld [vmem:[%s0 + $0x68] sm:$0xff]
    %v44 = vld [vmem:[%s0 + $0x70] sm:$0xff]
    %v45 = vld [vmem:[%s0 + $0x78] sm:$0xff]
    %v46 = vld [vmem:[%s1] sm:$0xf]
    %v47 = vld [vmem:[%s1 + $0x4] sm:$0xf]
    %v48 = vld [vmem:[%s1 + $0x8] sm:$0xf]
    %v49 = vld [vmem:[%s1 + $0xc] sm:$0xf]
    %v50 = vld [vmem:[%s1 + $0x10] sm:$0xf]
    %v51 = vld [vmem:[%s1 + $0x14] sm:$0xf]
    %v52 = vld [vmem:[%s1 + $0x18] sm:$0xf]
    %v53 = vld [vmem:[%s1 + $0x1c] sm:$0xf]
    %v54 = vld [vmem:[%s1 + $0x20] sm:$0xf]
    %v55 = vld [vmem:[%s1 + $0x24] sm:$0xf]
    %v56 = vld [vmem:[%s1 + $0x28] sm:$0xf]
    %v57 = vld [vmem:[%s1 + $0x2c] sm:$0xf]
    %v58 = vld [vmem:[%s1 + $0x30] sm:$0xf]
    %v59 = vld [vmem:[%s1 + $0x34] sm:$0xf]
    %v60 = vld [vmem:[%s1 + $0x38] sm:$0xf]
    %v61 = vld [vmem:[%s1 + $0x3c] sm:$0xf]
    %v62 = vld [vmem:[%s1 + $0x40] sm:$0xf]
    %v63 = vld [vmem:[%s1 + $0x44] sm:$0xf]
    %v64 = vld [vmem:[%s1 + $0x48] sm:$0xf]
    %v65 = vld [vmem:[%s1 + $0x4c] sm:$0xf]
    %v66 = vld [vmem:[%s1 + $0x50] sm:$0xf]
    %v67 = vld [vmem:[%s1 + $0x54] sm:$0xf]
    %v68 = vld [vmem:[%s1 + $0x58] sm:$0xf]
    %v69 = vld [vmem:[%s1 + $0x5c] sm:$0xf]
    %v70 = vld [vmem:[%s1 + $0x60] sm:$0xf]
    %v71 = vld [vmem:[%s1 + $0x64] sm:$0xf]
    %v72 = vld [vmem:[%s1 + $0x68] sm:$0xf]
    %v73 = vld [vmem:[%s1 + $0x6c] sm:$0xf]
    %v74 = vld [vmem:[%s1 + $0x70] sm:$0xf]
    %v75 = vld [vmem:[%s1 + $0x74] sm:$0xf]
    %v76 = vld [vmem:[%s1 + $0x78] sm:$0xf]
    %v77 = vld [vmem:[%s1 + $0x7c] sm:$0xf]
    %v78 = vld [vmem:[%s1 + $0x80] sm:$0xf]
    %v79 = vld [vmem:[%s1 + $0x84] sm:$0xf]
    %v80 = vld [vmem:[%s1 + $0x88] sm:$0xf]
    %v81 = vld [vmem:[%s1 + $0x8c] sm:$0xf]
    %v82 = vld [vmem:[%s1 + $0x90] sm:$0xf]
    %v83 = vld [vmem:[%s1 + $0x94] sm:$0xf]
    %v84 = vld [vmem:[%s1 + $0x98] sm:$0xf]
    %v85 = vld [vmem:[%s1 + $0x9c] sm:$0xf]
    %v86 = vld [vmem:[%s1 + $0xa0] sm:$0xf]
    %v87 = vld [vmem:[%s1 + $0xa4] sm:$0xf]
    %v88 = vld [vmem:[%s1 + $0xa8] sm:$0xf]
    %v89 = vld [vmem:[%s1 + $0xac] sm:$0xf]
    %v90 = vld [vmem:[%s1 + $0xb0] sm:$0xf]
    %v91 = vld [vmem:[%s1 + $0xb4] sm:$0xf]
    %v92 = vld [vmem:[%s1 + $0xb8] sm:$0xf]
    %v93 = vld [vmem:[%s1 + $0xbc] sm:$0xf]
    %v94 = vld [vmem:[%s1 + $0xc0] sm:$0xf]
    %v95 = vld [vmem:[%s1 + $0xc4] sm:$0xf]
    %v96 = vld [vmem:[%s1 + $0xc8] sm:$0xf]
    %v97 = vld [vmem:[%s1 + $0xcc] sm:$0xf]
    %v98 = vld [vmem:[%s1 + $0xd0] sm:$0xf]
    %v99 = vld [vmem:[%s1 + $0xd4] sm:$0xf]
    %v100 = vld [vmem:[%s1 + $0xd8] sm:$0xf]
    %v101 = vld [vmem:[%s1 + $0xdc] sm:$0xf]
    %v102 = vld [vmem:[%s1 + $0xe0] sm:$0xf]
    %v103 = vld [vmem:[%s1 + $0xe4] sm:$0xf]
    %v104 = vld [vmem:[%s1 + $0xe8] sm:$0xf]
    %v105 = vld [vmem:[%s1 + $0xec] sm:$0xf]
    %v106 = vld [vmem:[%s1 + $0xf0] sm:$0xf]
    %v107 = vld [vmem:[%s1 + $0xf4] sm:$0xf]
    %v108 = vld [vmem:[%s1 + $0xf8] sm:$0xf]
    %v109 = vld [vmem:[%s1 + $0xfc] sm:$0xf]
    %v110 = vld [vmem:[%s1 + $0x100] sm:$0xf]
    %v111 = vld [vmem:[%s1 + $0x104] sm:$0xf]
    %v112 = vld [vmem:[%s1 + $0x108] sm:$0xf]
    %v113 = vld [vmem:[%s1 + $0x10c] sm:$0xf]
    %v114 = vld [vmem:[%s1 + $0x110] sm:$0xf]
    %v115 = vld [vmem:[%s1 + $0x114] sm:$0xf]
    %v116 = vld [vmem:[%s1 + $0x118] sm:$0xf]
    %v117 = vld [vmem:[%s1 + $0x11c] sm:$0xf]
    %v118 = vld [vmem:[%s1 + $0x120] sm:$0xf]
    %v119 = vld [vmem:[%s1 + $0x124] sm:$0xf]
    %v120 = vld [vmem:[%s1 + $0x128] sm:$0xf]
    %v121 = vld [vmem:[%s1 + $0x12c] sm:$0xf]
    %v122 = vld [vmem:[%s1 + $0x130] sm:$0xf]
    %v123 = vld [vmem:[%s1 + $0x134] sm:$0xf]
    %v124 = vld [vmem:[%s1 + $0x138] sm:$0xf]
    %v125 = vld [vmem:[%s1 + $0x13c] sm:$0xf]
    %v126 = vld [vmem:[%s1 + $0x140] sm:$0xf]
    %v127 = vld [vmem:[%s1 + $0x144] sm:$0xf]
    %v128 = vld [vmem:[%s1 + $0x148] sm:$0xf]
    %v129 = vld [vmem:[%s1 + $0x14c] sm:$0xf]
    %v130 = vld [vmem:[%s1 + $0x150] sm:$0xf]
    %v131 = vld [vmem:[%s1 + $0x154] sm:$0xf]
    %v132 = vld [vmem:[%s1 + $0x158] sm:$0xf]
    %v133 = vld [vmem:[%s1 + $0x15c] sm:$0xf]
    %v134 = vld [vmem:[%s1 + $0x160] sm:$0xf]
    %v135 = vld [vmem:[%s1 + $0x164] sm:$0xf]
    %v136 = vld [vmem:[%s1 + $0x168] sm:$0xf]
    %v137 = vld [vmem:[%s1 + $0x16c] sm:$0xf]
    %v138 = vld [vmem:[%s1 + $0x170] sm:$0xf]
    %v139 = vld [vmem:[%s1 + $0x174] sm:$0xf]
    %v140 = vld [vmem:[%s1 + $0x178] sm:$0xf]
    %v141 = vld [vmem:[%s1 + $0x17c] sm:$0xf]
    %v142 = vld [vmem:[%s1 + $0x180] sm:$0xf]
    %v143 = vld [vmem:[%s1 + $0x184] sm:$0xf]
    %v144 = vld [vmem:[%s1 + $0x188] sm:$0xf]
    %v145 = vld [vmem:[%s1 + $0x18c] sm:$0xf]
    %v146 = vld [vmem:[%s1 + $0x190] sm:$0xf]
    %v147 = vld [vmem:[%s1 + $0x194] sm:$0xf]
    %v148 = vld [vmem:[%s1 + $0x198] sm:$0xf]
    %v149 = vld [vmem:[%s1 + $0x19c] sm:$0xf]
    %v150 = vld [vmem:[%s1 + $0x1a0] sm:$0xf]
    %v151 = vld [vmem:[%s1 + $0x1a4] sm:$0xf]
    %v152 = vld [vmem:[%s1 + $0x1a8] sm:$0xf]
    %v153 = vld [vmem:[%s1 + $0x1ac] sm:$0xf]
    %v154 = vld [vmem:[%s1 + $0x1b0] sm:$0xf]
    %v155 = vld [vmem:[%s1 + $0x1b4] sm:$0xf]
    %v156 = vld [vmem:[%s1 + $0x1b8] sm:$0xf]
    %v157 = vld [vmem:[%s1 + $0x1bc] sm:$0xf]
    %v158 = vld [vmem:[%s1 + $0x1c0] sm:$0xf]
    %v159 = vld [vmem:[%s1 + $0x1c4] sm:$0xf]
    %v160 = vld [vmem:[%s1 + $0x1c8] sm:$0xf]
    %v161 = vld [vmem:[%s1 + $0x1cc] sm:$0xf]
    %v162 = vld [vmem:[%s1 + $0x1d0] sm:$0xf]
    %v163 = vld [vmem:[%s1 + $0x1d4] sm:$0xf]
    %v164 = vld [vmem:[%s1 + $0x1d8] sm:$0xf]
    %v165 = vld [vmem:[%s1 + $0x1dc] sm:$0xf]
    %v166 = vld [vmem:[%s1 + $0x1e0] sm:$0xf]
    %v167 = vld [vmem:[%s1 + $0x1e4] sm:$0xf]
    %v168 = vld [vmem:[%s1 + $0x1e8] sm:$0xf]
    %v169 = vld [vmem:[%s1 + $0x1ec] sm:$0xf]
    %v170 = vld [vmem:[%s1 + $0x1f0] sm:$0xf]
    %v171 = vld [vmem:[%s1 + $0x1f4] sm:$0xf]
    %v172 = vld [vmem:[%s1 + $0x1f8] sm:$0xf]
    %v173 = vld [vmem:[%s1 + $0x1fc] sm:$0xf]
    %v190 = vunpack.c.l.b16 %v30
    %v191 = vunpack.c.h.b16 %v30
    %v192 = vunpack.c.l.b16 %v31
    %v193 = vunpack.c.h.b16 %v31
    %v194 = vunpack.c.l.b16 %v32
    %v195 = vunpack.c.h.b16 %v32
    %v196 = vunpack.c.l.b16 %v33
    %v197 = vunpack.c.h.b16 %v33
    %v198 = vunpack.c.l.b16 %v34
    %v199 = vunpack.c.h.b16 %v34
    %v200 = vunpack.c.l.b16 %v35
    %v201 = vunpack.c.h.b16 %v35
    %v202 = vunpack.c.l.b16 %v36
    %v203 = vunpack.c.h.b16 %v36
    %v204 = vunpack.c.l.b16 %v37
    %v205 = vunpack.c.h.b16 %v37
    %v206 = vunpack.c.l.b16 %v38
    %v207 = vunpack.c.h.b16 %v38
    %v208 = vunpack.c.l.b16 %v39
    %v209 = vunpack.c.h.b16 %v39
    %v210 = vunpack.c.l.b16 %v40
    %v211 = vunpack.c.h.b16 %v40
    %v212 = vunpack.c.l.b16 %v41
    %v213 = vunpack.c.h.b16 %v41
    %v214 = vunpack.c.l.b16 %v42
    %v215 = vunpack.c.h.b16 %v42
    %v216 = vunpack.c.l.b16 %v43
    %v217 = vunpack.c.h.b16 %v43
    %v218 = vunpack.c.l.b16 %v44
    %v219 = vunpack.c.h.b16 %v44
    %v220 = vunpack.c.l.b16 %v45
    %v221 = vunpack.c.h.b16 %v45
    %v222 = vpack.c.b16 %v198, %v190
    %v223 = vpack.c.b16 %v199, %v191
    %v224 = vpack.c.b16 %v200, %v192
    %v225 = vpack.c.b16 %v201, %v193
    %v226 = vpack.c.b16 %v202, %v194
    %v227 = vpack.c.b16 %v203, %v195
    %v228 = vpack.c.b16 %v204, %v196
    %v229 = vpack.c.b16 %v205, %v197
    %v230 = vpack.c.b16 %v214, %v206
    %v231 = vpack.c.b16 %v215, %v207
    %v232 = vpack.c.b16 %v216, %v208
    %v233 = vpack.c.b16 %v217, %v209
    %v234 = vpack.c.b16 %v218, %v210
    %v235 = vpack.c.b16 %v219, %v211
    %v236 = vpack.c.b16 %v220, %v212
    %v237 = vpack.c.b16 %v221, %v213
    %v382 = vunpack.c.l.b16 %v46
    %v383 = vunpack.c.l.b16 %v47
    %v384 = vunpack.c.l.b16 %v48
    %v385 = vunpack.c.l.b16 %v49
    %v386 = vunpack.c.l.b16 %v50
    %v387 = vunpack.c.l.b16 %v51
    %v388 = vunpack.c.l.b16 %v52
    %v389 = vunpack.c.l.b16 %v53
    %v390 = vunpack.c.l.b16 %v54
    %v391 = vunpack.c.l.b16 %v55
    %v392 = vunpack.c.l.b16 %v56
    %v393 = vunpack.c.l.b16 %v57
    %v394 = vunpack.c.l.b16 %v58
    %v395 = vunpack.c.l.b16 %v59
    %v396 = vunpack.c.l.b16 %v60
    %v397 = vunpack.c.l.b16 %v61
    %v398 = vunpack.c.l.b16 %v62
    %v399 = vunpack.c.l.b16 %v63
    %v400 = vunpack.c.l.b16 %v64
    %v401 = vunpack.c.l.b16 %v65
    %v402 = vunpack.c.l.b16 %v66
    %v403 = vunpack.c.l.b16 %v67
    %v404 = vunpack.c.l.b16 %v68
    %v405 = vunpack.c.l.b16 %v69
    %v406 = vunpack.c.l.b16 %v70
    %v407 = vunpack.c.l.b16 %v71
    %v408 = vunpack.c.l.b16 %v72
    %v409 = vunpack.c.l.b16 %v73
    %v410 = vunpack.c.l.b16 %v74
    %v411 = vunpack.c.l.b16 %v75
    %v412 = vunpack.c.l.b16 %v76
    %v413 = vunpack.c.l.b16 %v77
    %v414 = vunpack.c.l.b16 %v78
    %v415 = vunpack.c.l.b16 %v79
    %v416 = vunpack.c.l.b16 %v80
    %v417 = vunpack.c.l.b16 %v81
    %v418 = vunpack.c.l.b16 %v82
    %v419 = vunpack.c.l.b16 %v83
    %v420 = vunpack.c.l.b16 %v84
    %v421 = vunpack.c.l.b16 %v85
    %v422 = vunpack.c.l.b16 %v86
    %v423 = vunpack.c.l.b16 %v87
    %v424 = vunpack.c.l.b16 %v88
    %v425 = vunpack.c.l.b16 %v89
    %v426 = vunpack.c.l.b16 %v90
    %v427 = vunpack.c.l.b16 %v91
    %v428 = vunpack.c.l.b16 %v92
    %v429 = vunpack.c.l.b16 %v93
    %v430 = vunpack.c.l.b16 %v94
    %v431 = vunpack.c.l.b16 %v95
    %v432 = vunpack.c.l.b16 %v96
    %v433 = vunpack.c.l.b16 %v97
    %v434 = vunpack.c.l.b16 %v98
    %v435 = vunpack.c.l.b16 %v99
    %v436 = vunpack.c.l.b16 %v100
    %v437 = vunpack.c.l.b16 %v101
    %v438 = vunpack.c.l.b16 %v102
    %v439 = vunpack.c.l.b16 %v103
    %v440 = vunpack.c.l.b16 %v104
    %v441 = vunpack.c.l.b16 %v105
    %v442 = vunpack.c.l.b16 %v106
    %v443 = vunpack.c.l.b16 %v107
    %v444 = vunpack.c.l.b16 %v108
    %v445 = vunpack.c.l.b16 %v109
    %v446 = vunpack.c.l.b16 %v110
    %v447 = vunpack.c.l.b16 %v111
    %v448 = vunpack.c.l.b16 %v112
    %v449 = vunpack.c.l.b16 %v113
    %v450 = vunpack.c.l.b16 %v114
    %v451 = vunpack.c.l.b16 %v115
    %v452 = vunpack.c.l.b16 %v116
    %v453 = vunpack.c.l.b16 %v117
    %v454 = vunpack.c.l.b16 %v118
    %v455 = vunpack.c.l.b16 %v119
    %v456 = vunpack.c.l.b16 %v120
    %v457 = vunpack.c.l.b16 %v121
    %v458 = vunpack.c.l.b16 %v122
    %v459 = vunpack.c.l.b16 %v123
    %v460 = vunpack.c.l.b16 %v124
    %v461 = vunpack.c.l.b16 %v125
    %v462 = vunpack.c.l.b16 %v126
    %v463 = vunpack.c.l.b16 %v127
    %v464 = vunpack.c.l.b16 %v128
    %v465 = vunpack.c.l.b16 %v129
    %v466 = vunpack.c.l.b16 %v130
    %v467 = vunpack.c.l.b16 %v131
    %v468 = vunpack.c.l.b16 %v132
    %v469 = vunpack.c.l.b16 %v133
    %v470 = vunpack.c.l.b16 %v134
    %v471 = vunpack.c.l.b16 %v135
    %v472 = vunpack.c.l.b16 %v136
    %v473 = vunpack.c.l.b16 %v137
    %v474 = vunpack.c.l.b16 %v138
    %v475 = vunpack.c.l.b16 %v139
    %v476 = vunpack.c.l.b16 %v140
    %v477 = vunpack.c.l.b16 %v141
    %v478 = vunpack.c.l.b16 %v142
    %v479 = vunpack.c.l.b16 %v143
    %v480 = vunpack.c.l.b16 %v144
    %v481 = vunpack.c.l.b16 %v145
    %v482 = vunpack.c.l.b16 %v146
    %v483 = vunpack.c.l.b16 %v147
    %v484 = vunpack.c.l.b16 %v148
    %v485 = vunpack.c.l.b16 %v149
    %v486 = vunpack.c.l.b16 %v150
    %v487 = vunpack.c.l.b16 %v151
    %v488 = vunpack.c.l.b16 %v152
    %v489 = vunpack.c.l.b16 %v153
    %v490 = vunpack.c.l.b16 %v154
    %v491 = vunpack.c.l.b16 %v155
    %v492 = vunpack.c.l.b16 %v156
    %v493 = vunpack.c.l.b16 %v157
    %v494 = vunpack.c.l.b16 %v158
    %v495 = vunpack.c.l.b16 %v159
    %v496 = vunpack.c.l.b16 %v160
    %v497 = vunpack.c.l.b16 %v161
    %v498 = vunpack.c.l.b16 %v162
    %v499 = vunpack.c.l.b16 %v163
    %v500 = vunpack.c.l.b16 %v164
    %v501 = vunpack.c.l.b16 %v165
    %v502 = vunpack.c.l.b16 %v166
    %v503 = vunpack.c.l.b16 %v167
    %v504 = vunpack.c.l.b16 %v168
    %v505 = vunpack.c.l.b16 %v169
    %v506 = vunpack.c.l.b16 %v170
    %v507 = vunpack.c.l.b16 %v171
    %v508 = vunpack.c.l.b16 %v172
    %v509 = vunpack.c.l.b16 %v173
    %v510 = vpack.c.b16 %v383, %v382
    %v511 = vpack.c.b16 %v385, %v384
    %v512 = vpack.c.b16 %v387, %v386
    %v513 = vpack.c.b16 %v389, %v388
    %v514 = vpack.c.b16 %v391, %v390
    %v515 = vpack.c.b16 %v393, %v392
    %v516 = vpack.c.b16 %v395, %v394
    %v517 = vpack.c.b16 %v397, %v396
    %v518 = vpack.c.b16 %v399, %v398
    %v519 = vpack.c.b16 %v401, %v400
    %v520 = vpack.c.b16 %v403, %v402
    %v521 = vpack.c.b16 %v405, %v404
    %v522 = vpack.c.b16 %v407, %v406
    %v523 = vpack.c.b16 %v409, %v408
    %v524 = vpack.c.b16 %v411, %v410
    %v525 = vpack.c.b16 %v413, %v412
    %v526 = vpack.c.b16 %v415, %v414
    %v527 = vpack.c.b16 %v417, %v416
    %v528 = vpack.c.b16 %v419, %v418
    %v529 = vpack.c.b16 %v421, %v420
    %v530 = vpack.c.b16 %v423, %v422
    %v531 = vpack.c.b16 %v425, %v424
    %v532 = vpack.c.b16 %v427, %v426
    %v533 = vpack.c.b16 %v429, %v428
    %v534 = vpack.c.b16 %v431, %v430
    %v535 = vpack.c.b16 %v433, %v432
    %v536 = vpack.c.b16 %v435, %v434
    %v537 = vpack.c.b16 %v437, %v436
    %v538 = vpack.c.b16 %v439, %v438
    %v539 = vpack.c.b16 %v441, %v440
    %v540 = vpack.c.b16 %v443, %v442
    %v541 = vpack.c.b16 %v445, %v444
    %v542 = vpack.c.b16 %v447, %v446
    %v543 = vpack.c.b16 %v449, %v448
    %v544 = vpack.c.b16 %v451, %v450
    %v545 = vpack.c.b16 %v453, %v452
    %v546 = vpack.c.b16 %v455, %v454
    %v547 = vpack.c.b16 %v457, %v456
    %v548 = vpack.c.b16 %v459, %v458
    %v549 = vpack.c.b16 %v461, %v460
    %v550 = vpack.c.b16 %v463, %v462
    %v551 = vpack.c.b16 %v465, %v464
    %v552 = vpack.c.b16 %v467, %v466
    %v553 = vpack.c.b16 %v469, %v468
    %v554 = vpack.c.b16 %v471, %v470
    %v555 = vpack.c.b16 %v473, %v472
    %v556 = vpack.c.b16 %v475, %v474
    %v557 = vpack.c.b16 %v477, %v476
    %v558 = vpack.c.b16 %v479, %v478
    %v559 = vpack.c.b16 %v481, %v480
    %v560 = vpack.c.b16 %v483, %v482
    %v561 = vpack.c.b16 %v485, %v484
    %v562 = vpack.c.b16 %v487, %v486
    %v563 = vpack.c.b16 %v489, %v488
    %v564 = vpack.c.b16 %v491, %v490
    %v565 = vpack.c.b16 %v493, %v492
    %v566 = vpack.c.b16 %v495, %v494
    %v567 = vpack.c.b16 %v497, %v496
    %v568 = vpack.c.b16 %v499, %v498
    %v569 = vpack.c.b16 %v501, %v500
    %v570 = vpack.c.b16 %v503, %v502
    %v571 = vpack.c.b16 %v505, %v504
    %v572 = vpack.c.b16 %v507, %v506
    %v573 = vpack.c.b16 %v509, %v508
    %638 = vmatpush.bf16.msra.mxu0 %v517
    %639 = vmatpush.bf16.msra.mxu0 %v516
    %640 = vmatpush.bf16.msra.mxu0 %v515
    %641 = vmatpush.bf16.msra.mxu0 %v514
    %642 = vmatpush.bf16.msra.mxu0 %v513
    %643 = vmatpush.bf16.msra.mxu0 %v512
    %644 = vmatpush.bf16.msra.mxu0 %v511
    %645 = vmatpush.bf16.msra.mxu0 %v510
    %646 = vmatmul.bf16.gmra.mxu0 %v222
    %v647 = vpop.f32.mrf.mxu0
    %v648 = vadd.f32 0.0, %v647
    %v649 = vpop.f32.mrf.mxu0
    %v650 = vadd.f32 0.0, %v649
    %651 = vmatmul.bf16.gmra.mxu0 %v230
    %v652 = vpop.f32.mrf.mxu0
    %v653 = vadd.f32 0.0, %v652
    %v654 = vpop.f32.mrf.mxu0
    %v655 = vadd.f32 0.0, %v654
    %656 = vdwg.mxu0
    %657 = vmatpush.bf16.msra.mxu0 %v525
    %658 = vmatpush.bf16.msra.mxu0 %v524
    %659 = vmatpush.bf16.msra.mxu0 %v523
    %660 = vmatpush.bf16.msra.mxu0 %v522
    %661 = vmatpush.bf16.msra.mxu0 %v521
    %662 = vmatpush.bf16.msra.mxu0 %v520
    %663 = vmatpush.bf16.msra.mxu0 %v519
    %664 = vmatpush.bf16.msra.mxu0 %v518
    %665 = vmatmul.bf16.gmra.mxu0 %v223
    %v666 = vpop.f32.mrf.mxu0
    %v667 = vadd.f32 %v648, %v666
    %v668 = vpop.f32.mrf.mxu0
    %v669 = vadd.f32 %v650, %v668
    %670 = vmatmul.bf16.gmra.mxu0 %v231
    %v671 = vpop.f32.mrf.mxu0
    %v672 = vadd.f32 %v653, %v671
    %v673 = vpop.f32.mrf.mxu0
    %v674 = vadd.f32 %v655, %v673
    %675 = vdwg.mxu0
    %676 = vmatpush.bf16.msra.mxu0 %v533
    %677 = vmatpush.bf16.msra.mxu0 %v532
    %678 = vmatpush.bf16.msra.mxu0 %v531
    %679 = vmatpush.bf16.msra.mxu0 %v530
    %680 = vmatpush.bf16.msra.mxu0 %v529
    %681 = vmatpush.bf16.msra.mxu0 %v528
    %682 = vmatpush.bf16.msra.mxu0 %v527
    %683 = vmatpush.bf16.msra.mxu0 %v526
    %684 = vmatmul.bf16.gmra.mxu0 %v224
    %v685 = vpop.f32.mrf.mxu0
    %v686 = vadd.f32 %v667, %v685
    %v687 = vpop.f32.mrf.mxu0
    %v688 = vadd.f32 %v669, %v687
    %689 = vmatmul.bf16.gmra.mxu0 %v232
    %v690 = vpop.f32.mrf.mxu0
    %v691 = vadd.f32 %v672, %v690
    %v692 = vpop.f32.mrf.mxu0
    %v693 = vadd.f32 %v674, %v692
    %694 = vdwg.mxu0
    %695 = vmatpush.bf16.msra.mxu0 %v541
    %696 = vmatpush.bf16.msra.mxu0 %v540
    %697 = vmatpush.bf16.msra.mxu0 %v539
    %698 = vmatpush.bf16.msra.mxu0 %v538
    %699 = vmatpush.bf16.msra.mxu0 %v537
    %700 = vmatpush.bf16.msra.mxu0 %v536
    %701 = vmatpush.bf16.msra.mxu0 %v535
    %702 = vmatpush.bf16.msra.mxu0 %v534
    %703 = vmatmul.bf16.gmra.mxu0 %v225
    %v704 = vpop.f32.mrf.mxu0
    %v705 = vadd.f32 %v686, %v704
    %v706 = vpop.f32.mrf.mxu0
    %v707 = vadd.f32 %v688, %v706
    %708 = vmatmul.bf16.gmra.mxu0 %v233
    %v709 = vpop.f32.mrf.mxu0
    %v710 = vadd.f32 %v691, %v709
    %v711 = vpop.f32.mrf.mxu0
    %v712 = vadd.f32 %v693, %v711
    %713 = vdwg.mxu0
    %714 = vmatpush.bf16.msra.mxu0 %v549
    %715 = vmatpush.bf16.msra.mxu0 %v548
    %716 = vmatpush.bf16.msra.mxu0 %v547
    %717 = vmatpush.bf16.msra.mxu0 %v546
    %718 = vmatpush.bf16.msra.mxu0 %v545
    %719 = vmatpush.bf16.msra.mxu0 %v544
    %720 = vmatpush.bf16.msra.mxu0 %v543
    %721 = vmatpush.bf16.msra.mxu0 %v542
    %722 = vmatmul.bf16.gmra.mxu0 %v226
    %v723 = vpop.f32.mrf.mxu0
    %v724 = vadd.f32 %v705, %v723
    %v725 = vpop.f32.mrf.mxu0
    %v726 = vadd.f32 %v707, %v725
    %727 = vmatmul.bf16.gmra.mxu0 %v234
    %v728 = vpop.f32.mrf.mxu0
    %v729 = vadd.f32 %v710, %v728
    %v730 = vpop.f32.mrf.mxu0
    %v731 = vadd.f32 %v712, %v730
    %732 = vdwg.mxu0
    %733 = vmatpush.bf16.msra.mxu0 %v557
    %734 = vmatpush.bf16.msra.mxu0 %v556
    %735 = vmatpush.bf16.msra.mxu0 %v555
    %736 = vmatpush.bf16.msra.mxu0 %v554
    %737 = vmatpush.bf16.msra.mxu0 %v553
    %738 = vmatpush.bf16.msra.mxu0 %v552
    %739 = vmatpush.bf16.msra.mxu0 %v551
    %740 = vmatpush.bf16.msra.mxu0 %v550
    %741 = vmatmul.bf16.gmra.mxu0 %v227
    %v742 = vpop.f32.mrf.mxu0
    %v743 = vadd.f32 %v724, %v742
    %v744 = vpop.f32.mrf.mxu0
    %v745 = vadd.f32 %v726, %v744
    %746 = vmatmul.bf16.gmra.mxu0 %v235
    %v747 = vpop.f32.mrf.mxu0
    %v748 = vadd.f32 %v729, %v747
    %v749 = vpop.f32.mrf.mxu0
    %v750 = vadd.f32 %v731, %v749
    %751 = vdwg.mxu0
    %752 = vmatpush.bf16.msra.mxu0 %v565
    %753 = vmatpush.bf16.msra.mxu0 %v564
    %754 = vmatpush.bf16.msra.mxu0 %v563
    %755 = vmatpush.bf16.msra.mxu0 %v562
    %756 = vmatpush.bf16.msra.mxu0 %v561
    %757 = vmatpush.bf16.msra.mxu0 %v560
    %758 = vmatpush.bf16.msra.mxu0 %v559
    %759 = vmatpush.bf16.msra.mxu0 %v558
    %760 = vmatmul.bf16.gmra.mxu0 %v228
    %v761 = vpop.f32.mrf.mxu0
    %v762 = vadd.f32 %v743, %v761
    %v763 = vpop.f32.mrf.mxu0
    %v764 = vadd.f32 %v745, %v763
    %765 = vmatmul.bf16.gmra.mxu0 %v236
    %v766 = vpop.f32.mrf.mxu0
    %v767 = vadd.f32 %v748, %v766
    %v768 = vpop.f32.mrf.mxu0
    %v769 = vadd.f32 %v750, %v768
    %770 = vdwg.mxu0
    %771 = vmatpush.bf16.msra.mxu0 %v573
    %772 = vmatpush.bf16.msra.mxu0 %v572
    %773 = vmatpush.bf16.msra.mxu0 %v571
    %774 = vmatpush.bf16.msra.mxu0 %v570
    %775 = vmatpush.bf16.msra.mxu0 %v569
    %776 = vmatpush.bf16.msra.mxu0 %v568
    %777 = vmatpush.bf16.msra.mxu0 %v567
    %778 = vmatpush.bf16.msra.mxu0 %v566
    %779 = vmatmul.bf16.gmra.mxu0 %v229
    %v780 = vpop.f32.mrf.mxu0
    %v781 = vadd.f32 %v762, %v780
    %v782 = vpop.f32.mrf.mxu0
    %v783 = vadd.f32 %v764, %v782
    %784 = vmatmul.bf16.gmra.mxu0 %v237
    %v785 = vpop.f32.mrf.mxu0
    %v786 = vadd.f32 %v767, %v785
    %v787 = vpop.f32.mrf.mxu0
    %v788 = vadd.f32 %v769, %v787
    %789 = vdwg.mxu0
    %v790 = vadd.f32 %v26, %v781
    %v791 = vadd.f32 %v27, %v783
    %v792 = vadd.f32 %v28, %v786
    %v793 = vadd.f32 %v29, %v788
    %794 = vst [vmem:[#allocation2] sm:$0xff] %v790
    %795 = vst [vmem:[#allocation2 + $0x8] sm:$0xff] %v791
    %796 = vst [vmem:[#allocation2 + $0x10] sm:$0xff] %v792
    %797 = vst [vmem:[#allocation2 + $0x18] sm:$0xff] %v793
    // Predicated region
    $region22: #{detection_forward.9} parent=1 // pred_check
      %p798 = pneg %p18
    $region23: #{detection_forward.9} parent=1 // pred_check_branch
      %800 = sbr.rel (%p798) target = $region25
    $region24: #{detection_forward.9} parent=1 // pred_region
      %v801 = vld [vmem:[#allocation2] sm:$0xff]
      %v802 = vld [vmem:[#allocation2 + $0x8] sm:$0xff]
      %v803 = vld [vmem:[#allocation2 + $0x10] sm:$0xff]
      %v804 = vld [vmem:[#allocation2 + $0x18] sm:$0xff]
      %v805 = vld [vmem:[%s2] sm:$0x1]
      %v807 = vperm.slane %v805, 0
      %v809 = vmul.f32 %v801, %v807
      %v810 = vmul.f32 %v802, %v807
      %v811 = vmul.f32 %v803, %v807
      %v812 = vmul.f32 %v804, %v807
      %v813 = vld [vmem:[%s3] sm:$0x1]
      %v815 = vperm.slane %v813, 0
      %v817 = vadd.f32 %v809, %v815
      %v818 = vadd.f32 %v810, %v815
      %v819 = vadd.f32 %v811, %v815
      %v820 = vadd.f32 %v812, %v815
      %821 = vst [vmem:[#allocation3] sm:$0xff] %v817
      %822 = vst [vmem:[#allocation3 + $0x8] sm:$0xff] %v818
      %823 = vst [vmem:[#allocation3 + $0x10] sm:$0xff] %v819
      %824 = vst [vmem:[#allocation3 + $0x18] sm:$0xff] %v820
    $region25: #{detection_forward.9} parent=1 // pred_fallthru
      _
    // Predicated region
    $region26: #{detection_forward.9} parent=1 // pred_check
      _
    $region27: #{detection_forward.9} parent=1 // pred_check_branch
      %826 = sbr.rel (0) target = $region29
    $region28: #{detection_forward.9} parent=1 // pred_region
      %828 = vsyncadd [#allocation4], 0
      %s829 = sshll.u32 [#allocation3], 4
      %s830 = int_to_ptr.vmem [resolvable:$true] %s829
      %s831 = sshll.u32 %s4, 4
      %s832 = int_to_ptr.hbm [resolvable:$true] %s831
      %837 = dma.vmem_to_hbm [thread:$0]  %s830, 512, %s832, [#allocation4], 128, 128, 8
    $region29: #{detection_forward.9} parent=1 // pred_fallthru
      _
    // Predicated region
    $region30: #{detection_forward.9} parent=1 // pred_check
      _
    $region31: #{detection_forward.9} parent=1 // pred_check_branch
      %839 = sbr.rel (0) target = $region33
    $region32: #{detection_forward.9} parent=1 // pred_region
      %841 = dma.done [#allocation4], 512
    $region33: #{detection_forward.9} parent=1 // pred_fallthru
      _
    %842 = vsyncpa [#allocation4], 1

// kernel: detection_forward.8
$region0: #{detection_forward.8}
  #allocation0 [shape = 'u32[]', space=smem, size = 0x4, offset = 0x4, fixed_abs, tag = 'smem constant byte address 0x4 - core index']
  #allocation1 [shape = 'u32[72,128]{1,0:T(1,128)}', space=vmem, size = 0x9000, scoped, tag = 'internal scratch']
  #allocation2 [shape = 'f32[32,512]{1,0:T(8,128)}', space=vmem, size = 0x10000, scoped, tag = 'scratch operand']
  %s0 = inlined_call_operand.vmem [shape: bf16[32,11520], index: 0, kind: input, shape index: {}]
  %s1 = inlined_call_operand.hbm [shape: bf16[11520,1024], index: 1, kind: input, shape index: {}]
  %s2 = inlined_call_operand.vmem [shape: f32[1,1024], index: 2, kind: input, shape index: {}]
  %s3 = inlined_call_operand.vmem [shape: f32[1,1024], index: 3, kind: input, shape index: {}]
  %s4 = inlined_call_operand.vmem [shape: bf16[32,1024], index: 4, kind: output, shape index: {}]
  %s5 = sld [smem:[#allocation0]]
  $region103: #{detection_forward.8} parent=0
    _
  %s7 = ssub.s32 1, %s5
  %s8 = scalar_select 0, %s7, %s5
  $region1: #{detection_forward.8} parent=0
    #allocation3 [shape = 'u8[163840]{0}', space=vmem, size = 0x28000, scoped, tag = 'input window, operand 0']
    #allocation4 [shape = 'u8[2621440]{0}', space=vmem, size = 0x280000, scoped, tag = 'input window, operand 1']
    #allocation5 [shape = 's32[2]{0}', space=sflag, size = 0x8, scoped, tag = 'scoped memory for detection_forward.8']
    #allocation6 [shape = 'u8[65536]{0}', space=vmem, size = 0x10000, scoped, tag = 'output window, operand 0']
    %9 = vsyncpa [#allocation5], 0
    %s10 = scalar_lea.sflag [#allocation5], 1
    %11 = vsyncpa %s10, 0
    loop: start=0, step=1, limit=20
    $region2: #{detection_forward.8} parent=1 // loop_pre_header
      _
    $region3: #{detection_forward.8} parent=1 // loop_header
      %s13 = sphi 0, %s17
      %p14 = scmp.ge.s32.totalorder %s13, 20
      %s20 = sphi 0, %s32
      %s21 = sphi 0, %s28
      %s22 = sphi 0, %s20
      %s23 = sphi 0, %s21
      %s24 = sphi 0, %s22
      %s25 = sphi 0, %s23
      %s35 = sphi 0, %s37
      %s38 = sphi 0, %s35
      %s39 = sphi 0, %s38
      %s55 = sphi 0, %s39
      %s63 = sphi 0, %s65
      %s66 = sphi 0, %s63
      %s67 = sphi 0, %s66
      %s83 = sphi 0, %s67
      %s89 = sphi 0, %s91
      %s92 = sphi 0, %s89
      %s93 = sphi 0, %s92
      %s109 = sphi 0, %s93
      %s115 = sphi 0, %s117
      %s118 = sphi 0, %s115
      %s119 = sphi 0, %s118
      %s135 = sphi 0, %s119
      %s141 = sphi 0, %s143
      %s144 = sphi 0, %s141
      %s145 = sphi 0, %s144
      %s161 = sphi 0, %s145
    $region4: #{detection_forward.8} parent=1 // loop_header_branch
      %16 = sbr.rel (%p14) target = $region8
    $region5: #{detection_forward.8} parent=1 // loop_body
      %s18 = ssub.s32 %s13, 1
      %s19 = ssub.s32 %s13, 2
      %s26 = sadd.s32 1, %s21
      %p27 = scmp.ge.s32.totalorder %s26, 9
      %s28 = scalar_select %p27, 0, %s26
      %s29 = sadd.s32 1, %s20
      %s30 = scalar_select %p27, %s29, %s20
      %p31 = scmp.ge.s32.totalorder %s30, 2
      %s32 = scalar_select %p31, 0, %s30
      %s33 = ssub.s32 %s21, %s28
      %p34 = scmp.eq.s32.totalorder %s33, 0
      %s36 = sadd.s32 %s35, 1
      %s37 = scalar_select %p34, %s35, %s36
      %p40 = pneg %p34
      %p41 = scmp.eq.s32.totalorder %s13, 17
      %p42 = por %p40, %p41
      %p43 = scmp.ne.s32.totalorder %s35, %s38
      %p44 = scmp.eq.s32.totalorder %s13, 0
      %p45 = por %p43, %p44
      %p46 = scmp.ne.s32.totalorder %s35, %s38
      %p47 = scmp.eq.s32.totalorder %s18, 17
      %p48 = por %p46, %p47
      %p49 = scmp.ne.s32.totalorder %s38, %s39
      %p50 = scmp.eq.s32.totalorder %s18, 0
      %p51 = por %p49, %p50
      %p52 = scmp.ne.s32.totalorder %s38, %s39
      %p53 = scmp.eq.s32.totalorder %s19, 17
      %p54 = por %p52, %p53
      %p56 = scmp.ne.s32.totalorder %s39, %s55
      %p57 = scmp.eq.s32.totalorder %s19, 0
      %p58 = por %p56, %p57
      %s59 = ssub.s32 %s21, %s28
      %s60 = ssub.s32 %s20, %s32
      %s61 = sor.u32 %s59, %s60
      %p62 = scmp.eq.s32.totalorder %s61, 0
      %s64 = sadd.s32 %s63, 1
      %s65 = scalar_select %p62, %s63, %s64
      %p68 = pneg %p62
      %p69 = scmp.eq.s32.totalorder %s13, 17
      %p70 = por %p68, %p69
      %p71 = scmp.ne.s32.totalorder %s63, %s66
      %p72 = scmp.eq.s32.totalorder %s13, 0
      %p73 = por %p71, %p72
      %p74 = scmp.ne.s32.totalorder %s63, %s66
      %p75 = scmp.eq.s32.totalorder %s18, 17
      %p76 = por %p74, %p75
      %p77 = scmp.ne.s32.totalorder %s66, %s67
      %p78 = scmp.eq.s32.totalorder %s18, 0
      %p79 = por %p77, %p78
      %p80 = scmp.ne.s32.totalorder %s66, %s67
      %p81 = scmp.eq.s32.totalorder %s19, 17
      %p82 = por %p80, %p81
      %p84 = scmp.ne.s32.totalorder %s67, %s83
      %p85 = scmp.eq.s32.totalorder %s19, 0
      %p86 = por %p84, %p85
      %s87 = ssub.s32 %s20, %s32
      %p88 = scmp.eq.s32.totalorder %s87, 0
      %s90 = sadd.s32 %s89, 1
      %s91 = scalar_select %p88, %s89, %s90
      %p94 = pneg %p88
      %p95 = scmp.eq.s32.totalorder %s13, 17
      %p96 = por %p94, %p95
      %p97 = scmp.ne.s32.totalorder %s89, %s92
      %p98 = scmp.eq.s32.totalorder %s13, 0
      %p99 = por %p97, %p98
      %p100 = scmp.ne.s32.totalorder %s89, %s92
      %p101 = scmp.eq.s32.totalorder %s18, 17
      %p102 = por %p100, %p101
      %p103 = scmp.ne.s32.totalorder %s92, %s93
      %p104 = scmp.eq.s32.totalorder %s18, 0
      %p105 = por %p103, %p104
      %p106 = scmp.ne.s32.totalorder %s92, %s93
      %p107 = scmp.eq.s32.totalorder %s19, 17
      %p108 = por %p106, %p107
      %p110 = scmp.ne.s32.totalorder %s93, %s109
      %p111 = scmp.eq.s32.totalorder %s19, 0
      %p112 = por %p110, %p111
      %s113 = ssub.s32 %s20, %s32
      %p114 = scmp.eq.s32.totalorder %s113, 0
      %s116 = sadd.s32 %s115, 1
      %s117 = scalar_select %p114, %s115, %s116
      %p120 = pneg %p114
      %p121 = scmp.eq.s32.totalorder %s13, 17
      %p122 = por %p120, %p121
      %p123 = scmp.ne.s32.totalorder %s115, %s118
      %p124 = scmp.eq.s32.totalorder %s13, 0
      %p125 = por %p123, %p124
      %p126 = scmp.ne.s32.totalorder %s115, %s118
      %p127 = scmp.eq.s32.totalorder %s18, 17
      %p128 = por %p126, %p127
      %p129 = scmp.ne.s32.totalorder %s118, %s119
      %p130 = scmp.eq.s32.totalorder %s18, 0
      %p131 = por %p129, %p130
      %p132 = scmp.ne.s32.totalorder %s118, %s119
      %p133 = scmp.eq.s32.totalorder %s19, 17
      %p134 = por %p132, %p133
      %p136 = scmp.ne.s32.totalorder %s119, %s135
      %p137 = scmp.eq.s32.totalorder %s19, 0
      %p138 = por %p136, %p137
      %s139 = ssub.s32 %s20, %s32
      %p140 = scmp.eq.s32.totalorder %s139, 0
      %s142 = sadd.s32 %s141, 1
      %s143 = scalar_select %p140, %s141, %s142
      %p146 = pneg %p140
      %p147 = scmp.eq.s32.totalorder %s13, 17
      %p148 = por %p146, %p147
      %p149 = scmp.ne.s32.totalorder %s141, %s144
      %p150 = scmp.eq.s32.totalorder %s13, 0
      %p151 = por %p149, %p150
      %p152 = scmp.ne.s32.totalorder %s141, %s144
      %p153 = scmp.eq.s32.totalorder %s18, 17
      %p154 = por %p152, %p153
      %p155 = scmp.ne.s32.totalorder %s144, %s145
      %p156 = scmp.eq.s32.totalorder %s18, 0
      %p157 = por %p155, %p156
      %p158 = scmp.ne.s32.totalorder %s144, %s145
      %p159 = scmp.eq.s32.totalorder %s19, 17
      %p160 = por %p158, %p159
      %p162 = scmp.ne.s32.totalorder %s145, %s161
      %p163 = scmp.eq.s32.totalorder %s19, 0
      %p164 = por %p162, %p163
      %p165 = scmp.le.s32.totalorder 1, %s13
      %p166 = scmp.lt.s32.totalorder %s13, 19
      %p167 = pnand %p165, %p166
      %p168 = pneg %p167
      // Predicated region
      $region9: #{detection_forward.8} parent=5 // pred_check
        _
      $region10: #{detection_forward.8} parent=5 // pred_check_branch
        %170 = sbr.rel (%p167) target = $region12
      $region11: #{detection_forward.8} parent=5 // pred_region
        %s171 = ssub.s32 %s13, 1
      $region12: #{detection_forward.8} parent=5 // pred_fallthru
        _
      %p172 = scmp.lt.s32.totalorder %s13, 18
      // Predicated region
      $region13: #{detection_forward.8} parent=5 // pred_check
        %p173 = pneg %p172
      $region14: #{detection_forward.8} parent=5 // pred_check_branch
        %175 = sbr.rel (%p173) target = $region16
      $region15: #{detection_forward.8} parent=5 // pred_region
        // Predicated region
        $region17: #{detection_forward.8} parent=15 // pred_check
          %p176 = pneg %p45
        $region18: #{detection_forward.8} parent=15 // pred_check_branch
          %178 = sbr.rel (%p176) target = $region20
        $region19: #{detection_forward.8} parent=15 // pred_region
          %s179 = sand.u32 %s35, 1
          %s180 = sand.u32 %s35, 1
          %s181 = smul.addr %s180, 160
          %s182 = scalar_lea.vmem [#allocation3], %s181
          %s183 = smul.u32 10, %s21
          %s184 = smul.addr %s183, 4
          %s185 = scalar_lea.vmem %s0, %s184
          // Predicated region
          $region21: #{detection_forward.8} parent=19 // pred_check
            _
          $region22: #{detection_forward.8} parent=19 // pred_check_branch
            %187 = sbr.rel (0) target = $region24
          $region23: #{detection_forward.8} parent=19 // pred_region
            // Predicated region
            $region25: #{detection_forward.8} parent=23 // pred_check
              _
            $region26: #{detection_forward.8} parent=23 // pred_check_branch
              %189 = sbr.rel (0) target = $region28
            $region27: #{detection_forward.8} parent=23 // pred_region
              loop: start=0, step=1, limit=1
              $region29: #{detection_forward.8} parent=27 // loop_pre_header
                _
              $region30: #{detection_forward.8} parent=27 // loop_header
                %s191 = sphi 0, %s195
                %p192 = scmp.ge.s32.totalorder %s191, 1
                %s196 = sphi %s185, %s185
                %s197 = sphi %s182, %s182
              $region31: #{detection_forward.8} parent=27 // loop_header_branch
                %194 = sbr.rel (%p192) target = $region35
              $region32: #{detection_forward.8} parent=27 // loop_body
                %v198 = vld [vmem:[%s196] sm:$0xff]
                %199 = vst [vmem:[%s197] sm:$0xff] %v198
                %v200 = vld [vmem:[%s196 + $0x8] sm:$0xff]
                %201 = vst [vmem:[%s197 + $0x8] sm:$0xff] %v200
                %v202 = vld [vmem:[%s196 + $0x10] sm:$0xff]
                %203 = vst [vmem:[%s197 + $0x10] sm:$0xff] %v202
                %v204 = vld [vmem:[%s196 + $0x18] sm:$0xff]
                %205 = vst [vmem:[%s197 + $0x18] sm:$0xff] %v204
                %v206 = vld [vmem:[%s196 + $0x20] sm:$0xff]
                %207 = vst [vmem:[%s197 + $0x20] sm:$0xff] %v206
                %v208 = vld [vmem:[%s196 + $0x168] sm:$0xff]
                %209 = vst [vmem:[%s197 + $0x28] sm:$0xff] %v208
                %v210 = vld [vmem:[%s196 + $0x170] sm:$0xff]
                %211 = vst [vmem:[%s197 + $0x30] sm:$0xff] %v210
                %v212 = vld [vmem:[%s196 + $0x178] sm:$0xff]
                %213 = vst [vmem:[%s197 + $0x38] sm:$0xff] %v212
                %v214 = vld [vmem:[%s196 + $0x180] sm:$0xff]
                %215 = vst [vmem:[%s197 + $0x40] sm:$0xff] %v214
                %v216 = vld [vmem:[%s196 + $0x188] sm:$0xff]
                %217 = vst [vmem:[%s197 + $0x48] sm:$0xff] %v216
                %v218 = vld [vmem:[%s196 + $0x2d0] sm:$0xff]
                %219 = vst [vmem:[%s197 + $0x50] sm:$0xff] %v218
                %v220 = vld [vmem:[%s196 + $0x2d8] sm:$0xff]
                %221 = vst [vmem:[%s197 + $0x58] sm:$0xff] %v220
                %v222 = vld [vmem:[%s196 + $0x2e0] sm:$0xff]
                %223 = vst [vmem:[%s197 + $0x60] sm:$0xff] %v222
                %v224 = vld [vmem:[%s196 + $0x2e8] sm:$0xff]
                %225 = vst [vmem:[%s197 + $0x68] sm:$0xff] %v224
                %v226 = vld [vmem:[%s196 + $0x2f0] sm:$0xff]
                %227 = vst [vmem:[%s197 + $0x70] sm:$0xff] %v226
                %v228 = vld [vmem:[%s196 + $0x438] sm:$0xff]
                %229 = vst [vmem:[%s197 + $0x78] sm:$0xff] %v228
                %v230 = vld [vmem:[%s196 + $0x440] sm:$0xff]
                %231 = vst [vmem:[%s197 + $0x80] sm:$0xff] %v230
                %v232 = vld [vmem:[%s196 + $0x448] sm:$0xff]
                %233 = vst [vmem:[%s197 + $0x88] sm:$0xff] %v232
                %v234 = vld [vmem:[%s196 + $0x450] sm:$0xff]
                %235 = vst [vmem:[%s197 + $0x90] sm:$0xff] %v234
                %v236 = vld [vmem:[%s196 + $0x458] sm:$0xff]
                %237 = vst [vmem:[%s197 + $0x98] sm:$0xff] %v236
              $region33: #{detection_forward.8} parent=27 // loop_footer
                %s195 = sadd.s32 1, %s191
              $region34: #{detection_forward.8} parent=27 // loop_footer_branch
                %190 = sbr.rel target = $region30
              $region35: #{detection_forward.8} parent=27 // loop_exit
                _
            $region28: #{detection_forward.8} parent=23 // pred_fallthru
              _
            // Predicated region
            $region36: #{detection_forward.8} parent=23 // pred_check
              _
            $region37: #{detection_forward.8} parent=23 // pred_check_branch
              %239 = sbr.rel target = $region39
            $region38: #{detection_forward.8} parent=23 // pred_region
              _
            $region39: #{detection_forward.8} parent=23 // pred_fallthru
              _
          $region24: #{detection_forward.8} parent=19 // pred_fallthru
            _
          %240 = vnop
        $region20: #{detection_forward.8} parent=15 // pred_fallthru
          _
        // Predicated region
        $region40: #{detection_forward.8} parent=15 // pred_check
          %p241 = pneg %p73
        $region41: #{detection_forward.8} parent=15 // pred_check_branch
          %243 = sbr.rel (%p241) target = $region43
        $region42: #{detection_forward.8} parent=15 // pred_region
          %s244 = sand.u32 %s63, 1
          %s245 = scalar_lea.sflag [#allocation5], %s244
          %s246 = sand.u32 %s63, 1
          %s247 = smul.addr %s246, 2560
          %s248 = scalar_lea.vmem [#allocation4], %s247
          %s249 = smul.u32 160, %s21
          %s250 = smul.u32 4, %s20
          %252 = vsyncadd %s245, 0
          %s253 = smul.addr %s249, 8
          %s254 = sadd.s32 %s250, %s253
          %s255 = smul.addr %s254, 4
          %s256 = scalar_lea.hbm %s1, %s255
          %s257 = sshll.u32 %s256, 4
          %s258 = int_to_ptr.hbm [resolvable:$true] %s257
          %s259 = sshll.u32 %s248, 4
          %s260 = int_to_ptr.vmem [resolvable:$true] %s259
          %265 = dma.hbm_to_vmem [thread:$0]  %s258, 40960, %s260, %s245, 512, 256, 16
        $region43: #{detection_forward.8} parent=15 // pred_fallthru
          _
        // Predicated region
        $region44: #{detection_forward.8} parent=15 // pred_check
          %p266 = pneg %p99
        $region45: #{detection_forward.8} parent=15 // pred_check_branch
          %268 = sbr.rel (%p266) target = $region47
        $region46: #{detection_forward.8} parent=15 // pred_region
          %s269 = smul.u32 4, %s20
          %p270 = scmp.lt.s32.totalorder %s269, 7
          %s271 = scalar_select %p270, %s269, 7
          %s272 = scalar_lea.vmem %s2, %s271
          %s273 = smul.u32 4, %s20
        $region47: #{detection_forward.8} parent=15 // pred_fallthru
          _
        // Predicated region
        $region48: #{detection_forward.8} parent=15 // pred_check
          %p274 = pneg %p125
        $region49: #{detection_forward.8} parent=15 // pred_check_branch
          %276 = sbr.rel (%p274) target = $region51
        $region50: #{detection_forward.8} parent=15 // pred_region
          %s277 = smul.u32 4, %s20
          %p278 = scmp.lt.s32.totalorder %s277, 7
          %s279 = scalar_select %p278, %s277, 7
          %s280 = scalar_lea.vmem %s3, %s279
          %s281 = smul.u32 4, %s20
        $region51: #{detection_forward.8} parent=15 // pred_fallthru
          _
      $region16: #{detection_forward.8} parent=5 // pred_fallthru
        _
      %p282 = scmp.le.s32.totalorder 1, %s13
      %p283 = scmp.lt.s32.totalorder %s13, 19
      %p284 = pnand %p282, %p283
      %p285 = pneg %p284
      // Predicated region
      $region52: #{detection_forward.8} parent=5 // pred_check
        _
      $region53: #{detection_forward.8} parent=5 // pred_check_branch
        %287 = sbr.rel (%p284) target = $region55
      $region54: #{detection_forward.8} parent=5 // pred_region
        %s288 = ssub.s32 %s13, 1
        %s289 = sand.u32 %s38, 1
        %s290 = sand.u32 %s38, 1
        %s291 = smul.addr %s290, 160
        %s292 = scalar_lea.vmem [#allocation3], %s291
        // Predicated region
        $region56: #{detection_forward.8} parent=54 // pred_check
          %p293 = pneg %p51
        $region57: #{detection_forward.8} parent=54 // pred_check_branch
          %295 = sbr.rel (%p293) target = $region59
        $region58: #{detection_forward.8} parent=54 // pred_region
          _
        $region59: #{detection_forward.8} parent=54 // pred_fallthru
          _
        %s296 = sand.u32 %s66, 1
        %s297 = scalar_lea.sflag [#allocation5], %s296
        %s298 = sand.u32 %s66, 1
        %s299 = smul.addr %s298, 2560
        %s300 = scalar_lea.vmem [#allocation4], %s299
        // Predicated region
        $region60: #{detection_forward.8} parent=54 // pred_check
          %p301 = pneg %p79
        $region61: #{detection_forward.8} parent=54 // pred_check_branch
          %303 = sbr.rel (%p301) target = $region63
        $region62: #{detection_forward.8} parent=54 // pred_region
          %305 = dma.done %s297, 40960
        $region63: #{detection_forward.8} parent=54 // pred_fallthru
          _
        %s306 = sand.u32 %s38, 1
        %s307 = sand.u32 %s38, 1
        %s308 = smul.addr %s307, 160
        %s309 = scalar_lea.vmem [#allocation3], %s308
        %p310 = pneg %p51
        %p311 = pneg %p48
        %s312 = sand.u32 %s66, 1
        %s313 = scalar_lea.sflag [#allocation5], %s312
        %s314 = sand.u32 %s66, 1
        %s315 = smul.addr %s314, 2560
        %s316 = scalar_lea.vmem [#allocation4], %s315
        %p317 = pneg %p79
        %p318 = pneg %p76
        %s319 = smul.u32 4, %s22
        %p320 = scmp.lt.s32.totalorder %s319, 7
        %s321 = scalar_select %p320, %s319, 7
        %s322 = scalar_lea.vmem %s2, %s321
        %p323 = pneg %p105
        %p324 = pneg %p102
        %s325 = smul.u32 4, %s22
        %p326 = scmp.lt.s32.totalorder %s325, 7
        %s327 = scalar_select %p326, %s325, 7
        %s328 = scalar_lea.vmem %s3, %s327
        %p329 = pneg %p131
        %p330 = pneg %p128
        %p331 = pneg %p157
        %p332 = pneg %p154
        %s333 = sand.u32 %s144, 1
        %s334 = sand.u32 %s144, 1
        %s335 = smul.addr %s334, 64
        %s336 = scalar_lea.vmem [#allocation6], %s335
        %s337 = smul.u32 10, %s23
        %s338 = smul.u32 160, %s23
        %s339 = smul.u32 4, %s22
        %s340 = smul.u32 4, %s22
        %p341 = scmp.lt.s32.totalorder %s340, 7
        %s342 = scalar_select %p341, %s340, 7
        %s343 = scalar_lea.vmem %s2, %s342
        %s344 = smul.u32 4, %s22
        %s345 = smul.u32 4, %s22
        %p346 = scmp.lt.s32.totalorder %s345, 7
        %s347 = scalar_select %p346, %s345, 7
        %s348 = scalar_lea.vmem %s3, %s347
        %s349 = smul.u32 4, %s22
        %s350 = smul.u32 4, %s22
        %p351 = scmp.eq.s32.totalorder %s23, 0
        // Predicated region
        $region64: #{detection_forward.8} parent=54 // pred_check
          %p352 = pneg %p351
        $region65: #{detection_forward.8} parent=54 // pred_check_branch
          %354 = sbr.rel (%p352) target = $region67
        $region66: #{detection_forward.8} parent=54 // pred_region
          %355 = vst [vmem:[#allocation2] sm:$0xff] 0.0
          %356 = vst [vmem:[#allocation2 + $0x8] sm:$0xff] 0.0
          %357 = vst [vmem:[#allocation2 + $0x10] sm:$0xff] 0.0
          %358 = vst [vmem:[#allocation2 + $0x18] sm:$0xff] 0.0
          %359 = vst [vmem:[#allocation2 + $0x20] sm:$0xff] 0.0
          %360 = vst [vmem:[#allocation2 + $0x28] sm:$0xff] 0.0
          %361 = vst [vmem:[#allocation2 + $0x30] sm:$0xff] 0.0
          %362 = vst [vmem:[#allocation2 + $0x38] sm:$0xff] 0.0
          %363 = vst [vmem:[#allocation2 + $0x40] sm:$0xff] 0.0
          %364 = vst [vmem:[#allocation2 + $0x48] sm:$0xff] 0.0
          %365 = vst [vmem:[#allocation2 + $0x50] sm:$0xff] 0.0
          %366 = vst [vmem:[#allocation2 + $0x58] sm:$0xff] 0.0
          %367 = vst [vmem:[#allocation2 + $0x60] sm:$0xff] 0.0
          %368 = vst [vmem:[#allocation2 + $0x68] sm:$0xff] 0.0
          %369 = vst [vmem:[#allocation2 + $0x70] sm:$0xff] 0.0
          %370 = vst [vmem:[#allocation2 + $0x78] sm:$0xff] 0.0
        $region67: #{detection_forward.8} parent=54 // pred_fallthru
          _
        %v371 = vld [vmem:[#allocation2] sm:$0xff]
        %v372 = vld [vmem:[#allocation2 + $0x8] sm:$0xff]
        %v373 = vld [vmem:[#allocation2 + $0x10] sm:$0xff]
        %v374 = vld [vmem:[#allocation2 + $0x18] sm:$0xff]
        %v375 = vld [vmem:[#allocation2 + $0x20] sm:$0xff]
        %v376 = vld [vmem:[#allocation2 + $0x28] sm:$0xff]
        %v377 = vld [vmem:[#allocation2 + $0x30] sm:$0xff]
        %v378 = vld [vmem:[#allocation2 + $0x38] sm:$0xff]
        %v379 = vld [vmem:[#allocation2 + $0x40] sm:$0xff]
        %v380 = vld [vmem:[#allocation2 + $0x48] sm:$0xff]
        %v381 = vld [vmem:[#allocation2 + $0x50] sm:$0xff]
        %v382 = vld [vmem:[#allocation2 + $0x58] sm:$0xff]
        %v383 = vld [vmem:[#allocation2 + $0x60] sm:$0xff]
        %v384 = vld [vmem:[#allocation2 + $0x68] sm:$0xff]
        %v385 = vld [vmem:[#allocation2 + $0x70] sm:$0xff]
        %v386 = vld [vmem:[#allocation2 + $0x78] sm:$0xff]
        %v387 = vld [vmem:[%s292] sm:$0xff]
        %v388 = vld [vmem:[%s292 + $0x8] sm:$0xff]
        %v389 = vld [vmem:[%s292 + $0x10] sm:$0xff]
        %v390 = vld [vmem:[%s292 + $0x18] sm:$0xff]
        %v391 = vld [vmem:[%s292 + $0x20] sm:$0xff]
        %v392 = vld [vmem:[%s292 + $0x28] sm:$0xff]
        %v393 = vld [vmem:[%s292 + $0x30] sm:$0xff]
        %v394 = vld [vmem:[%s292 + $0x38] sm:$0xff]
        %v395 = vld [vmem:[%s292 + $0x40] sm:$0xff]
        %v396 = vld [vmem:[%s292 + $0x48] sm:$0xff]
        %v397 = vld [vmem:[%s292 + $0x50] sm:$0xff]
        %v398 = vld [vmem:[%s292 + $0x58] sm:$0xff]
        %v399 = vld [vmem:[%s292 + $0x60] sm:$0xff]
        %v400 = vld [vmem:[%s292 + $0x68] sm:$0xff]
        %v401 = vld [vmem:[%s292 + $0x70] sm:$0xff]
        %v402 = vld [vmem:[%s292 + $0x78] sm:$0xff]
        %v403 = vld [vmem:[%s292 + $0x80] sm:$0xff]
        %v404 = vld [vmem:[%s292 + $0x88] sm:$0xff]
        %v405 = vld [vmem:[%s292 + $0x90] sm:$0xff]
        %v406 = vld [vmem:[%s292 + $0x98] sm:$0xff]
        %v407 = vld [vmem:[%s300] sm:$0xff]
        %v408 = vld [vmem:[%s300 + $0x8] sm:$0xff]
        %v409 = vld [vmem:[%s300 + $0x10] sm:$0xff]
        %v410 = vld [vmem:[%s300 + $0x18] sm:$0xff]
        %v411 = vld [vmem:[%s300 + $0x20] sm:$0xff]
        %v412 = vld [vmem:[%s300 + $0x28] sm:$0xff]
        %v413 = vld [vmem:[%s300 + $0x30] sm:$0xff]
        %v414 = vld [vmem:[%s300 + $0x38] sm:$0xff]
        %v415 = vld [vmem:[%s300 + $0x40] sm:$0xff]
        %v416 = vld [vmem:[%s300 + $0x48] sm:$0xff]
        %v417 = vld [vmem:[%s300 + $0x50] sm:$0xff]
        %v418 = vld [vmem:[%s300 + $0x58] sm:$0xff]
        %v419 = vld [vmem:[%s300 + $0x60] sm:$0xff]
        %v420 = vld [vmem:[%s300 + $0x68] sm:$0xff]
        %v421 = vld [vmem:[%s300 + $0x70] sm:$0xff]
        %v422 = vld [vmem:[%s300 + $0x78] sm:$0xff]
        %v423 = vld [vmem:[%s300 + $0x80] sm:$0xff]
        %v424 = vld [vmem:[%s300 + $0x88] sm:$0xff]
        %v425 = vld [vmem:[%s300 + $0x90] sm:$0xff]
        %v426 = vld [vmem:[%s300 + $0x98] sm:$0xff]
        %v427 = vld [vmem:[%s300 + $0xa0] sm:$0xff]
        %v428 = vld [vmem:[%s300 + $0xa8] sm:$0xff]
        %v429 = vld [vmem:[%s300 + $0xb0] sm:$0xff]
        %v430 = vld [vmem:[%s300 + $0xb8] sm:$0xff]
        %v431 = vld [vmem:[%s300 + $0xc0] sm:$0xff]
        %v432 = vld [vmem:[%s300 + $0xc8] sm:$0xff]
        %v433 = vld [vmem:[%s300 + $0xd0] sm:$0xff]
        %v434 = vld [vmem:[%s300 + $0xd8] sm:$0xff]
        %v435 = vld [vmem:[%s300 + $0xe0] sm:$0xff]
        %v436 = vld [vmem:[%s300 + $0xe8] sm:$0xff]
        %v437 = vld [vmem:[%s300 + $0xf0] sm:$0xff]
        %v438 = vld [vmem:[%s300 + $0xf8] sm:$0xff]
        %v439 = vld [vmem:[%s300 + $0x100] sm:$0xff]
        %v440 = vld [vmem:[%s300 + $0x108] sm:$0xff]
        %v441 = vld [vmem:[%s300 + $0x110] sm:$0xff]
        %v442 = vld [vmem:[%s300 + $0x118] sm:$0xff]
        %v443 = vld [vmem:[%s300 + $0x120] sm:$0xff]
        %v444 = vld [vmem:[%s300 + $0x128] sm:$0xff]
        %v445 = vld [vmem:[%s300 + $0x130] sm:$0xff]
        %v446 = vld [vmem:[%s300 + $0x138] sm:$0xff]
        %v447 = vld [vmem:[%s300 + $0x140] sm:$0xff]
        %v448 = vld [vmem:[%s300 + $0x148] sm:$0xff]
        %v449 = vld [vmem:[%s300 + $0x150] sm:$0xff]
        %v450 = vld [vmem:[%s300 + $0x158] sm:$0xff]
        %v451 = vld [vmem:[%s300 + $0x160] sm:$0xff]
        %v452 = vld [vmem:[%s300 + $0x168] sm:$0xff]
        %v453 = vld [vmem:[%s300 + $0x170] sm:$0xff]
        %v454 = vld [vmem:[%s300 + $0x178] sm:$0xff]
        %v455 = vld [vmem:[%s300 + $0x180] sm:$0xff]
        %v456 = vld [vmem:[%s300 + $0x188] sm:$0xff]
        %v457 = vld [vmem:[%s300 + $0x190] sm:$0xff]
        %v458 = vld [vmem:[%s300 + $0x198] sm:$0xff]
        %v459 = vld [vmem:[%s300 + $0x1a0] sm:$0xff]
        %v460 = vld [vmem:[%s300 + $0x1a8] sm:$0xff]
        %v461 = vld [vmem:[%s300 + $0x1b0] sm:$0xff]
        %v462 = vld [vmem:[%s300 + $0x1b8] sm:$0xff]
        %v463 = vld [vmem:[%s300 + $0x1c0] sm:$0xff]
        %v464 = vld [vmem:[%s300 + $0x1c8] sm:$0xff]
        %v465 = vld [vmem:[%s300 + $0x1d0] sm:$0xff]
        %v466 = vld [vmem:[%s300 + $0x1d8] sm:$0xff]
        %v467 = vld [vmem:[%s300 + $0x1e0] sm:$0xff]
        %v468 = vld [vmem:[%s300 + $0x1e8] sm:$0xff]
        %v469 = vld [vmem:[%s300 + $0x1f0] sm:$0xff]
        %v470 = vld [vmem:[%s300 + $0x1f8] sm:$0xff]
        %v471 = vld [vmem:[%s300 + $0x200] sm:$0xff]
        %v472 = vld [vmem:[%s300 + $0x208] sm:$0xff]
        %v473 = vld [vmem:[%s300 + $0x210] sm:$0xff]
        %v474 = vld [vmem:[%s300 + $0x218] sm:$0xff]
        %v475 = vld [vmem:[%s300 + $0x220] sm:$0xff]
        %v476 = vld [vmem:[%s300 + $0x228] sm:$0xff]
        %v477 = vld [vmem:[%s300 + $0x230] sm:$0xff]
        %v478 = vld [vmem:[%s300 + $0x238] sm:$0xff]
        %v479 = vld [vmem:[%s300 + $0x240] sm:$0xff]
        %v480 = vld [vmem:[%s300 + $0x248] sm:$0xff]
        %v481 = vld [vmem:[%s300 + $0x250] sm:$0xff]
        %v482 = vld [vmem:[%s300 + $0x258] sm:$0xff]
        %v483 = vld [vmem:[%s300 + $0x260] sm:$0xff]
        %v484 = vld [vmem:[%s300 + $0x268] sm:$0xff]
        %v485 = vld [vmem:[%s300 + $0x270] sm:$0xff]
        %v486 = vld [vmem:[%s300 + $0x278] sm:$0xff]
        %v487 = vld [vmem:[%s300 + $0x280] sm:$0xff]
        %v488 = vld [vmem:[%s300 + $0x288] sm:$0xff]
        %v489 = vld [vmem:[%s300 + $0x290] sm:$0xff]
        %v490 = vld [vmem:[%s300 + $0x298] sm:$0xff]
        %v491 = vld [vmem:[%s300 + $0x2a0] sm:$0xff]
        %v492 = vld [vmem:[%s300 + $0x2a8] sm:$0xff]
        %v493 = vld [vmem:[%s300 + $0x2b0] sm:$0xff]
        %v494 = vld [vmem:[%s300 + $0x2b8] sm:$0xff]
        %v495 = vld [vmem:[%s300 + $0x2c0] sm:$0xff]
        %v496 = vld [vmem:[%s300 + $0x2c8] sm:$0xff]
        %v497 = vld [vmem:[%s300 + $0x2d0] sm:$0xff]
        %v498 = vld [vmem:[%s300 + $0x2d8] sm:$0xff]
        %v499 = vld [vmem:[%s300 + $0x2e0] sm:$0xff]
        %v500 = vld [vmem:[%s300 + $0x2e8] sm:$0xff]
        %v501 = vld [vmem:[%s300 + $0x2f0] sm:$0xff]
        %v502 = vld [vmem:[%s300 + $0x2f8] sm:$0xff]
        %v503 = vld [vmem:[%s300 + $0x300] sm:$0xff]
        %v504 = vld [vmem:[%s300 + $0x308] sm:$0xff]
        %v505 = vld [vmem:[%s300 + $0x310] sm:$0xff]
        %v506 = vld [vmem:[%s300 + $0x318] sm:$0xff]
        %v507 = vld [vmem:[%s300 + $0x320] sm:$0xff]
        %v508 = vld [vmem:[%s300 + $0x328] sm:$0xff]
        %v509 = vld [vmem:[%s300 + $0x330] sm:$0xff]
        %v510 = vld [vmem:[%s300 + $0x338] sm:$0xff]
        %v511 = vld [vmem:[%s300 + $0x340] sm:$0xff]
        %v512 = vld [vmem:[%s300 + $0x348] sm:$0xff]
        %v513 = vld [vmem:[%s300 + $0x350] sm:$0xff]
        %v514 = vld [vmem:[%s300 + $0x358] sm:$0xff]
        %v515 = vld [vmem:[%s300 + $0x360] sm:$0xff]
        %v516 = vld [vmem:[%s300 + $0x368] sm:$0xff]
        %v517 = vld [vmem:[%s300 + $0x370] sm:$0xff]
        %v518 = vld [vmem:[%s300 + $0x378] sm:$0xff]
        %v519 = vld [vmem:[%s300 + $0x380] sm:$0xff]
        %v520 = vld [vmem:[%s300 + $0x388] sm:$0xff]
        %v521 = vld [vmem:[%s300 + $0x390] sm:$0xff]
        %v522 = vld [vmem:[%s300 + $0x398] sm:$0xff]
        %v523 = vld [vmem:[%s300 + $0x3a0] sm:$0xff]
        %v524 = vld [vmem:[%s300 + $0x3a8] sm:$0xff]
        %v525 = vld [vmem:[%s300 + $0x3b0] sm:$0xff]
        %v526 = vld [vmem:[%s300 + $0x3b8] sm:$0xff]
        %v527 = vld [vmem:[%s300 + $0x3c0] sm:$0xff]
        %v528 = vld [vmem:[%s300 + $0x3c8] sm:$0xff]
        %v529 = vld [vmem:[%s300 + $0x3d0] sm:$0xff]
        %v530 = vld [vmem:[%s300 + $0x3d8] sm:$0xff]
        %v531 = vld [vmem:[%s300 + $0x3e0] sm:$0xff]
        %v532 = vld [vmem:[%s300 + $0x3e8] sm:$0xff]
        %v533 = vld [vmem:[%s300 + $0x3f0] sm:$0xff]
        %v534 = vld [vmem:[%s300 + $0x3f8] sm:$0xff]
        %v535 = vld [vmem:[%s300 + $0x400] sm:$0xff]
        %v536 = vld [vmem:[%s300 + $0x408] sm:$0xff]
        %v537 = vld [vmem:[%s300 + $0x410] sm:$0xff]
        %v538 = vld [vmem:[%s300 + $0x418] sm:$0xff]
        %v539 = vld [vmem:[%s300 + $0x420] sm:$0xff]
        %v540 = vld [vmem:[%s300 + $0x428] sm:$0xff]
        %v541 = vld [vmem:[%s300 + $0x430] sm:$0xff]
        %v542 = vld [vmem:[%s300 + $0x438] sm:$0xff]
        %v543 = vld [vmem:[%s300 + $0x440] sm:$0xff]
        %v544 = vld [vmem:[%s300 + $0x448] sm:$0xff]
        %v545 = vld [vmem:[%s300 + $0x450] sm:$0xff]
        %v546 = vld [vmem:[%s300 + $0x458] sm:$0xff]
        %v547 = vld [vmem:[%s300 + $0x460] sm:$0xff]
        %v548 = vld [vmem:[%s300 + $0x468] sm:$0xff]
        %v549 = vld [vmem:[%s300 + $0x470] sm:$0xff]
        %v550 = vld [vmem:[%s300 + $0x478] sm:$0xff]
        %v551 = vld [vmem:[%s300 + $0x480] sm:$0xff]
        %v552 = vld [vmem:[%s300 + $0x488] sm:$0xff]
        %v553 = vld [vmem:[%s300 + $0x490] sm:$0xff]
        %v554 = vld [vmem:[%s300 + $0x498] sm:$0xff]
        %v555 = vld [vmem:[%s300 + $0x4a0] sm:$0xff]
        %v556 = vld [vmem:[%s300 + $0x4a8] sm:$0xff]
        %v557 = vld [vmem:[%s300 + $0x4b0] sm:$0xff]
        %v558 = vld [vmem:[%s300 + $0x4b8] sm:$0xff]
        %v559 = vld [vmem:[%s300 + $0x4c0] sm:$0xff]
        %v560 = vld [vmem:[%s300 + $0x4c8] sm:$0xff]
        %v561 = vld [vmem:[%s300 + $0x4d0] sm:$0xff]
        %v562 = vld [vmem:[%s300 + $0x4d8] sm:$0xff]
        %v563 = vld [vmem:[%s300 + $0x4e0] sm:$0xff]
        %v564 = vld [vmem:[%s300 + $0x4e8] sm:$0xff]
        %v565 = vld [vmem:[%s300 + $0x4f0] sm:$0xff]
        %v566 = vld [vmem:[%s300 + $0x4f8] sm:$0xff]
        %v567 = vld [vmem:[%s300 + $0x500] sm:$0xff]
        %v568 = vld [vmem:[%s300 + $0x508] sm:$0xff]
        %v569 = vld [vmem:[%s300 + $0x510] sm:$0xff]
        %v570 = vld [vmem:[%s300 + $0x518] sm:$0xff]
        %v571 = vld [vmem:[%s300 + $0x520] sm:$0xff]
        %v572 = vld [vmem:[%s300 + $0x528] sm:$0xff]
        %v573 = vld [vmem:[%s300 + $0x530] sm:$0xff]
        %v574 = vld [vmem:[%s300 + $0x538] sm:$0xff]
        %v575 = vld [vmem:[%s300 + $0x540] sm:$0xff]
        %v576 = vld [vmem:[%s300 + $0x548] sm:$0xff]
        %v577 = vld [vmem:[%s300 + $0x550] sm:$0xff]
        %v578 = vld [vmem:[%s300 + $0x558] sm:$0xff]
        %v579 = vld [vmem:[%s300 + $0x560] sm:$0xff]
        %v580 = vld [vmem:[%s300 + $0x568] sm:$0xff]
        %v581 = vld [vmem:[%s300 + $0x570] sm:$0xff]
        %v582 = vld [vmem:[%s300 + $0x578] sm:$0xff]
        %v583 = vld [vmem:[%s300 + $0x580] sm:$0xff]
        %v584 = vld [vmem:[%s300 + $0x588] sm:$0xff]
        %v585 = vld [vmem:[%s300 + $0x590] sm:$0xff]
        %v586 = vld [vmem:[%s300 + $0x598] sm:$0xff]
        %v587 = vld [vmem:[%s300 + $0x5a0] sm:$0xff]
        %v588 = vld [vmem:[%s300 + $0x5a8] sm:$0xff]
        %v589 = vld [vmem:[%s300 + $0x5b0] sm:$0xff]
        %v590 = vld [vmem:[%s300 + $0x5b8] sm:$0xff]
        %v591 = vld [vmem:[%s300 + $0x5c0] sm:$0xff]
        %v592 = vld [vmem:[%s300 + $0x5c8] sm:$0xff]
        %v593 = vld [vmem:[%s300 + $0x5d0] sm:$0xff]
        %v594 = vld [vmem:[%s300 + $0x5d8] sm:$0xff]
        %v595 = vld [vmem:[%s300 + $0x5e0] sm:$0xff]
        %v596 = vld [vmem:[%s300 + $0x5e8] sm:$0xff]
        %v597 = vld [vmem:[%s300 + $0x5f0] sm:$0xff]
        %v598 = vld [vmem:[%s300 + $0x5f8] sm:$0xff]
        %v599 = vld [vmem:[%s300 + $0x600] sm:$0xff]
        %v600 = vld [vmem:[%s300 + $0x608] sm:$0xff]
        %v601 = vld [vmem:[%s300 + $0x610] sm:$0xff]
        %v602 = vld [vmem:[%s300 + $0x618] sm:$0xff]
        %v603 = vld [vmem:[%s300 + $0x620] sm:$0xff]
        %v604 = vld [vmem:[%s300 + $0x628] sm:$0xff]
        %v605 = vld [vmem:[%s300 + $0x630] sm:$0xff]
        %v606 = vld [vmem:[%s300 + $0x638] sm:$0xff]
        %v607 = vld [vmem:[%s300 + $0x640] sm:$0xff]
        %v608 = vld [vmem:[%s300 + $0x648] sm:$0xff]
        %v609 = vld [vmem:[%s300 + $0x650] sm:$0xff]
        %v610 = vld [vmem:[%s300 + $0x658] sm:$0xff]
        %v611 = vld [vmem:[%s300 + $0x660] sm:$0xff]
        %v612 = vld [vmem:[%s300 + $0x668] sm:$0xff]
        %v613 = vld [vmem:[%s300 + $0x670] sm:$0xff]
        %v614 = vld [vmem:[%s300 + $0x678] sm:$0xff]
        %v615 = vld [vmem:[%s300 + $0x680] sm:$0xff]
        %v616 = vld [vmem:[%s300 + $0x688] sm:$0xff]
        %v617 = vld [vmem:[%s300 + $0x690] sm:$0xff]
        %v618 = vld [vmem:[%s300 + $0x698] sm:$0xff]
        %v619 = vld [vmem:[%s300 + $0x6a0] sm:$0xff]
        %v620 = vld [vmem:[%s300 + $0x6a8] sm:$0xff]
        %v621 = vld [vmem:[%s300 + $0x6b0] sm:$0xff]
        %v622 = vld [vmem:[%s300 + $0x6b8] sm:$0xff]
        %v623 = vld [vmem:[%s300 + $0x6c0] sm:$0xff]
        %v624 = vld [vmem:[%s300 + $0x6c8] sm:$0xff]
        %v625 = vld [vmem:[%s300 + $0x6d0] sm:$0xff]
        %v626 = vld [vmem:[%s300 + $0x6d8] sm:$0xff]
        %v627 = vld [vmem:[%s300 + $0x6e0] sm:$0xff]
        %v628 = vld [vmem:[%s300 + $0x6e8] sm:$0xff]
        %v629 = vld [vmem:[%s300 + $0x6f0] sm:$0xff]
        %v630 = vld [vmem:[%s300 + $0x6f8] sm:$0xff]
        %v631 = vld [vmem:[%s300 + $0x700] sm:$0xff]
        %v632 = vld [vmem:[%s300 + $0x708] sm:$0xff]
        %v633 = vld [vmem:[%s300 + $0x710] sm:$0xff]
        %v634 = vld [vmem:[%s300 + $0x718] sm:$0xff]
        %v635 = vld [vmem:[%s300 + $0x720] sm:$0xff]
        %v636 = vld [vmem:[%s300 + $0x728] sm:$0xff]
        %v637 = vld [vmem:[%s300 + $0x730] sm:$0xff]
        %v638 = vld [vmem:[%s300 + $0x738] sm:$0xff]
        %v639 = vld [vmem:[%s300 + $0x740] sm:$0xff]
        %v640 = vld [vmem:[%s300 + $0x748] sm:$0xff]
        %v641 = vld [vmem:[%s300 + $0x750] sm:$0xff]
        %v642 = vld [vmem:[%s300 + $0x758] sm:$0xff]
        %v643 = vld [vmem:[%s300 + $0x760] sm:$0xff]
        %v644 = vld [vmem:[%s300 + $0x768] sm:$0xff]
        %v645 = vld [vmem:[%s300 + $0x770] sm:$0xff]
        %v646 = vld [vmem:[%s300 + $0x778] sm:$0xff]
        %v647 = vld [vmem:[%s300 + $0x780] sm:$0xff]
        %v648 = vld [vmem:[%s300 + $0x788] sm:$0xff]
        %v649 = vld [vmem:[%s300 + $0x790] sm:$0xff]
        %v650 = vld [vmem:[%s300 + $0x798] sm:$0xff]
        %v651 = vld [vmem:[%s300 + $0x7a0] sm:$0xff]
        %v652 = vld [vmem:[%s300 + $0x7a8] sm:$0xff]
        %v653 = vld [vmem:[%s300 + $0x7b0] sm:$0xff]
        %v654 = vld [vmem:[%s300 + $0x7b8] sm:$0xff]
        %v655 = vld [vmem:[%s300 + $0x7c0] sm:$0xff]
        %v656 = vld [vmem:[%s300 + $0x7c8] sm:$0xff]
        %v657 = vld [vmem:[%s300 + $0x7d0] sm:$0xff]
        %v658 = vld [vmem:[%s300 + $0x7d8] sm:$0xff]
        %v659 = vld [vmem:[%s300 + $0x7e0] sm:$0xff]
        %v660 = vld [vmem:[%s300 + $0x7e8] sm:$0xff]
        %v661 = vld [vmem:[%s300 + $0x7f0] sm:$0xff]
        %v662 = vld [vmem:[%s300 + $0x7f8] sm:$0xff]
        %v663 = vld [vmem:[%s300 + $0x800] sm:$0xff]
        %v664 = vld [vmem:[%s300 + $0x808] sm:$0xff]
        %v665 = vld [vmem:[%s300 + $0x810] sm:$0xff]
        %v666 = vld [vmem:[%s300 + $0x818] sm:$0xff]
        %v667 = vld [vmem:[%s300 + $0x820] sm:$0xff]
        %v668 = vld [vmem:[%s300 + $0x828] sm:$0xff]
        %v669 = vld [vmem:[%s300 + $0x830] sm:$0xff]
        %v670 = vld [vmem:[%s300 + $0x838] sm:$0xff]
        %v671 = vld [vmem:[%s300 + $0x840] sm:$0xff]
        %v672 = vld [vmem:[%s300 + $0x848] sm:$0xff]
        %v673 = vld [vmem:[%s300 + $0x850] sm:$0xff]
        %v674 = vld [vmem:[%s300 + $0x858] sm:$0xff]
        %v675 = vld [vmem:[%s300 + $0x860] sm:$0xff]
        %v676 = vld [vmem:[%s300 + $0x868] sm:$0xff]
        %v677 = vld [vmem:[%s300 + $0x870] sm:$0xff]
        %v678 = vld [vmem:[%s300 + $0x878] sm:$0xff]
        %v679 = vld [vmem:[%s300 + $0x880] sm:$0xff]
        %v680 = vld [vmem:[%s300 + $0x888] sm:$0xff]
        %v681 = vld [vmem:[%s300 + $0x890] sm:$0xff]
        %v682 = vld [vmem:[%s300 + $0x898] sm:$0xff]
        %v683 = vld [vmem:[%s300 + $0x8a0] sm:$0xff]
        %v684 = vld [vmem:[%s300 + $0x8a8] sm:$0xff]
        %v685 = vld [vmem:[%s300 + $0x8b0] sm:$0xff]
        %v686 = vld [vmem:[%s300 + $0x8b8] sm:$0xff]
        %v687 = vld [vmem:[%s300 + $0x8c0] sm:$0xff]
        %v688 = vld [vmem:[%s300 + $0x8c8] sm:$0xff]
        %v689 = vld [vmem:[%s300 + $0x8d0] sm:$0xff]
        %v690 = vld [vmem:[%s300 + $0x8d8] sm:$0xff]
        %v691 = vld [vmem:[%s300 + $0x8e0] sm:$0xff]
        %v692 = vld [vmem:[%s300 + $0x8e8] sm:$0xff]
        %v693 = vld [vmem:[%s300 + $0x8f0] sm:$0xff]
        %v694 = vld [vmem:[%s300 + $0x8f8] sm:$0xff]
        %v695 = vld [vmem:[%s300 + $0x900] sm:$0xff]
        %v696 = vld [vmem:[%s300 + $0x908] sm:$0xff]
        %v697 = vld [vmem:[%s300 + $0x910] sm:$0xff]
        %v698 = vld [vmem:[%s300 + $0x918] sm:$0xff]
        %v699 = vld [vmem:[%s300 + $0x920] sm:$0xff]
        %v700 = vld [vmem:[%s300 + $0x928] sm:$0xff]
        %v701 = vld [vmem:[%s300 + $0x930] sm:$0xff]
        %v702 = vld [vmem:[%s300 + $0x938] sm:$0xff]
        %v703 = vld [vmem:[%s300 + $0x940] sm:$0xff]
        %v704 = vld [vmem:[%s300 + $0x948] sm:$0xff]
        %v705 = vld [vmem:[%s300 + $0x950] sm:$0xff]
        %v706 = vld [vmem:[%s300 + $0x958] sm:$0xff]
        %v707 = vld [vmem:[%s300 + $0x960] sm:$0xff]
        %v708 = vld [vmem:[%s300 + $0x968] sm:$0xff]
        %v709 = vld [vmem:[%s300 + $0x970] sm:$0xff]
        %v710 = vld [vmem:[%s300 + $0x978] sm:$0xff]
        %v711 = vld [vmem:[%s300 + $0x980] sm:$0xff]
        %v712 = vld [vmem:[%s300 + $0x988] sm:$0xff]
        %v713 = vld [vmem:[%s300 + $0x990] sm:$0xff]
        %v714 = vld [vmem:[%s300 + $0x998] sm:$0xff]
        %v715 = vld [vmem:[%s300 + $0x9a0] sm:$0xff]
        %v716 = vld [vmem:[%s300 + $0x9a8] sm:$0xff]
        %v717 = vld [vmem:[%s300 + $0x9b0] sm:$0xff]
        %v718 = vld [vmem:[%s300 + $0x9b8] sm:$0xff]
        %v719 = vld [vmem:[%s300 + $0x9c0] sm:$0xff]
        %v720 = vld [vmem:[%s300 + $0x9c8] sm:$0xff]
        %v721 = vld [vmem:[%s300 + $0x9d0] sm:$0xff]
        %v722 = vld [vmem:[%s300 + $0x9d8] sm:$0xff]
        %v723 = vld [vmem:[%s300 + $0x9e0] sm:$0xff]
        %v724 = vld [vmem:[%s300 + $0x9e8] sm:$0xff]
        %v725 = vld [vmem:[%s300 + $0x9f0] sm:$0xff]
        %v726 = vld [vmem:[%s300 + $0x9f8] sm:$0xff]
        %v747 = vunpack.c.l.b16 %v387
        %v748 = vunpack.c.h.b16 %v387
        %v749 = vunpack.c.l.b16 %v388
        %v750 = vunpack.c.h.b16 %v388
        %v751 = vunpack.c.l.b16 %v389
        %v752 = vunpack.c.h.b16 %v389
        %v753 = vunpack.c.l.b16 %v390
        %v754 = vunpack.c.h.b16 %v390
        %v755 = vunpack.c.l.b16 %v391
        %v756 = vunpack.c.h.b16 %v391
        %v757 = vunpack.c.l.b16 %v392
        %v758 = vunpack.c.h.b16 %v392
        %v759 = vunpack.c.l.b16 %v393
        %v760 = vunpack.c.h.b16 %v393
        %v761 = vunpack.c.l.b16 %v394
        %v762 = vunpack.c.h.b16 %v394
        %v763 = vunpack.c.l.b16 %v395
        %v764 = vunpack.c.h.b16 %v395
        %v765 = vunpack.c.l.b16 %v396
        %v766 = vunpack.c.h.b16 %v396
        %v767 = vunpack.c.l.b16 %v397
        %v768 = vunpack.c.h.b16 %v397
        %v769 = vunpack.c.l.b16 %v398
        %v770 = vunpack.c.h.b16 %v398
        %v771 = vunpack.c.l.b16 %v399
        %v772 = vunpack.c.h.b16 %v399
        %v773 = vunpack.c.l.b16 %v400
        %v774 = vunpack.c.h.b16 %v400
        %v775 = vunpack.c.l.b16 %v401
        %v776 = vunpack.c.h.b16 %v401
        %v777 = vunpack.c.l.b16 %v402
        %v778 = vunpack.c.h.b16 %v402
        %v779 = vunpack.c.l.b16 %v403
        %v780 = vunpack.c.h.b16 %v403
        %v781 = vunpack.c.l.b16 %v404
        %v782 = vunpack.c.h.b16 %v404
        %v783 = vunpack.c.l.b16 %v405
        %v784 = vunpack.c.h.b16 %v405
        %v785 = vunpack.c.l.b16 %v406
        %v786 = vunpack.c.h.b16 %v406
        %v787 = vpack.c.b16 %v757, %v747
        %v788 = vpack.c.b16 %v758, %v748
        %v789 = vpack.c.b16 %v759, %v749
        %v790 = vpack.c.b16 %v760, %v750
        %v791 = vpack.c.b16 %v761, %v751
        %v792 = vpack.c.b16 %v762, %v752
        %v793 = vpack.c.b16 %v763, %v753
        %v794 = vpack.c.b16 %v764, %v754
        %v795 = vpack.c.b16 %v765, %v755
        %v796 = vpack.c.b16 %v766, %v756
        %v797 = vpack.c.b16 %v777, %v767
        %v798 = vpack.c.b16 %v778, %v768
        %v799 = vpack.c.b16 %v779, %v769
        %v800 = vpack.c.b16 %v780, %v770
        %v801 = vpack.c.b16 %v781, %v771
        %v802 = vpack.c.b16 %v782, %v772
        %v803 = vpack.c.b16 %v783, %v773
        %v804 = vpack.c.b16 %v784, %v774
        %v805 = vpack.c.b16 %v785, %v775
        %v806 = vpack.c.b16 %v786, %v776
        %v1147 = vunpack.c.l.b16 %v407
        %v1148 = vunpack.c.h.b16 %v407
        %v1149 = vunpack.c.l.b16 %v408
        %v1150 = vunpack.c.h.b16 %v408
        %v1151 = vunpack.c.l.b16 %v409
        %v1152 = vunpack.c.h.b16 %v409
        %v1153 = vunpack.c.l.b16 %v410
        %v1154 = vunpack.c.h.b16 %v410
        %v1155 = vunpack.c.l.b16 %v411
        %v1156 = vunpack.c.h.b16 %v411
        %v1157 = vunpack.c.l.b16 %v412
        %v1158 = vunpack.c.h.b16 %v412
        %v1159 = vunpack.c.l.b16 %v413
        %v1160 = vunpack.c.h.b16 %v413
        %v1161 = vunpack.c.l.b16 %v414
        %v1162 = vunpack.c.h.b16 %v414
        %v1163 = vunpack.c.l.b16 %v415
        %v1164 = vunpack.c.h.b16 %v415
        %v1165 = vunpack.c.l.b16 %v416
        %v1166 = vunpack.c.h.b16 %v416
        %v1167 = vunpack.c.l.b16 %v417
        %v1168 = vunpack.c.h.b16 %v417
        %v1169 = vunpack.c.l.b16 %v418
        %v1170 = vunpack.c.h.b16 %v418
        %v1171 = vunpack.c.l.b16 %v419
        %v1172 = vunpack.c.h.b16 %v419
        %v1173 = vunpack.c.l.b16 %v420
        %v1174 = vunpack.c.h.b16 %v420
        %v1175 = vunpack.c.l.b16 %v421
        %v1176 = vunpack.c.h.b16 %v421
        %v1177 = vunpack.c.l.b16 %v422
        %v1178 = vunpack.c.h.b16 %v422
        %v1179 = vunpack.c.l.b16 %v423
        %v1180 = vunpack.c.h.b16 %v423
        %v1181 = vunpack.c.l.b16 %v424
        %v1182 = vunpack.c.h.b16 %v424
        %v1183 = vunpack.c.l.b16 %v425
        %v1184 = vunpack.c.h.b16 %v425
        %v1185 = vunpack.c.l.b16 %v426
        %v1186 = vunpack.c.h.b16 %v426
        %v1187 = vunpack.c.l.b16 %v427
        %v1188 = vunpack.c.h.b16 %v427
        %v1189 = vunpack.c.l.b16 %v428
        %v1190 = vunpack.c.h.b16 %v428
        %v1191 = vunpack.c.l.b16 %v429
        %v1192 = vunpack.c.h.b16 %v429
        %v1193 = vunpack.c.l.b16 %v430
        %v1194 = vunpack.c.h.b16 %v430
        %v1195 = vunpack.c.l.b16 %v431
        %v1196 = vunpack.c.h.b16 %v431
        %v1197 = vunpack.c.l.b16 %v432
        %v1198 = vunpack.c.h.b16 %v432
        %v1199 = vunpack.c.l.b16 %v433
        %v1200 = vunpack.c.h.b16 %v433
        %v1201 = vunpack.c.l.b16 %v434
        %v1202 = vunpack.c.h.b16 %v434
        %v1203 = vunpack.c.l.b16 %v435
        %v1204 = vunpack.c.h.b16 %v435
        %v1205 = vunpack.c.l.b16 %v436
        %v1206 = vunpack.c.h.b16 %v436
        %v1207 = vunpack.c.l.b16 %v437
        %v1208 = vunpack.c.h.b16 %v437
        %v1209 = vunpack.c.l.b16 %v438
        %v1210 = vunpack.c.h.b16 %v438
        %v1211 = vunpack.c.l.b16 %v439
        %v1212 = vunpack.c.h.b16 %v439
        %v1213 = vunpack.c.l.b16 %v440
        %v1214 = vunpack.c.h.b16 %v440
        %v1215 = vunpack.c.l.b16 %v441
        %v1216 = vunpack.c.h.b16 %v441
        %v1217 = vunpack.c.l.b16 %v442
        %v1218 = vunpack.c.h.b16 %v442
        %v1219 = vunpack.c.l.b16 %v443
        %v1220 = vunpack.c.h.b16 %v443
        %v1221 = vunpack.c.l.b16 %v444
        %v1222 = vunpack.c.h.b16 %v444
        %v1223 = vunpack.c.l.b16 %v445
        %v1224 = vunpack.c.h.b16 %v445
        %v1225 = vunpack.c.l.b16 %v446
        %v1226 = vunpack.c.h.b16 %v446
        %v1227 = vunpack.c.l.b16 %v447
        %v1228 = vunpack.c.h.b16 %v447
        %v1229 = vunpack.c.l.b16 %v448
        %v1230 = vunpack.c.h.b16 %v448
        %v1231 = vunpack.c.l.b16 %v449
        %v1232 = vunpack.c.h.b16 %v449
        %v1233 = vunpack.c.l.b16 %v450
        %v1234 = vunpack.c.h.b16 %v450
        %v1235 = vunpack.c.l.b16 %v451
        %v1236 = vunpack.c.h.b16 %v451
        %v1237 = vunpack.c.l.b16 %v452
        %v1238 = vunpack.c.h.b16 %v452
        %v1239 = vunpack.c.l.b16 %v453
        %v1240 = vunpack.c.h.b16 %v453
        %v1241 = vunpack.c.l.b16 %v454
        %v1242 = vunpack.c.h.b16 %v454
        %v1243 = vunpack.c.l.b16 %v455
        %v1244 = vunpack.c.h.b16 %v455
        %v1245 = vunpack.c.l.b16 %v456
        %v1246 = vunpack.c.h.b16 %v456
        %v1247 = vunpack.c.l.b16 %v457
        %v1248 = vunpack.c.h.b16 %v457
        %v1249 = vunpack.c.l.b16 %v458
        %v1250 = vunpack.c.h.b16 %v458
        %v1251 = vunpack.c.l.b16 %v459
        %v1252 = vunpack.c.h.b16 %v459
        %v1253 = vunpack.c.l.b16 %v460
        %v1254 = vunpack.c.h.b16 %v460
        %v1255 = vunpack.c.l.b16 %v461
        %v1256 = vunpack.c.h.b16 %v461
        %v1257 = vunpack.c.l.b16 %v462
        %v1258 = vunpack.c.h.b16 %v462
        %v1259 = vunpack.c.l.b16 %v463
        %v1260 = vunpack.c.h.b16 %v463
        %v1261 = vunpack.c.l.b16 %v464
        %v1262 = vunpack.c.h.b16 %v464
        %v1263 = vunpack.c.l.b16 %v465
        %v1264 = vunpack.c.h.b16 %v465
        %v1265 = vunpack.c.l.b16 %v466
        %v1266 = vunpack.c.h.b16 %v466
        %v1267 = vunpack.c.l.b16 %v467
        %v1268 = vunpack.c.h.b16 %v467
        %v1269 = vunpack.c.l.b16 %v468
        %v1270 = vunpack.c.h.b16 %v468
        %v1271 = vunpack.c.l.b16 %v469
        %v1272 = vunpack.c.h.b16 %v469
        %v1273 = vunpack.c.l.b16 %v470
        %v1274 = vunpack.c.h.b16 %v470
        %v1275 = vunpack.c.l.b16 %v471
        %v1276 = vunpack.c.h.b16 %v471
        %v1277 = vunpack.c.l.b16 %v472
        %v1278 = vunpack.c.h.b16 %v472
        %v1279 = vunpack.c.l.b16 %v473
        %v1280 = vunpack.c.h.b16 %v473
        %v1281 = vunpack.c.l.b16 %v474
        %v1282 = vunpack.c.h.b16 %v474
        %v1283 = vunpack.c.l.b16 %v475
        %v1284 = vunpack.c.h.b16 %v475
        %v1285 = vunpack.c.l.b16 %v476
        %v1286 = vunpack.c.h.b16 %v476
        %v1287 = vunpack.c.l.b16 %v477
        %v1288 = vunpack.c.h.b16 %v477
        %v1289 = vunpack.c.l.b16 %v478
        %v1290 = vunpack.c.h.b16 %v478
        %v1291 = vunpack.c.l.b16 %v479
        %v1292 = vunpack.c.h.b16 %v479
        %v1293 = vunpack.c.l.b16 %v480
        %v1294 = vunpack.c.h.b16 %v480
        %v1295 = vunpack.c.l.b16 %v481
        %v1296 = vunpack.c.h.b16 %v481
        %v1297 = vunpack.c.l.b16 %v482
        %v1298 = vunpack.c.h.b16 %v482
        %v1299 = vunpack.c.l.b16 %v483
        %v1300 = vunpack.c.h.b16 %v483
        %v1301 = vunpack.c.l.b16 %v484
        %v1302 = vunpack.c.h.b16 %v484
        %v1303 = vunpack.c.l.b16 %v485
        %v1304 = vunpack.c.h.b16 %v485
        %v1305 = vunpack.c.l.b16 %v486
        %v1306 = vunpack.c.h.b16 %v486
        %v1307 = vunpack.c.l.b16 %v487
        %v1308 = vunpack.c.h.b16 %v487
        %v1309 = vunpack.c.l.b16 %v488
        %v1310 = vunpack.c.h.b16 %v488
        %v1311 = vunpack.c.l.b16 %v489
        %v1312 = vunpack.c.h.b16 %v489
        %v1313 = vunpack.c.l.b16 %v490
        %v1314 = vunpack.c.h.b16 %v490
        %v1315 = vunpack.c.l.b16 %v491
        %v1316 = vunpack.c.h.b16 %v491
        %v1317 = vunpack.c.l.b16 %v492
        %v1318 = vunpack.c.h.b16 %v492
        %v1319 = vunpack.c.l.b16 %v493
        %v1320 = vunpack.c.h.b16 %v493
        %v1321 = vunpack.c.l.b16 %v494
        %v1322 = vunpack.c.h.b16 %v494
        %v1323 = vunpack.c.l.b16 %v495
        %v1324 = vunpack.c.h.b16 %v495
        %v1325 = vunpack.c.l.b16 %v496
        %v1326 = vunpack.c.h.b16 %v496
        %v1327 = vunpack.c.l.b16 %v497
        %v1328 = vunpack.c.h.b16 %v497
        %v1329 = vunpack.c.l.b16 %v498
        %v1330 = vunpack.c.h.b16 %v498
        %v1331 = vunpack.c.l.b16 %v499
        %v1332 = vunpack.c.h.b16 %v499
        %v1333 = vunpack.c.l.b16 %v500
        %v1334 = vunpack.c.h.b16 %v500
        %v1335 = vunpack.c.l.b16 %v501
        %v1336 = vunpack.c.h.b16 %v501
        %v1337 = vunpack.c.l.b16 %v502
        %v1338 = vunpack.c.h.b16 %v502
        %v1339 = vunpack.c.l.b16 %v503
        %v1340 = vunpack.c.h.b16 %v503
        %v1341 = vunpack.c.l.b16 %v504
        %v1342 = vunpack.c.h.b16 %v504
        %v1343 = vunpack.c.l.b16 %v505
        %v1344 = vunpack.c.h.b16 %v505
        %v1345 = vunpack.c.l.b16 %v506
        %v1346 = vunpack.c.h.b16 %v506
        %v1347 = vunpack.c.l.b16 %v507
        %v1348 = vunpack.c.h.b16 %v507
        %v1349 = vunpack.c.l.b16 %v508
        %v1350 = vunpack.c.h.b16 %v508
        %v1351 = vunpack.c.l.b16 %v509
        %v1352 = vunpack.c.h.b16 %v509
        %v1353 = vunpack.c.l.b16 %v510
        %v1354 = vunpack.c.h.b16 %v510
        %v1355 = vunpack.c.l.b16 %v511
        %v1356 = vunpack.c.h.b16 %v511
        %v1357 = vunpack.c.l.b16 %v512
        %v1358 = vunpack.c.h.b16 %v512
        %v1359 = vunpack.c.l.b16 %v513
        %v1360 = vunpack.c.h.b16 %v513
        %v1361 = vunpack.c.l.b16 %v514
        %v1362 = vunpack.c.h.b16 %v514
        %v1363 = vunpack.c.l.b16 %v515
        %v1364 = vunpack.c.h.b16 %v515
        %v1365 = vunpack.c.l.b16 %v516
        %v1366 = vunpack.c.h.b16 %v516
        %v1367 = vunpack.c.l.b16 %v517
        %v1368 = vunpack.c.h.b16 %v517
        %v1369 = vunpack.c.l.b16 %v518
        %v1370 = vunpack.c.h.b16 %v518
        %v1371 = vunpack.c.l.b16 %v519
        %v1372 = vunpack.c.h.b16 %v519
        %v1373 = vunpack.c.l.b16 %v520
        %v1374 = vunpack.c.h.b16 %v520
        %v1375 = vunpack.c.l.b16 %v521
        %v1376 = vunpack.c.h.b16 %v521
        %v1377 = vunpack.c.l.b16 %v522
        %v1378 = vunpack.c.h.b16 %v522
        %v1379 = vunpack.c.l.b16 %v523
        %v1380 = vunpack.c.h.b16 %v523
        %v1381 = vunpack.c.l.b16 %v524
        %v1382 = vunpack.c.h.b16 %v524
        %v1383 = vunpack.c.l.b16 %v525
        %v1384 = vunpack.c.h.b16 %v525
        %v1385 = vunpack.c.l.b16 %v526
        %v1386 = vunpack.c.h.b16 %v526
        %v1387 = vunpack.c.l.b16 %v527
        %v1388 = vunpack.c.h.b16 %v527
        %v1389 = vunpack.c.l.b16 %v528
        %v1390 = vunpack.c.h.b16 %v528
        %v1391 = vunpack.c.l.b16 %v529
        %v1392 = vunpack.c.h.b16 %v529
        %v1393 = vunpack.c.l.b16 %v530
        %v1394 = vunpack.c.h.b16 %v530
        %v1395 = vunpack.c.l.b16 %v531
        %v1396 = vunpack.c.h.b16 %v531
        %v1397 = vunpack.c.l.b16 %v532
        %v1398 = vunpack.c.h.b16 %v532
        %v1399 = vunpack.c.l.b16 %v533
        %v1400 = vunpack.c.h.b16 %v533
        %v1401 = vunpack.c.l.b16 %v534
        %v1402 = vunpack.c.h.b16 %v534
        %v1403 = vunpack.c.l.b16 %v535
        %v1404 = vunpack.c.h.b16 %v535
        %v1405 = vunpack.c.l.b16 %v536
        %v1406 = vunpack.c.h.b16 %v536
        %v1407 = vunpack.c.l.b16 %v537
        %v1408 = vunpack.c.h.b16 %v537
        %v1409 = vunpack.c.l.b16 %v538
        %v1410 = vunpack.c.h.b16 %v538
        %v1411 = vunpack.c.l.b16 %v539
        %v1412 = vunpack.c.h.b16 %v539
        %v1413 = vunpack.c.l.b16 %v540
        %v1414 = vunpack.c.h.b16 %v540
        %v1415 = vunpack.c.l.b16 %v541
        %v1416 = vunpack.c.h.b16 %v541
        %v1417 = vunpack.c.l.b16 %v542
        %v1418 = vunpack.c.h.b16 %v542
        %v1419 = vunpack.c.l.b16 %v543
        %v1420 = vunpack.c.h.b16 %v543
        %v1421 = vunpack.c.l.b16 %v544
        %v1422 = vunpack.c.h.b16 %v544
        %v1423 = vunpack.c.l.b16 %v545
        %v1424 = vunpack.c.h.b16 %v545
        %v1425 = vunpack.c.l.b16 %v546
        %v1426 = vunpack.c.h.b16 %v546
        %v1427 = vunpack.c.l.b16 %v547
        %v1428 = vunpack.c.h.b16 %v547
        %v1429 = vunpack.c.l.b16 %v548
        %v1430 = vunpack.c.h.b16 %v548
        %v1431 = vunpack.c.l.b16 %v549
        %v1432 = vunpack.c.h.b16 %v549
        %v1433 = vunpack.c.l.b16 %v550
        %v1434 = vunpack.c.h.b16 %v550
        %v1435 = vunpack.c.l.b16 %v551
        %v1436 = vunpack.c.h.b16 %v551
        %v1437 = vunpack.c.l.b16 %v552
        %v1438 = vunpack.c.h.b16 %v552
        %v1439 = vunpack.c.l.b16 %v553
        %v1440 = vunpack.c.h.b16 %v553
        %v1441 = vunpack.c.l.b16 %v554
        %v1442 = vunpack.c.h.b16 %v554
        %v1443 = vunpack.c.l.b16 %v555
        %v1444 = vunpack.c.h.b16 %v555
        %v1445 = vunpack.c.l.b16 %v556
        %v1446 = vunpack.c.h.b16 %v556
        %v1447 = vunpack.c.l.b16 %v557
        %v1448 = vunpack.c.h.b16 %v557
        %v1449 = vunpack.c.l.b16 %v558
        %v1450 = vunpack.c.h.b16 %v558
        %v1451 = vunpack.c.l.b16 %v559
        %v1452 = vunpack.c.h.b16 %v559
        %v1453 = vunpack.c.l.b16 %v560
        %v1454 = vunpack.c.h.b16 %v560
        %v1455 = vunpack.c.l.b16 %v561
        %v1456 = vunpack.c.h.b16 %v561
        %v1457 = vunpack.c.l.b16 %v562
        %v1458 = vunpack.c.h.b16 %v562
        %v1459 = vunpack.c.l.b16 %v563
        %v1460 = vunpack.c.h.b16 %v563
        %v1461 = vunpack.c.l.b16 %v564
        %v1462 = vunpack.c.h.b16 %v564
        %v1463 = vunpack.c.l.b16 %v565
        %v1464 = vunpack.c.h.b16 %v565
        %v1465 = vunpack.c.l.b16 %v566
        %v1466 = vunpack.c.h.b16 %v566
        %v1467 = vunpack.c.l.b16 %v567
        %v1468 = vunpack.c.h.b16 %v567
        %v1469 = vunpack.c.l.b16 %v568
        %v1470 = vunpack.c.h.b16 %v568
        %v1471 = vunpack.c.l.b16 %v569
        %v1472 = vunpack.c.h.b16 %v569
        %v1473 = vunpack.c.l.b16 %v570
        %v1474 = vunpack.c.h.b16 %v570
        %v1475 = vunpack.c.l.b16 %v571
        %v1476 = vunpack.c.h.b16 %v571
        %v1477 = vunpack.c.l.b16 %v572
        %v1478 = vunpack.c.h.b16 %v572
        %v1479 = vunpack.c.l.b16 %v573
        %v1480 = vunpack.c.h.b16 %v573
        %v1481 = vunpack.c.l.b16 %v574
        %v1482 = vunpack.c.h.b16 %v574
        %v1483 = vunpack.c.l.b16 %v575
        %v1484 = vunpack.c.h.b16 %v575
        %v1485 = vunpack.c.l.b16 %v576
        %v1486 = vunpack.c.h.b16 %v576
        %v1487 = vunpack.c.l.b16 %v577
        %v1488 = vunpack.c.h.b16 %v577
        %v1489 = vunpack.c.l.b16 %v578
        %v1490 = vunpack.c.h.b16 %v578
        %v1491 = vunpack.c.l.b16 %v579
        %v1492 = vunpack.c.h.b16 %v579
        %v1493 = vunpack.c.l.b16 %v580
        %v1494 = vunpack.c.h.b16 %v580
        %v1495 = vunpack.c.l.b16 %v581
        %v1496 = vunpack.c.h.b16 %v581
        %v1497 = vunpack.c.l.b16 %v582
        %v1498 = vunpack.c.h.b16 %v582
        %v1499 = vunpack.c.l.b16 %v583
        %v1500 = vunpack.c.h.b16 %v583
        %v1501 = vunpack.c.l.b16 %v584
        %v1502 = vunpack.c.h.b16 %v584
        %v1503 = vunpack.c.l.b16 %v585
        %v1504 = vunpack.c.h.b16 %v585
        %v1505 = vunpack.c.l.b16 %v586
        %v1506 = vunpack.c.h.b16 %v586
        %v1507 = vunpack.c.l.b16 %v587
        %v1508 = vunpack.c.h.b16 %v587
        %v1509 = vunpack.c.l.b16 %v588
        %v1510 = vunpack.c.h.b16 %v588
        %v1511 = vunpack.c.l.b16 %v589
        %v1512 = vunpack.c.h.b16 %v589
        %v1513 = vunpack.c.l.b16 %v590
        %v1514 = vunpack.c.h.b16 %v590
        %v1515 = vunpack.c.l.b16 %v591
        %v1516 = vunpack.c.h.b16 %v591
        %v1517 = vunpack.c.l.b16 %v592
        %v1518 = vunpack.c.h.b16 %v592
        %v1519 = vunpack.c.l.b16 %v593
        %v1520 = vunpack.c.h.b16 %v593
        %v1521 = vunpack.c.l.b16 %v594
        %v1522 = vunpack.c.h.b16 %v594
        %v1523 = vunpack.c.l.b16 %v595
        %v1524 = vunpack.c.h.b16 %v595
        %v1525 = vunpack.c.l.b16 %v596
        %v1526 = vunpack.c.h.b16 %v596
        %v1527 = vunpack.c.l.b16 %v597
        %v1528 = vunpack.c.h.b16 %v597
        %v1529 = vunpack.c.l.b16 %v598
        %v1530 = vunpack.c.h.b16 %v598
        %v1531 = vunpack.c.l.b16 %v599
        %v1532 = vunpack.c.h.b16 %v599
        %v1533 = vunpack.c.l.b16 %v600
        %v1534 = vunpack.c.h.b16 %v600
        %v1535 = vunpack.c.l.b16 %v601
        %v1536 = vunpack.c.h.b16 %v601
        %v1537 = vunpack.c.l.b16 %v602
        %v1538 = vunpack.c.h.b16 %v602
        %v1539 = vunpack.c.l.b16 %v603
        %v1540 = vunpack.c.h.b16 %v603
        %v1541 = vunpack.c.l.b16 %v604
        %v1542 = vunpack.c.h.b16 %v604
        %v1543 = vunpack.c.l.b16 %v605
        %v1544 = vunpack.c.h.b16 %v605
        %v1545 = vunpack.c.l.b16 %v606
        %v1546 = vunpack.c.h.b16 %v606
        %v1547 = vunpack.c.l.b16 %v607
        %v1548 = vunpack.c.h.b16 %v607
        %v1549 = vunpack.c.l.b16 %v608
        %v1550 = vunpack.c.h.b16 %v608
        %v1551 = vunpack.c.l.b16 %v609
        %v1552 = vunpack.c.h.b16 %v609
        %v1553 = vunpack.c.l.b16 %v610
        %v1554 = vunpack.c.h.b16 %v610
        %v1555 = vunpack.c.l.b16 %v611
        %v1556 = vunpack.c.h.b16 %v611
        %v1557 = vunpack.c.l.b16 %v612
        %v1558 = vunpack.c.h.b16 %v612
        %v1559 = vunpack.c.l.b16 %v613
        %v1560 = vunpack.c.h.b16 %v613
        %v1561 = vunpack.c.l.b16 %v614
        %v1562 = vunpack.c.h.b16 %v614
        %v1563 = vunpack.c.l.b16 %v615
        %v1564 = vunpack.c.h.b16 %v615
        %v1565 = vunpack.c.l.b16 %v616
        %v1566 = vunpack.c.h.b16 %v616
        %v1567 = vunpack.c.l.b16 %v617
        %v1568 = vunpack.c.h.b16 %v617
        %v1569 = vunpack.c.l.b16 %v618
        %v1570 = vunpack.c.h.b16 %v618
        %v1571 = vunpack.c.l.b16 %v619
        %v1572 = vunpack.c.h.b16 %v619
        %v1573 = vunpack.c.l.b16 %v620
        %v1574 = vunpack.c.h.b16 %v620
        %v1575 = vunpack.c.l.b16 %v621
        %v1576 = vunpack.c.h.b16 %v621
        %v1577 = vunpack.c.l.b16 %v622
        %v1578 = vunpack.c.h.b16 %v622
        %v1579 = vunpack.c.l.b16 %v623
        %v1580 = vunpack.c.h.b16 %v623
        %v1581 = vunpack.c.l.b16 %v624
        %v1582 = vunpack.c.h.b16 %v624
        %v1583 = vunpack.c.l.b16 %v625
        %v1584 = vunpack.c.h.b16 %v625
        %v1585 = vunpack.c.l.b16 %v626
        %v1586 = vunpack.c.h.b16 %v626
        %v1587 = vunpack.c.l.b16 %v627
        %v1588 = vunpack.c.h.b16 %v627
        %v1589 = vunpack.c.l.b16 %v628
        %v1590 = vunpack.c.h.b16 %v628
        %v1591 = vunpack.c.l.b16 %v629
        %v1592 = vunpack.c.h.b16 %v629
        %v1593 = vunpack.c.l.b16 %v630
        %v1594 = vunpack.c.h.b16 %v630
        %v1595 = vunpack.c.l.b16 %v631
        %v1596 = vunpack.c.h.b16 %v631
        %v1597 = vunpack.c.l.b16 %v632
        %v1598 = vunpack.c.h.b16 %v632
        %v1599 = vunpack.c.l.b16 %v633
        %v1600 = vunpack.c.h.b16 %v633
        %v1601 = vunpack.c.l.b16 %v634
        %v1602 = vunpack.c.h.b16 %v634
        %v1603 = vunpack.c.l.b16 %v635
        %v1604 = vunpack.c.h.b16 %v635
        %v1605 = vunpack.c.l.b16 %v636
        %v1606 = vunpack.c.h.b16 %v636
        %v1607 = vunpack.c.l.b16 %v637
        %v1608 = vunpack.c.h.b16 %v637
        %v1609 = vunpack.c.l.b16 %v638
        %v1610 = vunpack.c.h.b16 %v638
        %v1611 = vunpack.c.l.b16 %v639
        %v1612 = vunpack.c.h.b16 %v639
        %v1613 = vunpack.c.l.b16 %v640
        %v1614 = vunpack.c.h.b16 %v640
        %v1615 = vunpack.c.l.b16 %v641
        %v1616 = vunpack.c.h.b16 %v641
        %v1617 = vunpack.c.l.b16 %v642
        %v1618 = vunpack.c.h.b16 %v642
        %v1619 = vunpack.c.l.b16 %v643
        %v1620 = vunpack.c.h.b16 %v643
        %v1621 = vunpack.c.l.b16 %v644
        %v1622 = vunpack.c.h.b16 %v644
        %v1623 = vunpack.c.l.b16 %v645
        %v1624 = vunpack.c.h.b16 %v645
        %v1625 = vunpack.c.l.b16 %v646
        %v1626 = vunpack.c.h.b16 %v646
        %v1627 = vunpack.c.l.b16 %v647
        %v1628 = vunpack.c.h.b16 %v647
        %v1629 = vunpack.c.l.b16 %v648
        %v1630 = vunpack.c.h.b16 %v648
        %v1631 = vunpack.c.l.b16 %v649
        %v1632 = vunpack.c.h.b16 %v649
        %v1633 = vunpack.c.l.b16 %v650
        %v1634 = vunpack.c.h.b16 %v650
        %v1635 = vunpack.c.l.b16 %v651
        %v1636 = vunpack.c.h.b16 %v651
        %v1637 = vunpack.c.l.b16 %v652
        %v1638 = vunpack.c.h.b16 %v652
        %v1639 = vunpack.c.l.b16 %v653
        %v1640 = vunpack.c.h.b16 %v653
        %v1641 = vunpack.c.l.b16 %v654
        %v1642 = vunpack.c.h.b16 %v654
        %v1643 = vunpack.c.l.b16 %v655
        %v1644 = vunpack.c.h.b16 %v655
        %v1645 = vunpack.c.l.b16 %v656
        %v1646 = vunpack.c.h.b16 %v656
        %v1647 = vunpack.c.l.b16 %v657
        %v1648 = vunpack.c.h.b16 %v657
        %v1649 = vunpack.c.l.b16 %v658
        %v1650 = vunpack.c.h.b16 %v658
        %v1651 = vunpack.c.l.b16 %v659
        %v1652 = vunpack.c.h.b16 %v659
        %v1653 = vunpack.c.l.b16 %v660
        %v1654 = vunpack.c.h.b16 %v660
        %v1655 = vunpack.c.l.b16 %v661
        %v1656 = vunpack.c.h.b16 %v661
        %v1657 = vunpack.c.l.b16 %v662
        %v1658 = vunpack.c.h.b16 %v662
        %v1659 = vunpack.c.l.b16 %v663
        %v1660 = vunpack.c.h.b16 %v663
        %v1661 = vunpack.c.l.b16 %v664
        %v1662 = vunpack.c.h.b16 %v664
        %v1663 = vunpack.c.l.b16 %v665
        %v1664 = vunpack.c.h.b16 %v665
        %v1665 = vunpack.c.l.b16 %v666
        %v1666 = vunpack.c.h.b16 %v666
        %v1667 = vunpack.c.l.b16 %v667
        %v1668 = vunpack.c.h.b16 %v667
        %v1669 = vunpack.c.l.b16 %v668
        %v1670 = vunpack.c.h.b16 %v668
        %v1671 = vunpack.c.l.b16 %v669
        %v1672 = vunpack.c.h.b16 %v669
        %v1673 = vunpack.c.l.b16 %v670
        %v1674 = vunpack.c.h.b16 %v670
        %v1675 = vunpack.c.l.b16 %v671
        %v1676 = vunpack.c.h.b16 %v671
        %v1677 = vunpack.c.l.b16 %v672
        %v1678 = vunpack.c.h.b16 %v672
        %v1679 = vunpack.c.l.b16 %v673
        %v1680 = vunpack.c.h.b16 %v673
        %v1681 = vunpack.c.l.b16 %v674
        %v1682 = vunpack.c.h.b16 %v674
        %v1683 = vunpack.c.l.b16 %v675
        %v1684 = vunpack.c.h.b16 %v675
        %v1685 = vunpack.c.l.b16 %v676
        %v1686 = vunpack.c.h.b16 %v676
        %v1687 = vunpack.c.l.b16 %v677
        %v1688 = vunpack.c.h.b16 %v677
        %v1689 = vunpack.c.l.b16 %v678
        %v1690 = vunpack.c.h.b16 %v678
        %v1691 = vunpack.c.l.b16 %v679
        %v1692 = vunpack.c.h.b16 %v679
        %v1693 = vunpack.c.l.b16 %v680
        %v1694 = vunpack.c.h.b16 %v680
        %v1695 = vunpack.c.l.b16 %v681
        %v1696 = vunpack.c.h.b16 %v681
        %v1697 = vunpack.c.l.b16 %v682
        %v1698 = vunpack.c.h.b16 %v682
        %v1699 = vunpack.c.l.b16 %v683
        %v1700 = vunpack.c.h.b16 %v683
        %v1701 = vunpack.c.l.b16 %v684
        %v1702 = vunpack.c.h.b16 %v684
        %v1703 = vunpack.c.l.b16 %v685
        %v1704 = vunpack.c.h.b16 %v685
        %v1705 = vunpack.c.l.b16 %v686
        %v1706 = vunpack.c.h.b16 %v686
        %v1707 = vunpack.c.l.b16 %v687
        %v1708 = vunpack.c.h.b16 %v687
        %v1709 = vunpack.c.l.b16 %v688
        %v1710 = vunpack.c.h.b16 %v688
        %v1711 = vunpack.c.l.b16 %v689
        %v1712 = vunpack.c.h.b16 %v689
        %v1713 = vunpack.c.l.b16 %v690
        %v1714 = vunpack.c.h.b16 %v690
        %v1715 = vunpack.c.l.b16 %v691
        %v1716 = vunpack.c.h.b16 %v691
        %v1717 = vunpack.c.l.b16 %v692
        %v1718 = vunpack.c.h.b16 %v692
        %v1719 = vunpack.c.l.b16 %v693
        %v1720 = vunpack.c.h.b16 %v693
        %v1721 = vunpack.c.l.b16 %v694
        %v1722 = vunpack.c.h.b16 %v694
        %v1723 = vunpack.c.l.b16 %v695
        %v1724 = vunpack.c.h.b16 %v695
        %v1725 = vunpack.c.l.b16 %v696
        %v1726 = vunpack.c.h.b16 %v696
        %v1727 = vunpack.c.l.b16 %v697
        %v1728 = vunpack.c.h.b16 %v697
        %v1729 = vunpack.c.l.b16 %v698
        %v1730 = vunpack.c.h.b16 %v698
        %v1731 = vunpack.c.l.b16 %v699
        %v1732 = vunpack.c.h.b16 %v699
        %v1733 = vunpack.c.l.b16 %v700
        %v1734 = vunpack.c.h.b16 %v700
        %v1735 = vunpack.c.l.b16 %v701
        %v1736 = vunpack.c.h.b16 %v701
        %v1737 = vunpack.c.l.b16 %v702
        %v1738 = vunpack.c.h.b16 %v702
        %v1739 = vunpack.c.l.b16 %v703
        %v1740 = vunpack.c.h.b16 %v703
        %v1741 = vunpack.c.l.b16 %v704
        %v1742 = vunpack.c.h.b16 %v704
        %v1743 = vunpack.c.l.b16 %v705
        %v1744 = vunpack.c.h.b16 %v705
        %v1745 = vunpack.c.l.b16 %v706
        %v1746 = vunpack.c.h.b16 %v706
        %v1747 = vunpack.c.l.b16 %v707
        %v1748 = vunpack.c.h.b16 %v707
        %v1749 = vunpack.c.l.b16 %v708
        %v1750 = vunpack.c.h.b16 %v708
        %v1751 = vunpack.c.l.b16 %v709
        %v1752 = vunpack.c.h.b16 %v709
        %v1753 = vunpack.c.l.b16 %v710
        %v1754 = vunpack.c.h.b16 %v710
        %v1755 = vunpack.c.l.b16 %v711
        %v1756 = vunpack.c.h.b16 %v711
        %v1757 = vunpack.c.l.b16 %v712
        %v1758 = vunpack.c.h.b16 %v712
        %v1759 = vunpack.c.l.b16 %v713
        %v1760 = vunpack.c.h.b16 %v713
        %v1761 = vunpack.c.l.b16 %v714
        %v1762 = vunpack.c.h.b16 %v714
        %v1763 = vunpack.c.l.b16 %v715
        %v1764 = vunpack.c.h.b16 %v715
        %v1765 = vunpack.c.l.b16 %v716
        %v1766 = vunpack.c.h.b16 %v716
        %v1767 = vunpack.c.l.b16 %v717
        %v1768 = vunpack.c.h.b16 %v717
        %v1769 = vunpack.c.l.b16 %v718
        %v1770 = vunpack.c.h.b16 %v718
        %v1771 = vunpack.c.l.b16 %v719
        %v1772 = vunpack.c.h.b16 %v719
        %v1773 = vunpack.c.l.b16 %v720
        %v1774 = vunpack.c.h.b16 %v720
        %v1775 = vunpack.c.l.b16 %v721
        %v1776 = vunpack.c.h.b16 %v721
        %v1777 = vunpack.c.l.b16 %v722
        %v1778 = vunpack.c.h.b16 %v722
        %v1779 = vunpack.c.l.b16 %v723
        %v1780 = vunpack.c.h.b16 %v723
        %v1781 = vunpack.c.l.b16 %v724
        %v1782 = vunpack.c.h.b16 %v724
        %v1783 = vunpack.c.l.b16 %v725
        %v1784 = vunpack.c.h.b16 %v725
        %v1785 = vunpack.c.l.b16 %v726
        %v1786 = vunpack.c.h.b16 %v726
        %v1787 = vpack.c.b16 %v1151, %v1147
        %v1788 = vpack.c.b16 %v1152, %v1148
        %v1789 = vpack.c.b16 %v1153, %v1149
        %v1790 = vpack.c.b16 %v1154, %v1150
        %v1791 = vpack.c.b16 %v1159, %v1155
        %v1792 = vpack.c.b16 %v1160, %v1156
        %v1793 = vpack.c.b16 %v1161, %v1157
        %v1794 = vpack.c.b16 %v1162, %v1158
        %v1795 = vpack.c.b16 %v1167, %v1163
        %v1796 = vpack.c.b16 %v1168, %v1164
        %v1797 = vpack.c.b16 %v1169, %v1165
        %v1798 = vpack.c.b16 %v1170, %v1166
        %v1799 = vpack.c.b16 %v1175, %v1171
        %v1800 = vpack.c.b16 %v1176, %v1172
        %v1801 = vpack.c.b16 %v1177, %v1173
        %v1802 = vpack.c.b16 %v1178, %v1174
        %v1803 = vpack.c.b16 %v1183, %v1179
        %v1804 = vpack.c.b16 %v1184, %v1180
        %v1805 = vpack.c.b16 %v1185, %v1181
        %v1806 = vpack.c.b16 %v1186, %v1182
        %v1807 = vpack.c.b16 %v1191, %v1187
        %v1808 = vpack.c.b16 %v1192, %v1188
        %v1809 = vpack.c.b16 %v1193, %v1189
        %v1810 = vpack.c.b16 %v1194, %v1190
        %v1811 = vpack.c.b16 %v1199, %v1195
        %v1812 = vpack.c.b16 %v1200, %v1196
        %v1813 = vpack.c.b16 %v1201, %v1197
        %v1814 = vpack.c.b16 %v1202, %v1198
        %v1815 = vpack.c.b16 %v1207, %v1203
        %v1816 = vpack.c.b16 %v1208, %v1204
        %v1817 = vpack.c.b16 %v1209, %v1205
        %v1818 = vpack.c.b16 %v1210, %v1206
        %v1819 = vpack.c.b16 %v1215, %v1211
        %v1820 = vpack.c.b16 %v1216, %v1212
        %v1821 = vpack.c.b16 %v1217, %v1213
        %v1822 = vpack.c.b16 %v1218, %v1214
        %v1823 = vpack.c.b16 %v1223, %v1219
        %v1824 = vpack.c.b16 %v1224, %v1220
        %v1825 = vpack.c.b16 %v1225, %v1221
        %v1826 = vpack.c.b16 %v1226, %v1222
        %v1827 = vpack.c.b16 %v1231, %v1227
        %v1828 = vpack.c.b16 %v1232, %v1228
        %v1829 = vpack.c.b16 %v1233, %v1229
        %v1830 = vpack.c.b16 %v1234, %v1230
        %v1831 = vpack.c.b16 %v1239, %v1235
        %v1832 = vpack.c.b16 %v1240, %v1236
        %v1833 = vpack.c.b16 %v1241, %v1237
        %v1834 = vpack.c.b16 %v1242, %v1238
        %v1835 = vpack.c.b16 %v1247, %v1243
        %v1836 = vpack.c.b16 %v1248, %v1244
        %v1837 = vpack.c.b16 %v1249, %v1245
        %v1838 = vpack.c.b16 %v1250, %v1246
        %v1839 = vpack.c.b16 %v1255, %v1251
        %v1840 = vpack.c.b16 %v1256, %v1252
        %v1841 = vpack.c.b16 %v1257, %v1253
        %v1842 = vpack.c.b16 %v1258, %v1254
        %v1843 = vpack.c.b16 %v1263, %v1259
        %v1844 = vpack.c.b16 %v1264, %v1260
        %v1845 = vpack.c.b16 %v1265, %v1261
        %v1846 = vpack.c.b16 %v1266, %v1262
        %v1847 = vpack.c.b16 %v1271, %v1267
        %v1848 = vpack.c.b16 %v1272, %v1268
        %v1849 = vpack.c.b16 %v1273, %v1269
        %v1850 = vpack.c.b16 %v1274, %v1270
        %v1851 = vpack.c.b16 %v1279, %v1275
        %v1852 = vpack.c.b16 %v1280, %v1276
        %v1853 = vpack.c.b16 %v1281, %v1277
        %v1854 = vpack.c.b16 %v1282, %v1278
        %v1855 = vpack.c.b16 %v1287, %v1283
        %v1856 = vpack.c.b16 %v1288, %v1284
        %v1857 = vpack.c.b16 %v1289, %v1285
        %v1858 = vpack.c.b16 %v1290, %v1286
        %v1859 = vpack.c.b16 %v1295, %v1291
        %v1860 = vpack.c.b16 %v1296, %v1292
        %v1861 = vpack.c.b16 %v1297, %v1293
        %v1862 = vpack.c.b16 %v1298, %v1294
        %v1863 = vpack.c.b16 %v1303, %v1299
        %v1864 = vpack.c.b16 %v1304, %v1300
        %v1865 = vpack.c.b16 %v1305, %v1301
        %v1866 = vpack.c.b16 %v1306, %v1302
        %v1867 = vpack.c.b16 %v1311, %v1307
        %v1868 = vpack.c.b16 %v1312, %v1308
        %v1869 = vpack.c.b16 %v1313, %v1309
        %v1870 = vpack.c.b16 %v1314, %v1310
        %v1871 = vpack.c.b16 %v1319, %v1315
        %v1872 = vpack.c.b16 %v1320, %v1316
        %v1873 = vpack.c.b16 %v1321, %v1317
        %v1874 = vpack.c.b16 %v1322, %v1318
        %v1875 = vpack.c.b16 %v1327, %v1323
        %v1876 = vpack.c.b16 %v1328, %v1324
        %v1877 = vpack.c.b16 %v1329, %v1325
        %v1878 = vpack.c.b16 %v1330, %v1326
        %v1879 = vpack.c.b16 %v1335, %v1331
        %v1880 = vpack.c.b16 %v1336, %v1332
        %v1881 = vpack.c.b16 %v1337, %v1333
        %v1882 = vpack.c.b16 %v1338, %v1334
        %v1883 = vpack.c.b16 %v1343, %v1339
        %v1884 = vpack.c.b16 %v1344, %v1340
        %v1885 = vpack.c.b16 %v1345, %v1341
        %v1886 = vpack.c.b16 %v1346, %v1342
        %v1887 = vpack.c.b16 %v1351, %v1347
        %v1888 = vpack.c.b16 %v1352, %v1348
        %v1889 = vpack.c.b16 %v1353, %v1349
        %v1890 = vpack.c.b16 %v1354, %v1350
        %v1891 = vpack.c.b16 %v1359, %v1355
        %v1892 = vpack.c.b16 %v1360, %v1356
        %v1893 = vpack.c.b16 %v1361, %v1357
        %v1894 = vpack.c.b16 %v1362, %v1358
        %v1895 = vpack.c.b16 %v1367, %v1363
        %v1896 = vpack.c.b16 %v1368, %v1364
        %v1897 = vpack.c.b16 %v1369, %v1365
        %v1898 = vpack.c.b16 %v1370, %v1366
        %v1899 = vpack.c.b16 %v1375, %v1371
        %v1900 = vpack.c.b16 %v1376, %v1372
        %v1901 = vpack.c.b16 %v1377, %v1373
        %v1902 = vpack.c.b16 %v1378, %v1374
        %v1903 = vpack.c.b16 %v1383, %v1379
        %v1904 = vpack.c.b16 %v1384, %v1380
        %v1905 = vpack.c.b16 %v1385, %v1381
        %v1906 = vpack.c.b16 %v1386, %v1382
        %v1907 = vpack.c.b16 %v1391, %v1387
        %v1908 = vpack.c.b16 %v1392, %v1388
        %v1909 = vpack.c.b16 %v1393, %v1389
        %v1910 = vpack.c.b16 %v1394, %v1390
        %v1911 = vpack.c.b16 %v1399, %v1395
        %v1912 = vpack.c.b16 %v1400, %v1396
        %v1913 = vpack.c.b16 %v1401, %v1397
        %v1914 = vpack.c.b16 %v1402, %v1398
        %v1915 = vpack.c.b16 %v1407, %v1403
        %v1916 = vpack.c.b16 %v1408, %v1404
        %v1917 = vpack.c.b16 %v1409, %v1405
        %v1918 = vpack.c.b16 %v1410, %v1406
        %v1919 = vpack.c.b16 %v1415, %v1411
        %v1920 = vpack.c.b16 %v1416, %v1412
        %v1921 = vpack.c.b16 %v1417, %v1413
        %v1922 = vpack.c.b16 %v1418, %v1414
        %v1923 = vpack.c.b16 %v1423, %v1419
        %v1924 = vpack.c.b16 %v1424, %v1420
        %v1925 = vpack.c.b16 %v1425, %v1421
        %v1926 = vpack.c.b16 %v1426, %v1422
        %v1927 = vpack.c.b16 %v1431, %v1427
        %v1928 = vpack.c.b16 %v1432, %v1428
        %v1929 = vpack.c.b16 %v1433, %v1429
        %v1930 = vpack.c.b16 %v1434, %v1430
        %v1931 = vpack.c.b16 %v1439, %v1435
        %v1932 = vpack.c.b16 %v1440, %v1436
        %v1933 = vpack.c.b16 %v1441, %v1437
        %v1934 = vpack.c.b16 %v1442, %v1438
        %v1935 = vpack.c.b16 %v1447, %v1443
        %v1936 = vpack.c.b16 %v1448, %v1444
        %v1937 = vpack.c.b16 %v1449, %v1445
        %v1938 = vpack.c.b16 %v1450, %v1446
        %v1939 = vpack.c.b16 %v1455, %v1451
        %v1940 = vpack.c.b16 %v1456, %v1452
        %v1941 = vpack.c.b16 %v1457, %v1453
        %v1942 = vpack.c.b16 %v1458, %v1454
        %v1943 = vpack.c.b16 %v1463, %v1459
        %v1944 = vpack.c.b16 %v1464, %v1460
        %v1945 = vpack.c.b16 %v1465, %v1461
        %v1946 = vpack.c.b16 %v1466, %v1462
        %v1947 = vpack.c.b16 %v1471, %v1467
        %v1948 = vpack.c.b16 %v1472, %v1468
        %v1949 = vpack.c.b16 %v1473, %v1469
        %v1950 = vpack.c.b16 %v1474, %v1470
        %v1951 = vpack.c.b16 %v1479, %v1475
        %v1952 = vpack.c.b16 %v1480, %v1476
        %v1953 = vpack.c.b16 %v1481, %v1477
        %v1954 = vpack.c.b16 %v1482, %v1478
        %v1955 = vpack.c.b16 %v1487, %v1483
        %v1956 = vpack.c.b16 %v1488, %v1484
        %v1957 = vpack.c.b16 %v1489, %v1485
        %v1958 = vpack.c.b16 %v1490, %v1486
        %v1959 = vpack.c.b16 %v1495, %v1491
        %v1960 = vpack.c.b16 %v1496, %v1492
        %v1961 = vpack.c.b16 %v1497, %v1493
        %v1962 = vpack.c.b16 %v1498, %v1494
        %v1963 = vpack.c.b16 %v1503, %v1499
        %v1964 = vpack.c.b16 %v1504, %v1500
        %v1965 = vpack.c.b16 %v1505, %v1501
        %v1966 = vpack.c.b16 %v1506, %v1502
        %v1967 = vpack.c.b16 %v1511, %v1507
        %v1968 = vpack.c.b16 %v1512, %v1508
        %v1969 = vpack.c.b16 %v1513, %v1509
        %v1970 = vpack.c.b16 %v1514, %v1510
        %v1971 = vpack.c.b16 %v1519, %v1515
        %v1972 = vpack.c.b16 %v1520, %v1516
        %v1973 = vpack.c.b16 %v1521, %v1517
        %v1974 = vpack.c.b16 %v1522, %v1518
        %v1975 = vpack.c.b16 %v1527, %v1523
        %v1976 = vpack.c.b16 %v1528, %v1524
        %v1977 = vpack.c.b16 %v1529, %v1525
        %v1978 = vpack.c.b16 %v1530, %v1526
        %v1979 = vpack.c.b16 %v1535, %v1531
        %v1980 = vpack.c.b16 %v1536, %v1532
        %v1981 = vpack.c.b16 %v1537, %v1533
        %v1982 = vpack.c.b16 %v1538, %v1534
        %v1983 = vpack.c.b16 %v1543, %v1539
        %v1984 = vpack.c.b16 %v1544, %v1540
        %v1985 = vpack.c.b16 %v1545, %v1541
        %v1986 = vpack.c.b16 %v1546, %v1542
        %v1987 = vpack.c.b16 %v1551, %v1547
        %v1988 = vpack.c.b16 %v1552, %v1548
        %v1989 = vpack.c.b16 %v1553, %v1549
        %v1990 = vpack.c.b16 %v1554, %v1550
        %v1991 = vpack.c.b16 %v1559, %v1555
        %v1992 = vpack.c.b16 %v1560, %v1556
        %v1993 = vpack.c.b16 %v1561, %v1557
        %v1994 = vpack.c.b16 %v1562, %v1558
        %v1995 = vpack.c.b16 %v1567, %v1563
        %v1996 = vpack.c.b16 %v1568, %v1564
        %v1997 = vpack.c.b16 %v1569, %v1565
        %v1998 = vpack.c.b16 %v1570, %v1566
        %v1999 = vpack.c.b16 %v1575, %v1571
        %v2000 = vpack.c.b16 %v1576, %v1572
        %v2001 = vpack.c.b16 %v1577, %v1573
        %v2002 = vpack.c.b16 %v1578, %v1574
        %v2003 = vpack.c.b16 %v1583, %v1579
        %v2004 = vpack.c.b16 %v1584, %v1580
        %v2005 = vpack.c.b16 %v1585, %v1581
        %v2006 = vpack.c.b16 %v1586, %v1582
        %v2007 = vpack.c.b16 %v1591, %v1587
        %v2008 = vpack.c.b16 %v1592, %v1588
        %v2009 = vpack.c.b16 %v1593, %v1589
        %v2010 = vpack.c.b16 %v1594, %v1590
        %v2011 = vpack.c.b16 %v1599, %v1595
        %v2012 = vpack.c.b16 %v1600, %v1596
        %v2013 = vpack.c.b16 %v1601, %v1597
        %v2014 = vpack.c.b16 %v1602, %v1598
        %v2015 = vpack.c.b16 %v1607, %v1603
        %v2016 = vpack.c.b16 %v1608, %v1604
        %v2017 = vpack.c.b16 %v1609, %v1605
        %v2018 = vpack.c.b16 %v1610, %v1606
        %v2019 = vpack.c.b16 %v1615, %v1611
        %v2020 = vpack.c.b16 %v1616, %v1612
        %v2021 = vpack.c.b16 %v1617, %v1613
        %v2022 = vpack.c.b16 %v1618, %v1614
        %v2023 = vpack.c.b16 %v1623, %v1619
        %v2024 = vpack.c.b16 %v1624, %v1620
        %v2025 = vpack.c.b16 %v1625, %v1621
        %v2026 = vpack.c.b16 %v1626, %v1622
        %v2027 = vpack.c.b16 %v1631, %v1627
        %v2028 = vpack.c.b16 %v1632, %v1628
        %v2029 = vpack.c.b16 %v1633, %v1629
        %v2030 = vpack.c.b16 %v1634, %v1630
        %v2031 = vpack.c.b16 %v1639, %v1635
        %v2032 = vpack.c.b16 %v1640, %v1636
        %v2033 = vpack.c.b16 %v1641, %v1637
        %v2034 = vpack.c.b16 %v1642, %v1638
        %v2035 = vpack.c.b16 %v1647, %v1643
        %v2036 = vpack.c.b16 %v1648, %v1644
        %v2037 = vpack.c.b16 %v1649, %v1645
        %v2038 = vpack.c.b16 %v1650, %v1646
        %v2039 = vpack.c.b16 %v1655, %v1651
        %v2040 = vpack.c.b16 %v1656, %v1652
        %v2041 = vpack.c.b16 %v1657, %v1653
        %v2042 = vpack.c.b16 %v1658, %v1654
        %v2043 = vpack.c.b16 %v1663, %v1659
        %v2044 = vpack.c.b16 %v1664, %v1660
        %v2045 = vpack.c.b16 %v1665, %v1661
        %v2046 = vpack.c.b16 %v1666, %v1662
        %v2047 = vpack.c.b16 %v1671, %v1667
        %v2048 = vpack.c.b16 %v1672, %v1668
        %v2049 = vpack.c.b16 %v1673, %v1669
        %v2050 = vpack.c.b16 %v1674, %v1670
        %v2051 = vpack.c.b16 %v1679, %v1675
        %v2052 = vpack.c.b16 %v1680, %v1676
        %v2053 = vpack.c.b16 %v1681, %v1677
        %v2054 = vpack.c.b16 %v1682, %v1678
        %v2055 = vpack.c.b16 %v1687, %v1683
        %v2056 = vpack.c.b16 %v1688, %v1684
        %v2057 = vpack.c.b16 %v1689, %v1685
        %v2058 = vpack.c.b16 %v1690, %v1686
        %v2059 = vpack.c.b16 %v1695, %v1691
        %v2060 = vpack.c.b16 %v1696, %v1692
        %v2061 = vpack.c.b16 %v1697, %v1693
        %v2062 = vpack.c.b16 %v1698, %v1694
        %v2063 = vpack.c.b16 %v1703, %v1699
        %v2064 = vpack.c.b16 %v1704, %v1700
        %v2065 = vpack.c.b16 %v1705, %v1701
        %v2066 = vpack.c.b16 %v1706, %v1702
        %v2067 = vpack.c.b16 %v1711, %v1707
        %v2068 = vpack.c.b16 %v1712, %v1708
        %v2069 = vpack.c.b16 %v1713, %v1709
        %v2070 = vpack.c.b16 %v1714, %v1710
        %v2071 = vpack.c.b16 %v1719, %v1715
        %v2072 = vpack.c.b16 %v1720, %v1716
        %v2073 = vpack.c.b16 %v1721, %v1717
        %v2074 = vpack.c.b16 %v1722, %v1718
        %v2075 = vpack.c.b16 %v1727, %v1723
        %v2076 = vpack.c.b16 %v1728, %v1724
        %v2077 = vpack.c.b16 %v1729, %v1725
        %v2078 = vpack.c.b16 %v1730, %v1726
        %v2079 = vpack.c.b16 %v1735, %v1731
        %v2080 = vpack.c.b16 %v1736, %v1732
        %v2081 = vpack.c.b16 %v1737, %v1733
        %v2082 = vpack.c.b16 %v1738, %v1734
        %v2083 = vpack.c.b16 %v1743, %v1739
        %v2084 = vpack.c.b16 %v1744, %v1740
        %v2085 = vpack.c.b16 %v1745, %v1741
        %v2086 = vpack.c.b16 %v1746, %v1742
        %v2087 = vpack.c.b16 %v1751, %v1747
        %v2088 = vpack.c.b16 %v1752, %v1748
        %v2089 = vpack.c.b16 %v1753, %v1749
        %v2090 = vpack.c.b16 %v1754, %v1750
        %v2091 = vpack.c.b16 %v1759, %v1755
        %v2092 = vpack.c.b16 %v1760, %v1756
        %v2093 = vpack.c.b16 %v1761, %v1757
        %v2094 = vpack.c.b16 %v1762, %v1758
        %v2095 = vpack.c.b16 %v1767, %v1763
        %v2096 = vpack.c.b16 %v1768, %v1764
        %v2097 = vpack.c.b16 %v1769, %v1765
        %v2098 = vpack.c.b16 %v1770, %v1766
        %v2099 = vpack.c.b16 %v1775, %v1771
        %v2100 = vpack.c.b16 %v1776, %v1772
        %v2101 = vpack.c.b16 %v1777, %v1773
        %v2102 = vpack.c.b16 %v1778, %v1774
        %v2103 = vpack.c.b16 %v1783, %v1779
        %v2104 = vpack.c.b16 %v1784, %v1780
        %v2105 = vpack.c.b16 %v1785, %v1781
        %v2106 = vpack.c.b16 %v1786, %v1782
        %2427 = vmatpush.bf16.msra.mxu0 %v1815
        %2428 = vmatpush.bf16.msra.mxu0 %v1811
        %2429 = vmatpush.bf16.msra.mxu0 %v1807
        %2430 = vmatpush.bf16.msra.mxu0 %v1803
        %2431 = vmatpush.bf16.msra.mxu0 %v1799
        %2432 = vmatpush.bf16.msra.mxu0 %v1795
        %2433 = vmatpush.bf16.msra.mxu0 %v1791
        %2434 = vmatpush.bf16.msra.mxu0 %v1787
        %2435 = vmatmul.bf16.gmra.mxu0 %v787
        %v2436 = vpop.f32.mrf.mxu0
        %v2437 = vadd.f32 0.0, %v2436
        %v2438 = vpop.f32.mrf.mxu0
        %v2439 = vadd.f32 0.0, %v2438
        %2440 = vmatmul.bf16.gmra.mxu0 %v797
        %v2441 = vpop.f32.mrf.mxu0
        %v2442 = vadd.f32 0.0, %v2441
        %v2443 = vpop.f32.mrf.mxu0
        %v2444 = vadd.f32 0.0, %v2443
        %2445 = vdwg.mxu0
        %2446 = vmatpush.bf16.msra.mxu0 %v1847
        %2447 = vmatpush.bf16.msra.mxu0 %v1843
        %2448 = vmatpush.bf16.msra.mxu0 %v1839
        %2449 = vmatpush.bf16.msra.mxu0 %v1835
        %2450 = vmatpush.bf16.msra.mxu0 %v1831
        %2451 = vmatpush.bf16.msra.mxu0 %v1827
        %2452 = vmatpush.bf16.msra.mxu0 %v1823
        %2453 = vmatpush.bf16.msra.mxu0 %v1819
        %2454 = vmatmul.bf16.gmra.mxu0 %v788
        %v2455 = vpop.f32.mrf.mxu0
        %v2456 = vadd.f32 %v2437, %v2455
        %v2457 = vpop.f32.mrf.mxu0
        %v2458 = vadd.f32 %v2439, %v2457
        %2459 = vmatmul.bf16.gmra.mxu0 %v798
        %v2460 = vpop.f32.mrf.mxu0
        %v2461 = vadd.f32 %v2442, %v2460
        %v2462 = vpop.f32.mrf.mxu0
        %v2463 = vadd.f32 %v2444, %v2462
        %2464 = vdwg.mxu0
        %2465 = vmatpush.bf16.msra.mxu0 %v1879
        %2466 = vmatpush.bf16.msra.mxu0 %v1875
        %2467 = vmatpush.bf16.msra.mxu0 %v1871
        %2468 = vmatpush.bf16.msra.mxu0 %v1867
        %2469 = vmatpush.bf16.msra.mxu0 %v1863
        %2470 = vmatpush.bf16.msra.mxu0 %v1859
        %2471 = vmatpush.bf16.msra.mxu0 %v1855
        %2472 = vmatpush.bf16.msra.mxu0 %v1851
        %2473 = vmatmul.bf16.gmra.mxu0 %v789
        %v2474 = vpop.f32.mrf.mxu0
        %v2475 = vadd.f32 %v2456, %v2474
        %v2476 = vpop.f32.mrf.mxu0
        %v2477 = vadd.f32 %v2458, %v2476
        %2478 = vmatmul.bf16.gmra.mxu0 %v799
        %v2479 = vpop.f32.mrf.mxu0
        %v2480 = vadd.f32 %v2461, %v2479
        %v2481 = vpop.f32.mrf.mxu0
        %v2482 = vadd.f32 %v2463, %v2481
        %2483 = vdwg.mxu0
        %2484 = vmatpush.bf16.msra.mxu0 %v1911
        %2485 = vmatpush.bf16.msra.mxu0 %v1907
        %2486 = vmatpush.bf16.msra.mxu0 %v1903
        %2487 = vmatpush.bf16.msra.mxu0 %v1899
        %2488 = vmatpush.bf16.msra.mxu0 %v1895
        %2489 = vmatpush.bf16.msra.mxu0 %v1891
        %2490 = vmatpush.bf16.msra.mxu0 %v1887
        %2491 = vmatpush.bf16.msra.mxu0 %v1883
        %2492 = vmatmul.bf16.gmra.mxu0 %v790
        %v2493 = vpop.f32.mrf.mxu0
        %v2494 = vadd.f32 %v2475, %v2493
        %v2495 = vpop.f32.mrf.mxu0
        %v2496 = vadd.f32 %v2477, %v2495
        %2497 = vmatmul.bf16.gmra.mxu0 %v800
        %v2498 = vpop.f32.mrf.mxu0
        %v2499 = vadd.f32 %v2480, %v2498
        %v2500 = vpop.f32.mrf.mxu0
        %v2501 = vadd.f32 %v2482, %v2500
        %2502 = vdwg.mxu0
        %2503 = vmatpush.bf16.msra.mxu0 %v1943
        %2504 = vmatpush.bf16.msra.mxu0 %v1939
        %2505 = vmatpush.bf16.msra.mxu0 %v1935
        %2506 = vmatpush.bf16.msra.mxu0 %v1931
        %2507 = vmatpush.bf16.msra.mxu0 %v1927
        %2508 = vmatpush.bf16.msra.mxu0 %v1923
        %2509 = vmatpush.bf16.msra.mxu0 %v1919
        %2510 = vmatpush.bf16.msra.mxu0 %v1915
        %2511 = vmatmul.bf16.gmra.mxu0 %v791
        %v2512 = vpop.f32.mrf.mxu0
        %v2513 = vadd.f32 %v2494, %v2512
        %v2514 = vpop.f32.mrf.mxu0
        %v2515 = vadd.f32 %v2496, %v2514
        %2516 = vmatmul.bf16.gmra.mxu0 %v801
        %v2517 = vpop.f32.mrf.mxu0
        %v2518 = vadd.f32 %v2499, %v2517
        %v2519 = vpop.f32.mrf.mxu0
        %v2520 = vadd.f32 %v2501, %v2519
        %2521 = vdwg.mxu0
        %2522 = vmatpush.bf16.msra.mxu0 %v1975
        %2523 = vmatpush.bf16.msra.mxu0 %v1971
        %2524 = vmatpush.bf16.msra.mxu0 %v1967
        %2525 = vmatpush.bf16.msra.mxu0 %v1963
        %2526 = vmatpush.bf16.msra.mxu0 %v1959
        %2527 = vmatpush.bf16.msra.mxu0 %v1955
        %2528 = vmatpush.bf16.msra.mxu0 %v1951
        %2529 = vmatpush.bf16.msra.mxu0 %v1947
        %2530 = vmatmul.bf16.gmra.mxu0 %v792
        %v2531 = vpop.f32.mrf.mxu0
        %v2532 = vadd.f32 %v2513, %v2531
        %v2533 = vpop.f32.mrf.mxu0
        %v2534 = vadd.f32 %v2515, %v2533
        %2535 = vmatmul.bf16.gmra.mxu0 %v802
        %v2536 = vpop.f32.mrf.mxu0
        %v2537 = vadd.f32 %v2518, %v2536
        %v2538 = vpop.f32.mrf.mxu0
        %v2539 = vadd.f32 %v2520, %v2538
        %2540 = vdwg.mxu0
        %2541 = vmatpush.bf16.msra.mxu0 %v2007
        %2542 = vmatpush.bf16.msra.mxu0 %v2003
        %2543 = vmatpush.bf16.msra.mxu0 %v1999
        %2544 = vmatpush.bf16.msra.mxu0 %v1995
        %2545 = vmatpush.bf16.msra.mxu0 %v1991
        %2546 = vmatpush.bf16.msra.mxu0 %v1987
        %2547 = vmatpush.bf16.msra.mxu0 %v1983
        %2548 = vmatpush.bf16.msra.mxu0 %v1979
        %2549 = vmatmul.bf16.gmra.mxu0 %v793
        %v2550 = vpop.f32.mrf.mxu0
        %v2551 = vadd.f32 %v2532, %v2550
        %v2552 = vpop.f32.mrf.mxu0
        %v2553 = vadd.f32 %v2534, %v2552
        %2554 = vmatmul.bf16.gmra.mxu0 %v803
        %v2555 = vpop.f32.mrf.mxu0
        %v2556 = vadd.f32 %v2537, %v2555
        %v2557 = vpop.f32.mrf.mxu0
        %v2558 = vadd.f32 %v2539, %v2557
        %2559 = vdwg.mxu0
        %2560 = vmatpush.bf16.msra.mxu0 %v2039
        %2561 = vmatpush.bf16.msra.mxu0 %v2035
        %2562 = vmatpush.bf16.msra.mxu0 %v2031
        %2563 = vmatpush.bf16.msra.mxu0 %v2027
        %2564 = vmatpush.bf16.msra.mxu0 %v2023
        %2565 = vmatpush.bf16.msra.mxu0 %v2019
        %2566 = vmatpush.bf16.msra.mxu0 %v2015
        %2567 = vmatpush.bf16.msra.mxu0 %v2011
        %2568 = vmatmul.bf16.gmra.mxu0 %v794
        %v2569 = vpop.f32.mrf.mxu0
        %v2570 = vadd.f32 %v2551, %v2569
        %v2571 = vpop.f32.mrf.mxu0
        %v2572 = vadd.f32 %v2553, %v2571
        %2573 = vmatmul.bf16.gmra.mxu0 %v804
        %v2574 = vpop.f32.mrf.mxu0
        %v2575 = vadd.f32 %v2556, %v2574
        %v2576 = vpop.f32.mrf.mxu0
        %v2577 = vadd.f32 %v2558, %v2576
        %2578 = vdwg.mxu0
        %2579 = vmatpush.bf16.msra.mxu0 %v2071
        %2580 = vmatpush.bf16.msra.mxu0 %v2067
        %2581 = vmatpush.bf16.msra.mxu0 %v2063
        %2582 = vmatpush.bf16.msra.mxu0 %v2059
        %2583 = vmatpush.bf16.msra.mxu0 %v2055
        %2584 = vmatpush.bf16.msra.mxu0 %v2051
        %2585 = vmatpush.bf16.msra.mxu0 %v2047
        %2586 = vmatpush.bf16.msra.mxu0 %v2043
        %2587 = vmatmul.bf16.gmra.mxu0 %v795
        %v2588 = vpop.f32.mrf.mxu0
        %v2589 = vadd.f32 %v2570, %v2588
        %v2590 = vpop.f32.mrf.mxu0
        %v2591 = vadd.f32 %v2572, %v2590
        %2592 = vmatmul.bf16.gmra.mxu0 %v805
        %v2593 = vpop.f32.mrf.mxu0
        %v2594 = vadd.f32 %v2575, %v2593
        %v2595 = vpop.f32.mrf.mxu0
        %v2596 = vadd.f32 %v2577, %v2595
        %2597 = vdwg.mxu0
        %2598 = vmatpush.bf16.msra.mxu0 %v2103
        %2599 = vmatpush.bf16.msra.mxu0 %v2099
        %2600 = vmatpush.bf16.msra.mxu0 %v2095
        %2601 = vmatpush.bf16.msra.mxu0 %v2091
        %2602 = vmatpush.bf16.msra.mxu0 %v2087
        %2603 = vmatpush.bf16.msra.mxu0 %v2083
        %2604 = vmatpush.bf16.msra.mxu0 %v2079
        %2605 = vmatpush.bf16.msra.mxu0 %v2075
        %2606 = vmatmul.bf16.gmra.mxu0 %v796
        %v2607 = vpop.f32.mrf.mxu0
        %v2608 = vadd.f32 %v2589, %v2607
        %v2609 = vpop.f32.mrf.mxu0
        %v2610 = vadd.f32 %v2591, %v2609
        %2611 = vmatmul.bf16.gmra.mxu0 %v806
        %v2612 = vpop.f32.mrf.mxu0
        %v2613 = vadd.f32 %v2594, %v2612
        %v2614 = vpop.f32.mrf.mxu0
        %v2615 = vadd.f32 %v2596, %v2614
        %2616 = vdwg.mxu0
        %2617 = vmatpush.bf16.msra.mxu0 %v1816
        %2618 = vmatpush.bf16.msra.mxu0 %v1812
        %2619 = vmatpush.bf16.msra.mxu0 %v1808
        %2620 = vmatpush.bf16.msra.mxu0 %v1804
        %2621 = vmatpush.bf16.msra.mxu0 %v1800
        %2622 = vmatpush.bf16.msra.mxu0 %v1796
        %2623 = vmatpush.bf16.msra.mxu0 %v1792
        %2624 = vmatpush.bf16.msra.mxu0 %v1788
        %2625 = vmatmul.bf16.gmra.mxu0 %v787
        %v2626 = vpop.f32.mrf.mxu0
        %v2627 = vadd.f32 0.0, %v2626
        %v2628 = vpop.f32.mrf.mxu0
        %v2629 = vadd.f32 0.0, %v2628
        %2630 = vmatmul.bf16.gmra.mxu0 %v797
        %v2631 = vpop.f32.mrf.mxu0
        %v2632 = vadd.f32 0.0, %v2631
        %v2633 = vpop.f32.mrf.mxu0
        %v2634 = vadd.f32 0.0, %v2633
        %2635 = vdwg.mxu0
        %2636 = vmatpush.bf16.msra.mxu0 %v1848
        %2637 = vmatpush.bf16.msra.mxu0 %v1844
        %2638 = vmatpush.bf16.msra.mxu0 %v1840
        %2639 = vmatpush.bf16.msra.mxu0 %v1836
        %2640 = vmatpush.bf16.msra.mxu0 %v1832
        %2641 = vmatpush.bf16.msra.mxu0 %v1828
        %2642 = vmatpush.bf16.msra.mxu0 %v1824
        %2643 = vmatpush.bf16.msra.mxu0 %v1820
        %2644 = vmatmul.bf16.gmra.mxu0 %v788
        %v2645 = vpop.f32.mrf.mxu0
        %v2646 = vadd.f32 %v2627, %v2645
        %v2647 = vpop.f32.mrf.mxu0
        %v2648 = vadd.f32 %v2629, %v2647
        %2649 = vmatmul.bf16.gmra.mxu0 %v798
        %v2650 = vpop.f32.mrf.mxu0
        %v2651 = vadd.f32 %v2632, %v2650
        %v2652 = vpop.f32.mrf.mxu0
        %v2653 = vadd.f32 %v2634, %v2652
        %2654 = vdwg.mxu0
        %2655 = vmatpush.bf16.msra.mxu0 %v1880
        %2656 = vmatpush.bf16.msra.mxu0 %v1876
        %2657 = vmatpush.bf16.msra.mxu0 %v1872
        %2658 = vmatpush.bf16.msra.mxu0 %v1868
        %2659 = vmatpush.bf16.msra.mxu0 %v1864
        %2660 = vmatpush.bf16.msra.mxu0 %v1860
        %2661 = vmatpush.bf16.msra.mxu0 %v1856
        %2662 = vmatpush.bf16.msra.mxu0 %v1852
        %2663 = vmatmul.bf16.gmra.mxu0 %v789
        %v2664 = vpop.f32.mrf.mxu0
        %v2665 = vadd.f32 %v2646, %v2664
        %v2666 = vpop.f32.mrf.mxu0
        %v2667 = vadd.f32 %v2648, %v2666
        %2668 = vmatmul.bf16.gmra.mxu0 %v799
        %v2669 = vpop.f32.mrf.mxu0
        %v2670 = vadd.f32 %v2651, %v2669
        %v2671 = vpop.f32.mrf.mxu0
        %v2672 = vadd.f32 %v2653, %v2671
        %2673 = vdwg.mxu0
        %2674 = vmatpush.bf16.msra.mxu0 %v1912
        %2675 = vmatpush.bf16.msra.mxu0 %v1908
        %2676 = vmatpush.bf16.msra.mxu0 %v1904
        %2677 = vmatpush.bf16.msra.mxu0 %v1900
        %2678 = vmatpush.bf16.msra.mxu0 %v1896
        %2679 = vmatpush.bf16.msra.mxu0 %v1892
        %2680 = vmatpush.bf16.msra.mxu0 %v1888
        %2681 = vmatpush.bf16.msra.mxu0 %v1884
        %2682 = vmatmul.bf16.gmra.mxu0 %v790
        %v2683 = vpop.f32.mrf.mxu0
        %v2684 = vadd.f32 %v2665, %v2683
        %v2685 = vpop.f32.mrf.mxu0
        %v2686 = vadd.f32 %v2667, %v2685
        %2687 = vmatmul.bf16.gmra.mxu0 %v800
        %v2688 = vpop.f32.mrf.mxu0
        %v2689 = vadd.f32 %v2670, %v2688
        %v2690 = vpop.f32.mrf.mxu0
        %v2691 = vadd.f32 %v2672, %v2690
        %2692 = vdwg.mxu0
        %2693 = vmatpush.bf16.msra.mxu0 %v1944
        %2694 = vmatpush.bf16.msra.mxu0 %v1940
        %2695 = vmatpush.bf16.msra.mxu0 %v1936
        %2696 = vmatpush.bf16.msra.mxu0 %v1932
        %2697 = vmatpush.bf16.msra.mxu0 %v1928
        %2698 = vmatpush.bf16.msra.mxu0 %v1924
        %2699 = vmatpush.bf16.msra.mxu0 %v1920
        %2700 = vmatpush.bf16.msra.mxu0 %v1916
        %2701 = vmatmul.bf16.gmra.mxu0 %v791
        %v2702 = vpop.f32.mrf.mxu0
        %v2703 = vadd.f32 %v2684, %v2702
        %v2704 = vpop.f32.mrf.mxu0
        %v2705 = vadd.f32 %v2686, %v2704
        %2706 = vmatmul.bf16.gmra.mxu0 %v801
        %v2707 = vpop.f32.mrf.mxu0
        %v2708 = vadd.f32 %v2689, %v2707
        %v2709 = vpop.f32.mrf.mxu0
        %v2710 = vadd.f32 %v2691, %v2709
        %2711 = vdwg.mxu0
        %2712 = vmatpush.bf16.msra.mxu0 %v1976
        %2713 = vmatpush.bf16.msra.mxu0 %v1972
        %2714 = vmatpush.bf16.msra.mxu0 %v1968
        %2715 = vmatpush.bf16.msra.mxu0 %v1964
        %2716 = vmatpush.bf16.msra.mxu0 %v1960
        %2717 = vmatpush.bf16.msra.mxu0 %v1956
        %2718 = vmatpush.bf16.msra.mxu0 %v1952
        %2719 = vmatpush.bf16.msra.mxu0 %v1948
        %2720 = vmatmul.bf16.gmra.mxu0 %v792
        %v2721 = vpop.f32.mrf.mxu0
        %v2722 = vadd.f32 %v2703, %v2721
        %v2723 = vpop.f32.mrf.mxu0
        %v2724 = vadd.f32 %v2705, %v2723
        %2725 = vmatmul.bf16.gmra.mxu0 %v802
        %v2726 = vpop.f32.mrf.mxu0
        %v2727 = vadd.f32 %v2708, %v2726
        %v2728 = vpop.f32.mrf.mxu0
        %v2729 = vadd.f32 %v2710, %v2728
        %2730 = vdwg.mxu0
        %2731 = vmatpush.bf16.msra.mxu0 %v2008
        %2732 = vmatpush.bf16.msra.mxu0 %v2004
        %2733 = vmatpush.bf16.msra.mxu0 %v2000
        %2734 = vmatpush.bf16.msra.mxu0 %v1996
        %2735 = vmatpush.bf16.msra.mxu0 %v1992
        %2736 = vmatpush.bf16.msra.mxu0 %v1988
        %2737 = vmatpush.bf16.msra.mxu0 %v1984
        %2738 = vmatpush.bf16.msra.mxu0 %v1980
        %2739 = vmatmul.bf16.gmra.mxu0 %v793
        %v2740 = vpop.f32.mrf.mxu0
        %v2741 = vadd.f32 %v2722, %v2740
        %v2742 = vpop.f32.mrf.mxu0
        %v2743 = vadd.f32 %v2724, %v2742
        %2744 = vmatmul.bf16.gmra.mxu0 %v803
        %v2745 = vpop.f32.mrf.mxu0
        %v2746 = vadd.f32 %v2727, %v2745
        %v2747 = vpop.f32.mrf.mxu0
        %v2748 = vadd.f32 %v2729, %v2747
        %2749 = vdwg.mxu0
        %2750 = vmatpush.bf16.msra.mxu0 %v2040
        %2751 = vmatpush.bf16.msra.mxu0 %v2036
        %2752 = vmatpush.bf16.msra.mxu0 %v2032
        %2753 = vmatpush.bf16.msra.mxu0 %v2028
        %2754 = vmatpush.bf16.msra.mxu0 %v2024
        %2755 = vmatpush.bf16.msra.mxu0 %v2020
        %2756 = vmatpush.bf16.msra.mxu0 %v2016
        %2757 = vmatpush.bf16.msra.mxu0 %v2012
        %2758 = vmatmul.bf16.gmra.mxu0 %v794
        %v2759 = vpop.f32.mrf.mxu0
        %v2760 = vadd.f32 %v2741, %v2759
        %v2761 = vpop.f32.mrf.mxu0
        %v2762 = vadd.f32 %v2743, %v2761
        %2763 = vmatmul.bf16.gmra.mxu0 %v804
        %v2764 = vpop.f32.mrf.mxu0
        %v2765 = vadd.f32 %v2746, %v2764
        %v2766 = vpop.f32.mrf.mxu0
        %v2767 = vadd.f32 %v2748, %v2766
        %2768 = vdwg.mxu0
        %2769 = vmatpush.bf16.msra.mxu0 %v2072
        %2770 = vmatpush.bf16.msra.mxu0 %v2068
        %2771 = vmatpush.bf16.msra.mxu0 %v2064
        %2772 = vmatpush.bf16.msra.mxu0 %v2060
        %2773 = vmatpush.bf16.msra.mxu0 %v2056
        %2774 = vmatpush.bf16.msra.mxu0 %v2052
        %2775 = vmatpush.bf16.msra.mxu0 %v2048
        %2776 = vmatpush.bf16.msra.mxu0 %v2044
        %2777 = vmatmul.bf16.gmra.mxu0 %v795
        %v2778 = vpop.f32.mrf.mxu0
        %v2779 = vadd.f32 %v2760, %v2778
        %v2780 = vpop.f32.mrf.mxu0
        %v2781 = vadd.f32 %v2762, %v2780
        %2782 = vmatmul.bf16.gmra.mxu0 %v805
        %v2783 = vpop.f32.mrf.mxu0
        %v2784 = vadd.f32 %v2765, %v2783
        %v2785 = vpop.f32.mrf.mxu0
        %v2786 = vadd.f32 %v2767, %v2785
        %2787 = vdwg.mxu0
        %2788 = vmatpush.bf16.msra.mxu0 %v2104
        %2789 = vmatpush.bf16.msra.mxu0 %v2100
        %2790 = vmatpush.bf16.msra.mxu0 %v2096
        %2791 = vmatpush.bf16.msra.mxu0 %v2092
        %2792 = vmatpush.bf16.msra.mxu0 %v2088
        %2793 = vmatpush.bf16.msra.mxu0 %v2084
        %2794 = vmatpush.bf16.msra.mxu0 %v2080
        %2795 = vmatpush.bf16.msra.mxu0 %v2076
        %2796 = vmatmul.bf16.gmra.mxu0 %v796
        %v2797 = vpop.f32.mrf.mxu0
        %v2798 = vadd.f32 %v2779, %v2797
        %v2799 = vpop.f32.mrf.mxu0
        %v2800 = vadd.f32 %v2781, %v2799
        %2801 = vmatmul.bf16.gmra.mxu0 %v806
        %v2802 = vpop.f32.mrf.mxu0
        %v2803 = vadd.f32 %v2784, %v2802
        %v2804 = vpop.f32.mrf.mxu0
        %v2805 = vadd.f32 %v2786, %v2804
        %2806 = vdwg.mxu0
        %2807 = vmatpush.bf16.msra.mxu0 %v1817
        %2808 = vmatpush.bf16.msra.mxu0 %v1813
        %2809 = vmatpush.bf16.msra.mxu0 %v1809
        %2810 = vmatpush.bf16.msra.mxu0 %v1805
        %2811 = vmatpush.bf16.msra.mxu0 %v1801
        %2812 = vmatpush.bf16.msra.mxu0 %v1797
        %2813 = vmatpush.bf16.msra.mxu0 %v1793
        %2814 = vmatpush.bf16.msra.mxu0 %v1789
        %2815 = vmatmul.bf16.gmra.mxu0 %v787
        %v2816 = vpop.f32.mrf.mxu0
        %v2817 = vadd.f32 0.0, %v2816
        %v2818 = vpop.f32.mrf.mxu0
        %v2819 = vadd.f32 0.0, %v2818
        %2820 = vmatmul.bf16.gmra.mxu0 %v797
        %v2821 = vpop.f32.mrf.mxu0
        %v2822 = vadd.f32 0.0, %v2821
        %v2823 = vpop.f32.mrf.mxu0
        %v2824 = vadd.f32 0.0, %v2823
        %2825 = vdwg.mxu0
        %2826 = vmatpush.bf16.msra.mxu0 %v1849
        %2827 = vmatpush.bf16.msra.mxu0 %v1845
        %2828 = vmatpush.bf16.msra.mxu0 %v1841
        %2829 = vmatpush.bf16.msra.mxu0 %v1837
        %2830 = vmatpush.bf16.msra.mxu0 %v1833
        %2831 = vmatpush.bf16.msra.mxu0 %v1829
        %2832 = vmatpush.bf16.msra.mxu0 %v1825
        %2833 = vmatpush.bf16.msra.mxu0 %v1821
        %2834 = vmatmul.bf16.gmra.mxu0 %v788
        %v2835 = vpop.f32.mrf.mxu0
        %v2836 = vadd.f32 %v2817, %v2835
        %v2837 = vpop.f32.mrf.mxu0
        %v2838 = vadd.f32 %v2819, %v2837
        %2839 = vmatmul.bf16.gmra.mxu0 %v798
        %v2840 = vpop.f32.mrf.mxu0
        %v2841 = vadd.f32 %v2822, %v2840
        %v2842 = vpop.f32.mrf.mxu0
        %v2843 = vadd.f32 %v2824, %v2842
        %2844 = vdwg.mxu0
        %2845 = vmatpush.bf16.msra.mxu0 %v1881
        %2846 = vmatpush.bf16.msra.mxu0 %v1877
        %2847 = vmatpush.bf16.msra.mxu0 %v1873
        %2848 = vmatpush.bf16.msra.mxu0 %v1869
        %2849 = vmatpush.bf16.msra.mxu0 %v1865
        %2850 = vmatpush.bf16.msra.mxu0 %v1861
        %2851 = vmatpush.bf16.msra.mxu0 %v1857
        %2852 = vmatpush.bf16.msra.mxu0 %v1853
        %2853 = vmatmul.bf16.gmra.mxu0 %v789
        %v2854 = vpop.f32.mrf.mxu0
        %v2855 = vadd.f32 %v2836, %v2854
        %v2856 = vpop.f32.mrf.mxu0
        %v2857 = vadd.f32 %v2838, %v2856
        %2858 = vmatmul.bf16.gmra.mxu0 %v799
        %v2859 = vpop.f32.mrf.mxu0
        %v2860 = vadd.f32 %v2841, %v2859
        %v2861 = vpop.f32.mrf.mxu0
        %v2862 = vadd.f32 %v2843, %v2861
        %2863 = vdwg.mxu0
        %2864 = vmatpush.bf16.msra.mxu0 %v1913
        %2865 = vmatpush.bf16.msra.mxu0 %v1909
        %2866 = vmatpush.bf16.msra.mxu0 %v1905
        %2867 = vmatpush.bf16.msra.mxu0 %v1901
        %2868 = vmatpush.bf16.msra.mxu0 %v1897
        %2869 = vmatpush.bf16.msra.mxu0 %v1893
        %2870 = vmatpush.bf16.msra.mxu0 %v1889
        %2871 = vmatpush.bf16.msra.mxu0 %v1885
        %2872 = vmatmul.bf16.gmra.mxu0 %v790
        %v2873 = vpop.f32.mrf.mxu0
        %v2874 = vadd.f32 %v2855, %v2873
        %v2875 = vpop.f32.mrf.mxu0
        %v2876 = vadd.f32 %v2857, %v2875
        %2877 = vmatmul.bf16.gmra.mxu0 %v800
        %v2878 = vpop.f32.mrf.mxu0
        %v2879 = vadd.f32 %v2860, %v2878
        %v2880 = vpop.f32.mrf.mxu0
        %v2881 = vadd.f32 %v2862, %v2880
        %2882 = vdwg.mxu0
        %2883 = vmatpush.bf16.msra.mxu0 %v1945
        %2884 = vmatpush.bf16.msra.mxu0 %v1941
        %2885 = vmatpush.bf16.msra.mxu0 %v1937
        %2886 = vmatpush.bf16.msra.mxu0 %v1933
        %2887 = vmatpush.bf16.msra.mxu0 %v1929
        %2888 = vmatpush.bf16.msra.mxu0 %v1925
        %2889 = vmatpush.bf16.msra.mxu0 %v1921
        %2890 = vmatpush.bf16.msra.mxu0 %v1917
        %2891 = vmatmul.bf16.gmra.mxu0 %v791
        %v2892 = vpop.f32.mrf.mxu0
        %v2893 = vadd.f32 %v2874, %v2892
        %v2894 = vpop.f32.mrf.mxu0
        %v2895 = vadd.f32 %v2876, %v2894
        %2896 = vmatmul.bf16.gmra.mxu0 %v801
        %v2897 = vpop.f32.mrf.mxu0
        %v2898 = vadd.f32 %v2879, %v2897
        %v2899 = vpop.f32.mrf.mxu0
        %v2900 = vadd.f32 %v2881, %v2899
        %2901 = vdwg.mxu0
        %2902 = vmatpush.bf16.msra.mxu0 %v1977
        %2903 = vmatpush.bf16.msra.mxu0 %v1973
        %2904 = vmatpush.bf16.msra.mxu0 %v1969
        %2905 = vmatpush.bf16.msra.mxu0 %v1965
        %2906 = vmatpush.bf16.msra.mxu0 %v1961
        %2907 = vmatpush.bf16.msra.mxu0 %v1957
        %2908 = vmatpush.bf16.msra.mxu0 %v1953
        %2909 = vmatpush.bf16.msra.mxu0 %v1949
        %2910 = vmatmul.bf16.gmra.mxu0 %v792
        %v2911 = vpop.f32.mrf.mxu0
        %v2912 = vadd.f32 %v2893, %v2911
        %v2913 = vpop.f32.mrf.mxu0
        %v2914 = vadd.f32 %v2895, %v2913
        %2915 = vmatmul.bf16.gmra.mxu0 %v802
        %v2916 = vpop.f32.mrf.mxu0
        %v2917 = vadd.f32 %v2898, %v2916
        %v2918 = vpop.f32.mrf.mxu0
        %v2919 = vadd.f32 %v2900, %v2918
        %2920 = vdwg.mxu0
        %2921 = vmatpush.bf16.msra.mxu0 %v2009
        %2922 = vmatpush.bf16.msra.mxu0 %v2005
        %2923 = vmatpush.bf16.msra.mxu0 %v2001
        %2924 = vmatpush.bf16.msra.mxu0 %v1997
        %2925 = vmatpush.bf16.msra.mxu0 %v1993
        %2926 = vmatpush.bf16.msra.mxu0 %v1989
        %2927 = vmatpush.bf16.msra.mxu0 %v1985
        %2928 = vmatpush.bf16.msra.mxu0 %v1981
        %2929 = vmatmul.bf16.gmra.mxu0 %v793
        %v2930 = vpop.f32.mrf.mxu0
        %v2931 = vadd.f32 %v2912, %v2930
        %v2932 = vpop.f32.mrf.mxu0
        %v2933 = vadd.f32 %v2914, %v2932
        %2934 = vmatmul.bf16.gmra.mxu0 %v803
        %v2935 = vpop.f32.mrf.mxu0
        %v2936 = vadd.f32 %v2917, %v2935
        %v2937 = vpop.f32.mrf.mxu0
        %v2938 = vadd.f32 %v2919, %v2937
        %2939 = vdwg.mxu0
        %2940 = vmatpush.bf16.msra.mxu0 %v2041
        %2941 = vmatpush.bf16.msra.mxu0 %v2037
        %2942 = vmatpush.bf16.msra.mxu0 %v2033
        %2943 = vmatpush.bf16.msra.mxu0 %v2029
        %2944 = vmatpush.bf16.msra.mxu0 %v2025
        %2945 = vmatpush.bf16.msra.mxu0 %v2021
        %2946 = vmatpush.bf16.msra.mxu0 %v2017
        %2947 = vmatpush.bf16.msra.mxu0 %v2013
        %2948 = vmatmul.bf16.gmra.mxu0 %v794
        %v2949 = vpop.f32.mrf.mxu0
        %v2950 = vadd.f32 %v2931, %v2949
        %v2951 = vpop.f32.mrf.mxu0
        %v2952 = vadd.f32 %v2933, %v2951
        %2953 = vmatmul.bf16.gmra.mxu0 %v804
        %v2954 = vpop.f32.mrf.mxu0
        %v2955 = vadd.f32 %v2936, %v2954
        %v2956 = vpop.f32.mrf.mxu0
        %v2957 = vadd.f32 %v2938, %v2956
        %2958 = vdwg.mxu0
        %2959 = vmatpush.bf16.msra.mxu0 %v2073
        %2960 = vmatpush.bf16.msra.mxu0 %v2069
        %2961 = vmatpush.bf16.msra.mxu0 %v2065
        %2962 = vmatpush.bf16.msra.mxu0 %v2061
        %2963 = vmatpush.bf16.msra.mxu0 %v2057
        %2964 = vmatpush.bf16.msra.mxu0 %v2053
        %2965 = vmatpush.bf16.msra.mxu0 %v2049
        %2966 = vmatpush.bf16.msra.mxu0 %v2045
        %2967 = vmatmul.bf16.gmra.mxu0 %v795
        %v2968 = vpop.f32.mrf.mxu0
        %v2969 = vadd.f32 %v2950, %v2968
        %v2970 = vpop.f32.mrf.mxu0
        %v2971 = vadd.f32 %v2952, %v2970
        %2972 = vmatmul.bf16.gmra.mxu0 %v805
        %v2973 = vpop.f32.mrf.mxu0
        %v2974 = vadd.f32 %v2955, %v2973
        %v2975 = vpop.f32.mrf.mxu0
        %v2976 = vadd.f32 %v2957, %v2975
        %2977 = vdwg.mxu0
        %2978 = vmatpush.bf16.msra.mxu0 %v2105
        %2979 = vmatpush.bf16.msra.mxu0 %v2101
        %2980 = vmatpush.bf16.msra.mxu0 %v2097
        %2981 = vmatpush.bf16.msra.mxu0 %v2093
        %2982 = vmatpush.bf16.msra.mxu0 %v2089
        %2983 = vmatpush.bf16.msra.mxu0 %v2085
        %2984 = vmatpush.bf16.msra.mxu0 %v2081
        %2985 = vmatpush.bf16.msra.mxu0 %v2077
        %2986 = vmatmul.bf16.gmra.mxu0 %v796
        %v2987 = vpop.f32.mrf.mxu0
        %v2988 = vadd.f32 %v2969, %v2987
        %v2989 = vpop.f32.mrf.mxu0
        %v2990 = vadd.f32 %v2971, %v2989
        %2991 = vmatmul.bf16.gmra.mxu0 %v806
        %v2992 = vpop.f32.mrf.mxu0
        %v2993 = vadd.f32 %v2974, %v2992
        %v2994 = vpop.f32.mrf.mxu0
        %v2995 = vadd.f32 %v2976, %v2994
        %2996 = vdwg.mxu0
        %2997 = vmatpush.bf16.msra.mxu0 %v1818
        %2998 = vmatpush.bf16.msra.mxu0 %v1814
        %2999 = vmatpush.bf16.msra.mxu0 %v1810
        %3000 = vmatpush.bf16.msra.mxu0 %v1806
        %3001 = vmatpush.bf16.msra.mxu0 %v1802
        %3002 = vmatpush.bf16.msra.mxu0 %v1798
        %3003 = vmatpush.bf16.msra.mxu0 %v1794
        %3004 = vmatpush.bf16.msra.mxu0 %v1790
        %3005 = vmatmul.bf16.gmra.mxu0 %v787
        %v3006 = vpop.f32.mrf.mxu0
        %v3007 = vadd.f32 0.0, %v3006
        %v3008 = vpop.f32.mrf.mxu0
        %v3009 = vadd.f32 0.0, %v3008
        %3010 = vmatmul.bf16.gmra.mxu0 %v797
        %v3011 = vpop.f32.mrf.mxu0
        %v3012 = vadd.f32 0.0, %v3011
        %v3013 = vpop.f32.mrf.mxu0
        %v3014 = vadd.f32 0.0, %v3013
        %3015 = vdwg.mxu0
        %3016 = vmatpush.bf16.msra.mxu0 %v1850
        %3017 = vmatpush.bf16.msra.mxu0 %v1846
        %3018 = vmatpush.bf16.msra.mxu0 %v1842
        %3019 = vmatpush.bf16.msra.mxu0 %v1838
        %3020 = vmatpush.bf16.msra.mxu0 %v1834
        %3021 = vmatpush.bf16.msra.mxu0 %v1830
        %3022 = vmatpush.bf16.msra.mxu0 %v1826
        %3023 = vmatpush.bf16.msra.mxu0 %v1822
        %3024 = vmatmul.bf16.gmra.mxu0 %v788
        %v3025 = vpop.f32.mrf.mxu0
        %v3026 = vadd.f32 %v3007, %v3025
        %v3027 = vpop.f32.mrf.mxu0
        %v3028 = vadd.f32 %v3009, %v3027
        %3029 = vmatmul.bf16.gmra.mxu0 %v798
        %v3030 = vpop.f32.mrf.mxu0
        %v3031 = vadd.f32 %v3012, %v3030
        %v3032 = vpop.f32.mrf.mxu0
        %v3033 = vadd.f32 %v3014, %v3032
        %3034 = vdwg.mxu0
        %3035 = vmatpush.bf16.msra.mxu0 %v1882
        %3036 = vmatpush.bf16.msra.mxu0 %v1878
        %3037 = vmatpush.bf16.msra.mxu0 %v1874
        %3038 = vmatpush.bf16.msra.mxu0 %v1870
        %3039 = vmatpush.bf16.msra.mxu0 %v1866
        %3040 = vmatpush.bf16.msra.mxu0 %v1862
        %3041 = vmatpush.bf16.msra.mxu0 %v1858
        %3042 = vmatpush.bf16.msra.mxu0 %v1854
        %3043 = vmatmul.bf16.gmra.mxu0 %v789
        %v3044 = vpop.f32.mrf.mxu0
        %v3045 = vadd.f32 %v3026, %v3044
        %v3046 = vpop.f32.mrf.mxu0
        %v3047 = vadd.f32 %v3028, %v3046
        %3048 = vmatmul.bf16.gmra.mxu0 %v799
        %v3049 = vpop.f32.mrf.mxu0
        %v3050 = vadd.f32 %v3031, %v3049
        %v3051 = vpop.f32.mrf.mxu0
        %v3052 = vadd.f32 %v3033, %v3051
        %3053 = vdwg.mxu0
        %3054 = vmatpush.bf16.msra.mxu0 %v1914
        %3055 = vmatpush.bf16.msra.mxu0 %v1910
        %3056 = vmatpush.bf16.msra.mxu0 %v1906
        %3057 = vmatpush.bf16.msra.mxu0 %v1902
        %3058 = vmatpush.bf16.msra.mxu0 %v1898
        %3059 = vmatpush.bf16.msra.mxu0 %v1894
        %3060 = vmatpush.bf16.msra.mxu0 %v1890
        %3061 = vmatpush.bf16.msra.mxu0 %v1886
        %3062 = vmatmul.bf16.gmra.mxu0 %v790
        %v3063 = vpop.f32.mrf.mxu0
        %v3064 = vadd.f32 %v3045, %v3063
        %v3065 = vpop.f32.mrf.mxu0
        %v3066 = vadd.f32 %v3047, %v3065
        %3067 = vmatmul.bf16.gmra.mxu0 %v800
        %v3068 = vpop.f32.mrf.mxu0
        %v3069 = vadd.f32 %v3050, %v3068
        %v3070 = vpop.f32.mrf.mxu0
        %v3071 = vadd.f32 %v3052, %v3070
        %3072 = vdwg.mxu0
        %3073 = vmatpush.bf16.msra.mxu0 %v1946
        %3074 = vmatpush.bf16.msra.mxu0 %v1942
        %3075 = vmatpush.bf16.msra.mxu0 %v1938
        %3076 = vmatpush.bf16.msra.mxu0 %v1934
        %3077 = vmatpush.bf16.msra.mxu0 %v1930
        %3078 = vmatpush.bf16.msra.mxu0 %v1926
        %3079 = vmatpush.bf16.msra.mxu0 %v1922
        %3080 = vmatpush.bf16.msra.mxu0 %v1918
        %3081 = vmatmul.bf16.gmra.mxu0 %v791
        %v3082 = vpop.f32.mrf.mxu0
        %v3083 = vadd.f32 %v3064, %v3082
        %v3084 = vpop.f32.mrf.mxu0
        %v3085 = vadd.f32 %v3066, %v3084
        %3086 = vmatmul.bf16.gmra.mxu0 %v801
        %v3087 = vpop.f32.mrf.mxu0
        %v3088 = vadd.f32 %v3069, %v3087
        %v3089 = vpop.f32.mrf.mxu0
        %v3090 = vadd.f32 %v3071, %v3089
        %3091 = vdwg.mxu0
        %3092 = vmatpush.bf16.msra.mxu0 %v1978
        %3093 = vmatpush.bf16.msra.mxu0 %v1974
        %3094 = vmatpush.bf16.msra.mxu0 %v1970
        %3095 = vmatpush.bf16.msra.mxu0 %v1966
        %3096 = vmatpush.bf16.msra.mxu0 %v1962
        %3097 = vmatpush.bf16.msra.mxu0 %v1958
        %3098 = vmatpush.bf16.msra.mxu0 %v1954
        %3099 = vmatpush.bf16.msra.mxu0 %v1950
        %3100 = vmatmul.bf16.gmra.mxu0 %v792
        %v3101 = vpop.f32.mrf.mxu0
        %v3102 = vadd.f32 %v3083, %v3101
        %v3103 = vpop.f32.mrf.mxu0
        %v3104 = vadd.f32 %v3085, %v3103
        %3105 = vmatmul.bf16.gmra.mxu0 %v802
        %v3106 = vpop.f32.mrf.mxu0
        %v3107 = vadd.f32 %v3088, %v3106
        %v3108 = vpop.f32.mrf.mxu0
        %v3109 = vadd.f32 %v3090, %v3108
        %3110 = vdwg.mxu0
        %3111 = vmatpush.bf16.msra.mxu0 %v2010
        %3112 = vmatpush.bf16.msra.mxu0 %v2006
        %3113 = vmatpush.bf16.msra.mxu0 %v2002
        %3114 = vmatpush.bf16.msra.mxu0 %v1998
        %3115 = vmatpush.bf16.msra.mxu0 %v1994
        %3116 = vmatpush.bf16.msra.mxu0 %v1990
        %3117 = vmatpush.bf16.msra.mxu0 %v1986
        %3118 = vmatpush.bf16.msra.mxu0 %v1982
        %3119 = vmatmul.bf16.gmra.mxu0 %v793
        %v3120 = vpop.f32.mrf.mxu0
        %v3121 = vadd.f32 %v3102, %v3120
        %v3122 = vpop.f32.mrf.mxu0
        %v3123 = vadd.f32 %v3104, %v3122
        %3124 = vmatmul.bf16.gmra.mxu0 %v803
        %v3125 = vpop.f32.mrf.mxu0
        %v3126 = vadd.f32 %v3107, %v3125
        %v3127 = vpop.f32.mrf.mxu0
        %v3128 = vadd.f32 %v3109, %v3127
        %3129 = vdwg.mxu0
        %3130 = vmatpush.bf16.msra.mxu0 %v2042
        %3131 = vmatpush.bf16.msra.mxu0 %v2038
        %3132 = vmatpush.bf16.msra.mxu0 %v2034
        %3133 = vmatpush.bf16.msra.mxu0 %v2030
        %3134 = vmatpush.bf16.msra.mxu0 %v2026
        %3135 = vmatpush.bf16.msra.mxu0 %v2022
        %3136 = vmatpush.bf16.msra.mxu0 %v2018
        %3137 = vmatpush.bf16.msra.mxu0 %v2014
        %3138 = vmatmul.bf16.gmra.mxu0 %v794
        %v3139 = vpop.f32.mrf.mxu0
        %v3140 = vadd.f32 %v3121, %v3139
        %v3141 = vpop.f32.mrf.mxu0
        %v3142 = vadd.f32 %v3123, %v3141
        %3143 = vmatmul.bf16.gmra.mxu0 %v804
        %v3144 = vpop.f32.mrf.mxu0
        %v3145 = vadd.f32 %v3126, %v3144
        %v3146 = vpop.f32.mrf.mxu0
        %v3147 = vadd.f32 %v3128, %v3146
        %3148 = vdwg.mxu0
        %3149 = vmatpush.bf16.msra.mxu0 %v2074
        %3150 = vmatpush.bf16.msra.mxu0 %v2070
        %3151 = vmatpush.bf16.msra.mxu0 %v2066
        %3152 = vmatpush.bf16.msra.mxu0 %v2062
        %3153 = vmatpush.bf16.msra.mxu0 %v2058
        %3154 = vmatpush.bf16.msra.mxu0 %v2054
        %3155 = vmatpush.bf16.msra.mxu0 %v2050
        %3156 = vmatpush.bf16.msra.mxu0 %v2046
        %3157 = vmatmul.bf16.gmra.mxu0 %v795
        %v3158 = vpop.f32.mrf.mxu0
        %v3159 = vadd.f32 %v3140, %v3158
        %v3160 = vpop.f32.mrf.mxu0
        %v3161 = vadd.f32 %v3142, %v3160
        %3162 = vmatmul.bf16.gmra.mxu0 %v805
        %v3163 = vpop.f32.mrf.mxu0
        %v3164 = vadd.f32 %v3145, %v3163
        %v3165 = vpop.f32.mrf.mxu0
        %v3166 = vadd.f32 %v3147, %v3165
        %3167 = vdwg.mxu0
        %3168 = vmatpush.bf16.msra.mxu0 %v2106
        %3169 = vmatpush.bf16.msra.mxu0 %v2102
        %3170 = vmatpush.bf16.msra.mxu0 %v2098
        %3171 = vmatpush.bf16.msra.mxu0 %v2094
        %3172 = vmatpush.bf16.msra.mxu0 %v2090
        %3173 = vmatpush.bf16.msra.mxu0 %v2086
        %3174 = vmatpush.bf16.msra.mxu0 %v2082
        %3175 = vmatpush.bf16.msra.mxu0 %v2078
        %3176 = vmatmul.bf16.gmra.mxu0 %v796
        %v3177 = vpop.f32.mrf.mxu0
        %v3178 = vadd.f32 %v3159, %v3177
        %v3179 = vpop.f32.mrf.mxu0
        %v3180 = vadd.f32 %v3161, %v3179
        %3181 = vmatmul.bf16.gmra.mxu0 %v806
        %v3182 = vpop.f32.mrf.mxu0
        %v3183 = vadd.f32 %v3164, %v3182
        %v3184 = vpop.f32.mrf.mxu0
        %v3185 = vadd.f32 %v3166, %v3184
        %3186 = vdwg.mxu0
        %v3187 = vadd.f32 %v371, %v2608
        %v3188 = vadd.f32 %v372, %v2798
        %v3189 = vadd.f32 %v373, %v2988
        %v3190 = vadd.f32 %v374, %v3178
        %v3191 = vadd.f32 %v375, %v2610
        %v3192 = vadd.f32 %v376, %v2800
        %v3193 = vadd.f32 %v377, %v2990
        %v3194 = vadd.f32 %v378, %v3180
        %v3195 = vadd.f32 %v379, %v2613
        %v3196 = vadd.f32 %v380, %v2803
        %v3197 = vadd.f32 %v381, %v2993
        %v3198 = vadd.f32 %v382, %v3183
        %v3199 = vadd.f32 %v383, %v2615
        %v3200 = vadd.f32 %v384, %v2805
        %v3201 = vadd.f32 %v385, %v2995
        %v3202 = vadd.f32 %v386, %v3185
        %3203 = vst [vmem:[#allocation2] sm:$0xff] %v3187
        %3204 = vst [vmem:[#allocation2 + $0x8] sm:$0xff] %v3188
        %3205 = vst [vmem:[#allocation2 + $0x10] sm:$0xff] %v3189
        %3206 = vst [vmem:[#allocation2 + $0x18] sm:$0xff] %v3190
        %3207 = vst [vmem:[#allocation2 + $0x20] sm:$0xff] %v3191
        %3208 = vst [vmem:[#allocation2 + $0x28] sm:$0xff] %v3192
        %3209 = vst [vmem:[#allocation2 + $0x30] sm:$0xff] %v3193
        %3210 = vst [vmem:[#allocation2 + $0x38] sm:$0xff] %v3194
        %3211 = vst [vmem:[#allocation2 + $0x40] sm:$0xff] %v3195
        %3212 = vst [vmem:[#allocation2 + $0x48] sm:$0xff] %v3196
        %3213 = vst [vmem:[#allocation2 + $0x50] sm:$0xff] %v3197
        %3214 = vst [vmem:[#allocation2 + $0x58] sm:$0xff] %v3198
        %3215 = vst [vmem:[#allocation2 + $0x60] sm:$0xff] %v3199
        %3216 = vst [vmem:[#allocation2 + $0x68] sm:$0xff] %v3200
        %3217 = vst [vmem:[#allocation2 + $0x70] sm:$0xff] %v3201
        %3218 = vst [vmem:[#allocation2 + $0x78] sm:$0xff] %v3202
        %p3219 = scmp.eq.s32.totalorder %s23, 8
        // Predicated region
        $region68: #{detection_forward.8} parent=54 // pred_check
          %p3220 = pneg %p3219
        $region69: #{detection_forward.8} parent=54 // pred_check_branch
          %3222 = sbr.rel (%p3220) target = $region71
        $region70: #{detection_forward.8} parent=54 // pred_region
          %v3223 = vld [vmem:[#allocation2] sm:$0xff]
          %v3224 = vld [vmem:[#allocation2 + $0x8] sm:$0xff]
          %v3225 = vld [vmem:[#allocation2 + $0x10] sm:$0xff]
          %v3226 = vld [vmem:[#allocation2 + $0x18] sm:$0xff]
          %v3227 = vld [vmem:[#allocation2 + $0x20] sm:$0xff]
          %v3228 = vld [vmem:[#allocation2 + $0x28] sm:$0xff]
          %v3229 = vld [vmem:[#allocation2 + $0x30] sm:$0xff]
          %v3230 = vld [vmem:[#allocation2 + $0x38] sm:$0xff]
          %v3231 = vld [vmem:[#allocation2 + $0x40] sm:$0xff]
          %v3232 = vld [vmem:[#allocation2 + $0x48] sm:$0xff]
          %v3233 = vld [vmem:[#allocation2 + $0x50] sm:$0xff]
          %v3234 = vld [vmem:[#allocation2 + $0x58] sm:$0xff]
          %v3235 = vld [vmem:[#allocation2 + $0x60] sm:$0xff]
          %v3236 = vld [vmem:[#allocation2 + $0x68] sm:$0xff]
          %v3237 = vld [vmem:[#allocation2 + $0x70] sm:$0xff]
          %v3238 = vld [vmem:[#allocation2 + $0x78] sm:$0xff]
          %v3239 = vadd.f32 %v3223, %v3227
          %v3240 = vadd.f32 %v3239, %v3231
          %v3241 = vadd.f32 %v3240, %v3235
          %v3242 = vrot.slane %v3241, 4
          %v3243 = vadd.f32 %v3241, %v3242
          %v3244 = vrot.slane %v3243, 2
          %v3245 = vadd.f32 %v3243, %v3244
          %v3246 = vrot.slane %v3245, 1
          %v3247 = vadd.f32 %v3245, %v3246
          %v3248 = vadd.f32 %v3224, %v3228
          %v3249 = vadd.f32 %v3248, %v3232
          %v3250 = vadd.f32 %v3249, %v3236
          %v3251 = vrot.slane %v3250, 4
          %v3252 = vadd.f32 %v3250, %v3251
          %v3253 = vrot.slane %v3252, 2
          %v3254 = vadd.f32 %v3252, %v3253
          %v3255 = vrot.slane %v3254, 1
          %v3256 = vadd.f32 %v3254, %v3255
          %v3257 = vadd.f32 %v3225, %v3229
          %v3258 = vadd.f32 %v3257, %v3233
          %v3259 = vadd.f32 %v3258, %v3237
          %v3260 = vrot.slane %v3259, 4
          %v3261 = vadd.f32 %v3259, %v3260
          %v3262 = vrot.slane %v3261, 2
          %v3263 = vadd.f32 %v3261, %v3262
          %v3264 = vrot.slane %v3263, 1
          %v3265 = vadd.f32 %v3263, %v3264
          %v3266 = vadd.f32 %v3226, %v3230
          %v3267 = vadd.f32 %v3266, %v3234
          %v3268 = vadd.f32 %v3267, %v3238
          %v3269 = vrot.slane %v3268, 4
          %v3270 = vadd.f32 %v3268, %v3269
          %v3271 = vrot.slane %v3270, 2
          %v3272 = vadd.f32 %v3270, %v3271
          %v3273 = vrot.slane %v3272, 1
          %v3274 = vadd.f32 %v3272, %v3273
          %v3275 = vmul.f32 %v3247, 0.03125
          %v3276 = vmul.f32 %v3256, 0.03125
          %v3277 = vmul.f32 %v3265, 0.03125
          %v3278 = vmul.f32 %v3274, 0.03125
          %v3279 = vsub.f32 %v3223, %v3275
          %v3280 = vsub.f32 %v3224, %v3276
          %v3281 = vsub.f32 %v3225, %v3277
          %v3282 = vsub.f32 %v3226, %v3278
          %v3283 = vsub.f32 %v3227, %v3275
          %v3284 = vsub.f32 %v3228, %v3276
          %v3285 = vsub.f32 %v3229, %v3277
          %v3286 = vsub.f32 %v3230, %v3278
          %v3287 = vsub.f32 %v3231, %v3275
          %v3288 = vsub.f32 %v3232, %v3276
          %v3289 = vsub.f32 %v3233, %v3277
          %v3290 = vsub.f32 %v3234, %v3278
          %v3291 = vsub.f32 %v3235, %v3275
          %v3292 = vsub.f32 %v3236, %v3276
          %v3293 = vsub.f32 %v3237, %v3277
          %v3294 = vsub.f32 %v3238, %v3278
          %v3295 = vmul.f32 %v3279, %v3279
          %v3296 = vmul.f32 %v3280, %v3280
          %v3297 = vmul.f32 %v3281, %v3281
          %v3298 = vmul.f32 %v3282, %v3282
          %v3299 = vmul.f32 %v3283, %v3283
          %v3300 = vmul.f32 %v3284, %v3284
          %v3301 = vmul.f32 %v3285, %v3285
          %v3302 = vmul.f32 %v3286, %v3286
          %v3303 = vmul.f32 %v3287, %v3287
          %v3304 = vmul.f32 %v3288, %v3288
          %v3305 = vmul.f32 %v3289, %v3289
          %v3306 = vmul.f32 %v3290, %v3290
          %v3307 = vmul.f32 %v3291, %v3291
          %v3308 = vmul.f32 %v3292, %v3292
          %v3309 = vmul.f32 %v3293, %v3293
          %v3310 = vmul.f32 %v3294, %v3294
          %v3311 = vadd.f32 %v3295, %v3299
          %v3312 = vadd.f32 %v3311, %v3303
          %v3313 = vadd.f32 %v3312, %v3307
          %v3314 = vrot.slane %v3313, 4
          %v3315 = vadd.f32 %v3313, %v3314
          %v3316 = vrot.slane %v3315, 2
          %v3317 = vadd.f32 %v3315, %v3316
          %v3318 = vrot.slane %v3317, 1
          %v3319 = vadd.f32 %v3317, %v3318
          %v3320 = vadd.f32 %v3296, %v3300
          %v3321 = vadd.f32 %v3320, %v3304
          %v3322 = vadd.f32 %v3321, %v3308
          %v3323 = vrot.slane %v3322, 4
          %v3324 = vadd.f32 %v3322, %v3323
          %v3325 = vrot.slane %v3324, 2
          %v3326 = vadd.f32 %v3324, %v3325
          %v3327 = vrot.slane %v3326, 1
          %v3328 = vadd.f32 %v3326, %v3327
          %v3329 = vadd.f32 %v3297, %v3301
          %v3330 = vadd.f32 %v3329, %v3305
          %v3331 = vadd.f32 %v3330, %v3309
          %v3332 = vrot.slane %v3331, 4
          %v3333 = vadd.f32 %v3331, %v3332
          %v3334 = vrot.slane %v3333, 2
          %v3335 = vadd.f32 %v3333, %v3334
          %v3336 = vrot.slane %v3335, 1
          %v3337 = vadd.f32 %v3335, %v3336
          %v3338 = vadd.f32 %v3298, %v3302
          %v3339 = vadd.f32 %v3338, %v3306
          %v3340 = vadd.f32 %v3339, %v3310
          %v3341 = vrot.slane %v3340, 4
          %v3342 = vadd.f32 %v3340, %v3341
          %v3343 = vrot.slane %v3342, 2
          %v3344 = vadd.f32 %v3342, %v3343
          %v3345 = vrot.slane %v3344, 1
          %v3346 = vadd.f32 %v3344, %v3345
          %v3347 = vmul.f32 %v3319, 0.03125
          %v3348 = vmul.f32 %v3328, 0.03125
          %v3349 = vmul.f32 %v3337, 0.03125
          %v3350 = vmul.f32 %v3346, 0.03125
          %v3351 = vld [vmem:[%s343] sm:$0xf]
          %v3352 = vadd.f32 %v3347, 1e-05
          %v3353 = vadd.f32 %v3348, 1e-05
          %v3354 = vadd.f32 %v3349, 1e-05
          %v3355 = vadd.f32 %v3350, 1e-05
          %v3356 = vrsqrt.pop %v3352
          %v3357 = vmul.f32 %v3356, %v3352
          %v3358 = vmul.f32 %v3357, %v3356
          %v3359 = vmul.f32 0.5, %v3358
          %v3360 = vsub.f32 1.5, %v3359
          %v3361 = vmul.f32 %v3356, %v3360
          %vm3362 = vweird.f32 %v3352
          %vm3363 = vweird.f32 %v3356
          %vm3364 = vmor %vm3362, %vm3363
          %v3365 = vsel %vm3364, %v3356, %v3361
          %v3366 = vrsqrt.pop %v3353
          %v3367 = vmul.f32 %v3366, %v3353
          %v3368 = vmul.f32 %v3367, %v3366
          %v3369 = vmul.f32 0.5, %v3368
          %v3370 = vsub.f32 1.5, %v3369
          %v3371 = vmul.f32 %v3366, %v3370
          %vm3372 = vweird.f32 %v3353
          %vm3373 = vweird.f32 %v3366
          %vm3374 = vmor %vm3372, %vm3373
          %v3375 = vsel %vm3374, %v3366, %v3371
          %v3376 = vrsqrt.pop %v3354
          %v3377 = vmul.f32 %v3376, %v3354
          %v3378 = vmul.f32 %v3377, %v3376
          %v3379 = vmul.f32 0.5, %v3378
          %v3380 = vsub.f32 1.5, %v3379
          %v3381 = vmul.f32 %v3376, %v3380
          %vm3382 = vweird.f32 %v3354
          %vm3383 = vweird.f32 %v3376
          %vm3384 = vmor %vm3382, %vm3383
          %v3385 = vsel %vm3384, %v3376, %v3381
          %v3386 = vrsqrt.pop %v3355
          %v3387 = vmul.f32 %v3386, %v3355
          %v3388 = vmul.f32 %v3387, %v3386
          %v3389 = vmul.f32 0.5, %v3388
          %v3390 = vsub.f32 1.5, %v3389
          %v3391 = vmul.f32 %v3386, %v3390
          %vm3392 = vweird.f32 %v3355
          %vm3393 = vweird.f32 %v3386
          %vm3394 = vmor %vm3392, %vm3393
          %v3395 = vsel %vm3394, %v3386, %v3391
          %v3400 = vrot.slane %v3375, 7
          %v3401 = vrot.slane %v3385, 6
          %v3402 = vrot.slane %v3395, 5
          %vm3403 = vcmask 1040384
          %v3404 = vsel %vm3403, %v3365, %v3400
          %vm3405 = vcmask 1042434
          %v3406 = vsel %vm3405, %v3401, %v3402
          %vm3407 = vcmask 1041408
          %v3408 = vsel %vm3407, %v3404, %v3406
          %v3410 = vmul.f32 %v3351, %v3408
          %v3412 = vperm.slane %v3410, 0
          %v3413 = vperm.slane %v3410, 1
          %v3414 = vperm.slane %v3410, 2
          %v3415 = vperm.slane %v3410, 3
          %v3420 = vmul.f32 %v3279, %v3412
          %v3421 = vmul.f32 %v3280, %v3413
          %v3422 = vmul.f32 %v3281, %v3414
          %v3423 = vmul.f32 %v3282, %v3415
          %v3424 = vmul.f32 %v3283, %v3412
          %v3425 = vmul.f32 %v3284, %v3413
          %v3426 = vmul.f32 %v3285, %v3414
          %v3427 = vmul.f32 %v3286, %v3415
          %v3428 = vmul.f32 %v3287, %v3412
          %v3429 = vmul.f32 %v3288, %v3413
          %v3430 = vmul.f32 %v3289, %v3414
          %v3431 = vmul.f32 %v3290, %v3415
          %v3432 = vmul.f32 %v3291, %v3412
          %v3433 = vmul.f32 %v3292, %v3413
          %v3434 = vmul.f32 %v3293, %v3414
          %v3435 = vmul.f32 %v3294, %v3415
          %v3436 = vld [vmem:[%s348] sm:$0xf]
          %v3438 = vperm.slane %v3436, 0
          %v3439 = vperm.slane %v3436, 1
          %v3440 = vperm.slane %v3436, 2
          %v3441 = vperm.slane %v3436, 3
          %v3446 = vadd.f32 %v3420, %v3438
          %v3447 = vadd.f32 %v3421, %v3439
          %v3448 = vadd.f32 %v3422, %v3440
          %v3449 = vadd.f32 %v3423, %v3441
          %v3450 = vadd.f32 %v3424, %v3438
          %v3451 = vadd.f32 %v3425, %v3439
          %v3452 = vadd.f32 %v3426, %v3440
          %v3453 = vadd.f32 %v3427, %v3441
          %v3454 = vadd.f32 %v3428, %v3438
          %v3455 = vadd.f32 %v3429, %v3439
          %v3456 = vadd.f32 %v3430, %v3440
          %v3457 = vadd.f32 %v3431, %v3441
          %v3458 = vadd.f32 %v3432, %v3438
          %v3459 = vadd.f32 %v3433, %v3439
          %v3460 = vadd.f32 %v3434, %v3440
          %v3461 = vadd.f32 %v3435, %v3441
          %vm3462 = vcmp.ge.f32.partialorder %v3446, 0.0
          %vm3463 = vcmp.ge.f32.partialorder %v3447, 0.0
          %vm3464 = vcmp.ge.f32.partialorder %v3448, 0.0
          %vm3465 = vcmp.ge.f32.partialorder %v3449, 0.0
          %vm3466 = vcmp.ge.f32.partialorder %v3450, 0.0
          %vm3467 = vcmp.ge.f32.partialorder %v3451, 0.0
          %vm3468 = vcmp.ge.f32.partialorder %v3452, 0.0
          %vm3469 = vcmp.ge.f32.partialorder %v3453, 0.0
          %vm3470 = vcmp.ge.f32.partialorder %v3454, 0.0
          %vm3471 = vcmp.ge.f32.partialorder %v3455, 0.0
          %vm3472 = vcmp.ge.f32.partialorder %v3456, 0.0
          %vm3473 = vcmp.ge.f32.partialorder %v3457, 0.0
          %vm3474 = vcmp.ge.f32.partialorder %v3458, 0.0
          %vm3475 = vcmp.ge.f32.partialorder %v3459, 0.0
          %vm3476 = vcmp.ge.f32.partialorder %v3460, 0.0
          %vm3477 = vcmp.ge.f32.partialorder %v3461, 0.0
          %v3478 = vmul.f32 %v3446, 0.1
          %v3479 = vmul.f32 %v3447, 0.1
          %v3480 = vmul.f32 %v3448, 0.1
          %v3481 = vmul.f32 %v3449, 0.1
          %v3482 = vmul.f32 %v3450, 0.1
          %v3483 = vmul.f32 %v3451, 0.1
          %v3484 = vmul.f32 %v3452, 0.1
          %v3485 = vmul.f32 %v3453, 0.1
          %v3486 = vmul.f32 %v3454, 0.1
          %v3487 = vmul.f32 %v3455, 0.1
          %v3488 = vmul.f32 %v3456, 0.1
          %v3489 = vmul.f32 %v3457, 0.1
          %v3490 = vmul.f32 %v3458, 0.1
          %v3491 = vmul.f32 %v3459, 0.1
          %v3492 = vmul.f32 %v3460, 0.1
          %v3493 = vmul.f32 %v3461, 0.1
          %v3494 = vsel %vm3462, %v3446, %v3478
          %v3495 = vsel %vm3463, %v3447, %v3479
          %v3496 = vsel %vm3464, %v3448, %v3480
          %v3497 = vsel %vm3465, %v3449, %v3481
          %v3498 = vsel %vm3466, %v3450, %v3482
          %v3499 = vsel %vm3467, %v3451, %v3483
          %v3500 = vsel %vm3468, %v3452, %v3484
          %v3501 = vsel %vm3469, %v3453, %v3485
          %v3502 = vsel %vm3470, %v3454, %v3486
          %v3503 = vsel %vm3471, %v3455, %v3487
          %v3504 = vsel %vm3472, %v3456, %v3488
          %v3505 = vsel %vm3473, %v3457, %v3489
          %v3506 = vsel %vm3474, %v3458, %v3490
          %v3507 = vsel %vm3475, %v3459, %v3491
          %v3508 = vsel %vm3476, %v3460, %v3492
          %v3509 = vsel %vm3477, %v3461, %v3493
          %v3510 = vpack.c.bf16 %v3495, %v3494
          %v3511 = vpack.c.bf16 %v3497, %v3496
          %v3512 = vpack.c.bf16 %v3499, %v3498
          %v3513 = vpack.c.bf16 %v3501, %v3500
          %v3514 = vpack.c.bf16 %v3503, %v3502
          %v3515 = vpack.c.bf16 %v3505, %v3504
          %v3516 = vpack.c.bf16 %v3507, %v3506
          %v3517 = vpack.c.bf16 %v3509, %v3508
          %3518 = vst [vmem:[%s336] sm:$0xff] %v3510
          %3519 = vst [vmem:[%s336 + $0x8] sm:$0xff] %v3511
          %3520 = vst [vmem:[%s336 + $0x10] sm:$0xff] %v3512
          %3521 = vst [vmem:[%s336 + $0x18] sm:$0xff] %v3513
          %3522 = vst [vmem:[%s336 + $0x20] sm:$0xff] %v3514
          %3523 = vst [vmem:[%s336 + $0x28] sm:$0xff] %v3515
          %3524 = vst [vmem:[%s336 + $0x30] sm:$0xff] %v3516
          %3525 = vst [vmem:[%s336 + $0x38] sm:$0xff] %v3517
        $region71: #{detection_forward.8} parent=54 // pred_fallthru
          _
        %s3526 = sand.u32 %s144, 1
        %s3527 = sand.u32 %s144, 1
        %s3528 = smul.addr %s3527, 64
        %s3529 = scalar_lea.vmem [#allocation6], %s3528
        // Predicated region
        $region72: #{detection_forward.8} parent=54 // pred_check
          %p3530 = pneg %p154
        $region73: #{detection_forward.8} parent=54 // pred_check_branch
          %3532 = sbr.rel (%p3530) target = $region75
        $region74: #{detection_forward.8} parent=54 // pred_region
          %s3533 = smul.u32 4, %s22
          %s3534 = smul.addr %s3533, 4
          %s3535 = scalar_lea.vmem %s4, %s3534
          // Predicated region
          $region76: #{detection_forward.8} parent=74 // pred_check
            _
          $region77: #{detection_forward.8} parent=74 // pred_check_branch
            %3537 = sbr.rel (0) target = $region79
          $region78: #{detection_forward.8} parent=74 // pred_region
            // Predicated region
            $region80: #{detection_forward.8} parent=78 // pred_check
              _
            $region81: #{detection_forward.8} parent=78 // pred_check_branch
              %3539 = sbr.rel (0) target = $region83
            $region82: #{detection_forward.8} parent=78 // pred_region
              loop: start=0, step=1, limit=1
              $region84: #{detection_forward.8} parent=82 // loop_pre_header
                _
              $region85: #{detection_forward.8} parent=82 // loop_header
                %s3541 = sphi 0, %s3545
                %p3542 = scmp.ge.s32.totalorder %s3541, 1
                %s3546 = sphi %s3529, %s3529
                %s3547 = sphi %s3535, %s3535
              $region86: #{detection_forward.8} parent=82 // loop_header_branch
                %3544 = sbr.rel (%p3542) target = $region90
              $region87: #{detection_forward.8} parent=82 // loop_body
                %v3548 = vld [vmem:[%s3546] sm:$0xff]
                %3549 = vst [vmem:[%s3547] sm:$0xff] %v3548
                %v3550 = vld [vmem:[%s3546 + $0x8] sm:$0xff]
                %3551 = vst [vmem:[%s3547 + $0x8] sm:$0xff] %v3550
                %v3552 = vld [vmem:[%s3546 + $0x10] sm:$0xff]
                %3553 = vst [vmem:[%s3547 + $0x20] sm:$0xff] %v3552
                %v3554 = vld [vmem:[%s3546 + $0x18] sm:$0xff]
                %3555 = vst [vmem:[%s3547 + $0x28] sm:$0xff] %v3554
                %v3556 = vld [vmem:[%s3546 + $0x20] sm:$0xff]
                %3557 = vst [vmem:[%s3547 + $0x40] sm:$0xff] %v3556
                %v3558 = vld [vmem:[%s3546 + $0x28] sm:$0xff]
                %3559 = vst [vmem:[%s3547 + $0x48] sm:$0xff] %v3558
                %v3560 = vld [vmem:[%s3546 + $0x30] sm:$0xff]
                %3561 = vst [vmem:[%s3547 + $0x60] sm:$0xff] %v3560
                %v3562 = vld [vmem:[%s3546 + $0x38] sm:$0xff]
                %3563 = vst [vmem:[%s3547 + $0x68] sm:$0xff] %v3562
              $region88: #{detection_forward.8} parent=82 // loop_footer
                %s3545 = sadd.s32 1, %s3541
              $region89: #{detection_forward.8} parent=82 // loop_footer_branch
                %3540 = sbr.rel target = $region85
              $region90: #{detection_forward.8} parent=82 // loop_exit
                _
            $region83: #{detection_forward.8} parent=78 // pred_fallthru
              _
            // Predicated region
            $region91: #{detection_forward.8} parent=78 // pred_check
              _
            $region92: #{detection_forward.8} parent=78 // pred_check_branch
              %3565 = sbr.rel target = $region94
            $region93: #{detection_forward.8} parent=78 // pred_region
              _
            $region94: #{detection_forward.8} parent=78 // pred_fallthru
              _
          $region79: #{detection_forward.8} parent=74 // pred_fallthru
            _
          %3566 = vnop
        $region75: #{detection_forward.8} parent=54 // pred_fallthru
          _
      $region55: #{detection_forward.8} parent=5 // pred_fallthru
        _
      %p3567 = scmp.le.s32.totalorder 2, %s13
      // Predicated region
      $region95: #{detection_forward.8} parent=5 // pred_check
        %p3568 = pneg %p3567
      $region96: #{detection_forward.8} parent=5 // pred_check_branch
        %3570 = sbr.rel (%p3568) target = $region98
      $region97: #{detection_forward.8} parent=5 // pred_region
        %s3571 = ssub.s32 %s13, 2
        // Predicated region
        $region99: #{detection_forward.8} parent=97 // pred_check
          %p3572 = pneg %p160
        $region100: #{detection_forward.8} parent=97 // pred_check_branch
          %3574 = sbr.rel (%p3572) target = $region102
        $region101: #{detection_forward.8} parent=97 // pred_region
          %s3575 = sand.u32 %s145, 1
          %s3576 = sand.u32 %s145, 1
          %s3577 = smul.addr %s3576, 64
          %s3578 = scalar_lea.vmem [#allocation6], %s3577
        $region102: #{detection_forward.8} parent=97 // pred_fallthru
          _
      $region98: #{detection_forward.8} parent=5 // pred_fallthru
        _
    $region6: #{detection_forward.8} parent=1 // loop_footer
      %s17 = sadd.s32 1, %s13
    $region7: #{detection_forward.8} parent=1 // loop_footer_branch
      %12 = sbr.rel target = $region3
    $region8: #{detection_forward.8} parent=1 // loop_exit
      _
    %3579 = vsyncpa [#allocation5], 1
    %s3580 = scalar_lea.sflag [#allocation5], 1
    %3581 = vsyncpa %s3580, 1

</llo_original>
